<compile_context>
chip_gen: v5e
topology: v5e:2x2
jax: 0.10.0
libtpu: 0.0.40
codegen_flags: <defaults>
</compile_context>

<pallas_src>
import functools

import jax
import jax.numpy as jnp
from jax.experimental import pallas as pl
from jax.experimental.pallas import tpu as pltpu

LN_EPS = 1e-5

# Packed 1-D parameter rows (only the two biases remain after LN-affine folding).
_ROW_B1, _ROW_B2 = 0, 1


def _round_up(n, m):
    return ((n + m - 1) // m) * m


def _gelu_exact(x):
    # PyTorch nn.GELU() default: exact erf-based GELU.
    return 0.5 * x * (1.0 + jax.lax.erf(x * 0.7071067811865476))


def _gelu_tanh(x):
    # tanh approximation (jax.nn.gelu approximate=True); tanh executes on the EUP slot.
    c = 0.7978845608028654  # sqrt(2/pi)
    return 0.5 * x * (1.0 + jnp.tanh(c * (x + 0.044715 * x * x * x)))


def _sigmoid_stable(x):
    # Stable sigmoid: exp(-|x|) never overflows; exp lands on the EUP slot.
    z = jnp.exp(-jnp.abs(x))
    return jnp.where(x >= 0, 1.0, z) / (1.0 + z)


def _ln_nobias(x, inv_n):
    # One-pass LayerNorm statistics, affine already folded into the following matmul.
    s1 = jnp.sum(x, axis=-1, keepdims=True)
    s2 = jnp.sum(x * x, axis=-1, keepdims=True)
    mu = s1 * inv_n
    var = jnp.maximum(s2 * inv_n - mu * mu, 0.0)
    return (x - mu) * jax.lax.rsqrt(var + LN_EPS)


def head_kernel(x_ref, vec_ref, w1_ref, w2_ref, o_ref, *, D, H, mxu_dtype, gelu_approx):
    x = x_ref[...].astype(jnp.float32)

    b1 = vec_ref[_ROW_B1:_ROW_B1 + 1, :H]    # folded: b1 + ln1_b @ W1
    b2 = vec_ref[_ROW_B2:_ROW_B2 + 1, 0:1]   # folded: b2 + ln2_b @ W2

    # outer self.norm = LayerNorm(input_size); affine folded into W1'/b1'
    xn = _ln_nobias(x, 1.0 / D)

    # Linear(input_size, hidden_size) on the MXU (bf16 operands optional), f32 accumulation.
    h = jnp.dot(xn.astype(mxu_dtype), w1_ref[...],
                preferred_element_type=jnp.float32) + b1

    # GELU + LayerNorm(hidden_size); LN2 affine folded into W2'/b2'
    h = _gelu_tanh(h) if gelu_approx else _gelu_exact(h)
    hn = _ln_nobias(h, 1.0 / H)

    # Linear(hidden_size, 1) + Sigmoid, computed transposed:
    #   [1, H] (folded W2 row) contracted with [block, H] along H -> [1, block]
    # so the result is already a lane-dense row for an unmasked store.
    y = jax.lax.dot_general(w2_ref[...], hn, (((1,), (1,)), ((), ())),
                            preferred_element_type=jnp.float32) + b2
    o_ref[...] = _sigmoid_stable(y).astype(o_ref.dtype)


def _pick_block(B, block_b):
    """Largest tile (multiple of 128, <= block_b) giving an even grid of >= 4 steps when B is
    large, so each v7x TensorCore gets >= 2 pipelined steps; small batches round up to 128 to
    keep the output row lane-dense."""
    if B <= block_b:
        return _round_up(B, 128)
    for b in range(block_b, 127, -128):
        n = pl.cdiv(B, b)
        if n >= 4 and n % 2 == 0:
            return b
    return block_b


def classification_head(x, params, *, block_b=512, mxu_dtype=jnp.float32,
                        gelu_approx=False, single_buffer_params=False):
    """x: [B, D] float32. params: dict of weights (see init_params). Returns [B, 1]."""
    B, D = x.shape
    H = params["w1"].shape[1]
    assert params["w2"].shape == (H, 1), "only num_outputs == 1 (sigmoid head) is implemented"
    assert block_b % 128 == 0, "block_b must be a multiple of 128 for lane-dense output tiles"

    # ---- batch tiling (ragged batches padded in the wrapper) ----
    block = _pick_block(B, block_b)
    Bp = _round_up(B, block)
    if Bp != B:
        x = jnp.pad(x, ((0, Bp - B), (0, 0)))
    n_blocks = Bp // block

    # ---- fold the LayerNorm affines into the linear layers (wrapper-side algebra) ----
    #   LN1: (xhat*g1 + b1g) @ W1 + b1 == xhat @ (g1[:,None]*W1) + (b1 + b1g@W1)
    #   LN2: (hhat*g2 + b2g) @ W2 + b2 == hhat @ (g2[:,None]*W2) + (b2 + b2g@W2)
    w1_f = (params["ln1_w"][:, None] * params["w1"]).astype(mxu_dtype)          # [D, H]
    b1_f = params["b1"] + jnp.dot(params["ln1_b"], params["w1"])                # [H]
    w2_row = (params["ln2_w"] * params["w2"][:, 0]).reshape(1, H).astype(jnp.float32)  # [1, H]
    b2_f = params["b2"][0] + jnp.dot(params["ln2_b"], params["w2"][:, 0])       # scalar

    # ---- pack the remaining 1-D params (b1', b2') into one (8, P) grid-invariant tile ----
    P = max(_round_up(H, 128), 128)
    vec = jnp.zeros((8, P), jnp.float32)
    vec = vec.at[_ROW_B1, :H].set(b1_f)
    vec = vec.at[_ROW_B2, 0].set(b2_f)

    # ---- VMEM budget: double-buffered x/out tiles, params (single- or double-buffered),
    #      generous f32 intermediates, 8 MiB headroom; capped at v7x's 64 MiB physical ----
    itemsize = jnp.dtype(mxu_dtype).itemsize
    param_factor = 1 if single_buffer_params else 2
    param_bytes = D * H * itemsize + 8 * P * 4 + H * 4
    io_bytes = 2 * (block * D * 4 + block * 4)
    interm_bytes = 8 * block * max(D, H) * 4
    vmem_limit = int(min(param_factor * param_bytes + io_bytes + interm_bytes + (8 << 20),
                         64 << 20))

    # Grid-invariant operands (index_map always (0,0)) are not re-DMA'd across grid steps;
    # optionally single-buffer them (v7x VMEM discipline for large heads).
    if single_buffer_params:
        full = lambda shape: pl.BlockSpec(shape, lambda i: (0, 0),
                                          pipeline_mode=pl.Buffered(1))
    else:
        full = lambda shape: pl.BlockSpec(shape, lambda i: (0, 0))

    kernel = functools.partial(head_kernel, D=D, H=H, mxu_dtype=mxu_dtype,
                               gelu_approx=gelu_approx)

    out = pl.pallas_call(
        kernel,
        out_shape=jax.ShapeDtypeStruct((1, Bp), jnp.float32),
        grid_spec=pltpu.PrefetchScalarGridSpec(
            num_scalar_prefetch=0,
            grid=(n_blocks,),
            in_specs=[
                pl.BlockSpec((block, D), lambda i: (i, 0)),   # x tile
                full((8, P)),                                 # packed folded biases
                full((D, H)),                                 # folded W1
                full((1, H)),                                 # folded W2 row
            ],
            # lane-dense output row per grid step (unmasked vst)
            out_specs=pl.BlockSpec((1, block), lambda i: (0, i)),
        ),
        compiler_params=pltpu.CompilerParams(
            dimension_semantics=("parallel",),
            vmem_limit_bytes=vmem_limit),
    )(x, vec, w1_f, w2_row)

    return out.reshape(Bp, 1)[:B]


def init_params(key, input_size, hidden_size, num_outputs=1):
    """Deterministic synthetic parameters (shapes match the nn.Module)."""
    k1, k2, k3, k4, k5, k6, k7, k8 = jax.random.split(key, 8)
    # Linear weights stored pre-transposed: [in, out]
    w1 = jax.random.normal(k1, (input_size, hidden_size), jnp.float32) * 0.02
    b1 = jax.random.normal(k2, (hidden_size,), jnp.float32) * 0.02
    w2 = jax.random.normal(k3, (hidden_size, num_outputs), jnp.float32) * 0.02
    b2 = jax.random.normal(k4, (num_outputs,), jnp.float32) * 0.02
    return {
        "ln1_w": 1.0 + 0.1 * jax.random.normal(k5, (input_size,), jnp.float32),
        "ln1_b": 0.05 * jax.random.normal(k6, (input_size,), jnp.float32),
        "w1": w1, "b1": b1,
        "ln2_w": 1.0 + 0.1 * jax.random.normal(k7, (hidden_size,), jnp.float32),
        "ln2_b": 0.05 * jax.random.normal(k8, (hidden_size,), jnp.float32),
        "w2": w2, "b2": b2,
    }


def reference(x, p):
    def ln(v, w, b):
        mu = jnp.mean(v, axis=-1, keepdims=True)
        var = jnp.mean((v - mu) ** 2, axis=-1, keepdims=True)
        return (v - mu) * jax.lax.rsqrt(var + LN_EPS) * w + b
    h = ln(x, p["ln1_w"], p["ln1_b"]) @ p["w1"] + p["b1"]
    h = jax.nn.gelu(h, approximate=False)
    h = ln(h, p["ln2_w"], p["ln2_b"])
    return jax.nn.sigmoid(h @ p["w2"] + p["b2"])


if __name__ == "__main__":
    B, INPUT_SIZE, HIDDEN_SIZE, NUM_OUTPUTS = 512, 256, 256, 1

    key = jax.random.PRNGKey(0)
    kx, kp = jax.random.split(key)
    x = jax.random.normal(kx, (B, INPUT_SIZE), jnp.float32)
    params = init_params(kp, INPUT_SIZE, HIDDEN_SIZE, NUM_OUTPUTS)
    ref = reference(x, params)

    # f32 MXU path, default 512-row tile (single grid step at this B).
    out = jax.block_until_ready(classification_head(x, params))
    assert out.shape == (B, NUM_OUTPUTS)
    assert jnp.allclose(out, ref, atol=1e-4, rtol=1e-4)   # folded-LN reassociation tolerance

    # multi-step grid (128-row tiles -> 4 parallel steps; 2 per v7x TensorCore).
    out_tiled = jax.block_until_ready(classification_head(x, params, block_b=128))
    assert jnp.allclose(out_tiled, ref, atol=1e-4, rtol=1e-4)

    # bf16 MXU operands (v5e/v6e/v7x fast path) -- intentionally looser tolerance.
    out_bf16 = jax.block_until_ready(
        classification_head(x, params, mxu_dtype=jnp.bfloat16))
    assert jnp.allclose(out_bf16, ref, atol=5e-2)

    # tanh-approximate GELU (EUP path) -- approximation tolerance.
    out_tanh = jax.block_until_ready(
        classification_head(x, params, gelu_approx=True))
    assert jnp.allclose(out_tanh, ref, atol=2e-2)

    # ragged batch (not a multiple of 128) handled by wrapper padding; tile rounds up to 128.
    out_ragged = jax.block_until_ready(classification_head(x[:100], params))
    assert out_ragged.shape == (100, NUM_OUTPUTS)
    assert jnp.allclose(out_ragged, ref[:100], atol=1e-4, rtol=1e-4)

    print("KERNEL_OK")
</pallas_src>

<mosaic_0001>
module attributes {stable_mosaic.version = 11 : i64} {
  func.func @head_kernel(%arg0: i32, %arg1: memref<512x256xf32, #tpu.memory_space<vmem>>, %arg2: memref<8x256xf32, #tpu.memory_space<vmem>>, %arg3: memref<256x256xf32, #tpu.memory_space<vmem>>, %arg4: memref<1x256xf32, #tpu.memory_space<vmem>>, %arg5: memref<1x512xf32, #tpu.memory_space<vmem>>) attributes {dimension_semantics = [#tpu.dimension_semantics<parallel>], iteration_bounds = array<i64: 1>, scalar_prefetch = 0 : i64, scratch_operands = 0 : i64, tpu.core_type = #tpu.core_type<tc>, window_params = [{transform_indices = @transform_0, window_bounds = array<i64: 512, 256>}, {pipeline_mode = #tpu.pipeline_mode<synchronous>, transform_indices = @transform_1, window_bounds = array<i64: 8, 256>}, {pipeline_mode = #tpu.pipeline_mode<synchronous>, transform_indices = @transform_2, window_bounds = array<i64: 256, 256>}, {pipeline_mode = #tpu.pipeline_mode<synchronous>, transform_indices = @transform_3, window_bounds = array<i64: 1, 256>}, {transform_indices = @transform_4, window_bounds = array<i64: 1, 512>}]} {
    %c0 = arith.constant 0 : index
    %c0_0 = arith.constant 0 : index
    %0 = vector.load %arg1[%c0, %c0_0] : memref<512x256xf32, #tpu.memory_space<vmem>>, vector<512x256xf32>
    %c0_1 = arith.constant 0 : index
    %c0_2 = arith.constant 0 : index
    %1 = vector.load %arg2[%c0_1, %c0_2] : memref<8x256xf32, #tpu.memory_space<vmem>>, vector<1x256xf32>
    %c1 = arith.constant 1 : index
    %c0_3 = arith.constant 0 : index
    %2 = vector.load %arg2[%c1, %c0_3] : memref<8x256xf32, #tpu.memory_space<vmem>>, vector<1x1xf32>
    %cst = arith.constant dense<0.000000e+00> : vector<512xf32>
    %3 = vector.multi_reduction <add>, %0, %cst [1] : vector<512x256xf32> to vector<512xf32>
    %4 = vector.shape_cast %3 : vector<512xf32> to vector<512x1xf32>
    %5 = arith.mulf %0, %0 : vector<512x256xf32>
    %cst_4 = arith.constant dense<0.000000e+00> : vector<512xf32>
    %6 = vector.multi_reduction <add>, %5, %cst_4 [1] : vector<512x256xf32> to vector<512xf32>
    %7 = vector.shape_cast %6 : vector<512xf32> to vector<512x1xf32>
    %cst_5 = arith.constant 3.906250e-03 : f32
    %8 = vector.broadcast %cst_5 : f32 to vector<512x1xf32>
    %9 = arith.mulf %4, %8 : vector<512x1xf32>
    %cst_6 = arith.constant 3.906250e-03 : f32
    %10 = vector.broadcast %cst_6 : f32 to vector<512x1xf32>
    %11 = arith.mulf %7, %10 : vector<512x1xf32>
    %12 = arith.mulf %9, %9 : vector<512x1xf32>
    %13 = arith.subf %11, %12 : vector<512x1xf32>
    %cst_7 = arith.constant 0.000000e+00 : f32
    %14 = vector.broadcast %cst_7 : f32 to vector<512x1xf32>
    %15 = arith.maximumf %13, %14 : vector<512x1xf32>
    %16 = vector.broadcast %9 : vector<512x1xf32> to vector<512x256xf32>
    %17 = arith.subf %0, %16 : vector<512x256xf32>
    %cst_8 = arith.constant 9.99999974E-6 : f32
    %18 = vector.broadcast %cst_8 : f32 to vector<512x1xf32>
    %19 = arith.addf %15, %18 : vector<512x1xf32>
    %20 = math.rsqrt %19 : vector<512x1xf32>
    %21 = vector.broadcast %20 : vector<512x1xf32> to vector<512x256xf32>
    %22 = arith.mulf %17, %21 : vector<512x256xf32>
    %c0_9 = arith.constant 0 : index
    %c0_10 = arith.constant 0 : index
    %23 = vector.load %arg3[%c0_9, %c0_10] : memref<256x256xf32, #tpu.memory_space<vmem>>, vector<256x256xf32>
    %cst_11 = arith.constant dense<0.000000e+00> : vector<512x256xf32>
    %24 = tpu.matmul %22, %23, %cst_11 {dimension_numbers = #tpu.dot_dimension_numbers<[1], [0], [0], [1], [0, 0, 1, 1], [], []>} : vector<512x256xf32>, vector<256x256xf32>, vector<512x256xf32> -> vector<512x256xf32>
    %25 = vector.broadcast %1 : vector<1x256xf32> to vector<512x256xf32>
    %26 = arith.addf %24, %25 : vector<512x256xf32>
    %cst_12 = arith.constant 5.000000e-01 : f32
    %27 = vector.broadcast %cst_12 : f32 to vector<512x256xf32>
    %28 = arith.mulf %27, %26 : vector<512x256xf32>
    %cst_13 = arith.constant 0.707106769 : f32
    %29 = vector.broadcast %cst_13 : f32 to vector<512x256xf32>
    %30 = arith.mulf %26, %29 : vector<512x256xf32>
    %31 = math.erf %30 : vector<512x256xf32>
    %cst_14 = arith.constant 1.000000e+00 : f32
    %32 = vector.broadcast %cst_14 : f32 to vector<512x256xf32>
    %33 = arith.addf %32, %31 : vector<512x256xf32>
    %34 = arith.mulf %28, %33 : vector<512x256xf32>
    %cst_15 = arith.constant dense<0.000000e+00> : vector<512xf32>
    %35 = vector.multi_reduction <add>, %34, %cst_15 [1] : vector<512x256xf32> to vector<512xf32>
    %36 = vector.shape_cast %35 : vector<512xf32> to vector<512x1xf32>
    %37 = arith.mulf %34, %34 : vector<512x256xf32>
    %cst_16 = arith.constant dense<0.000000e+00> : vector<512xf32>
    %38 = vector.multi_reduction <add>, %37, %cst_16 [1] : vector<512x256xf32> to vector<512xf32>
    %39 = vector.shape_cast %38 : vector<512xf32> to vector<512x1xf32>
    %cst_17 = arith.constant 3.906250e-03 : f32
    %40 = vector.broadcast %cst_17 : f32 to vector<512x1xf32>
    %41 = arith.mulf %36, %40 : vector<512x1xf32>
    %cst_18 = arith.constant 3.906250e-03 : f32
    %42 = vector.broadcast %cst_18 : f32 to vector<512x1xf32>
    %43 = arith.mulf %39, %42 : vector<512x1xf32>
    %44 = arith.mulf %41, %41 : vector<512x1xf32>
    %45 = arith.subf %43, %44 : vector<512x1xf32>
    %cst_19 = arith.constant 0.000000e+00 : f32
    %46 = vector.broadcast %cst_19 : f32 to vector<512x1xf32>
    %47 = arith.maximumf %45, %46 : vector<512x1xf32>
    %48 = vector.broadcast %41 : vector<512x1xf32> to vector<512x256xf32>
    %49 = arith.subf %34, %48 : vector<512x256xf32>
    %cst_20 = arith.constant 9.99999974E-6 : f32
    %50 = vector.broadcast %cst_20 : f32 to vector<512x1xf32>
    %51 = arith.addf %47, %50 : vector<512x1xf32>
    %52 = math.rsqrt %51 : vector<512x1xf32>
    %53 = vector.broadcast %52 : vector<512x1xf32> to vector<512x256xf32>
    %54 = arith.mulf %49, %53 : vector<512x256xf32>
    %c0_21 = arith.constant 0 : index
    %c0_22 = arith.constant 0 : index
    %55 = vector.load %arg4[%c0_21, %c0_22] : memref<1x256xf32, #tpu.memory_space<vmem>>, vector<1x256xf32>
    %cst_23 = arith.constant dense<0.000000e+00> : vector<1x512xf32>
    %56 = tpu.matmul %55, %54, %cst_23 {dimension_numbers = #tpu.dot_dimension_numbers<[1], [1], [0], [0], [0, 0, 1, 0], [], []>} : vector<1x256xf32>, vector<512x256xf32>, vector<1x512xf32> -> vector<1x512xf32>
    %57 = vector.broadcast %2 : vector<1x1xf32> to vector<1x512xf32>
    %58 = arith.addf %56, %57 : vector<1x512xf32>
    %59 = math.absf %58 : vector<1x512xf32>
    %cst_24 = arith.constant 0.000000e+00 : f32
    %60 = vector.broadcast %cst_24 : f32 to vector<1x512xf32>
    %61 = arith.subf %60, %59 : vector<1x512xf32>
    %62 = math.exp %61 : vector<1x512xf32>
    %cst_25 = arith.constant 0.000000e+00 : f32
    %63 = vector.broadcast %cst_25 : f32 to vector<1x512xf32>
    %64 = arith.cmpf oge, %58, %63 : vector<1x512xf32>
    %cst_26 = arith.constant 1.000000e+00 : f32
    %65 = vector.broadcast %cst_26 : f32 to vector<1x512xf32>
    %66 = arith.select %64, %65, %62 : vector<1x512xi1>, vector<1x512xf32>
    %cst_27 = arith.constant 1.000000e+00 : f32
    %67 = vector.broadcast %cst_27 : f32 to vector<1x512xf32>
    %68 = arith.addf %67, %62 : vector<1x512xf32>
    %69 = arith.divf %66, %68 : vector<1x512xf32>
    %c0_28 = arith.constant 0 : index
    %c0_29 = arith.constant 0 : index
    %70 = vector.load %arg5[%c0_28, %c0_29] : memref<1x512xf32, #tpu.memory_space<vmem>>, vector<1x512xf32>
    tpu.vector_store %arg5[%c0_28, %c0_29], %69 {strides = array<i32>} : memref<1x512xf32, #tpu.memory_space<vmem>>, vector<1x512xf32>,
    return
  }
  func.func @transform_0(%arg0: i32) -> (i32, i32) {
    %c0_i32 = arith.constant 0 : i32
    %c0_i32_0 = arith.constant 0 : i32
    return %arg0, %c0_i32 : i32, i32
  }
  func.func @transform_1(%arg0: i32) -> (i32, i32) {
    %c0_i32 = arith.constant 0 : i32
    %c0_i32_0 = arith.constant 0 : i32
    %c0_i32_1 = arith.constant 0 : i32
    return %c0_i32, %c0_i32_0 : i32, i32
  }
  func.func @transform_2(%arg0: i32) -> (i32, i32) {
    %c0_i32 = arith.constant 0 : i32
    %c0_i32_0 = arith.constant 0 : i32
    %c0_i32_1 = arith.constant 0 : i32
    return %c0_i32, %c0_i32_0 : i32, i32
  }
  func.func @transform_3(%arg0: i32) -> (i32, i32) {
    %c0_i32 = arith.constant 0 : i32
    %c0_i32_0 = arith.constant 0 : i32
    %c0_i32_1 = arith.constant 0 : i32
    return %c0_i32, %c0_i32_0 : i32, i32
  }
  func.func @transform_4(%arg0: i32) -> (i32, i32) {
    %c0_i32 = arith.constant 0 : i32
    %c0_i32_0 = arith.constant 0 : i32
    return %c0_i32, %arg0 : i32, i32
  }
}

</mosaic_0001>

<llo_original>
// kernel: tpu_custom_call.1
$region0: #{tpu_custom_call.1}
  #allocation0 [shape = 'u32[]', space=smem, size = 0x4, offset = 0x4, fixed_abs, tag = 'smem constant byte address 0x4 - core index']
  #allocation1 [shape = 'u32[72,128]{1,0:T(1,128)}', space=vmem, size = 0x9000, scoped, tag = 'internal scratch']
  %s0 = inlined_call_operand.hbm [shape: f32[512,256], index: 0, kind: input, shape index: {}]
  %s1 = inlined_call_operand.hbm [shape: f32[8,256], index: 1, kind: input, shape index: {}]
  %s2 = inlined_call_operand.hbm [shape: f32[256,256], index: 2, kind: input, shape index: {}]
  %s3 = inlined_call_operand.vmem [shape: f32[1,256], index: 3, kind: input, shape index: {}]
  %s4 = inlined_call_operand.hbm [shape: f32[1,512], index: 4, kind: output, shape index: {}]
  %s5 = sld [smem:[#allocation0]]
  $region38: #{tpu_custom_call.1} parent=0
    _
  %s7 = ssub.s32 1, %s5
  %s8 = scalar_select 0, %s7, %s5
  $region1: #{tpu_custom_call.1} parent=0
    #allocation2 [shape = 'u8[524288]{0}', space=vmem, size = 0x80000, scoped, tag = 'input window, operand 0, single buffered']
    #allocation3 [shape = 's32[1]{0}', space=sflag, size = 0x4, scoped, tag = 'scoped memory for tpu_custom_call.1']
    #allocation4 [shape = 's32[1]{0}', space=sflag, size = 0x4, scoped, tag = 'scoped memory for tpu_custom_call.1']
    #allocation5 [shape = 'u8[8192]{0}', space=vmem, size = 0x2000, scoped, tag = 'input window, operand 1, single buffered']
    #allocation6 [shape = 's32[1]{0}', space=sflag, size = 0x4, scoped, tag = 'scoped memory for tpu_custom_call.1']
    #allocation7 [shape = 'u8[262144]{0}', space=vmem, size = 0x40000, scoped, tag = 'input window, operand 2, single buffered']
    #allocation8 [shape = 'u8[2048]{0}', space=vmem, size = 0x800, scoped, tag = 'output window, operand 0, single buffered']
    %9 = vsyncpa [#allocation3], 0
    %10 = vsyncpa [#allocation6], 0
    %11 = vsyncpa [#allocation4], 0
    // Predicated region
    $region2: #{tpu_custom_call.1} parent=1 // pred_check
      _
    $region3: #{tpu_custom_call.1} parent=1 // pred_check_branch
      %13 = sbr.rel (0) target = $region5
    $region4: #{tpu_custom_call.1} parent=1 // pred_region
      %15 = vsyncadd [#allocation3], 0
      %s16 = sshll.u32 %s0, 4
      %s17 = int_to_ptr.hbm [resolvable:$true] %s16
      %s18 = sshll.u32 [#allocation2], 4
      %s19 = int_to_ptr.vmem [resolvable:$true] %s18
      %24 = dma.hbm_to_vmem [thread:$0]  %s17, 16384, %s19, [#allocation3], 256, 256, 16
    $region5: #{tpu_custom_call.1} parent=1 // pred_fallthru
      _
    // Predicated region
    $region6: #{tpu_custom_call.1} parent=1 // pred_check
      _
    $region7: #{tpu_custom_call.1} parent=1 // pred_check_branch
      %26 = sbr.rel (0) target = $region9
    $region8: #{tpu_custom_call.1} parent=1 // pred_region
      %28 = vsyncadd [#allocation6], 0
      %s30 = sshll.u32 %s1, 4
      %s31 = int_to_ptr.hbm [resolvable:$true] %s30
      %s32 = sshll.u32 [#allocation5], 4
      %s33 = int_to_ptr.vmem [resolvable:$true] %s32
      %35 = dma.hbm_to_vmem [thread:$0]  %s31, 256, %s33, [#allocation6]
    $region9: #{tpu_custom_call.1} parent=1 // pred_fallthru
      _
    // Predicated region
    $region10: #{tpu_custom_call.1} parent=1 // pred_check
      _
    $region11: #{tpu_custom_call.1} parent=1 // pred_check_branch
      %37 = sbr.rel (0) target = $region13
    $region12: #{tpu_custom_call.1} parent=1 // pred_region
      %39 = vsyncadd [#allocation6], 0
      %s40 = sshll.u32 %s2, 4
      %s41 = int_to_ptr.hbm [resolvable:$true] %s40
      %s42 = sshll.u32 [#allocation7], 4
      %s43 = int_to_ptr.vmem [resolvable:$true] %s42
      %48 = dma.hbm_to_vmem [thread:$0]  %s41, 8192, %s43, [#allocation6], 256, 256, 16
    $region13: #{tpu_custom_call.1} parent=1 // pred_fallthru
      _
    // Predicated region
    $region14: #{tpu_custom_call.1} parent=1 // pred_check
      _
    $region15: #{tpu_custom_call.1} parent=1 // pred_check_branch
      %50 = sbr.rel (0) target = $region17
    $region16: #{tpu_custom_call.1} parent=1 // pred_region
      _
    $region17: #{tpu_custom_call.1} parent=1 // pred_fallthru
      _
    // Predicated region
    $region18: #{tpu_custom_call.1} parent=1 // pred_check
      _
    $region19: #{tpu_custom_call.1} parent=1 // pred_check_branch
      %52 = sbr.rel (0) target = $region21
    $region20: #{tpu_custom_call.1} parent=1 // pred_region
      %54 = dma.done [#allocation3], 16384
    $region21: #{tpu_custom_call.1} parent=1 // pred_fallthru
      _
    // Predicated region
    $region22: #{tpu_custom_call.1} parent=1 // pred_check
      _
    $region23: #{tpu_custom_call.1} parent=1 // pred_check_branch
      %56 = sbr.rel (0) target = $region25
    $region24: #{tpu_custom_call.1} parent=1 // pred_region
      %58 = dma.done [#allocation6], 256
    $region25: #{tpu_custom_call.1} parent=1 // pred_fallthru
      _
    // Predicated region
    $region26: #{tpu_custom_call.1} parent=1 // pred_check
      _
    $region27: #{tpu_custom_call.1} parent=1 // pred_check_branch
      %60 = sbr.rel (0) target = $region29
    $region28: #{tpu_custom_call.1} parent=1 // pred_region
      %62 = dma.done [#allocation6], 8192
    $region29: #{tpu_custom_call.1} parent=1 // pred_fallthru
      _
    %v63 = vld [vmem:[#allocation2] sm:$0xff]
    %v64 = vld [vmem:[#allocation2 + $0x8] sm:$0xff]
    %v65 = vld [vmem:[#allocation2 + $0x10] sm:$0xff]
    %v66 = vld [vmem:[#allocation2 + $0x18] sm:$0xff]
    %v67 = vld [vmem:[#allocation2 + $0x20] sm:$0xff]
    %v68 = vld [vmem:[#allocation2 + $0x28] sm:$0xff]
    %v69 = vld [vmem:[#allocation2 + $0x30] sm:$0xff]
    %v70 = vld [vmem:[#allocation2 + $0x38] sm:$0xff]
    %v71 = vld [vmem:[#allocation2 + $0x40] sm:$0xff]
    %v72 = vld [vmem:[#allocation2 + $0x48] sm:$0xff]
    %v73 = vld [vmem:[#allocation2 + $0x50] sm:$0xff]
    %v74 = vld [vmem:[#allocation2 + $0x58] sm:$0xff]
    %v75 = vld [vmem:[#allocation2 + $0x60] sm:$0xff]
    %v76 = vld [vmem:[#allocation2 + $0x68] sm:$0xff]
    %v77 = vld [vmem:[#allocation2 + $0x70] sm:$0xff]
    %v78 = vld [vmem:[#allocation2 + $0x78] sm:$0xff]
    %v79 = vld [vmem:[#allocation2 + $0x80] sm:$0xff]
    %v80 = vld [vmem:[#allocation2 + $0x88] sm:$0xff]
    %v81 = vld [vmem:[#allocation2 + $0x90] sm:$0xff]
    %v82 = vld [vmem:[#allocation2 + $0x98] sm:$0xff]
    %v83 = vld [vmem:[#allocation2 + $0xa0] sm:$0xff]
    %v84 = vld [vmem:[#allocation2 + $0xa8] sm:$0xff]
    %v85 = vld [vmem:[#allocation2 + $0xb0] sm:$0xff]
    %v86 = vld [vmem:[#allocation2 + $0xb8] sm:$0xff]
    %v87 = vld [vmem:[#allocation2 + $0xc0] sm:$0xff]
    %v88 = vld [vmem:[#allocation2 + $0xc8] sm:$0xff]
    %v89 = vld [vmem:[#allocation2 + $0xd0] sm:$0xff]
    %v90 = vld [vmem:[#allocation2 + $0xd8] sm:$0xff]
    %v91 = vld [vmem:[#allocation2 + $0xe0] sm:$0xff]
    %v92 = vld [vmem:[#allocation2 + $0xe8] sm:$0xff]
    %v93 = vld [vmem:[#allocation2 + $0xf0] sm:$0xff]
    %v94 = vld [vmem:[#allocation2 + $0xf8] sm:$0xff]
    %v95 = vld [vmem:[#allocation2 + $0x100] sm:$0xff]
    %v96 = vld [vmem:[#allocation2 + $0x108] sm:$0xff]
    %v97 = vld [vmem:[#allocation2 + $0x110] sm:$0xff]
    %v98 = vld [vmem:[#allocation2 + $0x118] sm:$0xff]
    %v99 = vld [vmem:[#allocation2 + $0x120] sm:$0xff]
    %v100 = vld [vmem:[#allocation2 + $0x128] sm:$0xff]
    %v101 = vld [vmem:[#allocation2 + $0x130] sm:$0xff]
    %v102 = vld [vmem:[#allocation2 + $0x138] sm:$0xff]
    %v103 = vld [vmem:[#allocation2 + $0x140] sm:$0xff]
    %v104 = vld [vmem:[#allocation2 + $0x148] sm:$0xff]
    %v105 = vld [vmem:[#allocation2 + $0x150] sm:$0xff]
    %v106 = vld [vmem:[#allocation2 + $0x158] sm:$0xff]
    %v107 = vld [vmem:[#allocation2 + $0x160] sm:$0xff]
    %v108 = vld [vmem:[#allocation2 + $0x168] sm:$0xff]
    %v109 = vld [vmem:[#allocation2 + $0x170] sm:$0xff]
    %v110 = vld [vmem:[#allocation2 + $0x178] sm:$0xff]
    %v111 = vld [vmem:[#allocation2 + $0x180] sm:$0xff]
    %v112 = vld [vmem:[#allocation2 + $0x188] sm:$0xff]
    %v113 = vld [vmem:[#allocation2 + $0x190] sm:$0xff]
    %v114 = vld [vmem:[#allocation2 + $0x198] sm:$0xff]
    %v115 = vld [vmem:[#allocation2 + $0x1a0] sm:$0xff]
    %v116 = vld [vmem:[#allocation2 + $0x1a8] sm:$0xff]
    %v117 = vld [vmem:[#allocation2 + $0x1b0] sm:$0xff]
    %v118 = vld [vmem:[#allocation2 + $0x1b8] sm:$0xff]
    %v119 = vld [vmem:[#allocation2 + $0x1c0] sm:$0xff]
    %v120 = vld [vmem:[#allocation2 + $0x1c8] sm:$0xff]
    %v121 = vld [vmem:[#allocation2 + $0x1d0] sm:$0xff]
    %v122 = vld [vmem:[#allocation2 + $0x1d8] sm:$0xff]
    %v123 = vld [vmem:[#allocation2 + $0x1e0] sm:$0xff]
    %v124 = vld [vmem:[#allocation2 + $0x1e8] sm:$0xff]
    %v125 = vld [vmem:[#allocation2 + $0x1f0] sm:$0xff]
    %v126 = vld [vmem:[#allocation2 + $0x1f8] sm:$0xff]
    %v127 = vld [vmem:[#allocation2 + $0x200] sm:$0xff]
    %v128 = vld [vmem:[#allocation2 + $0x208] sm:$0xff]
    %v129 = vld [vmem:[#allocation2 + $0x210] sm:$0xff]
    %v130 = vld [vmem:[#allocation2 + $0x218] sm:$0xff]
    %v131 = vld [vmem:[#allocation2 + $0x220] sm:$0xff]
    %v132 = vld [vmem:[#allocation2 + $0x228] sm:$0xff]
    %v133 = vld [vmem:[#allocation2 + $0x230] sm:$0xff]
    %v134 = vld [vmem:[#allocation2 + $0x238] sm:$0xff]
    %v135 = vld [vmem:[#allocation2 + $0x240] sm:$0xff]
    %v136 = vld [vmem:[#allocation2 + $0x248] sm:$0xff]
    %v137 = vld [vmem:[#allocation2 + $0x250] sm:$0xff]
    %v138 = vld [vmem:[#allocation2 + $0x258] sm:$0xff]
    %v139 = vld [vmem:[#allocation2 + $0x260] sm:$0xff]
    %v140 = vld [vmem:[#allocation2 + $0x268] sm:$0xff]
    %v141 = vld [vmem:[#allocation2 + $0x270] sm:$0xff]
    %v142 = vld [vmem:[#allocation2 + $0x278] sm:$0xff]
    %v143 = vld [vmem:[#allocation2 + $0x280] sm:$0xff]
    %v144 = vld [vmem:[#allocation2 + $0x288] sm:$0xff]
    %v145 = vld [vmem:[#allocation2 + $0x290] sm:$0xff]
    %v146 = vld [vmem:[#allocation2 + $0x298] sm:$0xff]
    %v147 = vld [vmem:[#allocation2 + $0x2a0] sm:$0xff]
    %v148 = vld [vmem:[#allocation2 + $0x2a8] sm:$0xff]
    %v149 = vld [vmem:[#allocation2 + $0x2b0] sm:$0xff]
    %v150 = vld [vmem:[#allocation2 + $0x2b8] sm:$0xff]
    %v151 = vld [vmem:[#allocation2 + $0x2c0] sm:$0xff]
    %v152 = vld [vmem:[#allocation2 + $0x2c8] sm:$0xff]
    %v153 = vld [vmem:[#allocation2 + $0x2d0] sm:$0xff]
    %v154 = vld [vmem:[#allocation2 + $0x2d8] sm:$0xff]
    %v155 = vld [vmem:[#allocation2 + $0x2e0] sm:$0xff]
    %v156 = vld [vmem:[#allocation2 + $0x2e8] sm:$0xff]
    %v157 = vld [vmem:[#allocation2 + $0x2f0] sm:$0xff]
    %v158 = vld [vmem:[#allocation2 + $0x2f8] sm:$0xff]
    %v159 = vld [vmem:[#allocation2 + $0x300] sm:$0xff]
    %v160 = vld [vmem:[#allocation2 + $0x308] sm:$0xff]
    %v161 = vld [vmem:[#allocation2 + $0x310] sm:$0xff]
    %v162 = vld [vmem:[#allocation2 + $0x318] sm:$0xff]
    %v163 = vld [vmem:[#allocation2 + $0x320] sm:$0xff]
    %v164 = vld [vmem:[#allocation2 + $0x328] sm:$0xff]
    %v165 = vld [vmem:[#allocation2 + $0x330] sm:$0xff]
    %v166 = vld [vmem:[#allocation2 + $0x338] sm:$0xff]
    %v167 = vld [vmem:[#allocation2 + $0x340] sm:$0xff]
    %v168 = vld [vmem:[#allocation2 + $0x348] sm:$0xff]
    %v169 = vld [vmem:[#allocation2 + $0x350] sm:$0xff]
    %v170 = vld [vmem:[#allocation2 + $0x358] sm:$0xff]
    %v171 = vld [vmem:[#allocation2 + $0x360] sm:$0xff]
    %v172 = vld [vmem:[#allocation2 + $0x368] sm:$0xff]
    %v173 = vld [vmem:[#allocation2 + $0x370] sm:$0xff]
    %v174 = vld [vmem:[#allocation2 + $0x378] sm:$0xff]
    %v175 = vld [vmem:[#allocation2 + $0x380] sm:$0xff]
    %v176 = vld [vmem:[#allocation2 + $0x388] sm:$0xff]
    %v177 = vld [vmem:[#allocation2 + $0x390] sm:$0xff]
    %v178 = vld [vmem:[#allocation2 + $0x398] sm:$0xff]
    %v179 = vld [vmem:[#allocation2 + $0x3a0] sm:$0xff]
    %v180 = vld [vmem:[#allocation2 + $0x3a8] sm:$0xff]
    %v181 = vld [vmem:[#allocation2 + $0x3b0] sm:$0xff]
    %v182 = vld [vmem:[#allocation2 + $0x3b8] sm:$0xff]
    %v183 = vld [vmem:[#allocation2 + $0x3c0] sm:$0xff]
    %v184 = vld [vmem:[#allocation2 + $0x3c8] sm:$0xff]
    %v185 = vld [vmem:[#allocation2 + $0x3d0] sm:$0xff]
    %v186 = vld [vmem:[#allocation2 + $0x3d8] sm:$0xff]
    %v187 = vld [vmem:[#allocation2 + $0x3e0] sm:$0xff]
    %v188 = vld [vmem:[#allocation2 + $0x3e8] sm:$0xff]
    %v189 = vld [vmem:[#allocation2 + $0x3f0] sm:$0xff]
    %v190 = vld [vmem:[#allocation2 + $0x3f8] sm:$0xff]
    %v191 = vld [vmem:[#allocation5] ss:$8 sm:$0x3]
    %v192 = vld [vmem:[#allocation5 + $0x1] ss:$0 sm:$0xff]
    %v193 = vadd.f32 %v63, %v64
    %194 = vadd.xlane.f32.xlu0 %v193
    %v195 = vpop.xlane.xlu0 %194
    %v196 = vadd.f32 %v65, %v66
    %197 = vadd.xlane.f32.xlu0 %v196
    %v198 = vpop.xlane.xlu0 %197
    %v199 = vadd.f32 %v67, %v68
    %200 = vadd.xlane.f32.xlu0 %v199
    %v201 = vpop.xlane.xlu0 %200
    %v202 = vadd.f32 %v69, %v70
    %203 = vadd.xlane.f32.xlu0 %v202
    %v204 = vpop.xlane.xlu0 %203
    %v205 = vadd.f32 %v71, %v72
    %206 = vadd.xlane.f32.xlu0 %v205
    %v207 = vpop.xlane.xlu0 %206
    %v208 = vadd.f32 %v73, %v74
    %209 = vadd.xlane.f32.xlu0 %v208
    %v210 = vpop.xlane.xlu0 %209
    %v211 = vadd.f32 %v75, %v76
    %212 = vadd.xlane.f32.xlu0 %v211
    %v213 = vpop.xlane.xlu0 %212
    %v214 = vadd.f32 %v77, %v78
    %215 = vadd.xlane.f32.xlu0 %v214
    %v216 = vpop.xlane.xlu0 %215
    %v217 = vadd.f32 %v79, %v80
    %218 = vadd.xlane.f32.xlu0 %v217
    %v219 = vpop.xlane.xlu0 %218
    %v220 = vadd.f32 %v81, %v82
    %221 = vadd.xlane.f32.xlu0 %v220
    %v222 = vpop.xlane.xlu0 %221
    %v223 = vadd.f32 %v83, %v84
    %224 = vadd.xlane.f32.xlu0 %v223
    %v225 = vpop.xlane.xlu0 %224
    %v226 = vadd.f32 %v85, %v86
    %227 = vadd.xlane.f32.xlu0 %v226
    %v228 = vpop.xlane.xlu0 %227
    %v229 = vadd.f32 %v87, %v88
    %230 = vadd.xlane.f32.xlu0 %v229
    %v231 = vpop.xlane.xlu0 %230
    %v232 = vadd.f32 %v89, %v90
    %233 = vadd.xlane.f32.xlu0 %v232
    %v234 = vpop.xlane.xlu0 %233
    %v235 = vadd.f32 %v91, %v92
    %236 = vadd.xlane.f32.xlu0 %v235
    %v237 = vpop.xlane.xlu0 %236
    %v238 = vadd.f32 %v93, %v94
    %239 = vadd.xlane.f32.xlu0 %v238
    %v240 = vpop.xlane.xlu0 %239
    %v241 = vadd.f32 %v95, %v96
    %242 = vadd.xlane.f32.xlu0 %v241
    %v243 = vpop.xlane.xlu0 %242
    %v244 = vadd.f32 %v97, %v98
    %245 = vadd.xlane.f32.xlu0 %v244
    %v246 = vpop.xlane.xlu0 %245
    %v247 = vadd.f32 %v99, %v100
    %248 = vadd.xlane.f32.xlu0 %v247
    %v249 = vpop.xlane.xlu0 %248
    %v250 = vadd.f32 %v101, %v102
    %251 = vadd.xlane.f32.xlu0 %v250
    %v252 = vpop.xlane.xlu0 %251
    %v253 = vadd.f32 %v103, %v104
    %254 = vadd.xlane.f32.xlu0 %v253
    %v255 = vpop.xlane.xlu0 %254
    %v256 = vadd.f32 %v105, %v106
    %257 = vadd.xlane.f32.xlu0 %v256
    %v258 = vpop.xlane.xlu0 %257
    %v259 = vadd.f32 %v107, %v108
    %260 = vadd.xlane.f32.xlu0 %v259
    %v261 = vpop.xlane.xlu0 %260
    %v262 = vadd.f32 %v109, %v110
    %263 = vadd.xlane.f32.xlu0 %v262
    %v264 = vpop.xlane.xlu0 %263
    %v265 = vadd.f32 %v111, %v112
    %266 = vadd.xlane.f32.xlu0 %v265
    %v267 = vpop.xlane.xlu0 %266
    %v268 = vadd.f32 %v113, %v114
    %269 = vadd.xlane.f32.xlu0 %v268
    %v270 = vpop.xlane.xlu0 %269
    %v271 = vadd.f32 %v115, %v116
    %272 = vadd.xlane.f32.xlu0 %v271
    %v273 = vpop.xlane.xlu0 %272
    %v274 = vadd.f32 %v117, %v118
    %275 = vadd.xlane.f32.xlu0 %v274
    %v276 = vpop.xlane.xlu0 %275
    %v277 = vadd.f32 %v119, %v120
    %278 = vadd.xlane.f32.xlu0 %v277
    %v279 = vpop.xlane.xlu0 %278
    %v280 = vadd.f32 %v121, %v122
    %281 = vadd.xlane.f32.xlu0 %v280
    %v282 = vpop.xlane.xlu0 %281
    %v283 = vadd.f32 %v123, %v124
    %284 = vadd.xlane.f32.xlu0 %v283
    %v285 = vpop.xlane.xlu0 %284
    %v286 = vadd.f32 %v125, %v126
    %287 = vadd.xlane.f32.xlu0 %v286
    %v288 = vpop.xlane.xlu0 %287
    %v289 = vadd.f32 %v127, %v128
    %290 = vadd.xlane.f32.xlu0 %v289
    %v291 = vpop.xlane.xlu0 %290
    %v292 = vadd.f32 %v129, %v130
    %293 = vadd.xlane.f32.xlu0 %v292
    %v294 = vpop.xlane.xlu0 %293
    %v295 = vadd.f32 %v131, %v132
    %296 = vadd.xlane.f32.xlu0 %v295
    %v297 = vpop.xlane.xlu0 %296
    %v298 = vadd.f32 %v133, %v134
    %299 = vadd.xlane.f32.xlu0 %v298
    %v300 = vpop.xlane.xlu0 %299
    %v301 = vadd.f32 %v135, %v136
    %302 = vadd.xlane.f32.xlu0 %v301
    %v303 = vpop.xlane.xlu0 %302
    %v304 = vadd.f32 %v137, %v138
    %305 = vadd.xlane.f32.xlu0 %v304
    %v306 = vpop.xlane.xlu0 %305
    %v307 = vadd.f32 %v139, %v140
    %308 = vadd.xlane.f32.xlu0 %v307
    %v309 = vpop.xlane.xlu0 %308
    %v310 = vadd.f32 %v141, %v142
    %311 = vadd.xlane.f32.xlu0 %v310
    %v312 = vpop.xlane.xlu0 %311
    %v313 = vadd.f32 %v143, %v144
    %314 = vadd.xlane.f32.xlu0 %v313
    %v315 = vpop.xlane.xlu0 %314
    %v316 = vadd.f32 %v145, %v146
    %317 = vadd.xlane.f32.xlu0 %v316
    %v318 = vpop.xlane.xlu0 %317
    %v319 = vadd.f32 %v147, %v148
    %320 = vadd.xlane.f32.xlu0 %v319
    %v321 = vpop.xlane.xlu0 %320
    %v322 = vadd.f32 %v149, %v150
    %323 = vadd.xlane.f32.xlu0 %v322
    %v324 = vpop.xlane.xlu0 %323
    %v325 = vadd.f32 %v151, %v152
    %326 = vadd.xlane.f32.xlu0 %v325
    %v327 = vpop.xlane.xlu0 %326
    %v328 = vadd.f32 %v153, %v154
    %329 = vadd.xlane.f32.xlu0 %v328
    %v330 = vpop.xlane.xlu0 %329
    %v331 = vadd.f32 %v155, %v156
    %332 = vadd.xlane.f32.xlu0 %v331
    %v333 = vpop.xlane.xlu0 %332
    %v334 = vadd.f32 %v157, %v158
    %335 = vadd.xlane.f32.xlu0 %v334
    %v336 = vpop.xlane.xlu0 %335
    %v337 = vadd.f32 %v159, %v160
    %338 = vadd.xlane.f32.xlu0 %v337
    %v339 = vpop.xlane.xlu0 %338
    %v340 = vadd.f32 %v161, %v162
    %341 = vadd.xlane.f32.xlu0 %v340
    %v342 = vpop.xlane.xlu0 %341
    %v343 = vadd.f32 %v163, %v164
    %344 = vadd.xlane.f32.xlu0 %v343
    %v345 = vpop.xlane.xlu0 %344
    %v346 = vadd.f32 %v165, %v166
    %347 = vadd.xlane.f32.xlu0 %v346
    %v348 = vpop.xlane.xlu0 %347
    %v349 = vadd.f32 %v167, %v168
    %350 = vadd.xlane.f32.xlu0 %v349
    %v351 = vpop.xlane.xlu0 %350
    %v352 = vadd.f32 %v169, %v170
    %353 = vadd.xlane.f32.xlu0 %v352
    %v354 = vpop.xlane.xlu0 %353
    %v355 = vadd.f32 %v171, %v172
    %356 = vadd.xlane.f32.xlu0 %v355
    %v357 = vpop.xlane.xlu0 %356
    %v358 = vadd.f32 %v173, %v174
    %359 = vadd.xlane.f32.xlu0 %v358
    %v360 = vpop.xlane.xlu0 %359
    %v361 = vadd.f32 %v175, %v176
    %362 = vadd.xlane.f32.xlu0 %v361
    %v363 = vpop.xlane.xlu0 %362
    %v364 = vadd.f32 %v177, %v178
    %365 = vadd.xlane.f32.xlu0 %v364
    %v366 = vpop.xlane.xlu0 %365
    %v367 = vadd.f32 %v179, %v180
    %368 = vadd.xlane.f32.xlu0 %v367
    %v369 = vpop.xlane.xlu0 %368
    %v370 = vadd.f32 %v181, %v182
    %371 = vadd.xlane.f32.xlu0 %v370
    %v372 = vpop.xlane.xlu0 %371
    %v373 = vadd.f32 %v183, %v184
    %374 = vadd.xlane.f32.xlu0 %v373
    %v375 = vpop.xlane.xlu0 %374
    %v376 = vadd.f32 %v185, %v186
    %377 = vadd.xlane.f32.xlu0 %v376
    %v378 = vpop.xlane.xlu0 %377
    %v379 = vadd.f32 %v187, %v188
    %380 = vadd.xlane.f32.xlu0 %v379
    %v381 = vpop.xlane.xlu0 %380
    %v382 = vadd.f32 %v189, %v190
    %383 = vadd.xlane.f32.xlu0 %v382
    %v384 = vpop.xlane.xlu0 %383
    %v385 = vmul.f32 %v63, %v63
    %v386 = vmul.f32 %v64, %v64
    %v387 = vmul.f32 %v65, %v65
    %v388 = vmul.f32 %v66, %v66
    %v389 = vmul.f32 %v67, %v67
    %v390 = vmul.f32 %v68, %v68
    %v391 = vmul.f32 %v69, %v69
    %v392 = vmul.f32 %v70, %v70
    %v393 = vmul.f32 %v71, %v71
    %v394 = vmul.f32 %v72, %v72
    %v395 = vmul.f32 %v73, %v73
    %v396 = vmul.f32 %v74, %v74
    %v397 = vmul.f32 %v75, %v75
    %v398 = vmul.f32 %v76, %v76
    %v399 = vmul.f32 %v77, %v77
    %v400 = vmul.f32 %v78, %v78
    %v401 = vmul.f32 %v79, %v79
    %v402 = vmul.f32 %v80, %v80
    %v403 = vmul.f32 %v81, %v81
    %v404 = vmul.f32 %v82, %v82
    %v405 = vmul.f32 %v83, %v83
    %v406 = vmul.f32 %v84, %v84
    %v407 = vmul.f32 %v85, %v85
    %v408 = vmul.f32 %v86, %v86
    %v409 = vmul.f32 %v87, %v87
    %v410 = vmul.f32 %v88, %v88
    %v411 = vmul.f32 %v89, %v89
    %v412 = vmul.f32 %v90, %v90
    %v413 = vmul.f32 %v91, %v91
    %v414 = vmul.f32 %v92, %v92
    %v415 = vmul.f32 %v93, %v93
    %v416 = vmul.f32 %v94, %v94
    %v417 = vmul.f32 %v95, %v95
    %v418 = vmul.f32 %v96, %v96
    %v419 = vmul.f32 %v97, %v97
    %v420 = vmul.f32 %v98, %v98
    %v421 = vmul.f32 %v99, %v99
    %v422 = vmul.f32 %v100, %v100
    %v423 = vmul.f32 %v101, %v101
    %v424 = vmul.f32 %v102, %v102
    %v425 = vmul.f32 %v103, %v103
    %v426 = vmul.f32 %v104, %v104
    %v427 = vmul.f32 %v105, %v105
    %v428 = vmul.f32 %v106, %v106
    %v429 = vmul.f32 %v107, %v107
    %v430 = vmul.f32 %v108, %v108
    %v431 = vmul.f32 %v109, %v109
    %v432 = vmul.f32 %v110, %v110
    %v433 = vmul.f32 %v111, %v111
    %v434 = vmul.f32 %v112, %v112
    %v435 = vmul.f32 %v113, %v113
    %v436 = vmul.f32 %v114, %v114
    %v437 = vmul.f32 %v115, %v115
    %v438 = vmul.f32 %v116, %v116
    %v439 = vmul.f32 %v117, %v117
    %v440 = vmul.f32 %v118, %v118
    %v441 = vmul.f32 %v119, %v119
    %v442 = vmul.f32 %v120, %v120
    %v443 = vmul.f32 %v121, %v121
    %v444 = vmul.f32 %v122, %v122
    %v445 = vmul.f32 %v123, %v123
    %v446 = vmul.f32 %v124, %v124
    %v447 = vmul.f32 %v125, %v125
    %v448 = vmul.f32 %v126, %v126
    %v449 = vmul.f32 %v127, %v127
    %v450 = vmul.f32 %v128, %v128
    %v451 = vmul.f32 %v129, %v129
    %v452 = vmul.f32 %v130, %v130
    %v453 = vmul.f32 %v131, %v131
    %v454 = vmul.f32 %v132, %v132
    %v455 = vmul.f32 %v133, %v133
    %v456 = vmul.f32 %v134, %v134
    %v457 = vmul.f32 %v135, %v135
    %v458 = vmul.f32 %v136, %v136
    %v459 = vmul.f32 %v137, %v137
    %v460 = vmul.f32 %v138, %v138
    %v461 = vmul.f32 %v139, %v139
    %v462 = vmul.f32 %v140, %v140
    %v463 = vmul.f32 %v141, %v141
    %v464 = vmul.f32 %v142, %v142
    %v465 = vmul.f32 %v143, %v143
    %v466 = vmul.f32 %v144, %v144
    %v467 = vmul.f32 %v145, %v145
    %v468 = vmul.f32 %v146, %v146
    %v469 = vmul.f32 %v147, %v147
    %v470 = vmul.f32 %v148, %v148
    %v471 = vmul.f32 %v149, %v149
    %v472 = vmul.f32 %v150, %v150
    %v473 = vmul.f32 %v151, %v151
    %v474 = vmul.f32 %v152, %v152
    %v475 = vmul.f32 %v153, %v153
    %v476 = vmul.f32 %v154, %v154
    %v477 = vmul.f32 %v155, %v155
    %v478 = vmul.f32 %v156, %v156
    %v479 = vmul.f32 %v157, %v157
    %v480 = vmul.f32 %v158, %v158
    %v481 = vmul.f32 %v159, %v159
    %v482 = vmul.f32 %v160, %v160
    %v483 = vmul.f32 %v161, %v161
    %v484 = vmul.f32 %v162, %v162
    %v485 = vmul.f32 %v163, %v163
    %v486 = vmul.f32 %v164, %v164
    %v487 = vmul.f32 %v165, %v165
    %v488 = vmul.f32 %v166, %v166
    %v489 = vmul.f32 %v167, %v167
    %v490 = vmul.f32 %v168, %v168
    %v491 = vmul.f32 %v169, %v169
    %v492 = vmul.f32 %v170, %v170
    %v493 = vmul.f32 %v171, %v171
    %v494 = vmul.f32 %v172, %v172
    %v495 = vmul.f32 %v173, %v173
    %v496 = vmul.f32 %v174, %v174
    %v497 = vmul.f32 %v175, %v175
    %v498 = vmul.f32 %v176, %v176
    %v499 = vmul.f32 %v177, %v177
    %v500 = vmul.f32 %v178, %v178
    %v501 = vmul.f32 %v179, %v179
    %v502 = vmul.f32 %v180, %v180
    %v503 = vmul.f32 %v181, %v181
    %v504 = vmul.f32 %v182, %v182
    %v505 = vmul.f32 %v183, %v183
    %v506 = vmul.f32 %v184, %v184
    %v507 = vmul.f32 %v185, %v185
    %v508 = vmul.f32 %v186, %v186
    %v509 = vmul.f32 %v187, %v187
    %v510 = vmul.f32 %v188, %v188
    %v511 = vmul.f32 %v189, %v189
    %v512 = vmul.f32 %v190, %v190
    %v513 = vadd.f32 %v385, %v386
    %514 = vadd.xlane.f32.xlu0 %v513
    %v515 = vpop.xlane.xlu0 %514
    %v516 = vadd.f32 %v387, %v388
    %517 = vadd.xlane.f32.xlu0 %v516
    %v518 = vpop.xlane.xlu0 %517
    %v519 = vadd.f32 %v389, %v390
    %520 = vadd.xlane.f32.xlu0 %v519
    %v521 = vpop.xlane.xlu0 %520
    %v522 = vadd.f32 %v391, %v392
    %523 = vadd.xlane.f32.xlu0 %v522
    %v524 = vpop.xlane.xlu0 %523
    %v525 = vadd.f32 %v393, %v394
    %526 = vadd.xlane.f32.xlu0 %v525
    %v527 = vpop.xlane.xlu0 %526
    %v528 = vadd.f32 %v395, %v396
    %529 = vadd.xlane.f32.xlu0 %v528
    %v530 = vpop.xlane.xlu0 %529
    %v531 = vadd.f32 %v397, %v398
    %532 = vadd.xlane.f32.xlu0 %v531
    %v533 = vpop.xlane.xlu0 %532
    %v534 = vadd.f32 %v399, %v400
    %535 = vadd.xlane.f32.xlu0 %v534
    %v536 = vpop.xlane.xlu0 %535
    %v537 = vadd.f32 %v401, %v402
    %538 = vadd.xlane.f32.xlu0 %v537
    %v539 = vpop.xlane.xlu0 %538
    %v540 = vadd.f32 %v403, %v404
    %541 = vadd.xlane.f32.xlu0 %v540
    %v542 = vpop.xlane.xlu0 %541
    %v543 = vadd.f32 %v405, %v406
    %544 = vadd.xlane.f32.xlu0 %v543
    %v545 = vpop.xlane.xlu0 %544
    %v546 = vadd.f32 %v407, %v408
    %547 = vadd.xlane.f32.xlu0 %v546
    %v548 = vpop.xlane.xlu0 %547
    %v549 = vadd.f32 %v409, %v410
    %550 = vadd.xlane.f32.xlu0 %v549
    %v551 = vpop.xlane.xlu0 %550
    %v552 = vadd.f32 %v411, %v412
    %553 = vadd.xlane.f32.xlu0 %v552
    %v554 = vpop.xlane.xlu0 %553
    %v555 = vadd.f32 %v413, %v414
    %556 = vadd.xlane.f32.xlu0 %v555
    %v557 = vpop.xlane.xlu0 %556
    %v558 = vadd.f32 %v415, %v416
    %559 = vadd.xlane.f32.xlu0 %v558
    %v560 = vpop.xlane.xlu0 %559
    %v561 = vadd.f32 %v417, %v418
    %562 = vadd.xlane.f32.xlu0 %v561
    %v563 = vpop.xlane.xlu0 %562
    %v564 = vadd.f32 %v419, %v420
    %565 = vadd.xlane.f32.xlu0 %v564
    %v566 = vpop.xlane.xlu0 %565
    %v567 = vadd.f32 %v421, %v422
    %568 = vadd.xlane.f32.xlu0 %v567
    %v569 = vpop.xlane.xlu0 %568
    %v570 = vadd.f32 %v423, %v424
    %571 = vadd.xlane.f32.xlu0 %v570
    %v572 = vpop.xlane.xlu0 %571
    %v573 = vadd.f32 %v425, %v426
    %574 = vadd.xlane.f32.xlu0 %v573
    %v575 = vpop.xlane.xlu0 %574
    %v576 = vadd.f32 %v427, %v428
    %577 = vadd.xlane.f32.xlu0 %v576
    %v578 = vpop.xlane.xlu0 %577
    %v579 = vadd.f32 %v429, %v430
    %580 = vadd.xlane.f32.xlu0 %v579
    %v581 = vpop.xlane.xlu0 %580
    %v582 = vadd.f32 %v431, %v432
    %583 = vadd.xlane.f32.xlu0 %v582
    %v584 = vpop.xlane.xlu0 %583
    %v585 = vadd.f32 %v433, %v434
    %586 = vadd.xlane.f32.xlu0 %v585
    %v587 = vpop.xlane.xlu0 %586
    %v588 = vadd.f32 %v435, %v436
    %589 = vadd.xlane.f32.xlu0 %v588
    %v590 = vpop.xlane.xlu0 %589
    %v591 = vadd.f32 %v437, %v438
    %592 = vadd.xlane.f32.xlu0 %v591
    %v593 = vpop.xlane.xlu0 %592
    %v594 = vadd.f32 %v439, %v440
    %595 = vadd.xlane.f32.xlu0 %v594
    %v596 = vpop.xlane.xlu0 %595
    %v597 = vadd.f32 %v441, %v442
    %598 = vadd.xlane.f32.xlu0 %v597
    %v599 = vpop.xlane.xlu0 %598
    %v600 = vadd.f32 %v443, %v444
    %601 = vadd.xlane.f32.xlu0 %v600
    %v602 = vpop.xlane.xlu0 %601
    %v603 = vadd.f32 %v445, %v446
    %604 = vadd.xlane.f32.xlu0 %v603
    %v605 = vpop.xlane.xlu0 %604
    %v606 = vadd.f32 %v447, %v448
    %607 = vadd.xlane.f32.xlu0 %v606
    %v608 = vpop.xlane.xlu0 %607
    %v609 = vadd.f32 %v449, %v450
    %610 = vadd.xlane.f32.xlu0 %v609
    %v611 = vpop.xlane.xlu0 %610
    %v612 = vadd.f32 %v451, %v452
    %613 = vadd.xlane.f32.xlu0 %v612
    %v614 = vpop.xlane.xlu0 %613
    %v615 = vadd.f32 %v453, %v454
    %616 = vadd.xlane.f32.xlu0 %v615
    %v617 = vpop.xlane.xlu0 %616
    %v618 = vadd.f32 %v455, %v456
    %619 = vadd.xlane.f32.xlu0 %v618
    %v620 = vpop.xlane.xlu0 %619
    %v621 = vadd.f32 %v457, %v458
    %622 = vadd.xlane.f32.xlu0 %v621
    %v623 = vpop.xlane.xlu0 %622
    %v624 = vadd.f32 %v459, %v460
    %625 = vadd.xlane.f32.xlu0 %v624
    %v626 = vpop.xlane.xlu0 %625
    %v627 = vadd.f32 %v461, %v462
    %628 = vadd.xlane.f32.xlu0 %v627
    %v629 = vpop.xlane.xlu0 %628
    %v630 = vadd.f32 %v463, %v464
    %631 = vadd.xlane.f32.xlu0 %v630
    %v632 = vpop.xlane.xlu0 %631
    %v633 = vadd.f32 %v465, %v466
    %634 = vadd.xlane.f32.xlu0 %v633
    %v635 = vpop.xlane.xlu0 %634
    %v636 = vadd.f32 %v467, %v468
    %637 = vadd.xlane.f32.xlu0 %v636
    %v638 = vpop.xlane.xlu0 %637
    %v639 = vadd.f32 %v469, %v470
    %640 = vadd.xlane.f32.xlu0 %v639
    %v641 = vpop.xlane.xlu0 %640
    %v642 = vadd.f32 %v471, %v472
    %643 = vadd.xlane.f32.xlu0 %v642
    %v644 = vpop.xlane.xlu0 %643
    %v645 = vadd.f32 %v473, %v474
    %646 = vadd.xlane.f32.xlu0 %v645
    %v647 = vpop.xlane.xlu0 %646
    %v648 = vadd.f32 %v475, %v476
    %649 = vadd.xlane.f32.xlu0 %v648
    %v650 = vpop.xlane.xlu0 %649
    %v651 = vadd.f32 %v477, %v478
    %652 = vadd.xlane.f32.xlu0 %v651
    %v653 = vpop.xlane.xlu0 %652
    %v654 = vadd.f32 %v479, %v480
    %655 = vadd.xlane.f32.xlu0 %v654
    %v656 = vpop.xlane.xlu0 %655
    %v657 = vadd.f32 %v481, %v482
    %658 = vadd.xlane.f32.xlu0 %v657
    %v659 = vpop.xlane.xlu0 %658
    %v660 = vadd.f32 %v483, %v484
    %661 = vadd.xlane.f32.xlu0 %v660
    %v662 = vpop.xlane.xlu0 %661
    %v663 = vadd.f32 %v485, %v486
    %664 = vadd.xlane.f32.xlu0 %v663
    %v665 = vpop.xlane.xlu0 %664
    %v666 = vadd.f32 %v487, %v488
    %667 = vadd.xlane.f32.xlu0 %v666
    %v668 = vpop.xlane.xlu0 %667
    %v669 = vadd.f32 %v489, %v490
    %670 = vadd.xlane.f32.xlu0 %v669
    %v671 = vpop.xlane.xlu0 %670
    %v672 = vadd.f32 %v491, %v492
    %673 = vadd.xlane.f32.xlu0 %v672
    %v674 = vpop.xlane.xlu0 %673
    %v675 = vadd.f32 %v493, %v494
    %676 = vadd.xlane.f32.xlu0 %v675
    %v677 = vpop.xlane.xlu0 %676
    %v678 = vadd.f32 %v495, %v496
    %679 = vadd.xlane.f32.xlu0 %v678
    %v680 = vpop.xlane.xlu0 %679
    %v681 = vadd.f32 %v497, %v498
    %682 = vadd.xlane.f32.xlu0 %v681
    %v683 = vpop.xlane.xlu0 %682
    %v684 = vadd.f32 %v499, %v500
    %685 = vadd.xlane.f32.xlu0 %v684
    %v686 = vpop.xlane.xlu0 %685
    %v687 = vadd.f32 %v501, %v502
    %688 = vadd.xlane.f32.xlu0 %v687
    %v689 = vpop.xlane.xlu0 %688
    %v690 = vadd.f32 %v503, %v504
    %691 = vadd.xlane.f32.xlu0 %v690
    %v692 = vpop.xlane.xlu0 %691
    %v693 = vadd.f32 %v505, %v506
    %694 = vadd.xlane.f32.xlu0 %v693
    %v695 = vpop.xlane.xlu0 %694
    %v696 = vadd.f32 %v507, %v508
    %697 = vadd.xlane.f32.xlu0 %v696
    %v698 = vpop.xlane.xlu0 %697
    %v699 = vadd.f32 %v509, %v510
    %700 = vadd.xlane.f32.xlu0 %v699
    %v701 = vpop.xlane.xlu0 %700
    %v702 = vadd.f32 %v511, %v512
    %703 = vadd.xlane.f32.xlu0 %v702
    %v704 = vpop.xlane.xlu0 %703
    %v705 = vmul.f32 %v195, 0.00390625
    %v706 = vmul.f32 %v198, 0.00390625
    %v707 = vmul.f32 %v201, 0.00390625
    %v708 = vmul.f32 %v204, 0.00390625
    %v709 = vmul.f32 %v207, 0.00390625
    %v710 = vmul.f32 %v210, 0.00390625
    %v711 = vmul.f32 %v213, 0.00390625
    %v712 = vmul.f32 %v216, 0.00390625
    %v713 = vmul.f32 %v219, 0.00390625
    %v714 = vmul.f32 %v222, 0.00390625
    %v715 = vmul.f32 %v225, 0.00390625
    %v716 = vmul.f32 %v228, 0.00390625
    %v717 = vmul.f32 %v231, 0.00390625
    %v718 = vmul.f32 %v234, 0.00390625
    %v719 = vmul.f32 %v237, 0.00390625
    %v720 = vmul.f32 %v240, 0.00390625
    %v721 = vmul.f32 %v243, 0.00390625
    %v722 = vmul.f32 %v246, 0.00390625
    %v723 = vmul.f32 %v249, 0.00390625
    %v724 = vmul.f32 %v252, 0.00390625
    %v725 = vmul.f32 %v255, 0.00390625
    %v726 = vmul.f32 %v258, 0.00390625
    %v727 = vmul.f32 %v261, 0.00390625
    %v728 = vmul.f32 %v264, 0.00390625
    %v729 = vmul.f32 %v267, 0.00390625
    %v730 = vmul.f32 %v270, 0.00390625
    %v731 = vmul.f32 %v273, 0.00390625
    %v732 = vmul.f32 %v276, 0.00390625
    %v733 = vmul.f32 %v279, 0.00390625
    %v734 = vmul.f32 %v282, 0.00390625
    %v735 = vmul.f32 %v285, 0.00390625
    %v736 = vmul.f32 %v288, 0.00390625
    %v737 = vmul.f32 %v291, 0.00390625
    %v738 = vmul.f32 %v294, 0.00390625
    %v739 = vmul.f32 %v297, 0.00390625
    %v740 = vmul.f32 %v300, 0.00390625
    %v741 = vmul.f32 %v303, 0.00390625
    %v742 = vmul.f32 %v306, 0.00390625
    %v743 = vmul.f32 %v309, 0.00390625
    %v744 = vmul.f32 %v312, 0.00390625
    %v745 = vmul.f32 %v315, 0.00390625
    %v746 = vmul.f32 %v318, 0.00390625
    %v747 = vmul.f32 %v321, 0.00390625
    %v748 = vmul.f32 %v324, 0.00390625
    %v749 = vmul.f32 %v327, 0.00390625
    %v750 = vmul.f32 %v330, 0.00390625
    %v751 = vmul.f32 %v333, 0.00390625
    %v752 = vmul.f32 %v336, 0.00390625
    %v753 = vmul.f32 %v339, 0.00390625
    %v754 = vmul.f32 %v342, 0.00390625
    %v755 = vmul.f32 %v345, 0.00390625
    %v756 = vmul.f32 %v348, 0.00390625
    %v757 = vmul.f32 %v351, 0.00390625
    %v758 = vmul.f32 %v354, 0.00390625
    %v759 = vmul.f32 %v357, 0.00390625
    %v760 = vmul.f32 %v360, 0.00390625
    %v761 = vmul.f32 %v363, 0.00390625
    %v762 = vmul.f32 %v366, 0.00390625
    %v763 = vmul.f32 %v369, 0.00390625
    %v764 = vmul.f32 %v372, 0.00390625
    %v765 = vmul.f32 %v375, 0.00390625
    %v766 = vmul.f32 %v378, 0.00390625
    %v767 = vmul.f32 %v381, 0.00390625
    %v768 = vmul.f32 %v384, 0.00390625
    %v769 = vmul.f32 %v515, 0.00390625
    %v770 = vmul.f32 %v518, 0.00390625
    %v771 = vmul.f32 %v521, 0.00390625
    %v772 = vmul.f32 %v524, 0.00390625
    %v773 = vmul.f32 %v527, 0.00390625
    %v774 = vmul.f32 %v530, 0.00390625
    %v775 = vmul.f32 %v533, 0.00390625
    %v776 = vmul.f32 %v536, 0.00390625
    %v777 = vmul.f32 %v539, 0.00390625
    %v778 = vmul.f32 %v542, 0.00390625
    %v779 = vmul.f32 %v545, 0.00390625
    %v780 = vmul.f32 %v548, 0.00390625
    %v781 = vmul.f32 %v551, 0.00390625
    %v782 = vmul.f32 %v554, 0.00390625
    %v783 = vmul.f32 %v557, 0.00390625
    %v784 = vmul.f32 %v560, 0.00390625
    %v785 = vmul.f32 %v563, 0.00390625
    %v786 = vmul.f32 %v566, 0.00390625
    %v787 = vmul.f32 %v569, 0.00390625
    %v788 = vmul.f32 %v572, 0.00390625
    %v789 = vmul.f32 %v575, 0.00390625
    %v790 = vmul.f32 %v578, 0.00390625
    %v791 = vmul.f32 %v581, 0.00390625
    %v792 = vmul.f32 %v584, 0.00390625
    %v793 = vmul.f32 %v587, 0.00390625
    %v794 = vmul.f32 %v590, 0.00390625
    %v795 = vmul.f32 %v593, 0.00390625
    %v796 = vmul.f32 %v596, 0.00390625
    %v797 = vmul.f32 %v599, 0.00390625
    %v798 = vmul.f32 %v602, 0.00390625
    %v799 = vmul.f32 %v605, 0.00390625
    %v800 = vmul.f32 %v608, 0.00390625
    %v801 = vmul.f32 %v611, 0.00390625
    %v802 = vmul.f32 %v614, 0.00390625
    %v803 = vmul.f32 %v617, 0.00390625
    %v804 = vmul.f32 %v620, 0.00390625
    %v805 = vmul.f32 %v623, 0.00390625
    %v806 = vmul.f32 %v626, 0.00390625
    %v807 = vmul.f32 %v629, 0.00390625
    %v808 = vmul.f32 %v632, 0.00390625
    %v809 = vmul.f32 %v635, 0.00390625
    %v810 = vmul.f32 %v638, 0.00390625
    %v811 = vmul.f32 %v641, 0.00390625
    %v812 = vmul.f32 %v644, 0.00390625
    %v813 = vmul.f32 %v647, 0.00390625
    %v814 = vmul.f32 %v650, 0.00390625
    %v815 = vmul.f32 %v653, 0.00390625
    %v816 = vmul.f32 %v656, 0.00390625
    %v817 = vmul.f32 %v659, 0.00390625
    %v818 = vmul.f32 %v662, 0.00390625
    %v819 = vmul.f32 %v665, 0.00390625
    %v820 = vmul.f32 %v668, 0.00390625
    %v821 = vmul.f32 %v671, 0.00390625
    %v822 = vmul.f32 %v674, 0.00390625
    %v823 = vmul.f32 %v677, 0.00390625
    %v824 = vmul.f32 %v680, 0.00390625
    %v825 = vmul.f32 %v683, 0.00390625
    %v826 = vmul.f32 %v686, 0.00390625
    %v827 = vmul.f32 %v689, 0.00390625
    %v828 = vmul.f32 %v692, 0.00390625
    %v829 = vmul.f32 %v695, 0.00390625
    %v830 = vmul.f32 %v698, 0.00390625
    %v831 = vmul.f32 %v701, 0.00390625
    %v832 = vmul.f32 %v704, 0.00390625
    %v833 = vmul.f32 %v705, %v705
    %v834 = vmul.f32 %v706, %v706
    %v835 = vmul.f32 %v707, %v707
    %v836 = vmul.f32 %v708, %v708
    %v837 = vmul.f32 %v709, %v709
    %v838 = vmul.f32 %v710, %v710
    %v839 = vmul.f32 %v711, %v711
    %v840 = vmul.f32 %v712, %v712
    %v841 = vmul.f32 %v713, %v713
    %v842 = vmul.f32 %v714, %v714
    %v843 = vmul.f32 %v715, %v715
    %v844 = vmul.f32 %v716, %v716
    %v845 = vmul.f32 %v717, %v717
    %v846 = vmul.f32 %v718, %v718
    %v847 = vmul.f32 %v719, %v719
    %v848 = vmul.f32 %v720, %v720
    %v849 = vmul.f32 %v721, %v721
    %v850 = vmul.f32 %v722, %v722
    %v851 = vmul.f32 %v723, %v723
    %v852 = vmul.f32 %v724, %v724
    %v853 = vmul.f32 %v725, %v725
    %v854 = vmul.f32 %v726, %v726
    %v855 = vmul.f32 %v727, %v727
    %v856 = vmul.f32 %v728, %v728
    %v857 = vmul.f32 %v729, %v729
    %v858 = vmul.f32 %v730, %v730
    %v859 = vmul.f32 %v731, %v731
    %v860 = vmul.f32 %v732, %v732
    %v861 = vmul.f32 %v733, %v733
    %v862 = vmul.f32 %v734, %v734
    %v863 = vmul.f32 %v735, %v735
    %v864 = vmul.f32 %v736, %v736
    %v865 = vmul.f32 %v737, %v737
    %v866 = vmul.f32 %v738, %v738
    %v867 = vmul.f32 %v739, %v739
    %v868 = vmul.f32 %v740, %v740
    %v869 = vmul.f32 %v741, %v741
    %v870 = vmul.f32 %v742, %v742
    %v871 = vmul.f32 %v743, %v743
    %v872 = vmul.f32 %v744, %v744
    %v873 = vmul.f32 %v745, %v745
    %v874 = vmul.f32 %v746, %v746
    %v875 = vmul.f32 %v747, %v747
    %v876 = vmul.f32 %v748, %v748
    %v877 = vmul.f32 %v749, %v749
    %v878 = vmul.f32 %v750, %v750
    %v879 = vmul.f32 %v751, %v751
    %v880 = vmul.f32 %v752, %v752
    %v881 = vmul.f32 %v753, %v753
    %v882 = vmul.f32 %v754, %v754
    %v883 = vmul.f32 %v755, %v755
    %v884 = vmul.f32 %v756, %v756
    %v885 = vmul.f32 %v757, %v757
    %v886 = vmul.f32 %v758, %v758
    %v887 = vmul.f32 %v759, %v759
    %v888 = vmul.f32 %v760, %v760
    %v889 = vmul.f32 %v761, %v761
    %v890 = vmul.f32 %v762, %v762
    %v891 = vmul.f32 %v763, %v763
    %v892 = vmul.f32 %v764, %v764
    %v893 = vmul.f32 %v765, %v765
    %v894 = vmul.f32 %v766, %v766
    %v895 = vmul.f32 %v767, %v767
    %v896 = vmul.f32 %v768, %v768
    %v897 = vsub.f32 %v769, %v833
    %v898 = vsub.f32 %v770, %v834
    %v899 = vsub.f32 %v771, %v835
    %v900 = vsub.f32 %v772, %v836
    %v901 = vsub.f32 %v773, %v837
    %v902 = vsub.f32 %v774, %v838
    %v903 = vsub.f32 %v775, %v839
    %v904 = vsub.f32 %v776, %v840
    %v905 = vsub.f32 %v777, %v841
    %v906 = vsub.f32 %v778, %v842
    %v907 = vsub.f32 %v779, %v843
    %v908 = vsub.f32 %v780, %v844
    %v909 = vsub.f32 %v781, %v845
    %v910 = vsub.f32 %v782, %v846
    %v911 = vsub.f32 %v783, %v847
    %v912 = vsub.f32 %v784, %v848
    %v913 = vsub.f32 %v785, %v849
    %v914 = vsub.f32 %v786, %v850
    %v915 = vsub.f32 %v787, %v851
    %v916 = vsub.f32 %v788, %v852
    %v917 = vsub.f32 %v789, %v853
    %v918 = vsub.f32 %v790, %v854
    %v919 = vsub.f32 %v791, %v855
    %v920 = vsub.f32 %v792, %v856
    %v921 = vsub.f32 %v793, %v857
    %v922 = vsub.f32 %v794, %v858
    %v923 = vsub.f32 %v795, %v859
    %v924 = vsub.f32 %v796, %v860
    %v925 = vsub.f32 %v797, %v861
    %v926 = vsub.f32 %v798, %v862
    %v927 = vsub.f32 %v799, %v863
    %v928 = vsub.f32 %v800, %v864
    %v929 = vsub.f32 %v801, %v865
    %v930 = vsub.f32 %v802, %v866
    %v931 = vsub.f32 %v803, %v867
    %v932 = vsub.f32 %v804, %v868
    %v933 = vsub.f32 %v805, %v869
    %v934 = vsub.f32 %v806, %v870
    %v935 = vsub.f32 %v807, %v871
    %v936 = vsub.f32 %v808, %v872
    %v937 = vsub.f32 %v809, %v873
    %v938 = vsub.f32 %v810, %v874
    %v939 = vsub.f32 %v811, %v875
    %v940 = vsub.f32 %v812, %v876
    %v941 = vsub.f32 %v813, %v877
    %v942 = vsub.f32 %v814, %v878
    %v943 = vsub.f32 %v815, %v879
    %v944 = vsub.f32 %v816, %v880
    %v945 = vsub.f32 %v817, %v881
    %v946 = vsub.f32 %v818, %v882
    %v947 = vsub.f32 %v819, %v883
    %v948 = vsub.f32 %v820, %v884
    %v949 = vsub.f32 %v821, %v885
    %v950 = vsub.f32 %v822, %v886
    %v951 = vsub.f32 %v823, %v887
    %v952 = vsub.f32 %v824, %v888
    %v953 = vsub.f32 %v825, %v889
    %v954 = vsub.f32 %v826, %v890
    %v955 = vsub.f32 %v827, %v891
    %v956 = vsub.f32 %v828, %v892
    %v957 = vsub.f32 %v829, %v893
    %v958 = vsub.f32 %v830, %v894
    %v959 = vsub.f32 %v831, %v895
    %v960 = vsub.f32 %v832, %v896
    %v961 = vmax.f32 %v897, 0.0
    %v962 = vmax.f32 %v898, 0.0
    %v963 = vmax.f32 %v899, 0.0
    %v964 = vmax.f32 %v900, 0.0
    %v965 = vmax.f32 %v901, 0.0
    %v966 = vmax.f32 %v902, 0.0
    %v967 = vmax.f32 %v903, 0.0
    %v968 = vmax.f32 %v904, 0.0
    %v969 = vmax.f32 %v905, 0.0
    %v970 = vmax.f32 %v906, 0.0
    %v971 = vmax.f32 %v907, 0.0
    %v972 = vmax.f32 %v908, 0.0
    %v973 = vmax.f32 %v909, 0.0
    %v974 = vmax.f32 %v910, 0.0
    %v975 = vmax.f32 %v911, 0.0
    %v976 = vmax.f32 %v912, 0.0
    %v977 = vmax.f32 %v913, 0.0
    %v978 = vmax.f32 %v914, 0.0
    %v979 = vmax.f32 %v915, 0.0
    %v980 = vmax.f32 %v916, 0.0
    %v981 = vmax.f32 %v917, 0.0
    %v982 = vmax.f32 %v918, 0.0
    %v983 = vmax.f32 %v919, 0.0
    %v984 = vmax.f32 %v920, 0.0
    %v985 = vmax.f32 %v921, 0.0
    %v986 = vmax.f32 %v922, 0.0
    %v987 = vmax.f32 %v923, 0.0
    %v988 = vmax.f32 %v924, 0.0
    %v989 = vmax.f32 %v925, 0.0
    %v990 = vmax.f32 %v926, 0.0
    %v991 = vmax.f32 %v927, 0.0
    %v992 = vmax.f32 %v928, 0.0
    %v993 = vmax.f32 %v929, 0.0
    %v994 = vmax.f32 %v930, 0.0
    %v995 = vmax.f32 %v931, 0.0
    %v996 = vmax.f32 %v932, 0.0
    %v997 = vmax.f32 %v933, 0.0
    %v998 = vmax.f32 %v934, 0.0
    %v999 = vmax.f32 %v935, 0.0
    %v1000 = vmax.f32 %v936, 0.0
    %v1001 = vmax.f32 %v937, 0.0
    %v1002 = vmax.f32 %v938, 0.0
    %v1003 = vmax.f32 %v939, 0.0
    %v1004 = vmax.f32 %v940, 0.0
    %v1005 = vmax.f32 %v941, 0.0
    %v1006 = vmax.f32 %v942, 0.0
    %v1007 = vmax.f32 %v943, 0.0
    %v1008 = vmax.f32 %v944, 0.0
    %v1009 = vmax.f32 %v945, 0.0
    %v1010 = vmax.f32 %v946, 0.0
    %v1011 = vmax.f32 %v947, 0.0
    %v1012 = vmax.f32 %v948, 0.0
    %v1013 = vmax.f32 %v949, 0.0
    %v1014 = vmax.f32 %v950, 0.0
    %v1015 = vmax.f32 %v951, 0.0
    %v1016 = vmax.f32 %v952, 0.0
    %v1017 = vmax.f32 %v953, 0.0
    %v1018 = vmax.f32 %v954, 0.0
    %v1019 = vmax.f32 %v955, 0.0
    %v1020 = vmax.f32 %v956, 0.0
    %v1021 = vmax.f32 %v957, 0.0
    %v1022 = vmax.f32 %v958, 0.0
    %v1023 = vmax.f32 %v959, 0.0
    %v1024 = vmax.f32 %v960, 0.0
    %v1025 = vsub.f32 %v63, %v705
    %v1026 = vsub.f32 %v64, %v705
    %v1027 = vsub.f32 %v65, %v706
    %v1028 = vsub.f32 %v66, %v706
    %v1029 = vsub.f32 %v67, %v707
    %v1030 = vsub.f32 %v68, %v707
    %v1031 = vsub.f32 %v69, %v708
    %v1032 = vsub.f32 %v70, %v708
    %v1033 = vsub.f32 %v71, %v709
    %v1034 = vsub.f32 %v72, %v709
    %v1035 = vsub.f32 %v73, %v710
    %v1036 = vsub.f32 %v74, %v710
    %v1037 = vsub.f32 %v75, %v711
    %v1038 = vsub.f32 %v76, %v711
    %v1039 = vsub.f32 %v77, %v712
    %v1040 = vsub.f32 %v78, %v712
    %v1041 = vsub.f32 %v79, %v713
    %v1042 = vsub.f32 %v80, %v713
    %v1043 = vsub.f32 %v81, %v714
    %v1044 = vsub.f32 %v82, %v714
    %v1045 = vsub.f32 %v83, %v715
    %v1046 = vsub.f32 %v84, %v715
    %v1047 = vsub.f32 %v85, %v716
    %v1048 = vsub.f32 %v86, %v716
    %v1049 = vsub.f32 %v87, %v717
    %v1050 = vsub.f32 %v88, %v717
    %v1051 = vsub.f32 %v89, %v718
    %v1052 = vsub.f32 %v90, %v718
    %v1053 = vsub.f32 %v91, %v719
    %v1054 = vsub.f32 %v92, %v719
    %v1055 = vsub.f32 %v93, %v720
    %v1056 = vsub.f32 %v94, %v720
    %v1057 = vsub.f32 %v95, %v721
    %v1058 = vsub.f32 %v96, %v721
    %v1059 = vsub.f32 %v97, %v722
    %v1060 = vsub.f32 %v98, %v722
    %v1061 = vsub.f32 %v99, %v723
    %v1062 = vsub.f32 %v100, %v723
    %v1063 = vsub.f32 %v101, %v724
    %v1064 = vsub.f32 %v102, %v724
    %v1065 = vsub.f32 %v103, %v725
    %v1066 = vsub.f32 %v104, %v725
    %v1067 = vsub.f32 %v105, %v726
    %v1068 = vsub.f32 %v106, %v726
    %v1069 = vsub.f32 %v107, %v727
    %v1070 = vsub.f32 %v108, %v727
    %v1071 = vsub.f32 %v109, %v728
    %v1072 = vsub.f32 %v110, %v728
    %v1073 = vsub.f32 %v111, %v729
    %v1074 = vsub.f32 %v112, %v729
    %v1075 = vsub.f32 %v113, %v730
    %v1076 = vsub.f32 %v114, %v730
    %v1077 = vsub.f32 %v115, %v731
    %v1078 = vsub.f32 %v116, %v731
    %v1079 = vsub.f32 %v117, %v732
    %v1080 = vsub.f32 %v118, %v732
    %v1081 = vsub.f32 %v119, %v733
    %v1082 = vsub.f32 %v120, %v733
    %v1083 = vsub.f32 %v121, %v734
    %v1084 = vsub.f32 %v122, %v734
    %v1085 = vsub.f32 %v123, %v735
    %v1086 = vsub.f32 %v124, %v735
    %v1087 = vsub.f32 %v125, %v736
    %v1088 = vsub.f32 %v126, %v736
    %v1089 = vsub.f32 %v127, %v737
    %v1090 = vsub.f32 %v128, %v737
    %v1091 = vsub.f32 %v129, %v738
    %v1092 = vsub.f32 %v130, %v738
    %v1093 = vsub.f32 %v131, %v739
    %v1094 = vsub.f32 %v132, %v739
    %v1095 = vsub.f32 %v133, %v740
    %v1096 = vsub.f32 %v134, %v740
    %v1097 = vsub.f32 %v135, %v741
    %v1098 = vsub.f32 %v136, %v741
    %v1099 = vsub.f32 %v137, %v742
    %v1100 = vsub.f32 %v138, %v742
    %v1101 = vsub.f32 %v139, %v743
    %v1102 = vsub.f32 %v140, %v743
    %v1103 = vsub.f32 %v141, %v744
    %v1104 = vsub.f32 %v142, %v744
    %v1105 = vsub.f32 %v143, %v745
    %v1106 = vsub.f32 %v144, %v745
    %v1107 = vsub.f32 %v145, %v746
    %v1108 = vsub.f32 %v146, %v746
    %v1109 = vsub.f32 %v147, %v747
    %v1110 = vsub.f32 %v148, %v747
    %v1111 = vsub.f32 %v149, %v748
    %v1112 = vsub.f32 %v150, %v748
    %v1113 = vsub.f32 %v151, %v749
    %v1114 = vsub.f32 %v152, %v749
    %v1115 = vsub.f32 %v153, %v750
    %v1116 = vsub.f32 %v154, %v750
    %v1117 = vsub.f32 %v155, %v751
    %v1118 = vsub.f32 %v156, %v751
    %v1119 = vsub.f32 %v157, %v752
    %v1120 = vsub.f32 %v158, %v752
    %v1121 = vsub.f32 %v159, %v753
    %v1122 = vsub.f32 %v160, %v753
    %v1123 = vsub.f32 %v161, %v754
    %v1124 = vsub.f32 %v162, %v754
    %v1125 = vsub.f32 %v163, %v755
    %v1126 = vsub.f32 %v164, %v755
    %v1127 = vsub.f32 %v165, %v756
    %v1128 = vsub.f32 %v166, %v756
    %v1129 = vsub.f32 %v167, %v757
    %v1130 = vsub.f32 %v168, %v757
    %v1131 = vsub.f32 %v169, %v758
    %v1132 = vsub.f32 %v170, %v758
    %v1133 = vsub.f32 %v171, %v759
    %v1134 = vsub.f32 %v172, %v759
    %v1135 = vsub.f32 %v173, %v760
    %v1136 = vsub.f32 %v174, %v760
    %v1137 = vsub.f32 %v175, %v761
    %v1138 = vsub.f32 %v176, %v761
    %v1139 = vsub.f32 %v177, %v762
    %v1140 = vsub.f32 %v178, %v762
    %v1141 = vsub.f32 %v179, %v763
    %v1142 = vsub.f32 %v180, %v763
    %v1143 = vsub.f32 %v181, %v764
    %v1144 = vsub.f32 %v182, %v764
    %v1145 = vsub.f32 %v183, %v765
    %v1146 = vsub.f32 %v184, %v765
    %v1147 = vsub.f32 %v185, %v766
    %v1148 = vsub.f32 %v186, %v766
    %v1149 = vsub.f32 %v187, %v767
    %v1150 = vsub.f32 %v188, %v767
    %v1151 = vsub.f32 %v189, %v768
    %v1152 = vsub.f32 %v190, %v768
    %v1153 = vadd.f32 %v961, 1e-05
    %v1154 = vadd.f32 %v962, 1e-05
    %v1155 = vadd.f32 %v963, 1e-05
    %v1156 = vadd.f32 %v964, 1e-05
    %v1157 = vadd.f32 %v965, 1e-05
    %v1158 = vadd.f32 %v966, 1e-05
    %v1159 = vadd.f32 %v967, 1e-05
    %v1160 = vadd.f32 %v968, 1e-05
    %v1161 = vadd.f32 %v969, 1e-05
    %v1162 = vadd.f32 %v970, 1e-05
    %v1163 = vadd.f32 %v971, 1e-05
    %v1164 = vadd.f32 %v972, 1e-05
    %v1165 = vadd.f32 %v973, 1e-05
    %v1166 = vadd.f32 %v974, 1e-05
    %v1167 = vadd.f32 %v975, 1e-05
    %v1168 = vadd.f32 %v976, 1e-05
    %v1169 = vadd.f32 %v977, 1e-05
    %v1170 = vadd.f32 %v978, 1e-05
    %v1171 = vadd.f32 %v979, 1e-05
    %v1172 = vadd.f32 %v980, 1e-05
    %v1173 = vadd.f32 %v981, 1e-05
    %v1174 = vadd.f32 %v982, 1e-05
    %v1175 = vadd.f32 %v983, 1e-05
    %v1176 = vadd.f32 %v984, 1e-05
    %v1177 = vadd.f32 %v985, 1e-05
    %v1178 = vadd.f32 %v986, 1e-05
    %v1179 = vadd.f32 %v987, 1e-05
    %v1180 = vadd.f32 %v988, 1e-05
    %v1181 = vadd.f32 %v989, 1e-05
    %v1182 = vadd.f32 %v990, 1e-05
    %v1183 = vadd.f32 %v991, 1e-05
    %v1184 = vadd.f32 %v992, 1e-05
    %v1185 = vadd.f32 %v993, 1e-05
    %v1186 = vadd.f32 %v994, 1e-05
    %v1187 = vadd.f32 %v995, 1e-05
    %v1188 = vadd.f32 %v996, 1e-05
    %v1189 = vadd.f32 %v997, 1e-05
    %v1190 = vadd.f32 %v998, 1e-05
    %v1191 = vadd.f32 %v999, 1e-05
    %v1192 = vadd.f32 %v1000, 1e-05
    %v1193 = vadd.f32 %v1001, 1e-05
    %v1194 = vadd.f32 %v1002, 1e-05
    %v1195 = vadd.f32 %v1003, 1e-05
    %v1196 = vadd.f32 %v1004, 1e-05
    %v1197 = vadd.f32 %v1005, 1e-05
    %v1198 = vadd.f32 %v1006, 1e-05
    %v1199 = vadd.f32 %v1007, 1e-05
    %v1200 = vadd.f32 %v1008, 1e-05
    %v1201 = vadd.f32 %v1009, 1e-05
    %v1202 = vadd.f32 %v1010, 1e-05
    %v1203 = vadd.f32 %v1011, 1e-05
    %v1204 = vadd.f32 %v1012, 1e-05
    %v1205 = vadd.f32 %v1013, 1e-05
    %v1206 = vadd.f32 %v1014, 1e-05
    %v1207 = vadd.f32 %v1015, 1e-05
    %v1208 = vadd.f32 %v1016, 1e-05
    %v1209 = vadd.f32 %v1017, 1e-05
    %v1210 = vadd.f32 %v1018, 1e-05
    %v1211 = vadd.f32 %v1019, 1e-05
    %v1212 = vadd.f32 %v1020, 1e-05
    %v1213 = vadd.f32 %v1021, 1e-05
    %v1214 = vadd.f32 %v1022, 1e-05
    %v1215 = vadd.f32 %v1023, 1e-05
    %v1216 = vadd.f32 %v1024, 1e-05
    %v1217 = vrsqrt.pop %v1153
    %v1218 = vmul.f32 %v1217, %v1153
    %v1219 = vmul.f32 %v1218, %v1217
    %v1220 = vmul.f32 0.5, %v1219
    %v1221 = vsub.f32 1.5, %v1220
    %v1222 = vmul.f32 %v1217, %v1221
    %vm1223 = vweird.f32 %v1153
    %vm1224 = vweird.f32 %v1217
    %vm1225 = vmor %vm1223, %vm1224
    %v1226 = vsel %vm1225, %v1217, %v1222
    %v1227 = vrsqrt.pop %v1154
    %v1228 = vmul.f32 %v1227, %v1154
    %v1229 = vmul.f32 %v1228, %v1227
    %v1230 = vmul.f32 0.5, %v1229
    %v1231 = vsub.f32 1.5, %v1230
    %v1232 = vmul.f32 %v1227, %v1231
    %vm1233 = vweird.f32 %v1154
    %vm1234 = vweird.f32 %v1227
    %vm1235 = vmor %vm1233, %vm1234
    %v1236 = vsel %vm1235, %v1227, %v1232
    %v1237 = vrsqrt.pop %v1155
    %v1238 = vmul.f32 %v1237, %v1155
    %v1239 = vmul.f32 %v1238, %v1237
    %v1240 = vmul.f32 0.5, %v1239
    %v1241 = vsub.f32 1.5, %v1240
    %v1242 = vmul.f32 %v1237, %v1241
    %vm1243 = vweird.f32 %v1155
    %vm1244 = vweird.f32 %v1237
    %vm1245 = vmor %vm1243, %vm1244
    %v1246 = vsel %vm1245, %v1237, %v1242
    %v1247 = vrsqrt.pop %v1156
    %v1248 = vmul.f32 %v1247, %v1156
    %v1249 = vmul.f32 %v1248, %v1247
    %v1250 = vmul.f32 0.5, %v1249
    %v1251 = vsub.f32 1.5, %v1250
    %v1252 = vmul.f32 %v1247, %v1251
    %vm1253 = vweird.f32 %v1156
    %vm1254 = vweird.f32 %v1247
    %vm1255 = vmor %vm1253, %vm1254
    %v1256 = vsel %vm1255, %v1247, %v1252
    %v1257 = vrsqrt.pop %v1157
    %v1258 = vmul.f32 %v1257, %v1157
    %v1259 = vmul.f32 %v1258, %v1257
    %v1260 = vmul.f32 0.5, %v1259
    %v1261 = vsub.f32 1.5, %v1260
    %v1262 = vmul.f32 %v1257, %v1261
    %vm1263 = vweird.f32 %v1157
    %vm1264 = vweird.f32 %v1257
    %vm1265 = vmor %vm1263, %vm1264
    %v1266 = vsel %vm1265, %v1257, %v1262
    %v1267 = vrsqrt.pop %v1158
    %v1268 = vmul.f32 %v1267, %v1158
    %v1269 = vmul.f32 %v1268, %v1267
    %v1270 = vmul.f32 0.5, %v1269
    %v1271 = vsub.f32 1.5, %v1270
    %v1272 = vmul.f32 %v1267, %v1271
    %vm1273 = vweird.f32 %v1158
    %vm1274 = vweird.f32 %v1267
    %vm1275 = vmor %vm1273, %vm1274
    %v1276 = vsel %vm1275, %v1267, %v1272
    %v1277 = vrsqrt.pop %v1159
    %v1278 = vmul.f32 %v1277, %v1159
    %v1279 = vmul.f32 %v1278, %v1277
    %v1280 = vmul.f32 0.5, %v1279
    %v1281 = vsub.f32 1.5, %v1280
    %v1282 = vmul.f32 %v1277, %v1281
    %vm1283 = vweird.f32 %v1159
    %vm1284 = vweird.f32 %v1277
    %vm1285 = vmor %vm1283, %vm1284
    %v1286 = vsel %vm1285, %v1277, %v1282
    %v1287 = vrsqrt.pop %v1160
    %v1288 = vmul.f32 %v1287, %v1160
    %v1289 = vmul.f32 %v1288, %v1287
    %v1290 = vmul.f32 0.5, %v1289
    %v1291 = vsub.f32 1.5, %v1290
    %v1292 = vmul.f32 %v1287, %v1291
    %vm1293 = vweird.f32 %v1160
    %vm1294 = vweird.f32 %v1287
    %vm1295 = vmor %vm1293, %vm1294
    %v1296 = vsel %vm1295, %v1287, %v1292
    %v1297 = vrsqrt.pop %v1161
    %v1298 = vmul.f32 %v1297, %v1161
    %v1299 = vmul.f32 %v1298, %v1297
    %v1300 = vmul.f32 0.5, %v1299
    %v1301 = vsub.f32 1.5, %v1300
    %v1302 = vmul.f32 %v1297, %v1301
    %vm1303 = vweird.f32 %v1161
    %vm1304 = vweird.f32 %v1297
    %vm1305 = vmor %vm1303, %vm1304
    %v1306 = vsel %vm1305, %v1297, %v1302
    %v1307 = vrsqrt.pop %v1162
    %v1308 = vmul.f32 %v1307, %v1162
    %v1309 = vmul.f32 %v1308, %v1307
    %v1310 = vmul.f32 0.5, %v1309
    %v1311 = vsub.f32 1.5, %v1310
    %v1312 = vmul.f32 %v1307, %v1311
    %vm1313 = vweird.f32 %v1162
    %vm1314 = vweird.f32 %v1307
    %vm1315 = vmor %vm1313, %vm1314
    %v1316 = vsel %vm1315, %v1307, %v1312
    %v1317 = vrsqrt.pop %v1163
    %v1318 = vmul.f32 %v1317, %v1163
    %v1319 = vmul.f32 %v1318, %v1317
    %v1320 = vmul.f32 0.5, %v1319
    %v1321 = vsub.f32 1.5, %v1320
    %v1322 = vmul.f32 %v1317, %v1321
    %vm1323 = vweird.f32 %v1163
    %vm1324 = vweird.f32 %v1317
    %vm1325 = vmor %vm1323, %vm1324
    %v1326 = vsel %vm1325, %v1317, %v1322
    %v1327 = vrsqrt.pop %v1164
    %v1328 = vmul.f32 %v1327, %v1164
    %v1329 = vmul.f32 %v1328, %v1327
    %v1330 = vmul.f32 0.5, %v1329
    %v1331 = vsub.f32 1.5, %v1330
    %v1332 = vmul.f32 %v1327, %v1331
    %vm1333 = vweird.f32 %v1164
    %vm1334 = vweird.f32 %v1327
    %vm1335 = vmor %vm1333, %vm1334
    %v1336 = vsel %vm1335, %v1327, %v1332
    %v1337 = vrsqrt.pop %v1165
    %v1338 = vmul.f32 %v1337, %v1165
    %v1339 = vmul.f32 %v1338, %v1337
    %v1340 = vmul.f32 0.5, %v1339
    %v1341 = vsub.f32 1.5, %v1340
    %v1342 = vmul.f32 %v1337, %v1341
    %vm1343 = vweird.f32 %v1165
    %vm1344 = vweird.f32 %v1337
    %vm1345 = vmor %vm1343, %vm1344
    %v1346 = vsel %vm1345, %v1337, %v1342
    %v1347 = vrsqrt.pop %v1166
    %v1348 = vmul.f32 %v1347, %v1166
    %v1349 = vmul.f32 %v1348, %v1347
    %v1350 = vmul.f32 0.5, %v1349
    %v1351 = vsub.f32 1.5, %v1350
    %v1352 = vmul.f32 %v1347, %v1351
    %vm1353 = vweird.f32 %v1166
    %vm1354 = vweird.f32 %v1347
    %vm1355 = vmor %vm1353, %vm1354
    %v1356 = vsel %vm1355, %v1347, %v1352
    %v1357 = vrsqrt.pop %v1167
    %v1358 = vmul.f32 %v1357, %v1167
    %v1359 = vmul.f32 %v1358, %v1357
    %v1360 = vmul.f32 0.5, %v1359
    %v1361 = vsub.f32 1.5, %v1360
    %v1362 = vmul.f32 %v1357, %v1361
    %vm1363 = vweird.f32 %v1167
    %vm1364 = vweird.f32 %v1357
    %vm1365 = vmor %vm1363, %vm1364
    %v1366 = vsel %vm1365, %v1357, %v1362
    %v1367 = vrsqrt.pop %v1168
    %v1368 = vmul.f32 %v1367, %v1168
    %v1369 = vmul.f32 %v1368, %v1367
    %v1370 = vmul.f32 0.5, %v1369
    %v1371 = vsub.f32 1.5, %v1370
    %v1372 = vmul.f32 %v1367, %v1371
    %vm1373 = vweird.f32 %v1168
    %vm1374 = vweird.f32 %v1367
    %vm1375 = vmor %vm1373, %vm1374
    %v1376 = vsel %vm1375, %v1367, %v1372
    %v1377 = vrsqrt.pop %v1169
    %v1378 = vmul.f32 %v1377, %v1169
    %v1379 = vmul.f32 %v1378, %v1377
    %v1380 = vmul.f32 0.5, %v1379
    %v1381 = vsub.f32 1.5, %v1380
    %v1382 = vmul.f32 %v1377, %v1381
    %vm1383 = vweird.f32 %v1169
    %vm1384 = vweird.f32 %v1377
    %vm1385 = vmor %vm1383, %vm1384
    %v1386 = vsel %vm1385, %v1377, %v1382
    %v1387 = vrsqrt.pop %v1170
    %v1388 = vmul.f32 %v1387, %v1170
    %v1389 = vmul.f32 %v1388, %v1387
    %v1390 = vmul.f32 0.5, %v1389
    %v1391 = vsub.f32 1.5, %v1390
    %v1392 = vmul.f32 %v1387, %v1391
    %vm1393 = vweird.f32 %v1170
    %vm1394 = vweird.f32 %v1387
    %vm1395 = vmor %vm1393, %vm1394
    %v1396 = vsel %vm1395, %v1387, %v1392
    %v1397 = vrsqrt.pop %v1171
    %v1398 = vmul.f32 %v1397, %v1171
    %v1399 = vmul.f32 %v1398, %v1397
    %v1400 = vmul.f32 0.5, %v1399
    %v1401 = vsub.f32 1.5, %v1400
    %v1402 = vmul.f32 %v1397, %v1401
    %vm1403 = vweird.f32 %v1171
    %vm1404 = vweird.f32 %v1397
    %vm1405 = vmor %vm1403, %vm1404
    %v1406 = vsel %vm1405, %v1397, %v1402
    %v1407 = vrsqrt.pop %v1172
    %v1408 = vmul.f32 %v1407, %v1172
    %v1409 = vmul.f32 %v1408, %v1407
    %v1410 = vmul.f32 0.5, %v1409
    %v1411 = vsub.f32 1.5, %v1410
    %v1412 = vmul.f32 %v1407, %v1411
    %vm1413 = vweird.f32 %v1172
    %vm1414 = vweird.f32 %v1407
    %vm1415 = vmor %vm1413, %vm1414
    %v1416 = vsel %vm1415, %v1407, %v1412
    %v1417 = vrsqrt.pop %v1173
    %v1418 = vmul.f32 %v1417, %v1173
    %v1419 = vmul.f32 %v1418, %v1417
    %v1420 = vmul.f32 0.5, %v1419
    %v1421 = vsub.f32 1.5, %v1420
    %v1422 = vmul.f32 %v1417, %v1421
    %vm1423 = vweird.f32 %v1173
    %vm1424 = vweird.f32 %v1417
    %vm1425 = vmor %vm1423, %vm1424
    %v1426 = vsel %vm1425, %v1417, %v1422
    %v1427 = vrsqrt.pop %v1174
    %v1428 = vmul.f32 %v1427, %v1174
    %v1429 = vmul.f32 %v1428, %v1427
    %v1430 = vmul.f32 0.5, %v1429
    %v1431 = vsub.f32 1.5, %v1430
    %v1432 = vmul.f32 %v1427, %v1431
    %vm1433 = vweird.f32 %v1174
    %vm1434 = vweird.f32 %v1427
    %vm1435 = vmor %vm1433, %vm1434
    %v1436 = vsel %vm1435, %v1427, %v1432
    %v1437 = vrsqrt.pop %v1175
    %v1438 = vmul.f32 %v1437, %v1175
    %v1439 = vmul.f32 %v1438, %v1437
    %v1440 = vmul.f32 0.5, %v1439
    %v1441 = vsub.f32 1.5, %v1440
    %v1442 = vmul.f32 %v1437, %v1441
    %vm1443 = vweird.f32 %v1175
    %vm1444 = vweird.f32 %v1437
    %vm1445 = vmor %vm1443, %vm1444
    %v1446 = vsel %vm1445, %v1437, %v1442
    %v1447 = vrsqrt.pop %v1176
    %v1448 = vmul.f32 %v1447, %v1176
    %v1449 = vmul.f32 %v1448, %v1447
    %v1450 = vmul.f32 0.5, %v1449
    %v1451 = vsub.f32 1.5, %v1450
    %v1452 = vmul.f32 %v1447, %v1451
    %vm1453 = vweird.f32 %v1176
    %vm1454 = vweird.f32 %v1447
    %vm1455 = vmor %vm1453, %vm1454
    %v1456 = vsel %vm1455, %v1447, %v1452
    %v1457 = vrsqrt.pop %v1177
    %v1458 = vmul.f32 %v1457, %v1177
    %v1459 = vmul.f32 %v1458, %v1457
    %v1460 = vmul.f32 0.5, %v1459
    %v1461 = vsub.f32 1.5, %v1460
    %v1462 = vmul.f32 %v1457, %v1461
    %vm1463 = vweird.f32 %v1177
    %vm1464 = vweird.f32 %v1457
    %vm1465 = vmor %vm1463, %vm1464
    %v1466 = vsel %vm1465, %v1457, %v1462
    %v1467 = vrsqrt.pop %v1178
    %v1468 = vmul.f32 %v1467, %v1178
    %v1469 = vmul.f32 %v1468, %v1467
    %v1470 = vmul.f32 0.5, %v1469
    %v1471 = vsub.f32 1.5, %v1470
    %v1472 = vmul.f32 %v1467, %v1471
    %vm1473 = vweird.f32 %v1178
    %vm1474 = vweird.f32 %v1467
    %vm1475 = vmor %vm1473, %vm1474
    %v1476 = vsel %vm1475, %v1467, %v1472
    %v1477 = vrsqrt.pop %v1179
    %v1478 = vmul.f32 %v1477, %v1179
    %v1479 = vmul.f32 %v1478, %v1477
    %v1480 = vmul.f32 0.5, %v1479
    %v1481 = vsub.f32 1.5, %v1480
    %v1482 = vmul.f32 %v1477, %v1481
    %vm1483 = vweird.f32 %v1179
    %vm1484 = vweird.f32 %v1477
    %vm1485 = vmor %vm1483, %vm1484
    %v1486 = vsel %vm1485, %v1477, %v1482
    %v1487 = vrsqrt.pop %v1180
    %v1488 = vmul.f32 %v1487, %v1180
    %v1489 = vmul.f32 %v1488, %v1487
    %v1490 = vmul.f32 0.5, %v1489
    %v1491 = vsub.f32 1.5, %v1490
    %v1492 = vmul.f32 %v1487, %v1491
    %vm1493 = vweird.f32 %v1180
    %vm1494 = vweird.f32 %v1487
    %vm1495 = vmor %vm1493, %vm1494
    %v1496 = vsel %vm1495, %v1487, %v1492
    %v1497 = vrsqrt.pop %v1181
    %v1498 = vmul.f32 %v1497, %v1181
    %v1499 = vmul.f32 %v1498, %v1497
    %v1500 = vmul.f32 0.5, %v1499
    %v1501 = vsub.f32 1.5, %v1500
    %v1502 = vmul.f32 %v1497, %v1501
    %vm1503 = vweird.f32 %v1181
    %vm1504 = vweird.f32 %v1497
    %vm1505 = vmor %vm1503, %vm1504
    %v1506 = vsel %vm1505, %v1497, %v1502
    %v1507 = vrsqrt.pop %v1182
    %v1508 = vmul.f32 %v1507, %v1182
    %v1509 = vmul.f32 %v1508, %v1507
    %v1510 = vmul.f32 0.5, %v1509
    %v1511 = vsub.f32 1.5, %v1510
    %v1512 = vmul.f32 %v1507, %v1511
    %vm1513 = vweird.f32 %v1182
    %vm1514 = vweird.f32 %v1507
    %vm1515 = vmor %vm1513, %vm1514
    %v1516 = vsel %vm1515, %v1507, %v1512
    %v1517 = vrsqrt.pop %v1183
    %v1518 = vmul.f32 %v1517, %v1183
    %v1519 = vmul.f32 %v1518, %v1517
    %v1520 = vmul.f32 0.5, %v1519
    %v1521 = vsub.f32 1.5, %v1520
    %v1522 = vmul.f32 %v1517, %v1521
    %vm1523 = vweird.f32 %v1183
    %vm1524 = vweird.f32 %v1517
    %vm1525 = vmor %vm1523, %vm1524
    %v1526 = vsel %vm1525, %v1517, %v1522
    %v1527 = vrsqrt.pop %v1184
    %v1528 = vmul.f32 %v1527, %v1184
    %v1529 = vmul.f32 %v1528, %v1527
    %v1530 = vmul.f32 0.5, %v1529
    %v1531 = vsub.f32 1.5, %v1530
    %v1532 = vmul.f32 %v1527, %v1531
    %vm1533 = vweird.f32 %v1184
    %vm1534 = vweird.f32 %v1527
    %vm1535 = vmor %vm1533, %vm1534
    %v1536 = vsel %vm1535, %v1527, %v1532
    %v1537 = vrsqrt.pop %v1185
    %v1538 = vmul.f32 %v1537, %v1185
    %v1539 = vmul.f32 %v1538, %v1537
    %v1540 = vmul.f32 0.5, %v1539
    %v1541 = vsub.f32 1.5, %v1540
    %v1542 = vmul.f32 %v1537, %v1541
    %vm1543 = vweird.f32 %v1185
    %vm1544 = vweird.f32 %v1537
    %vm1545 = vmor %vm1543, %vm1544
    %v1546 = vsel %vm1545, %v1537, %v1542
    %v1547 = vrsqrt.pop %v1186
    %v1548 = vmul.f32 %v1547, %v1186
    %v1549 = vmul.f32 %v1548, %v1547
    %v1550 = vmul.f32 0.5, %v1549
    %v1551 = vsub.f32 1.5, %v1550
    %v1552 = vmul.f32 %v1547, %v1551
    %vm1553 = vweird.f32 %v1186
    %vm1554 = vweird.f32 %v1547
    %vm1555 = vmor %vm1553, %vm1554
    %v1556 = vsel %vm1555, %v1547, %v1552
    %v1557 = vrsqrt.pop %v1187
    %v1558 = vmul.f32 %v1557, %v1187
    %v1559 = vmul.f32 %v1558, %v1557
    %v1560 = vmul.f32 0.5, %v1559
    %v1561 = vsub.f32 1.5, %v1560
    %v1562 = vmul.f32 %v1557, %v1561
    %vm1563 = vweird.f32 %v1187
    %vm1564 = vweird.f32 %v1557
    %vm1565 = vmor %vm1563, %vm1564
    %v1566 = vsel %vm1565, %v1557, %v1562
    %v1567 = vrsqrt.pop %v1188
    %v1568 = vmul.f32 %v1567, %v1188
    %v1569 = vmul.f32 %v1568, %v1567
    %v1570 = vmul.f32 0.5, %v1569
    %v1571 = vsub.f32 1.5, %v1570
    %v1572 = vmul.f32 %v1567, %v1571
    %vm1573 = vweird.f32 %v1188
    %vm1574 = vweird.f32 %v1567
    %vm1575 = vmor %vm1573, %vm1574
    %v1576 = vsel %vm1575, %v1567, %v1572
    %v1577 = vrsqrt.pop %v1189
    %v1578 = vmul.f32 %v1577, %v1189
    %v1579 = vmul.f32 %v1578, %v1577
    %v1580 = vmul.f32 0.5, %v1579
    %v1581 = vsub.f32 1.5, %v1580
    %v1582 = vmul.f32 %v1577, %v1581
    %vm1583 = vweird.f32 %v1189
    %vm1584 = vweird.f32 %v1577
    %vm1585 = vmor %vm1583, %vm1584
    %v1586 = vsel %vm1585, %v1577, %v1582
    %v1587 = vrsqrt.pop %v1190
    %v1588 = vmul.f32 %v1587, %v1190
    %v1589 = vmul.f32 %v1588, %v1587
    %v1590 = vmul.f32 0.5, %v1589
    %v1591 = vsub.f32 1.5, %v1590
    %v1592 = vmul.f32 %v1587, %v1591
    %vm1593 = vweird.f32 %v1190
    %vm1594 = vweird.f32 %v1587
    %vm1595 = vmor %vm1593, %vm1594
    %v1596 = vsel %vm1595, %v1587, %v1592
    %v1597 = vrsqrt.pop %v1191
    %v1598 = vmul.f32 %v1597, %v1191
    %v1599 = vmul.f32 %v1598, %v1597
    %v1600 = vmul.f32 0.5, %v1599
    %v1601 = vsub.f32 1.5, %v1600
    %v1602 = vmul.f32 %v1597, %v1601
    %vm1603 = vweird.f32 %v1191
    %vm1604 = vweird.f32 %v1597
    %vm1605 = vmor %vm1603, %vm1604
    %v1606 = vsel %vm1605, %v1597, %v1602
    %v1607 = vrsqrt.pop %v1192
    %v1608 = vmul.f32 %v1607, %v1192
    %v1609 = vmul.f32 %v1608, %v1607
    %v1610 = vmul.f32 0.5, %v1609
    %v1611 = vsub.f32 1.5, %v1610
    %v1612 = vmul.f32 %v1607, %v1611
    %vm1613 = vweird.f32 %v1192
    %vm1614 = vweird.f32 %v1607
    %vm1615 = vmor %vm1613, %vm1614
    %v1616 = vsel %vm1615, %v1607, %v1612
    %v1617 = vrsqrt.pop %v1193
    %v1618 = vmul.f32 %v1617, %v1193
    %v1619 = vmul.f32 %v1618, %v1617
    %v1620 = vmul.f32 0.5, %v1619
    %v1621 = vsub.f32 1.5, %v1620
    %v1622 = vmul.f32 %v1617, %v1621
    %vm1623 = vweird.f32 %v1193
    %vm1624 = vweird.f32 %v1617
    %vm1625 = vmor %vm1623, %vm1624
    %v1626 = vsel %vm1625, %v1617, %v1622
    %v1627 = vrsqrt.pop %v1194
    %v1628 = vmul.f32 %v1627, %v1194
    %v1629 = vmul.f32 %v1628, %v1627
    %v1630 = vmul.f32 0.5, %v1629
    %v1631 = vsub.f32 1.5, %v1630
    %v1632 = vmul.f32 %v1627, %v1631
    %vm1633 = vweird.f32 %v1194
    %vm1634 = vweird.f32 %v1627
    %vm1635 = vmor %vm1633, %vm1634
    %v1636 = vsel %vm1635, %v1627, %v1632
    %v1637 = vrsqrt.pop %v1195
    %v1638 = vmul.f32 %v1637, %v1195
    %v1639 = vmul.f32 %v1638, %v1637
    %v1640 = vmul.f32 0.5, %v1639
    %v1641 = vsub.f32 1.5, %v1640
    %v1642 = vmul.f32 %v1637, %v1641
    %vm1643 = vweird.f32 %v1195
    %vm1644 = vweird.f32 %v1637
    %vm1645 = vmor %vm1643, %vm1644
    %v1646 = vsel %vm1645, %v1637, %v1642
    %v1647 = vrsqrt.pop %v1196
    %v1648 = vmul.f32 %v1647, %v1196
    %v1649 = vmul.f32 %v1648, %v1647
    %v1650 = vmul.f32 0.5, %v1649
    %v1651 = vsub.f32 1.5, %v1650
    %v1652 = vmul.f32 %v1647, %v1651
    %vm1653 = vweird.f32 %v1196
    %vm1654 = vweird.f32 %v1647
    %vm1655 = vmor %vm1653, %vm1654
    %v1656 = vsel %vm1655, %v1647, %v1652
    %v1657 = vrsqrt.pop %v1197
    %v1658 = vmul.f32 %v1657, %v1197
    %v1659 = vmul.f32 %v1658, %v1657
    %v1660 = vmul.f32 0.5, %v1659
    %v1661 = vsub.f32 1.5, %v1660
    %v1662 = vmul.f32 %v1657, %v1661
    %vm1663 = vweird.f32 %v1197
    %vm1664 = vweird.f32 %v1657
    %vm1665 = vmor %vm1663, %vm1664
    %v1666 = vsel %vm1665, %v1657, %v1662
    %v1667 = vrsqrt.pop %v1198
    %v1668 = vmul.f32 %v1667, %v1198
    %v1669 = vmul.f32 %v1668, %v1667
    %v1670 = vmul.f32 0.5, %v1669
    %v1671 = vsub.f32 1.5, %v1670
    %v1672 = vmul.f32 %v1667, %v1671
    %vm1673 = vweird.f32 %v1198
    %vm1674 = vweird.f32 %v1667
    %vm1675 = vmor %vm1673, %vm1674
    %v1676 = vsel %vm1675, %v1667, %v1672
    %v1677 = vrsqrt.pop %v1199
    %v1678 = vmul.f32 %v1677, %v1199
    %v1679 = vmul.f32 %v1678, %v1677
    %v1680 = vmul.f32 0.5, %v1679
    %v1681 = vsub.f32 1.5, %v1680
    %v1682 = vmul.f32 %v1677, %v1681
    %vm1683 = vweird.f32 %v1199
    %vm1684 = vweird.f32 %v1677
    %vm1685 = vmor %vm1683, %vm1684
    %v1686 = vsel %vm1685, %v1677, %v1682
    %v1687 = vrsqrt.pop %v1200
    %v1688 = vmul.f32 %v1687, %v1200
    %v1689 = vmul.f32 %v1688, %v1687
    %v1690 = vmul.f32 0.5, %v1689
    %v1691 = vsub.f32 1.5, %v1690
    %v1692 = vmul.f32 %v1687, %v1691
    %vm1693 = vweird.f32 %v1200
    %vm1694 = vweird.f32 %v1687
    %vm1695 = vmor %vm1693, %vm1694
    %v1696 = vsel %vm1695, %v1687, %v1692
    %v1697 = vrsqrt.pop %v1201
    %v1698 = vmul.f32 %v1697, %v1201
    %v1699 = vmul.f32 %v1698, %v1697
    %v1700 = vmul.f32 0.5, %v1699
    %v1701 = vsub.f32 1.5, %v1700
    %v1702 = vmul.f32 %v1697, %v1701
    %vm1703 = vweird.f32 %v1201
    %vm1704 = vweird.f32 %v1697
    %vm1705 = vmor %vm1703, %vm1704
    %v1706 = vsel %vm1705, %v1697, %v1702
    %v1707 = vrsqrt.pop %v1202
    %v1708 = vmul.f32 %v1707, %v1202
    %v1709 = vmul.f32 %v1708, %v1707
    %v1710 = vmul.f32 0.5, %v1709
    %v1711 = vsub.f32 1.5, %v1710
    %v1712 = vmul.f32 %v1707, %v1711
    %vm1713 = vweird.f32 %v1202
    %vm1714 = vweird.f32 %v1707
    %vm1715 = vmor %vm1713, %vm1714
    %v1716 = vsel %vm1715, %v1707, %v1712
    %v1717 = vrsqrt.pop %v1203
    %v1718 = vmul.f32 %v1717, %v1203
    %v1719 = vmul.f32 %v1718, %v1717
    %v1720 = vmul.f32 0.5, %v1719
    %v1721 = vsub.f32 1.5, %v1720
    %v1722 = vmul.f32 %v1717, %v1721
    %vm1723 = vweird.f32 %v1203
    %vm1724 = vweird.f32 %v1717
    %vm1725 = vmor %vm1723, %vm1724
    %v1726 = vsel %vm1725, %v1717, %v1722
    %v1727 = vrsqrt.pop %v1204
    %v1728 = vmul.f32 %v1727, %v1204
    %v1729 = vmul.f32 %v1728, %v1727
    %v1730 = vmul.f32 0.5, %v1729
    %v1731 = vsub.f32 1.5, %v1730
    %v1732 = vmul.f32 %v1727, %v1731
    %vm1733 = vweird.f32 %v1204
    %vm1734 = vweird.f32 %v1727
    %vm1735 = vmor %vm1733, %vm1734
    %v1736 = vsel %vm1735, %v1727, %v1732
    %v1737 = vrsqrt.pop %v1205
    %v1738 = vmul.f32 %v1737, %v1205
    %v1739 = vmul.f32 %v1738, %v1737
    %v1740 = vmul.f32 0.5, %v1739
    %v1741 = vsub.f32 1.5, %v1740
    %v1742 = vmul.f32 %v1737, %v1741
    %vm1743 = vweird.f32 %v1205
    %vm1744 = vweird.f32 %v1737
    %vm1745 = vmor %vm1743, %vm1744
    %v1746 = vsel %vm1745, %v1737, %v1742
    %v1747 = vrsqrt.pop %v1206
    %v1748 = vmul.f32 %v1747, %v1206
    %v1749 = vmul.f32 %v1748, %v1747
    %v1750 = vmul.f32 0.5, %v1749
    %v1751 = vsub.f32 1.5, %v1750
    %v1752 = vmul.f32 %v1747, %v1751
    %vm1753 = vweird.f32 %v1206
    %vm1754 = vweird.f32 %v1747
    %vm1755 = vmor %vm1753, %vm1754
    %v1756 = vsel %vm1755, %v1747, %v1752
    %v1757 = vrsqrt.pop %v1207
    %v1758 = vmul.f32 %v1757, %v1207
    %v1759 = vmul.f32 %v1758, %v1757
    %v1760 = vmul.f32 0.5, %v1759
    %v1761 = vsub.f32 1.5, %v1760
    %v1762 = vmul.f32 %v1757, %v1761
    %vm1763 = vweird.f32 %v1207
    %vm1764 = vweird.f32 %v1757
    %vm1765 = vmor %vm1763, %vm1764
    %v1766 = vsel %vm1765, %v1757, %v1762
    %v1767 = vrsqrt.pop %v1208
    %v1768 = vmul.f32 %v1767, %v1208
    %v1769 = vmul.f32 %v1768, %v1767
    %v1770 = vmul.f32 0.5, %v1769
    %v1771 = vsub.f32 1.5, %v1770
    %v1772 = vmul.f32 %v1767, %v1771
    %vm1773 = vweird.f32 %v1208
    %vm1774 = vweird.f32 %v1767
    %vm1775 = vmor %vm1773, %vm1774
    %v1776 = vsel %vm1775, %v1767, %v1772
    %v1777 = vrsqrt.pop %v1209
    %v1778 = vmul.f32 %v1777, %v1209
    %v1779 = vmul.f32 %v1778, %v1777
    %v1780 = vmul.f32 0.5, %v1779
    %v1781 = vsub.f32 1.5, %v1780
    %v1782 = vmul.f32 %v1777, %v1781
    %vm1783 = vweird.f32 %v1209
    %vm1784 = vweird.f32 %v1777
    %vm1785 = vmor %vm1783, %vm1784
    %v1786 = vsel %vm1785, %v1777, %v1782
    %v1787 = vrsqrt.pop %v1210
    %v1788 = vmul.f32 %v1787, %v1210
    %v1789 = vmul.f32 %v1788, %v1787
    %v1790 = vmul.f32 0.5, %v1789
    %v1791 = vsub.f32 1.5, %v1790
    %v1792 = vmul.f32 %v1787, %v1791
    %vm1793 = vweird.f32 %v1210
    %vm1794 = vweird.f32 %v1787
    %vm1795 = vmor %vm1793, %vm1794
    %v1796 = vsel %vm1795, %v1787, %v1792
    %v1797 = vrsqrt.pop %v1211
    %v1798 = vmul.f32 %v1797, %v1211
    %v1799 = vmul.f32 %v1798, %v1797
    %v1800 = vmul.f32 0.5, %v1799
    %v1801 = vsub.f32 1.5, %v1800
    %v1802 = vmul.f32 %v1797, %v1801
    %vm1803 = vweird.f32 %v1211
    %vm1804 = vweird.f32 %v1797
    %vm1805 = vmor %vm1803, %vm1804
    %v1806 = vsel %vm1805, %v1797, %v1802
    %v1807 = vrsqrt.pop %v1212
    %v1808 = vmul.f32 %v1807, %v1212
    %v1809 = vmul.f32 %v1808, %v1807
    %v1810 = vmul.f32 0.5, %v1809
    %v1811 = vsub.f32 1.5, %v1810
    %v1812 = vmul.f32 %v1807, %v1811
    %vm1813 = vweird.f32 %v1212
    %vm1814 = vweird.f32 %v1807
    %vm1815 = vmor %vm1813, %vm1814
    %v1816 = vsel %vm1815, %v1807, %v1812
    %v1817 = vrsqrt.pop %v1213
    %v1818 = vmul.f32 %v1817, %v1213
    %v1819 = vmul.f32 %v1818, %v1817
    %v1820 = vmul.f32 0.5, %v1819
    %v1821 = vsub.f32 1.5, %v1820
    %v1822 = vmul.f32 %v1817, %v1821
    %vm1823 = vweird.f32 %v1213
    %vm1824 = vweird.f32 %v1817
    %vm1825 = vmor %vm1823, %vm1824
    %v1826 = vsel %vm1825, %v1817, %v1822
    %v1827 = vrsqrt.pop %v1214
    %v1828 = vmul.f32 %v1827, %v1214
    %v1829 = vmul.f32 %v1828, %v1827
    %v1830 = vmul.f32 0.5, %v1829
    %v1831 = vsub.f32 1.5, %v1830
    %v1832 = vmul.f32 %v1827, %v1831
    %vm1833 = vweird.f32 %v1214
    %vm1834 = vweird.f32 %v1827
    %vm1835 = vmor %vm1833, %vm1834
    %v1836 = vsel %vm1835, %v1827, %v1832
    %v1837 = vrsqrt.pop %v1215
    %v1838 = vmul.f32 %v1837, %v1215
    %v1839 = vmul.f32 %v1838, %v1837
    %v1840 = vmul.f32 0.5, %v1839
    %v1841 = vsub.f32 1.5, %v1840
    %v1842 = vmul.f32 %v1837, %v1841
    %vm1843 = vweird.f32 %v1215
    %vm1844 = vweird.f32 %v1837
    %vm1845 = vmor %vm1843, %vm1844
    %v1846 = vsel %vm1845, %v1837, %v1842
    %v1847 = vrsqrt.pop %v1216
    %v1848 = vmul.f32 %v1847, %v1216
    %v1849 = vmul.f32 %v1848, %v1847
    %v1850 = vmul.f32 0.5, %v1849
    %v1851 = vsub.f32 1.5, %v1850
    %v1852 = vmul.f32 %v1847, %v1851
    %vm1853 = vweird.f32 %v1216
    %vm1854 = vweird.f32 %v1847
    %vm1855 = vmor %vm1853, %vm1854
    %v1856 = vsel %vm1855, %v1847, %v1852
    %v1857 = vmul.f32 %v1025, %v1226
    %v1858 = vmul.f32 %v1026, %v1226
    %v1859 = vmul.f32 %v1027, %v1236
    %v1860 = vmul.f32 %v1028, %v1236
    %v1861 = vmul.f32 %v1029, %v1246
    %v1862 = vmul.f32 %v1030, %v1246
    %v1863 = vmul.f32 %v1031, %v1256
    %v1864 = vmul.f32 %v1032, %v1256
    %v1865 = vmul.f32 %v1033, %v1266
    %v1866 = vmul.f32 %v1034, %v1266
    %v1867 = vmul.f32 %v1035, %v1276
    %v1868 = vmul.f32 %v1036, %v1276
    %v1869 = vmul.f32 %v1037, %v1286
    %v1870 = vmul.f32 %v1038, %v1286
    %v1871 = vmul.f32 %v1039, %v1296
    %v1872 = vmul.f32 %v1040, %v1296
    %v1873 = vmul.f32 %v1041, %v1306
    %v1874 = vmul.f32 %v1042, %v1306
    %v1875 = vmul.f32 %v1043, %v1316
    %v1876 = vmul.f32 %v1044, %v1316
    %v1877 = vmul.f32 %v1045, %v1326
    %v1878 = vmul.f32 %v1046, %v1326
    %v1879 = vmul.f32 %v1047, %v1336
    %v1880 = vmul.f32 %v1048, %v1336
    %v1881 = vmul.f32 %v1049, %v1346
    %v1882 = vmul.f32 %v1050, %v1346
    %v1883 = vmul.f32 %v1051, %v1356
    %v1884 = vmul.f32 %v1052, %v1356
    %v1885 = vmul.f32 %v1053, %v1366
    %v1886 = vmul.f32 %v1054, %v1366
    %v1887 = vmul.f32 %v1055, %v1376
    %v1888 = vmul.f32 %v1056, %v1376
    %v1889 = vmul.f32 %v1057, %v1386
    %v1890 = vmul.f32 %v1058, %v1386
    %v1891 = vmul.f32 %v1059, %v1396
    %v1892 = vmul.f32 %v1060, %v1396
    %v1893 = vmul.f32 %v1061, %v1406
    %v1894 = vmul.f32 %v1062, %v1406
    %v1895 = vmul.f32 %v1063, %v1416
    %v1896 = vmul.f32 %v1064, %v1416
    %v1897 = vmul.f32 %v1065, %v1426
    %v1898 = vmul.f32 %v1066, %v1426
    %v1899 = vmul.f32 %v1067, %v1436
    %v1900 = vmul.f32 %v1068, %v1436
    %v1901 = vmul.f32 %v1069, %v1446
    %v1902 = vmul.f32 %v1070, %v1446
    %v1903 = vmul.f32 %v1071, %v1456
    %v1904 = vmul.f32 %v1072, %v1456
    %v1905 = vmul.f32 %v1073, %v1466
    %v1906 = vmul.f32 %v1074, %v1466
    %v1907 = vmul.f32 %v1075, %v1476
    %v1908 = vmul.f32 %v1076, %v1476
    %v1909 = vmul.f32 %v1077, %v1486
    %v1910 = vmul.f32 %v1078, %v1486
    %v1911 = vmul.f32 %v1079, %v1496
    %v1912 = vmul.f32 %v1080, %v1496
    %v1913 = vmul.f32 %v1081, %v1506
    %v1914 = vmul.f32 %v1082, %v1506
    %v1915 = vmul.f32 %v1083, %v1516
    %v1916 = vmul.f32 %v1084, %v1516
    %v1917 = vmul.f32 %v1085, %v1526
    %v1918 = vmul.f32 %v1086, %v1526
    %v1919 = vmul.f32 %v1087, %v1536
    %v1920 = vmul.f32 %v1088, %v1536
    %v1921 = vmul.f32 %v1089, %v1546
    %v1922 = vmul.f32 %v1090, %v1546
    %v1923 = vmul.f32 %v1091, %v1556
    %v1924 = vmul.f32 %v1092, %v1556
    %v1925 = vmul.f32 %v1093, %v1566
    %v1926 = vmul.f32 %v1094, %v1566
    %v1927 = vmul.f32 %v1095, %v1576
    %v1928 = vmul.f32 %v1096, %v1576
    %v1929 = vmul.f32 %v1097, %v1586
    %v1930 = vmul.f32 %v1098, %v1586
    %v1931 = vmul.f32 %v1099, %v1596
    %v1932 = vmul.f32 %v1100, %v1596
    %v1933 = vmul.f32 %v1101, %v1606
    %v1934 = vmul.f32 %v1102, %v1606
    %v1935 = vmul.f32 %v1103, %v1616
    %v1936 = vmul.f32 %v1104, %v1616
    %v1937 = vmul.f32 %v1105, %v1626
    %v1938 = vmul.f32 %v1106, %v1626
    %v1939 = vmul.f32 %v1107, %v1636
    %v1940 = vmul.f32 %v1108, %v1636
    %v1941 = vmul.f32 %v1109, %v1646
    %v1942 = vmul.f32 %v1110, %v1646
    %v1943 = vmul.f32 %v1111, %v1656
    %v1944 = vmul.f32 %v1112, %v1656
    %v1945 = vmul.f32 %v1113, %v1666
    %v1946 = vmul.f32 %v1114, %v1666
    %v1947 = vmul.f32 %v1115, %v1676
    %v1948 = vmul.f32 %v1116, %v1676
    %v1949 = vmul.f32 %v1117, %v1686
    %v1950 = vmul.f32 %v1118, %v1686
    %v1951 = vmul.f32 %v1119, %v1696
    %v1952 = vmul.f32 %v1120, %v1696
    %v1953 = vmul.f32 %v1121, %v1706
    %v1954 = vmul.f32 %v1122, %v1706
    %v1955 = vmul.f32 %v1123, %v1716
    %v1956 = vmul.f32 %v1124, %v1716
    %v1957 = vmul.f32 %v1125, %v1726
    %v1958 = vmul.f32 %v1126, %v1726
    %v1959 = vmul.f32 %v1127, %v1736
    %v1960 = vmul.f32 %v1128, %v1736
    %v1961 = vmul.f32 %v1129, %v1746
    %v1962 = vmul.f32 %v1130, %v1746
    %v1963 = vmul.f32 %v1131, %v1756
    %v1964 = vmul.f32 %v1132, %v1756
    %v1965 = vmul.f32 %v1133, %v1766
    %v1966 = vmul.f32 %v1134, %v1766
    %v1967 = vmul.f32 %v1135, %v1776
    %v1968 = vmul.f32 %v1136, %v1776
    %v1969 = vmul.f32 %v1137, %v1786
    %v1970 = vmul.f32 %v1138, %v1786
    %v1971 = vmul.f32 %v1139, %v1796
    %v1972 = vmul.f32 %v1140, %v1796
    %v1973 = vmul.f32 %v1141, %v1806
    %v1974 = vmul.f32 %v1142, %v1806
    %v1975 = vmul.f32 %v1143, %v1816
    %v1976 = vmul.f32 %v1144, %v1816
    %v1977 = vmul.f32 %v1145, %v1826
    %v1978 = vmul.f32 %v1146, %v1826
    %v1979 = vmul.f32 %v1147, %v1836
    %v1980 = vmul.f32 %v1148, %v1836
    %v1981 = vmul.f32 %v1149, %v1846
    %v1982 = vmul.f32 %v1150, %v1846
    %v1983 = vmul.f32 %v1151, %v1856
    %v1984 = vmul.f32 %v1152, %v1856
    %v1985 = vld [vmem:[#allocation7] sm:$0xff]
    %v1986 = vld [vmem:[#allocation7 + $0x8] sm:$0xff]
    %v1987 = vld [vmem:[#allocation7 + $0x10] sm:$0xff]
    %v1988 = vld [vmem:[#allocation7 + $0x18] sm:$0xff]
    %v1989 = vld [vmem:[#allocation7 + $0x20] sm:$0xff]
    %v1990 = vld [vmem:[#allocation7 + $0x28] sm:$0xff]
    %v1991 = vld [vmem:[#allocation7 + $0x30] sm:$0xff]
    %v1992 = vld [vmem:[#allocation7 + $0x38] sm:$0xff]
    %v1993 = vld [vmem:[#allocation7 + $0x40] sm:$0xff]
    %v1994 = vld [vmem:[#allocation7 + $0x48] sm:$0xff]
    %v1995 = vld [vmem:[#allocation7 + $0x50] sm:$0xff]
    %v1996 = vld [vmem:[#allocation7 + $0x58] sm:$0xff]
    %v1997 = vld [vmem:[#allocation7 + $0x60] sm:$0xff]
    %v1998 = vld [vmem:[#allocation7 + $0x68] sm:$0xff]
    %v1999 = vld [vmem:[#allocation7 + $0x70] sm:$0xff]
    %v2000 = vld [vmem:[#allocation7 + $0x78] sm:$0xff]
    %v2001 = vld [vmem:[#allocation7 + $0x80] sm:$0xff]
    %v2002 = vld [vmem:[#allocation7 + $0x88] sm:$0xff]
    %v2003 = vld [vmem:[#allocation7 + $0x90] sm:$0xff]
    %v2004 = vld [vmem:[#allocation7 + $0x98] sm:$0xff]
    %v2005 = vld [vmem:[#allocation7 + $0xa0] sm:$0xff]
    %v2006 = vld [vmem:[#allocation7 + $0xa8] sm:$0xff]
    %v2007 = vld [vmem:[#allocation7 + $0xb0] sm:$0xff]
    %v2008 = vld [vmem:[#allocation7 + $0xb8] sm:$0xff]
    %v2009 = vld [vmem:[#allocation7 + $0xc0] sm:$0xff]
    %v2010 = vld [vmem:[#allocation7 + $0xc8] sm:$0xff]
    %v2011 = vld [vmem:[#allocation7 + $0xd0] sm:$0xff]
    %v2012 = vld [vmem:[#allocation7 + $0xd8] sm:$0xff]
    %v2013 = vld [vmem:[#allocation7 + $0xe0] sm:$0xff]
    %v2014 = vld [vmem:[#allocation7 + $0xe8] sm:$0xff]
    %v2015 = vld [vmem:[#allocation7 + $0xf0] sm:$0xff]
    %v2016 = vld [vmem:[#allocation7 + $0xf8] sm:$0xff]
    %v2017 = vld [vmem:[#allocation7 + $0x100] sm:$0xff]
    %v2018 = vld [vmem:[#allocation7 + $0x108] sm:$0xff]
    %v2019 = vld [vmem:[#allocation7 + $0x110] sm:$0xff]
    %v2020 = vld [vmem:[#allocation7 + $0x118] sm:$0xff]
    %v2021 = vld [vmem:[#allocation7 + $0x120] sm:$0xff]
    %v2022 = vld [vmem:[#allocation7 + $0x128] sm:$0xff]
    %v2023 = vld [vmem:[#allocation7 + $0x130] sm:$0xff]
    %v2024 = vld [vmem:[#allocation7 + $0x138] sm:$0xff]
    %v2025 = vld [vmem:[#allocation7 + $0x140] sm:$0xff]
    %v2026 = vld [vmem:[#allocation7 + $0x148] sm:$0xff]
    %v2027 = vld [vmem:[#allocation7 + $0x150] sm:$0xff]
    %v2028 = vld [vmem:[#allocation7 + $0x158] sm:$0xff]
    %v2029 = vld [vmem:[#allocation7 + $0x160] sm:$0xff]
    %v2030 = vld [vmem:[#allocation7 + $0x168] sm:$0xff]
    %v2031 = vld [vmem:[#allocation7 + $0x170] sm:$0xff]
    %v2032 = vld [vmem:[#allocation7 + $0x178] sm:$0xff]
    %v2033 = vld [vmem:[#allocation7 + $0x180] sm:$0xff]
    %v2034 = vld [vmem:[#allocation7 + $0x188] sm:$0xff]
    %v2035 = vld [vmem:[#allocation7 + $0x190] sm:$0xff]
    %v2036 = vld [vmem:[#allocation7 + $0x198] sm:$0xff]
    %v2037 = vld [vmem:[#allocation7 + $0x1a0] sm:$0xff]
    %v2038 = vld [vmem:[#allocation7 + $0x1a8] sm:$0xff]
    %v2039 = vld [vmem:[#allocation7 + $0x1b0] sm:$0xff]
    %v2040 = vld [vmem:[#allocation7 + $0x1b8] sm:$0xff]
    %v2041 = vld [vmem:[#allocation7 + $0x1c0] sm:$0xff]
    %v2042 = vld [vmem:[#allocation7 + $0x1c8] sm:$0xff]
    %v2043 = vld [vmem:[#allocation7 + $0x1d0] sm:$0xff]
    %v2044 = vld [vmem:[#allocation7 + $0x1d8] sm:$0xff]
    %v2045 = vld [vmem:[#allocation7 + $0x1e0] sm:$0xff]
    %v2046 = vld [vmem:[#allocation7 + $0x1e8] sm:$0xff]
    %v2047 = vld [vmem:[#allocation7 + $0x1f0] sm:$0xff]
    %v2048 = vld [vmem:[#allocation7 + $0x1f8] sm:$0xff]
    %v2050 = vperm.slane %v191, 0
    %v2051 = vperm.slane %v191, 1
    %2054 = vmatpush.msra.mxu0 %v2015
    %2055 = vmatpush.msra.mxu0 %v2013
    %2056 = vmatpush.msra.mxu0 %v2011
    %2057 = vmatpush.msra.mxu0 %v2009
    %2058 = vmatpush.msra.mxu0 %v2007
    %2059 = vmatpush.msra.mxu0 %v2005
    %2060 = vmatpush.msra.mxu0 %v2003
    %2061 = vmatpush.msra.mxu0 %v2001
    %2062 = vmatpush.msra.mxu0 %v1999
    %2063 = vmatpush.msra.mxu0 %v1997
    %2064 = vmatpush.msra.mxu0 %v1995
    %2065 = vmatpush.msra.mxu0 %v1993
    %2066 = vmatpush.msra.mxu0 %v1991
    %2067 = vmatpush.msra.mxu0 %v1989
    %2068 = vmatpush.msra.mxu0 %v1987
    %2069 = vmatpush.msra.mxu0 %v1985
    %2070 = vmatmul.f32.gmra.mxu0 %v1857
    %v2071 = vpop.f32.mrf.mxu0
    %v2072 = vadd.f32 %v2050, %v2071
    %2073 = vmatmul.f32.gmra.mxu0 %v1859
    %v2074 = vpop.f32.mrf.mxu0
    %v2075 = vadd.f32 %v2050, %v2074
    %2076 = vmatmul.f32.gmra.mxu0 %v1861
    %v2077 = vpop.f32.mrf.mxu0
    %v2078 = vadd.f32 %v2050, %v2077
    %2079 = vmatmul.f32.gmra.mxu0 %v1863
    %v2080 = vpop.f32.mrf.mxu0
    %v2081 = vadd.f32 %v2050, %v2080
    %2082 = vmatmul.f32.gmra.mxu0 %v1865
    %v2083 = vpop.f32.mrf.mxu0
    %v2084 = vadd.f32 %v2050, %v2083
    %2085 = vmatmul.f32.gmra.mxu0 %v1867
    %v2086 = vpop.f32.mrf.mxu0
    %v2087 = vadd.f32 %v2050, %v2086
    %2088 = vmatmul.f32.gmra.mxu0 %v1869
    %v2089 = vpop.f32.mrf.mxu0
    %v2090 = vadd.f32 %v2050, %v2089
    %2091 = vmatmul.f32.gmra.mxu0 %v1871
    %v2092 = vpop.f32.mrf.mxu0
    %v2093 = vadd.f32 %v2050, %v2092
    %2094 = vmatmul.f32.gmra.mxu0 %v1873
    %v2095 = vpop.f32.mrf.mxu0
    %v2096 = vadd.f32 %v2050, %v2095
    %2097 = vmatmul.f32.gmra.mxu0 %v1875
    %v2098 = vpop.f32.mrf.mxu0
    %v2099 = vadd.f32 %v2050, %v2098
    %2100 = vmatmul.f32.gmra.mxu0 %v1877
    %v2101 = vpop.f32.mrf.mxu0
    %v2102 = vadd.f32 %v2050, %v2101
    %2103 = vmatmul.f32.gmra.mxu0 %v1879
    %v2104 = vpop.f32.mrf.mxu0
    %v2105 = vadd.f32 %v2050, %v2104
    %2106 = vmatmul.f32.gmra.mxu0 %v1881
    %v2107 = vpop.f32.mrf.mxu0
    %v2108 = vadd.f32 %v2050, %v2107
    %2109 = vmatmul.f32.gmra.mxu0 %v1883
    %v2110 = vpop.f32.mrf.mxu0
    %v2111 = vadd.f32 %v2050, %v2110
    %2112 = vmatmul.f32.gmra.mxu0 %v1885
    %v2113 = vpop.f32.mrf.mxu0
    %v2114 = vadd.f32 %v2050, %v2113
    %2115 = vmatmul.f32.gmra.mxu0 %v1887
    %v2116 = vpop.f32.mrf.mxu0
    %v2117 = vadd.f32 %v2050, %v2116
    %2118 = vmatmul.f32.gmra.mxu0 %v1889
    %v2119 = vpop.f32.mrf.mxu0
    %v2120 = vadd.f32 %v2050, %v2119
    %2121 = vmatmul.f32.gmra.mxu0 %v1891
    %v2122 = vpop.f32.mrf.mxu0
    %v2123 = vadd.f32 %v2050, %v2122
    %2124 = vmatmul.f32.gmra.mxu0 %v1893
    %v2125 = vpop.f32.mrf.mxu0
    %v2126 = vadd.f32 %v2050, %v2125
    %2127 = vmatmul.f32.gmra.mxu0 %v1895
    %v2128 = vpop.f32.mrf.mxu0
    %v2129 = vadd.f32 %v2050, %v2128
    %2130 = vmatmul.f32.gmra.mxu0 %v1897
    %v2131 = vpop.f32.mrf.mxu0
    %v2132 = vadd.f32 %v2050, %v2131
    %2133 = vmatmul.f32.gmra.mxu0 %v1899
    %v2134 = vpop.f32.mrf.mxu0
    %v2135 = vadd.f32 %v2050, %v2134
    %2136 = vmatmul.f32.gmra.mxu0 %v1901
    %v2137 = vpop.f32.mrf.mxu0
    %v2138 = vadd.f32 %v2050, %v2137
    %2139 = vmatmul.f32.gmra.mxu0 %v1903
    %v2140 = vpop.f32.mrf.mxu0
    %v2141 = vadd.f32 %v2050, %v2140
    %2142 = vmatmul.f32.gmra.mxu0 %v1905
    %v2143 = vpop.f32.mrf.mxu0
    %v2144 = vadd.f32 %v2050, %v2143
    %2145 = vmatmul.f32.gmra.mxu0 %v1907
    %v2146 = vpop.f32.mrf.mxu0
    %v2147 = vadd.f32 %v2050, %v2146
    %2148 = vmatmul.f32.gmra.mxu0 %v1909
    %v2149 = vpop.f32.mrf.mxu0
    %v2150 = vadd.f32 %v2050, %v2149
    %2151 = vmatmul.f32.gmra.mxu0 %v1911
    %v2152 = vpop.f32.mrf.mxu0
    %v2153 = vadd.f32 %v2050, %v2152
    %2154 = vmatmul.f32.gmra.mxu0 %v1913
    %v2155 = vpop.f32.mrf.mxu0
    %v2156 = vadd.f32 %v2050, %v2155
    %2157 = vmatmul.f32.gmra.mxu0 %v1915
    %v2158 = vpop.f32.mrf.mxu0
    %v2159 = vadd.f32 %v2050, %v2158
    %2160 = vmatmul.f32.gmra.mxu0 %v1917
    %v2161 = vpop.f32.mrf.mxu0
    %v2162 = vadd.f32 %v2050, %v2161
    %2163 = vmatmul.f32.gmra.mxu0 %v1919
    %v2164 = vpop.f32.mrf.mxu0
    %v2165 = vadd.f32 %v2050, %v2164
    %2166 = vmatmul.f32.gmra.mxu0 %v1921
    %v2167 = vpop.f32.mrf.mxu0
    %v2168 = vadd.f32 %v2050, %v2167
    %2169 = vmatmul.f32.gmra.mxu0 %v1923
    %v2170 = vpop.f32.mrf.mxu0
    %v2171 = vadd.f32 %v2050, %v2170
    %2172 = vmatmul.f32.gmra.mxu0 %v1925
    %v2173 = vpop.f32.mrf.mxu0
    %v2174 = vadd.f32 %v2050, %v2173
    %2175 = vmatmul.f32.gmra.mxu0 %v1927
    %v2176 = vpop.f32.mrf.mxu0
    %v2177 = vadd.f32 %v2050, %v2176
    %2178 = vmatmul.f32.gmra.mxu0 %v1929
    %v2179 = vpop.f32.mrf.mxu0
    %v2180 = vadd.f32 %v2050, %v2179
    %2181 = vmatmul.f32.gmra.mxu0 %v1931
    %v2182 = vpop.f32.mrf.mxu0
    %v2183 = vadd.f32 %v2050, %v2182
    %2184 = vmatmul.f32.gmra.mxu0 %v1933
    %v2185 = vpop.f32.mrf.mxu0
    %v2186 = vadd.f32 %v2050, %v2185
    %2187 = vmatmul.f32.gmra.mxu0 %v1935
    %v2188 = vpop.f32.mrf.mxu0
    %v2189 = vadd.f32 %v2050, %v2188
    %2190 = vmatmul.f32.gmra.mxu0 %v1937
    %v2191 = vpop.f32.mrf.mxu0
    %v2192 = vadd.f32 %v2050, %v2191
    %2193 = vmatmul.f32.gmra.mxu0 %v1939
    %v2194 = vpop.f32.mrf.mxu0
    %v2195 = vadd.f32 %v2050, %v2194
    %2196 = vmatmul.f32.gmra.mxu0 %v1941
    %v2197 = vpop.f32.mrf.mxu0
    %v2198 = vadd.f32 %v2050, %v2197
    %2199 = vmatmul.f32.gmra.mxu0 %v1943
    %v2200 = vpop.f32.mrf.mxu0
    %v2201 = vadd.f32 %v2050, %v2200
    %2202 = vmatmul.f32.gmra.mxu0 %v1945
    %v2203 = vpop.f32.mrf.mxu0
    %v2204 = vadd.f32 %v2050, %v2203
    %2205 = vmatmul.f32.gmra.mxu0 %v1947
    %v2206 = vpop.f32.mrf.mxu0
    %v2207 = vadd.f32 %v2050, %v2206
    %2208 = vmatmul.f32.gmra.mxu0 %v1949
    %v2209 = vpop.f32.mrf.mxu0
    %v2210 = vadd.f32 %v2050, %v2209
    %2211 = vmatmul.f32.gmra.mxu0 %v1951
    %v2212 = vpop.f32.mrf.mxu0
    %v2213 = vadd.f32 %v2050, %v2212
    %2214 = vmatmul.f32.gmra.mxu0 %v1953
    %v2215 = vpop.f32.mrf.mxu0
    %v2216 = vadd.f32 %v2050, %v2215
    %2217 = vmatmul.f32.gmra.mxu0 %v1955
    %v2218 = vpop.f32.mrf.mxu0
    %v2219 = vadd.f32 %v2050, %v2218
    %2220 = vmatmul.f32.gmra.mxu0 %v1957
    %v2221 = vpop.f32.mrf.mxu0
    %v2222 = vadd.f32 %v2050, %v2221
    %2223 = vmatmul.f32.gmra.mxu0 %v1959
    %v2224 = vpop.f32.mrf.mxu0
    %v2225 = vadd.f32 %v2050, %v2224
    %2226 = vmatmul.f32.gmra.mxu0 %v1961
    %v2227 = vpop.f32.mrf.mxu0
    %v2228 = vadd.f32 %v2050, %v2227
    %2229 = vmatmul.f32.gmra.mxu0 %v1963
    %v2230 = vpop.f32.mrf.mxu0
    %v2231 = vadd.f32 %v2050, %v2230
    %2232 = vmatmul.f32.gmra.mxu0 %v1965
    %v2233 = vpop.f32.mrf.mxu0
    %v2234 = vadd.f32 %v2050, %v2233
    %2235 = vmatmul.f32.gmra.mxu0 %v1967
    %v2236 = vpop.f32.mrf.mxu0
    %v2237 = vadd.f32 %v2050, %v2236
    %2238 = vmatmul.f32.gmra.mxu0 %v1969
    %v2239 = vpop.f32.mrf.mxu0
    %v2240 = vadd.f32 %v2050, %v2239
    %2241 = vmatmul.f32.gmra.mxu0 %v1971
    %v2242 = vpop.f32.mrf.mxu0
    %v2243 = vadd.f32 %v2050, %v2242
    %2244 = vmatmul.f32.gmra.mxu0 %v1973
    %v2245 = vpop.f32.mrf.mxu0
    %v2246 = vadd.f32 %v2050, %v2245
    %2247 = vmatmul.f32.gmra.mxu0 %v1975
    %v2248 = vpop.f32.mrf.mxu0
    %v2249 = vadd.f32 %v2050, %v2248
    %2250 = vmatmul.f32.gmra.mxu0 %v1977
    %v2251 = vpop.f32.mrf.mxu0
    %v2252 = vadd.f32 %v2050, %v2251
    %2253 = vmatmul.f32.gmra.mxu0 %v1979
    %v2254 = vpop.f32.mrf.mxu0
    %v2255 = vadd.f32 %v2050, %v2254
    %2256 = vmatmul.f32.gmra.mxu0 %v1981
    %v2257 = vpop.f32.mrf.mxu0
    %v2258 = vadd.f32 %v2050, %v2257
    %2259 = vmatmul.f32.gmra.mxu0 %v1983
    %v2260 = vpop.f32.mrf.mxu0
    %v2261 = vadd.f32 %v2050, %v2260
    %2262 = vdwg.mxu0
    %2263 = vmatpush.msra.mxu0 %v2047
    %2264 = vmatpush.msra.mxu0 %v2045
    %2265 = vmatpush.msra.mxu0 %v2043
    %2266 = vmatpush.msra.mxu0 %v2041
    %2267 = vmatpush.msra.mxu0 %v2039
    %2268 = vmatpush.msra.mxu0 %v2037
    %2269 = vmatpush.msra.mxu0 %v2035
    %2270 = vmatpush.msra.mxu0 %v2033
    %2271 = vmatpush.msra.mxu0 %v2031
    %2272 = vmatpush.msra.mxu0 %v2029
    %2273 = vmatpush.msra.mxu0 %v2027
    %2274 = vmatpush.msra.mxu0 %v2025
    %2275 = vmatpush.msra.mxu0 %v2023
    %2276 = vmatpush.msra.mxu0 %v2021
    %2277 = vmatpush.msra.mxu0 %v2019
    %2278 = vmatpush.msra.mxu0 %v2017
    %2279 = vmatmul.f32.gmra.mxu0 %v1858
    %v2280 = vpop.f32.mrf.mxu0
    %v2281 = vadd.f32 %v2072, %v2280
    %2282 = vmatmul.f32.gmra.mxu0 %v1860
    %v2283 = vpop.f32.mrf.mxu0
    %v2284 = vadd.f32 %v2075, %v2283
    %2285 = vmatmul.f32.gmra.mxu0 %v1862
    %v2286 = vpop.f32.mrf.mxu0
    %v2287 = vadd.f32 %v2078, %v2286
    %2288 = vmatmul.f32.gmra.mxu0 %v1864
    %v2289 = vpop.f32.mrf.mxu0
    %v2290 = vadd.f32 %v2081, %v2289
    %2291 = vmatmul.f32.gmra.mxu0 %v1866
    %v2292 = vpop.f32.mrf.mxu0
    %v2293 = vadd.f32 %v2084, %v2292
    %2294 = vmatmul.f32.gmra.mxu0 %v1868
    %v2295 = vpop.f32.mrf.mxu0
    %v2296 = vadd.f32 %v2087, %v2295
    %2297 = vmatmul.f32.gmra.mxu0 %v1870
    %v2298 = vpop.f32.mrf.mxu0
    %v2299 = vadd.f32 %v2090, %v2298
    %2300 = vmatmul.f32.gmra.mxu0 %v1872
    %v2301 = vpop.f32.mrf.mxu0
    %v2302 = vadd.f32 %v2093, %v2301
    %2303 = vmatmul.f32.gmra.mxu0 %v1874
    %v2304 = vpop.f32.mrf.mxu0
    %v2305 = vadd.f32 %v2096, %v2304
    %2306 = vmatmul.f32.gmra.mxu0 %v1876
    %v2307 = vpop.f32.mrf.mxu0
    %v2308 = vadd.f32 %v2099, %v2307
    %2309 = vmatmul.f32.gmra.mxu0 %v1878
    %v2310 = vpop.f32.mrf.mxu0
    %v2311 = vadd.f32 %v2102, %v2310
    %2312 = vmatmul.f32.gmra.mxu0 %v1880
    %v2313 = vpop.f32.mrf.mxu0
    %v2314 = vadd.f32 %v2105, %v2313
    %2315 = vmatmul.f32.gmra.mxu0 %v1882
    %v2316 = vpop.f32.mrf.mxu0
    %v2317 = vadd.f32 %v2108, %v2316
    %2318 = vmatmul.f32.gmra.mxu0 %v1884
    %v2319 = vpop.f32.mrf.mxu0
    %v2320 = vadd.f32 %v2111, %v2319
    %2321 = vmatmul.f32.gmra.mxu0 %v1886
    %v2322 = vpop.f32.mrf.mxu0
    %v2323 = vadd.f32 %v2114, %v2322
    %2324 = vmatmul.f32.gmra.mxu0 %v1888
    %v2325 = vpop.f32.mrf.mxu0
    %v2326 = vadd.f32 %v2117, %v2325
    %2327 = vmatmul.f32.gmra.mxu0 %v1890
    %v2328 = vpop.f32.mrf.mxu0
    %v2329 = vadd.f32 %v2120, %v2328
    %2330 = vmatmul.f32.gmra.mxu0 %v1892
    %v2331 = vpop.f32.mrf.mxu0
    %v2332 = vadd.f32 %v2123, %v2331
    %2333 = vmatmul.f32.gmra.mxu0 %v1894
    %v2334 = vpop.f32.mrf.mxu0
    %v2335 = vadd.f32 %v2126, %v2334
    %2336 = vmatmul.f32.gmra.mxu0 %v1896
    %v2337 = vpop.f32.mrf.mxu0
    %v2338 = vadd.f32 %v2129, %v2337
    %2339 = vmatmul.f32.gmra.mxu0 %v1898
    %v2340 = vpop.f32.mrf.mxu0
    %v2341 = vadd.f32 %v2132, %v2340
    %2342 = vmatmul.f32.gmra.mxu0 %v1900
    %v2343 = vpop.f32.mrf.mxu0
    %v2344 = vadd.f32 %v2135, %v2343
    %2345 = vmatmul.f32.gmra.mxu0 %v1902
    %v2346 = vpop.f32.mrf.mxu0
    %v2347 = vadd.f32 %v2138, %v2346
    %2348 = vmatmul.f32.gmra.mxu0 %v1904
    %v2349 = vpop.f32.mrf.mxu0
    %v2350 = vadd.f32 %v2141, %v2349
    %2351 = vmatmul.f32.gmra.mxu0 %v1906
    %v2352 = vpop.f32.mrf.mxu0
    %v2353 = vadd.f32 %v2144, %v2352
    %2354 = vmatmul.f32.gmra.mxu0 %v1908
    %v2355 = vpop.f32.mrf.mxu0
    %v2356 = vadd.f32 %v2147, %v2355
    %2357 = vmatmul.f32.gmra.mxu0 %v1910
    %v2358 = vpop.f32.mrf.mxu0
    %v2359 = vadd.f32 %v2150, %v2358
    %2360 = vmatmul.f32.gmra.mxu0 %v1912
    %v2361 = vpop.f32.mrf.mxu0
    %v2362 = vadd.f32 %v2153, %v2361
    %2363 = vmatmul.f32.gmra.mxu0 %v1914
    %v2364 = vpop.f32.mrf.mxu0
    %v2365 = vadd.f32 %v2156, %v2364
    %2366 = vmatmul.f32.gmra.mxu0 %v1916
    %v2367 = vpop.f32.mrf.mxu0
    %v2368 = vadd.f32 %v2159, %v2367
    %2369 = vmatmul.f32.gmra.mxu0 %v1918
    %v2370 = vpop.f32.mrf.mxu0
    %v2371 = vadd.f32 %v2162, %v2370
    %2372 = vmatmul.f32.gmra.mxu0 %v1920
    %v2373 = vpop.f32.mrf.mxu0
    %v2374 = vadd.f32 %v2165, %v2373
    %2375 = vmatmul.f32.gmra.mxu0 %v1922
    %v2376 = vpop.f32.mrf.mxu0
    %v2377 = vadd.f32 %v2168, %v2376
    %2378 = vmatmul.f32.gmra.mxu0 %v1924
    %v2379 = vpop.f32.mrf.mxu0
    %v2380 = vadd.f32 %v2171, %v2379
    %2381 = vmatmul.f32.gmra.mxu0 %v1926
    %v2382 = vpop.f32.mrf.mxu0
    %v2383 = vadd.f32 %v2174, %v2382
    %2384 = vmatmul.f32.gmra.mxu0 %v1928
    %v2385 = vpop.f32.mrf.mxu0
    %v2386 = vadd.f32 %v2177, %v2385
    %2387 = vmatmul.f32.gmra.mxu0 %v1930
    %v2388 = vpop.f32.mrf.mxu0
    %v2389 = vadd.f32 %v2180, %v2388
    %2390 = vmatmul.f32.gmra.mxu0 %v1932
    %v2391 = vpop.f32.mrf.mxu0
    %v2392 = vadd.f32 %v2183, %v2391
    %2393 = vmatmul.f32.gmra.mxu0 %v1934
    %v2394 = vpop.f32.mrf.mxu0
    %v2395 = vadd.f32 %v2186, %v2394
    %2396 = vmatmul.f32.gmra.mxu0 %v1936
    %v2397 = vpop.f32.mrf.mxu0
    %v2398 = vadd.f32 %v2189, %v2397
    %2399 = vmatmul.f32.gmra.mxu0 %v1938
    %v2400 = vpop.f32.mrf.mxu0
    %v2401 = vadd.f32 %v2192, %v2400
    %2402 = vmatmul.f32.gmra.mxu0 %v1940
    %v2403 = vpop.f32.mrf.mxu0
    %v2404 = vadd.f32 %v2195, %v2403
    %2405 = vmatmul.f32.gmra.mxu0 %v1942
    %v2406 = vpop.f32.mrf.mxu0
    %v2407 = vadd.f32 %v2198, %v2406
    %2408 = vmatmul.f32.gmra.mxu0 %v1944
    %v2409 = vpop.f32.mrf.mxu0
    %v2410 = vadd.f32 %v2201, %v2409
    %2411 = vmatmul.f32.gmra.mxu0 %v1946
    %v2412 = vpop.f32.mrf.mxu0
    %v2413 = vadd.f32 %v2204, %v2412
    %2414 = vmatmul.f32.gmra.mxu0 %v1948
    %v2415 = vpop.f32.mrf.mxu0
    %v2416 = vadd.f32 %v2207, %v2415
    %2417 = vmatmul.f32.gmra.mxu0 %v1950
    %v2418 = vpop.f32.mrf.mxu0
    %v2419 = vadd.f32 %v2210, %v2418
    %2420 = vmatmul.f32.gmra.mxu0 %v1952
    %v2421 = vpop.f32.mrf.mxu0
    %v2422 = vadd.f32 %v2213, %v2421
    %2423 = vmatmul.f32.gmra.mxu0 %v1954
    %v2424 = vpop.f32.mrf.mxu0
    %v2425 = vadd.f32 %v2216, %v2424
    %2426 = vmatmul.f32.gmra.mxu0 %v1956
    %v2427 = vpop.f32.mrf.mxu0
    %v2428 = vadd.f32 %v2219, %v2427
    %2429 = vmatmul.f32.gmra.mxu0 %v1958
    %v2430 = vpop.f32.mrf.mxu0
    %v2431 = vadd.f32 %v2222, %v2430
    %2432 = vmatmul.f32.gmra.mxu0 %v1960
    %v2433 = vpop.f32.mrf.mxu0
    %v2434 = vadd.f32 %v2225, %v2433
    %2435 = vmatmul.f32.gmra.mxu0 %v1962
    %v2436 = vpop.f32.mrf.mxu0
    %v2437 = vadd.f32 %v2228, %v2436
    %2438 = vmatmul.f32.gmra.mxu0 %v1964
    %v2439 = vpop.f32.mrf.mxu0
    %v2440 = vadd.f32 %v2231, %v2439
    %2441 = vmatmul.f32.gmra.mxu0 %v1966
    %v2442 = vpop.f32.mrf.mxu0
    %v2443 = vadd.f32 %v2234, %v2442
    %2444 = vmatmul.f32.gmra.mxu0 %v1968
    %v2445 = vpop.f32.mrf.mxu0
    %v2446 = vadd.f32 %v2237, %v2445
    %2447 = vmatmul.f32.gmra.mxu0 %v1970
    %v2448 = vpop.f32.mrf.mxu0
    %v2449 = vadd.f32 %v2240, %v2448
    %2450 = vmatmul.f32.gmra.mxu0 %v1972
    %v2451 = vpop.f32.mrf.mxu0
    %v2452 = vadd.f32 %v2243, %v2451
    %2453 = vmatmul.f32.gmra.mxu0 %v1974
    %v2454 = vpop.f32.mrf.mxu0
    %v2455 = vadd.f32 %v2246, %v2454
    %2456 = vmatmul.f32.gmra.mxu0 %v1976
    %v2457 = vpop.f32.mrf.mxu0
    %v2458 = vadd.f32 %v2249, %v2457
    %2459 = vmatmul.f32.gmra.mxu0 %v1978
    %v2460 = vpop.f32.mrf.mxu0
    %v2461 = vadd.f32 %v2252, %v2460
    %2462 = vmatmul.f32.gmra.mxu0 %v1980
    %v2463 = vpop.f32.mrf.mxu0
    %v2464 = vadd.f32 %v2255, %v2463
    %2465 = vmatmul.f32.gmra.mxu0 %v1982
    %v2466 = vpop.f32.mrf.mxu0
    %v2467 = vadd.f32 %v2258, %v2466
    %2468 = vmatmul.f32.gmra.mxu0 %v1984
    %v2469 = vpop.f32.mrf.mxu0
    %v2470 = vadd.f32 %v2261, %v2469
    %2471 = vdwg.mxu0
    %2472 = vmatpush.msra.mxu0 %v2016
    %2473 = vmatpush.msra.mxu0 %v2014
    %2474 = vmatpush.msra.mxu0 %v2012
    %2475 = vmatpush.msra.mxu0 %v2010
    %2476 = vmatpush.msra.mxu0 %v2008
    %2477 = vmatpush.msra.mxu0 %v2006
    %2478 = vmatpush.msra.mxu0 %v2004
    %2479 = vmatpush.msra.mxu0 %v2002
    %2480 = vmatpush.msra.mxu0 %v2000
    %2481 = vmatpush.msra.mxu0 %v1998
    %2482 = vmatpush.msra.mxu0 %v1996
    %2483 = vmatpush.msra.mxu0 %v1994
    %2484 = vmatpush.msra.mxu0 %v1992
    %2485 = vmatpush.msra.mxu0 %v1990
    %2486 = vmatpush.msra.mxu0 %v1988
    %2487 = vmatpush.msra.mxu0 %v1986
    %2488 = vmatmul.f32.gmra.mxu0 %v1857
    %v2489 = vpop.f32.mrf.mxu0
    %v2490 = vadd.f32 %v2051, %v2489
    %2491 = vmatmul.f32.gmra.mxu0 %v1859
    %v2492 = vpop.f32.mrf.mxu0
    %v2493 = vadd.f32 %v2051, %v2492
    %2494 = vmatmul.f32.gmra.mxu0 %v1861
    %v2495 = vpop.f32.mrf.mxu0
    %v2496 = vadd.f32 %v2051, %v2495
    %2497 = vmatmul.f32.gmra.mxu0 %v1863
    %v2498 = vpop.f32.mrf.mxu0
    %v2499 = vadd.f32 %v2051, %v2498
    %2500 = vmatmul.f32.gmra.mxu0 %v1865
    %v2501 = vpop.f32.mrf.mxu0
    %v2502 = vadd.f32 %v2051, %v2501
    %2503 = vmatmul.f32.gmra.mxu0 %v1867
    %v2504 = vpop.f32.mrf.mxu0
    %v2505 = vadd.f32 %v2051, %v2504
    %2506 = vmatmul.f32.gmra.mxu0 %v1869
    %v2507 = vpop.f32.mrf.mxu0
    %v2508 = vadd.f32 %v2051, %v2507
    %2509 = vmatmul.f32.gmra.mxu0 %v1871
    %v2510 = vpop.f32.mrf.mxu0
    %v2511 = vadd.f32 %v2051, %v2510
    %2512 = vmatmul.f32.gmra.mxu0 %v1873
    %v2513 = vpop.f32.mrf.mxu0
    %v2514 = vadd.f32 %v2051, %v2513
    %2515 = vmatmul.f32.gmra.mxu0 %v1875
    %v2516 = vpop.f32.mrf.mxu0
    %v2517 = vadd.f32 %v2051, %v2516
    %2518 = vmatmul.f32.gmra.mxu0 %v1877
    %v2519 = vpop.f32.mrf.mxu0
    %v2520 = vadd.f32 %v2051, %v2519
    %2521 = vmatmul.f32.gmra.mxu0 %v1879
    %v2522 = vpop.f32.mrf.mxu0
    %v2523 = vadd.f32 %v2051, %v2522
    %2524 = vmatmul.f32.gmra.mxu0 %v1881
    %v2525 = vpop.f32.mrf.mxu0
    %v2526 = vadd.f32 %v2051, %v2525
    %2527 = vmatmul.f32.gmra.mxu0 %v1883
    %v2528 = vpop.f32.mrf.mxu0
    %v2529 = vadd.f32 %v2051, %v2528
    %2530 = vmatmul.f32.gmra.mxu0 %v1885
    %v2531 = vpop.f32.mrf.mxu0
    %v2532 = vadd.f32 %v2051, %v2531
    %2533 = vmatmul.f32.gmra.mxu0 %v1887
    %v2534 = vpop.f32.mrf.mxu0
    %v2535 = vadd.f32 %v2051, %v2534
    %2536 = vmatmul.f32.gmra.mxu0 %v1889
    %v2537 = vpop.f32.mrf.mxu0
    %v2538 = vadd.f32 %v2051, %v2537
    %2539 = vmatmul.f32.gmra.mxu0 %v1891
    %v2540 = vpop.f32.mrf.mxu0
    %v2541 = vadd.f32 %v2051, %v2540
    %2542 = vmatmul.f32.gmra.mxu0 %v1893
    %v2543 = vpop.f32.mrf.mxu0
    %v2544 = vadd.f32 %v2051, %v2543
    %2545 = vmatmul.f32.gmra.mxu0 %v1895
    %v2546 = vpop.f32.mrf.mxu0
    %v2547 = vadd.f32 %v2051, %v2546
    %2548 = vmatmul.f32.gmra.mxu0 %v1897
    %v2549 = vpop.f32.mrf.mxu0
    %v2550 = vadd.f32 %v2051, %v2549
    %2551 = vmatmul.f32.gmra.mxu0 %v1899
    %v2552 = vpop.f32.mrf.mxu0
    %v2553 = vadd.f32 %v2051, %v2552
    %2554 = vmatmul.f32.gmra.mxu0 %v1901
    %v2555 = vpop.f32.mrf.mxu0
    %v2556 = vadd.f32 %v2051, %v2555
    %2557 = vmatmul.f32.gmra.mxu0 %v1903
    %v2558 = vpop.f32.mrf.mxu0
    %v2559 = vadd.f32 %v2051, %v2558
    %2560 = vmatmul.f32.gmra.mxu0 %v1905
    %v2561 = vpop.f32.mrf.mxu0
    %v2562 = vadd.f32 %v2051, %v2561
    %2563 = vmatmul.f32.gmra.mxu0 %v1907
    %v2564 = vpop.f32.mrf.mxu0
    %v2565 = vadd.f32 %v2051, %v2564
    %2566 = vmatmul.f32.gmra.mxu0 %v1909
    %v2567 = vpop.f32.mrf.mxu0
    %v2568 = vadd.f32 %v2051, %v2567
    %2569 = vmatmul.f32.gmra.mxu0 %v1911
    %v2570 = vpop.f32.mrf.mxu0
    %v2571 = vadd.f32 %v2051, %v2570
    %2572 = vmatmul.f32.gmra.mxu0 %v1913
    %v2573 = vpop.f32.mrf.mxu0
    %v2574 = vadd.f32 %v2051, %v2573
    %2575 = vmatmul.f32.gmra.mxu0 %v1915
    %v2576 = vpop.f32.mrf.mxu0
    %v2577 = vadd.f32 %v2051, %v2576
    %2578 = vmatmul.f32.gmra.mxu0 %v1917
    %v2579 = vpop.f32.mrf.mxu0
    %v2580 = vadd.f32 %v2051, %v2579
    %2581 = vmatmul.f32.gmra.mxu0 %v1919
    %v2582 = vpop.f32.mrf.mxu0
    %v2583 = vadd.f32 %v2051, %v2582
    %2584 = vmatmul.f32.gmra.mxu0 %v1921
    %v2585 = vpop.f32.mrf.mxu0
    %v2586 = vadd.f32 %v2051, %v2585
    %2587 = vmatmul.f32.gmra.mxu0 %v1923
    %v2588 = vpop.f32.mrf.mxu0
    %v2589 = vadd.f32 %v2051, %v2588
    %2590 = vmatmul.f32.gmra.mxu0 %v1925
    %v2591 = vpop.f32.mrf.mxu0
    %v2592 = vadd.f32 %v2051, %v2591
    %2593 = vmatmul.f32.gmra.mxu0 %v1927
    %v2594 = vpop.f32.mrf.mxu0
    %v2595 = vadd.f32 %v2051, %v2594
    %2596 = vmatmul.f32.gmra.mxu0 %v1929
    %v2597 = vpop.f32.mrf.mxu0
    %v2598 = vadd.f32 %v2051, %v2597
    %2599 = vmatmul.f32.gmra.mxu0 %v1931
    %v2600 = vpop.f32.mrf.mxu0
    %v2601 = vadd.f32 %v2051, %v2600
    %2602 = vmatmul.f32.gmra.mxu0 %v1933
    %v2603 = vpop.f32.mrf.mxu0
    %v2604 = vadd.f32 %v2051, %v2603
    %2605 = vmatmul.f32.gmra.mxu0 %v1935
    %v2606 = vpop.f32.mrf.mxu0
    %v2607 = vadd.f32 %v2051, %v2606
    %2608 = vmatmul.f32.gmra.mxu0 %v1937
    %v2609 = vpop.f32.mrf.mxu0
    %v2610 = vadd.f32 %v2051, %v2609
    %2611 = vmatmul.f32.gmra.mxu0 %v1939
    %v2612 = vpop.f32.mrf.mxu0
    %v2613 = vadd.f32 %v2051, %v2612
    %2614 = vmatmul.f32.gmra.mxu0 %v1941
    %v2615 = vpop.f32.mrf.mxu0
    %v2616 = vadd.f32 %v2051, %v2615
    %2617 = vmatmul.f32.gmra.mxu0 %v1943
    %v2618 = vpop.f32.mrf.mxu0
    %v2619 = vadd.f32 %v2051, %v2618
    %2620 = vmatmul.f32.gmra.mxu0 %v1945
    %v2621 = vpop.f32.mrf.mxu0
    %v2622 = vadd.f32 %v2051, %v2621
    %2623 = vmatmul.f32.gmra.mxu0 %v1947
    %v2624 = vpop.f32.mrf.mxu0
    %v2625 = vadd.f32 %v2051, %v2624
    %2626 = vmatmul.f32.gmra.mxu0 %v1949
    %v2627 = vpop.f32.mrf.mxu0
    %v2628 = vadd.f32 %v2051, %v2627
    %2629 = vmatmul.f32.gmra.mxu0 %v1951
    %v2630 = vpop.f32.mrf.mxu0
    %v2631 = vadd.f32 %v2051, %v2630
    %2632 = vmatmul.f32.gmra.mxu0 %v1953
    %v2633 = vpop.f32.mrf.mxu0
    %v2634 = vadd.f32 %v2051, %v2633
    %2635 = vmatmul.f32.gmra.mxu0 %v1955
    %v2636 = vpop.f32.mrf.mxu0
    %v2637 = vadd.f32 %v2051, %v2636
    %2638 = vmatmul.f32.gmra.mxu0 %v1957
    %v2639 = vpop.f32.mrf.mxu0
    %v2640 = vadd.f32 %v2051, %v2639
    %2641 = vmatmul.f32.gmra.mxu0 %v1959
    %v2642 = vpop.f32.mrf.mxu0
    %v2643 = vadd.f32 %v2051, %v2642
    %2644 = vmatmul.f32.gmra.mxu0 %v1961
    %v2645 = vpop.f32.mrf.mxu0
    %v2646 = vadd.f32 %v2051, %v2645
    %2647 = vmatmul.f32.gmra.mxu0 %v1963
    %v2648 = vpop.f32.mrf.mxu0
    %v2649 = vadd.f32 %v2051, %v2648
    %2650 = vmatmul.f32.gmra.mxu0 %v1965
    %v2651 = vpop.f32.mrf.mxu0
    %v2652 = vadd.f32 %v2051, %v2651
    %2653 = vmatmul.f32.gmra.mxu0 %v1967
    %v2654 = vpop.f32.mrf.mxu0
    %v2655 = vadd.f32 %v2051, %v2654
    %2656 = vmatmul.f32.gmra.mxu0 %v1969
    %v2657 = vpop.f32.mrf.mxu0
    %v2658 = vadd.f32 %v2051, %v2657
    %2659 = vmatmul.f32.gmra.mxu0 %v1971
    %v2660 = vpop.f32.mrf.mxu0
    %v2661 = vadd.f32 %v2051, %v2660
    %2662 = vmatmul.f32.gmra.mxu0 %v1973
    %v2663 = vpop.f32.mrf.mxu0
    %v2664 = vadd.f32 %v2051, %v2663
    %2665 = vmatmul.f32.gmra.mxu0 %v1975
    %v2666 = vpop.f32.mrf.mxu0
    %v2667 = vadd.f32 %v2051, %v2666
    %2668 = vmatmul.f32.gmra.mxu0 %v1977
    %v2669 = vpop.f32.mrf.mxu0
    %v2670 = vadd.f32 %v2051, %v2669
    %2671 = vmatmul.f32.gmra.mxu0 %v1979
    %v2672 = vpop.f32.mrf.mxu0
    %v2673 = vadd.f32 %v2051, %v2672
    %2674 = vmatmul.f32.gmra.mxu0 %v1981
    %v2675 = vpop.f32.mrf.mxu0
    %v2676 = vadd.f32 %v2051, %v2675
    %2677 = vmatmul.f32.gmra.mxu0 %v1983
    %v2678 = vpop.f32.mrf.mxu0
    %v2679 = vadd.f32 %v2051, %v2678
    %2680 = vdwg.mxu0
    %2681 = vmatpush.msra.mxu0 %v2048
    %2682 = vmatpush.msra.mxu0 %v2046
    %2683 = vmatpush.msra.mxu0 %v2044
    %2684 = vmatpush.msra.mxu0 %v2042
    %2685 = vmatpush.msra.mxu0 %v2040
    %2686 = vmatpush.msra.mxu0 %v2038
    %2687 = vmatpush.msra.mxu0 %v2036
    %2688 = vmatpush.msra.mxu0 %v2034
    %2689 = vmatpush.msra.mxu0 %v2032
    %2690 = vmatpush.msra.mxu0 %v2030
    %2691 = vmatpush.msra.mxu0 %v2028
    %2692 = vmatpush.msra.mxu0 %v2026
    %2693 = vmatpush.msra.mxu0 %v2024
    %2694 = vmatpush.msra.mxu0 %v2022
    %2695 = vmatpush.msra.mxu0 %v2020
    %2696 = vmatpush.msra.mxu0 %v2018
    %2697 = vmatmul.f32.gmra.mxu0 %v1858
    %v2698 = vpop.f32.mrf.mxu0
    %v2699 = vadd.f32 %v2490, %v2698
    %2700 = vmatmul.f32.gmra.mxu0 %v1860
    %v2701 = vpop.f32.mrf.mxu0
    %v2702 = vadd.f32 %v2493, %v2701
    %2703 = vmatmul.f32.gmra.mxu0 %v1862
    %v2704 = vpop.f32.mrf.mxu0
    %v2705 = vadd.f32 %v2496, %v2704
    %2706 = vmatmul.f32.gmra.mxu0 %v1864
    %v2707 = vpop.f32.mrf.mxu0
    %v2708 = vadd.f32 %v2499, %v2707
    %2709 = vmatmul.f32.gmra.mxu0 %v1866
    %v2710 = vpop.f32.mrf.mxu0
    %v2711 = vadd.f32 %v2502, %v2710
    %2712 = vmatmul.f32.gmra.mxu0 %v1868
    %v2713 = vpop.f32.mrf.mxu0
    %v2714 = vadd.f32 %v2505, %v2713
    %2715 = vmatmul.f32.gmra.mxu0 %v1870
    %v2716 = vpop.f32.mrf.mxu0
    %v2717 = vadd.f32 %v2508, %v2716
    %2718 = vmatmul.f32.gmra.mxu0 %v1872
    %v2719 = vpop.f32.mrf.mxu0
    %v2720 = vadd.f32 %v2511, %v2719
    %2721 = vmatmul.f32.gmra.mxu0 %v1874
    %v2722 = vpop.f32.mrf.mxu0
    %v2723 = vadd.f32 %v2514, %v2722
    %2724 = vmatmul.f32.gmra.mxu0 %v1876
    %v2725 = vpop.f32.mrf.mxu0
    %v2726 = vadd.f32 %v2517, %v2725
    %2727 = vmatmul.f32.gmra.mxu0 %v1878
    %v2728 = vpop.f32.mrf.mxu0
    %v2729 = vadd.f32 %v2520, %v2728
    %2730 = vmatmul.f32.gmra.mxu0 %v1880
    %v2731 = vpop.f32.mrf.mxu0
    %v2732 = vadd.f32 %v2523, %v2731
    %2733 = vmatmul.f32.gmra.mxu0 %v1882
    %v2734 = vpop.f32.mrf.mxu0
    %v2735 = vadd.f32 %v2526, %v2734
    %2736 = vmatmul.f32.gmra.mxu0 %v1884
    %v2737 = vpop.f32.mrf.mxu0
    %v2738 = vadd.f32 %v2529, %v2737
    %2739 = vmatmul.f32.gmra.mxu0 %v1886
    %v2740 = vpop.f32.mrf.mxu0
    %v2741 = vadd.f32 %v2532, %v2740
    %2742 = vmatmul.f32.gmra.mxu0 %v1888
    %v2743 = vpop.f32.mrf.mxu0
    %v2744 = vadd.f32 %v2535, %v2743
    %2745 = vmatmul.f32.gmra.mxu0 %v1890
    %v2746 = vpop.f32.mrf.mxu0
    %v2747 = vadd.f32 %v2538, %v2746
    %2748 = vmatmul.f32.gmra.mxu0 %v1892
    %v2749 = vpop.f32.mrf.mxu0
    %v2750 = vadd.f32 %v2541, %v2749
    %2751 = vmatmul.f32.gmra.mxu0 %v1894
    %v2752 = vpop.f32.mrf.mxu0
    %v2753 = vadd.f32 %v2544, %v2752
    %2754 = vmatmul.f32.gmra.mxu0 %v1896
    %v2755 = vpop.f32.mrf.mxu0
    %v2756 = vadd.f32 %v2547, %v2755
    %2757 = vmatmul.f32.gmra.mxu0 %v1898
    %v2758 = vpop.f32.mrf.mxu0
    %v2759 = vadd.f32 %v2550, %v2758
    %2760 = vmatmul.f32.gmra.mxu0 %v1900
    %v2761 = vpop.f32.mrf.mxu0
    %v2762 = vadd.f32 %v2553, %v2761
    %2763 = vmatmul.f32.gmra.mxu0 %v1902
    %v2764 = vpop.f32.mrf.mxu0
    %v2765 = vadd.f32 %v2556, %v2764
    %2766 = vmatmul.f32.gmra.mxu0 %v1904
    %v2767 = vpop.f32.mrf.mxu0
    %v2768 = vadd.f32 %v2559, %v2767
    %2769 = vmatmul.f32.gmra.mxu0 %v1906
    %v2770 = vpop.f32.mrf.mxu0
    %v2771 = vadd.f32 %v2562, %v2770
    %2772 = vmatmul.f32.gmra.mxu0 %v1908
    %v2773 = vpop.f32.mrf.mxu0
    %v2774 = vadd.f32 %v2565, %v2773
    %2775 = vmatmul.f32.gmra.mxu0 %v1910
    %v2776 = vpop.f32.mrf.mxu0
    %v2777 = vadd.f32 %v2568, %v2776
    %2778 = vmatmul.f32.gmra.mxu0 %v1912
    %v2779 = vpop.f32.mrf.mxu0
    %v2780 = vadd.f32 %v2571, %v2779
    %2781 = vmatmul.f32.gmra.mxu0 %v1914
    %v2782 = vpop.f32.mrf.mxu0
    %v2783 = vadd.f32 %v2574, %v2782
    %2784 = vmatmul.f32.gmra.mxu0 %v1916
    %v2785 = vpop.f32.mrf.mxu0
    %v2786 = vadd.f32 %v2577, %v2785
    %2787 = vmatmul.f32.gmra.mxu0 %v1918
    %v2788 = vpop.f32.mrf.mxu0
    %v2789 = vadd.f32 %v2580, %v2788
    %2790 = vmatmul.f32.gmra.mxu0 %v1920
    %v2791 = vpop.f32.mrf.mxu0
    %v2792 = vadd.f32 %v2583, %v2791
    %2793 = vmatmul.f32.gmra.mxu0 %v1922
    %v2794 = vpop.f32.mrf.mxu0
    %v2795 = vadd.f32 %v2586, %v2794
    %2796 = vmatmul.f32.gmra.mxu0 %v1924
    %v2797 = vpop.f32.mrf.mxu0
    %v2798 = vadd.f32 %v2589, %v2797
    %2799 = vmatmul.f32.gmra.mxu0 %v1926
    %v2800 = vpop.f32.mrf.mxu0
    %v2801 = vadd.f32 %v2592, %v2800
    %2802 = vmatmul.f32.gmra.mxu0 %v1928
    %v2803 = vpop.f32.mrf.mxu0
    %v2804 = vadd.f32 %v2595, %v2803
    %2805 = vmatmul.f32.gmra.mxu0 %v1930
    %v2806 = vpop.f32.mrf.mxu0
    %v2807 = vadd.f32 %v2598, %v2806
    %2808 = vmatmul.f32.gmra.mxu0 %v1932
    %v2809 = vpop.f32.mrf.mxu0
    %v2810 = vadd.f32 %v2601, %v2809
    %2811 = vmatmul.f32.gmra.mxu0 %v1934
    %v2812 = vpop.f32.mrf.mxu0
    %v2813 = vadd.f32 %v2604, %v2812
    %2814 = vmatmul.f32.gmra.mxu0 %v1936
    %v2815 = vpop.f32.mrf.mxu0
    %v2816 = vadd.f32 %v2607, %v2815
    %2817 = vmatmul.f32.gmra.mxu0 %v1938
    %v2818 = vpop.f32.mrf.mxu0
    %v2819 = vadd.f32 %v2610, %v2818
    %2820 = vmatmul.f32.gmra.mxu0 %v1940
    %v2821 = vpop.f32.mrf.mxu0
    %v2822 = vadd.f32 %v2613, %v2821
    %2823 = vmatmul.f32.gmra.mxu0 %v1942
    %v2824 = vpop.f32.mrf.mxu0
    %v2825 = vadd.f32 %v2616, %v2824
    %2826 = vmatmul.f32.gmra.mxu0 %v1944
    %v2827 = vpop.f32.mrf.mxu0
    %v2828 = vadd.f32 %v2619, %v2827
    %2829 = vmatmul.f32.gmra.mxu0 %v1946
    %v2830 = vpop.f32.mrf.mxu0
    %v2831 = vadd.f32 %v2622, %v2830
    %2832 = vmatmul.f32.gmra.mxu0 %v1948
    %v2833 = vpop.f32.mrf.mxu0
    %v2834 = vadd.f32 %v2625, %v2833
    %2835 = vmatmul.f32.gmra.mxu0 %v1950
    %v2836 = vpop.f32.mrf.mxu0
    %v2837 = vadd.f32 %v2628, %v2836
    %2838 = vmatmul.f32.gmra.mxu0 %v1952
    %v2839 = vpop.f32.mrf.mxu0
    %v2840 = vadd.f32 %v2631, %v2839
    %2841 = vmatmul.f32.gmra.mxu0 %v1954
    %v2842 = vpop.f32.mrf.mxu0
    %v2843 = vadd.f32 %v2634, %v2842
    %2844 = vmatmul.f32.gmra.mxu0 %v1956
    %v2845 = vpop.f32.mrf.mxu0
    %v2846 = vadd.f32 %v2637, %v2845
    %2847 = vmatmul.f32.gmra.mxu0 %v1958
    %v2848 = vpop.f32.mrf.mxu0
    %v2849 = vadd.f32 %v2640, %v2848
    %2850 = vmatmul.f32.gmra.mxu0 %v1960
    %v2851 = vpop.f32.mrf.mxu0
    %v2852 = vadd.f32 %v2643, %v2851
    %2853 = vmatmul.f32.gmra.mxu0 %v1962
    %v2854 = vpop.f32.mrf.mxu0
    %v2855 = vadd.f32 %v2646, %v2854
    %2856 = vmatmul.f32.gmra.mxu0 %v1964
    %v2857 = vpop.f32.mrf.mxu0
    %v2858 = vadd.f32 %v2649, %v2857
    %2859 = vmatmul.f32.gmra.mxu0 %v1966
    %v2860 = vpop.f32.mrf.mxu0
    %v2861 = vadd.f32 %v2652, %v2860
    %2862 = vmatmul.f32.gmra.mxu0 %v1968
    %v2863 = vpop.f32.mrf.mxu0
    %v2864 = vadd.f32 %v2655, %v2863
    %2865 = vmatmul.f32.gmra.mxu0 %v1970
    %v2866 = vpop.f32.mrf.mxu0
    %v2867 = vadd.f32 %v2658, %v2866
    %2868 = vmatmul.f32.gmra.mxu0 %v1972
    %v2869 = vpop.f32.mrf.mxu0
    %v2870 = vadd.f32 %v2661, %v2869
    %2871 = vmatmul.f32.gmra.mxu0 %v1974
    %v2872 = vpop.f32.mrf.mxu0
    %v2873 = vadd.f32 %v2664, %v2872
    %2874 = vmatmul.f32.gmra.mxu0 %v1976
    %v2875 = vpop.f32.mrf.mxu0
    %v2876 = vadd.f32 %v2667, %v2875
    %2877 = vmatmul.f32.gmra.mxu0 %v1978
    %v2878 = vpop.f32.mrf.mxu0
    %v2879 = vadd.f32 %v2670, %v2878
    %2880 = vmatmul.f32.gmra.mxu0 %v1980
    %v2881 = vpop.f32.mrf.mxu0
    %v2882 = vadd.f32 %v2673, %v2881
    %2883 = vmatmul.f32.gmra.mxu0 %v1982
    %v2884 = vpop.f32.mrf.mxu0
    %v2885 = vadd.f32 %v2676, %v2884
    %2886 = vmatmul.f32.gmra.mxu0 %v1984
    %v2887 = vpop.f32.mrf.mxu0
    %v2888 = vadd.f32 %v2679, %v2887
    %2889 = vdwg.mxu0
    %v2890 = vmul.f32 %v2281, 0.5
    %v2891 = vmul.f32 %v2699, 0.5
    %v2892 = vmul.f32 %v2284, 0.5
    %v2893 = vmul.f32 %v2702, 0.5
    %v2894 = vmul.f32 %v2287, 0.5
    %v2895 = vmul.f32 %v2705, 0.5
    %v2896 = vmul.f32 %v2290, 0.5
    %v2897 = vmul.f32 %v2708, 0.5
    %v2898 = vmul.f32 %v2293, 0.5
    %v2899 = vmul.f32 %v2711, 0.5
    %v2900 = vmul.f32 %v2296, 0.5
    %v2901 = vmul.f32 %v2714, 0.5
    %v2902 = vmul.f32 %v2299, 0.5
    %v2903 = vmul.f32 %v2717, 0.5
    %v2904 = vmul.f32 %v2302, 0.5
    %v2905 = vmul.f32 %v2720, 0.5
    %v2906 = vmul.f32 %v2305, 0.5
    %v2907 = vmul.f32 %v2723, 0.5
    %v2908 = vmul.f32 %v2308, 0.5
    %v2909 = vmul.f32 %v2726, 0.5
    %v2910 = vmul.f32 %v2311, 0.5
    %v2911 = vmul.f32 %v2729, 0.5
    %v2912 = vmul.f32 %v2314, 0.5
    %v2913 = vmul.f32 %v2732, 0.5
    %v2914 = vmul.f32 %v2317, 0.5
    %v2915 = vmul.f32 %v2735, 0.5
    %v2916 = vmul.f32 %v2320, 0.5
    %v2917 = vmul.f32 %v2738, 0.5
    %v2918 = vmul.f32 %v2323, 0.5
    %v2919 = vmul.f32 %v2741, 0.5
    %v2920 = vmul.f32 %v2326, 0.5
    %v2921 = vmul.f32 %v2744, 0.5
    %v2922 = vmul.f32 %v2329, 0.5
    %v2923 = vmul.f32 %v2747, 0.5
    %v2924 = vmul.f32 %v2332, 0.5
    %v2925 = vmul.f32 %v2750, 0.5
    %v2926 = vmul.f32 %v2335, 0.5
    %v2927 = vmul.f32 %v2753, 0.5
    %v2928 = vmul.f32 %v2338, 0.5
    %v2929 = vmul.f32 %v2756, 0.5
    %v2930 = vmul.f32 %v2341, 0.5
    %v2931 = vmul.f32 %v2759, 0.5
    %v2932 = vmul.f32 %v2344, 0.5
    %v2933 = vmul.f32 %v2762, 0.5
    %v2934 = vmul.f32 %v2347, 0.5
    %v2935 = vmul.f32 %v2765, 0.5
    %v2936 = vmul.f32 %v2350, 0.5
    %v2937 = vmul.f32 %v2768, 0.5
    %v2938 = vmul.f32 %v2353, 0.5
    %v2939 = vmul.f32 %v2771, 0.5
    %v2940 = vmul.f32 %v2356, 0.5
    %v2941 = vmul.f32 %v2774, 0.5
    %v2942 = vmul.f32 %v2359, 0.5
    %v2943 = vmul.f32 %v2777, 0.5
    %v2944 = vmul.f32 %v2362, 0.5
    %v2945 = vmul.f32 %v2780, 0.5
    %v2946 = vmul.f32 %v2365, 0.5
    %v2947 = vmul.f32 %v2783, 0.5
    %v2948 = vmul.f32 %v2368, 0.5
    %v2949 = vmul.f32 %v2786, 0.5
    %v2950 = vmul.f32 %v2371, 0.5
    %v2951 = vmul.f32 %v2789, 0.5
    %v2952 = vmul.f32 %v2374, 0.5
    %v2953 = vmul.f32 %v2792, 0.5
    %v2954 = vmul.f32 %v2377, 0.5
    %v2955 = vmul.f32 %v2795, 0.5
    %v2956 = vmul.f32 %v2380, 0.5
    %v2957 = vmul.f32 %v2798, 0.5
    %v2958 = vmul.f32 %v2383, 0.5
    %v2959 = vmul.f32 %v2801, 0.5
    %v2960 = vmul.f32 %v2386, 0.5
    %v2961 = vmul.f32 %v2804, 0.5
    %v2962 = vmul.f32 %v2389, 0.5
    %v2963 = vmul.f32 %v2807, 0.5
    %v2964 = vmul.f32 %v2392, 0.5
    %v2965 = vmul.f32 %v2810, 0.5
    %v2966 = vmul.f32 %v2395, 0.5
    %v2967 = vmul.f32 %v2813, 0.5
    %v2968 = vmul.f32 %v2398, 0.5
    %v2969 = vmul.f32 %v2816, 0.5
    %v2970 = vmul.f32 %v2401, 0.5
    %v2971 = vmul.f32 %v2819, 0.5
    %v2972 = vmul.f32 %v2404, 0.5
    %v2973 = vmul.f32 %v2822, 0.5
    %v2974 = vmul.f32 %v2407, 0.5
    %v2975 = vmul.f32 %v2825, 0.5
    %v2976 = vmul.f32 %v2410, 0.5
    %v2977 = vmul.f32 %v2828, 0.5
    %v2978 = vmul.f32 %v2413, 0.5
    %v2979 = vmul.f32 %v2831, 0.5
    %v2980 = vmul.f32 %v2416, 0.5
    %v2981 = vmul.f32 %v2834, 0.5
    %v2982 = vmul.f32 %v2419, 0.5
    %v2983 = vmul.f32 %v2837, 0.5
    %v2984 = vmul.f32 %v2422, 0.5
    %v2985 = vmul.f32 %v2840, 0.5
    %v2986 = vmul.f32 %v2425, 0.5
    %v2987 = vmul.f32 %v2843, 0.5
    %v2988 = vmul.f32 %v2428, 0.5
    %v2989 = vmul.f32 %v2846, 0.5
    %v2990 = vmul.f32 %v2431, 0.5
    %v2991 = vmul.f32 %v2849, 0.5
    %v2992 = vmul.f32 %v2434, 0.5
    %v2993 = vmul.f32 %v2852, 0.5
    %v2994 = vmul.f32 %v2437, 0.5
    %v2995 = vmul.f32 %v2855, 0.5
    %v2996 = vmul.f32 %v2440, 0.5
    %v2997 = vmul.f32 %v2858, 0.5
    %v2998 = vmul.f32 %v2443, 0.5
    %v2999 = vmul.f32 %v2861, 0.5
    %v3000 = vmul.f32 %v2446, 0.5
    %v3001 = vmul.f32 %v2864, 0.5
    %v3002 = vmul.f32 %v2449, 0.5
    %v3003 = vmul.f32 %v2867, 0.5
    %v3004 = vmul.f32 %v2452, 0.5
    %v3005 = vmul.f32 %v2870, 0.5
    %v3006 = vmul.f32 %v2455, 0.5
    %v3007 = vmul.f32 %v2873, 0.5
    %v3008 = vmul.f32 %v2458, 0.5
    %v3009 = vmul.f32 %v2876, 0.5
    %v3010 = vmul.f32 %v2461, 0.5
    %v3011 = vmul.f32 %v2879, 0.5
    %v3012 = vmul.f32 %v2464, 0.5
    %v3013 = vmul.f32 %v2882, 0.5
    %v3014 = vmul.f32 %v2467, 0.5
    %v3015 = vmul.f32 %v2885, 0.5
    %v3016 = vmul.f32 %v2470, 0.5
    %v3017 = vmul.f32 %v2888, 0.5
    %v3018 = vmul.f32 %v2281, 0.70710677
    %v3019 = vmul.f32 %v2699, 0.70710677
    %v3020 = vmul.f32 %v2284, 0.70710677
    %v3021 = vmul.f32 %v2702, 0.70710677
    %v3022 = vmul.f32 %v2287, 0.70710677
    %v3023 = vmul.f32 %v2705, 0.70710677
    %v3024 = vmul.f32 %v2290, 0.70710677
    %v3025 = vmul.f32 %v2708, 0.70710677
    %v3026 = vmul.f32 %v2293, 0.70710677
    %v3027 = vmul.f32 %v2711, 0.70710677
    %v3028 = vmul.f32 %v2296, 0.70710677
    %v3029 = vmul.f32 %v2714, 0.70710677
    %v3030 = vmul.f32 %v2299, 0.70710677
    %v3031 = vmul.f32 %v2717, 0.70710677
    %v3032 = vmul.f32 %v2302, 0.70710677
    %v3033 = vmul.f32 %v2720, 0.70710677
    %v3034 = vmul.f32 %v2305, 0.70710677
    %v3035 = vmul.f32 %v2723, 0.70710677
    %v3036 = vmul.f32 %v2308, 0.70710677
    %v3037 = vmul.f32 %v2726, 0.70710677
    %v3038 = vmul.f32 %v2311, 0.70710677
    %v3039 = vmul.f32 %v2729, 0.70710677
    %v3040 = vmul.f32 %v2314, 0.70710677
    %v3041 = vmul.f32 %v2732, 0.70710677
    %v3042 = vmul.f32 %v2317, 0.70710677
    %v3043 = vmul.f32 %v2735, 0.70710677
    %v3044 = vmul.f32 %v2320, 0.70710677
    %v3045 = vmul.f32 %v2738, 0.70710677
    %v3046 = vmul.f32 %v2323, 0.70710677
    %v3047 = vmul.f32 %v2741, 0.70710677
    %v3048 = vmul.f32 %v2326, 0.70710677
    %v3049 = vmul.f32 %v2744, 0.70710677
    %v3050 = vmul.f32 %v2329, 0.70710677
    %v3051 = vmul.f32 %v2747, 0.70710677
    %v3052 = vmul.f32 %v2332, 0.70710677
    %v3053 = vmul.f32 %v2750, 0.70710677
    %v3054 = vmul.f32 %v2335, 0.70710677
    %v3055 = vmul.f32 %v2753, 0.70710677
    %v3056 = vmul.f32 %v2338, 0.70710677
    %v3057 = vmul.f32 %v2756, 0.70710677
    %v3058 = vmul.f32 %v2341, 0.70710677
    %v3059 = vmul.f32 %v2759, 0.70710677
    %v3060 = vmul.f32 %v2344, 0.70710677
    %v3061 = vmul.f32 %v2762, 0.70710677
    %v3062 = vmul.f32 %v2347, 0.70710677
    %v3063 = vmul.f32 %v2765, 0.70710677
    %v3064 = vmul.f32 %v2350, 0.70710677
    %v3065 = vmul.f32 %v2768, 0.70710677
    %v3066 = vmul.f32 %v2353, 0.70710677
    %v3067 = vmul.f32 %v2771, 0.70710677
    %v3068 = vmul.f32 %v2356, 0.70710677
    %v3069 = vmul.f32 %v2774, 0.70710677
    %v3070 = vmul.f32 %v2359, 0.70710677
    %v3071 = vmul.f32 %v2777, 0.70710677
    %v3072 = vmul.f32 %v2362, 0.70710677
    %v3073 = vmul.f32 %v2780, 0.70710677
    %v3074 = vmul.f32 %v2365, 0.70710677
    %v3075 = vmul.f32 %v2783, 0.70710677
    %v3076 = vmul.f32 %v2368, 0.70710677
    %v3077 = vmul.f32 %v2786, 0.70710677
    %v3078 = vmul.f32 %v2371, 0.70710677
    %v3079 = vmul.f32 %v2789, 0.70710677
    %v3080 = vmul.f32 %v2374, 0.70710677
    %v3081 = vmul.f32 %v2792, 0.70710677
    %v3082 = vmul.f32 %v2377, 0.70710677
    %v3083 = vmul.f32 %v2795, 0.70710677
    %v3084 = vmul.f32 %v2380, 0.70710677
    %v3085 = vmul.f32 %v2798, 0.70710677
    %v3086 = vmul.f32 %v2383, 0.70710677
    %v3087 = vmul.f32 %v2801, 0.70710677
    %v3088 = vmul.f32 %v2386, 0.70710677
    %v3089 = vmul.f32 %v2804, 0.70710677
    %v3090 = vmul.f32 %v2389, 0.70710677
    %v3091 = vmul.f32 %v2807, 0.70710677
    %v3092 = vmul.f32 %v2392, 0.70710677
    %v3093 = vmul.f32 %v2810, 0.70710677
    %v3094 = vmul.f32 %v2395, 0.70710677
    %v3095 = vmul.f32 %v2813, 0.70710677
    %v3096 = vmul.f32 %v2398, 0.70710677
    %v3097 = vmul.f32 %v2816, 0.70710677
    %v3098 = vmul.f32 %v2401, 0.70710677
    %v3099 = vmul.f32 %v2819, 0.70710677
    %v3100 = vmul.f32 %v2404, 0.70710677
    %v3101 = vmul.f32 %v2822, 0.70710677
    %v3102 = vmul.f32 %v2407, 0.70710677
    %v3103 = vmul.f32 %v2825, 0.70710677
    %v3104 = vmul.f32 %v2410, 0.70710677
    %v3105 = vmul.f32 %v2828, 0.70710677
    %v3106 = vmul.f32 %v2413, 0.70710677
    %v3107 = vmul.f32 %v2831, 0.70710677
    %v3108 = vmul.f32 %v2416, 0.70710677
    %v3109 = vmul.f32 %v2834, 0.70710677
    %v3110 = vmul.f32 %v2419, 0.70710677
    %v3111 = vmul.f32 %v2837, 0.70710677
    %v3112 = vmul.f32 %v2422, 0.70710677
    %v3113 = vmul.f32 %v2840, 0.70710677
    %v3114 = vmul.f32 %v2425, 0.70710677
    %v3115 = vmul.f32 %v2843, 0.70710677
    %v3116 = vmul.f32 %v2428, 0.70710677
    %v3117 = vmul.f32 %v2846, 0.70710677
    %v3118 = vmul.f32 %v2431, 0.70710677
    %v3119 = vmul.f32 %v2849, 0.70710677
    %v3120 = vmul.f32 %v2434, 0.70710677
    %v3121 = vmul.f32 %v2852, 0.70710677
    %v3122 = vmul.f32 %v2437, 0.70710677
    %v3123 = vmul.f32 %v2855, 0.70710677
    %v3124 = vmul.f32 %v2440, 0.70710677
    %v3125 = vmul.f32 %v2858, 0.70710677
    %v3126 = vmul.f32 %v2443, 0.70710677
    %v3127 = vmul.f32 %v2861, 0.70710677
    %v3128 = vmul.f32 %v2446, 0.70710677
    %v3129 = vmul.f32 %v2864, 0.70710677
    %v3130 = vmul.f32 %v2449, 0.70710677
    %v3131 = vmul.f32 %v2867, 0.70710677
    %v3132 = vmul.f32 %v2452, 0.70710677
    %v3133 = vmul.f32 %v2870, 0.70710677
    %v3134 = vmul.f32 %v2455, 0.70710677
    %v3135 = vmul.f32 %v2873, 0.70710677
    %v3136 = vmul.f32 %v2458, 0.70710677
    %v3137 = vmul.f32 %v2876, 0.70710677
    %v3138 = vmul.f32 %v2461, 0.70710677
    %v3139 = vmul.f32 %v2879, 0.70710677
    %v3140 = vmul.f32 %v2464, 0.70710677
    %v3141 = vmul.f32 %v2882, 0.70710677
    %v3142 = vmul.f32 %v2467, 0.70710677
    %v3143 = vmul.f32 %v2885, 0.70710677
    %v3144 = vmul.f32 %v2470, 0.70710677
    %v3145 = vmul.f32 %v2888, 0.70710677
    %v3146 = vmul.f32 %v3018, %v3018
    %v3147 = vmin.f32 16.0, %v3146
    %v3148 = vmul.f32 %v3147, 2.1237322e-06
    %v3149 = vadd.f32 %v3148, 0.00028619796
    %v3150 = vmul.f32 %v3147, %v3149
    %v3151 = vadd.f32 %v3150, 0.0036580483
    %v3152 = vmul.f32 %v3147, %v3151
    %v3153 = vadd.f32 %v3152, 0.05243302
    %v3154 = vmul.f32 %v3147, %v3153
    %v3155 = vadd.f32 %v3154, 0.18741608
    %v3156 = vmul.f32 %v3147, %v3155
    %v3157 = vadd.f32 %v3156, 1.1283791
    %v3158 = vmul.f32 %v3018, %v3157
    %v3159 = vmul.f32 %v3147, 3.8918573e-05
    %v3160 = vadd.f32 %v3159, 0.001143296
    %v3161 = vmul.f32 %v3147, %v3160
    %v3162 = vadd.f32 %v3161, 0.014752088
    %v3163 = vmul.f32 %v3147, %v3162
    %v3164 = vadd.f32 %v3163, 0.112945676
    %v3165 = vmul.f32 %v3147, %v3164
    %v3166 = vadd.f32 %v3165, 0.4994258
    %v3167 = vmul.f32 %v3147, %v3166
    %v3168 = vadd.f32 %v3167, 1.0
    %v3169 = vrcp.pop %v3168
    %v3170 = vmul.f32 %v3168, %v3169
    %v3171 = vsub.f32 1.0, %v3170
    %v3172 = vmul.f32 %v3169, %v3171
    %v3173 = vadd.f32 %v3169, %v3172
    %vm3174 = vweird.f32 %v3168
    %vm3175 = vweird.f32 %v3169
    %vm3176 = vmor %vm3174, %vm3175
    %v3177 = vsel %vm3176, %v3169, %v3173
    %v3178 = vand.u32 2147483647, %v3168
    %vm3179 = vcmp.eq.f32.partialorder %v3178, 8.507059e+37
    %v3180 = vand.u32 %v3168, 2147483648
    %v3181 = vor.u32 1.1754944e-38, %v3180
    %v3182 = vsel %vm3179, %v3181, %v3177
    %v3183 = vmul.f32 %v3158, %v3182
    %v3184 = vmin.f32 %v3183, 1.0
    %v3185 = vmax.f32 %v3184, -1.0
    %v3186 = vmul.f32 %v3019, %v3019
    %v3187 = vmin.f32 16.0, %v3186
    %v3188 = vmul.f32 %v3187, 2.1237322e-06
    %v3189 = vadd.f32 %v3188, 0.00028619796
    %v3190 = vmul.f32 %v3187, %v3189
    %v3191 = vadd.f32 %v3190, 0.0036580483
    %v3192 = vmul.f32 %v3187, %v3191
    %v3193 = vadd.f32 %v3192, 0.05243302
    %v3194 = vmul.f32 %v3187, %v3193
    %v3195 = vadd.f32 %v3194, 0.18741608
    %v3196 = vmul.f32 %v3187, %v3195
    %v3197 = vadd.f32 %v3196, 1.1283791
    %v3198 = vmul.f32 %v3019, %v3197
    %v3199 = vmul.f32 %v3187, 3.8918573e-05
    %v3200 = vadd.f32 %v3199, 0.001143296
    %v3201 = vmul.f32 %v3187, %v3200
    %v3202 = vadd.f32 %v3201, 0.014752088
    %v3203 = vmul.f32 %v3187, %v3202
    %v3204 = vadd.f32 %v3203, 0.112945676
    %v3205 = vmul.f32 %v3187, %v3204
    %v3206 = vadd.f32 %v3205, 0.4994258
    %v3207 = vmul.f32 %v3187, %v3206
    %v3208 = vadd.f32 %v3207, 1.0
    %v3209 = vrcp.pop %v3208
    %v3210 = vmul.f32 %v3208, %v3209
    %v3211 = vsub.f32 1.0, %v3210
    %v3212 = vmul.f32 %v3209, %v3211
    %v3213 = vadd.f32 %v3209, %v3212
    %vm3214 = vweird.f32 %v3208
    %vm3215 = vweird.f32 %v3209
    %vm3216 = vmor %vm3214, %vm3215
    %v3217 = vsel %vm3216, %v3209, %v3213
    %v3218 = vand.u32 2147483647, %v3208
    %vm3219 = vcmp.eq.f32.partialorder %v3218, 8.507059e+37
    %v3220 = vand.u32 %v3208, 2147483648
    %v3221 = vor.u32 1.1754944e-38, %v3220
    %v3222 = vsel %vm3219, %v3221, %v3217
    %v3223 = vmul.f32 %v3198, %v3222
    %v3224 = vmin.f32 %v3223, 1.0
    %v3225 = vmax.f32 %v3224, -1.0
    %v3226 = vmul.f32 %v3020, %v3020
    %v3227 = vmin.f32 16.0, %v3226
    %v3228 = vmul.f32 %v3227, 2.1237322e-06
    %v3229 = vadd.f32 %v3228, 0.00028619796
    %v3230 = vmul.f32 %v3227, %v3229
    %v3231 = vadd.f32 %v3230, 0.0036580483
    %v3232 = vmul.f32 %v3227, %v3231
    %v3233 = vadd.f32 %v3232, 0.05243302
    %v3234 = vmul.f32 %v3227, %v3233
    %v3235 = vadd.f32 %v3234, 0.18741608
    %v3236 = vmul.f32 %v3227, %v3235
    %v3237 = vadd.f32 %v3236, 1.1283791
    %v3238 = vmul.f32 %v3020, %v3237
    %v3239 = vmul.f32 %v3227, 3.8918573e-05
    %v3240 = vadd.f32 %v3239, 0.001143296
    %v3241 = vmul.f32 %v3227, %v3240
    %v3242 = vadd.f32 %v3241, 0.014752088
    %v3243 = vmul.f32 %v3227, %v3242
    %v3244 = vadd.f32 %v3243, 0.112945676
    %v3245 = vmul.f32 %v3227, %v3244
    %v3246 = vadd.f32 %v3245, 0.4994258
    %v3247 = vmul.f32 %v3227, %v3246
    %v3248 = vadd.f32 %v3247, 1.0
    %v3249 = vrcp.pop %v3248
    %v3250 = vmul.f32 %v3248, %v3249
    %v3251 = vsub.f32 1.0, %v3250
    %v3252 = vmul.f32 %v3249, %v3251
    %v3253 = vadd.f32 %v3249, %v3252
    %vm3254 = vweird.f32 %v3248
    %vm3255 = vweird.f32 %v3249
    %vm3256 = vmor %vm3254, %vm3255
    %v3257 = vsel %vm3256, %v3249, %v3253
    %v3258 = vand.u32 2147483647, %v3248
    %vm3259 = vcmp.eq.f32.partialorder %v3258, 8.507059e+37
    %v3260 = vand.u32 %v3248, 2147483648
    %v3261 = vor.u32 1.1754944e-38, %v3260
    %v3262 = vsel %vm3259, %v3261, %v3257
    %v3263 = vmul.f32 %v3238, %v3262
    %v3264 = vmin.f32 %v3263, 1.0
    %v3265 = vmax.f32 %v3264, -1.0
    %v3266 = vmul.f32 %v3021, %v3021
    %v3267 = vmin.f32 16.0, %v3266
    %v3268 = vmul.f32 %v3267, 2.1237322e-06
    %v3269 = vadd.f32 %v3268, 0.00028619796
    %v3270 = vmul.f32 %v3267, %v3269
    %v3271 = vadd.f32 %v3270, 0.0036580483
    %v3272 = vmul.f32 %v3267, %v3271
    %v3273 = vadd.f32 %v3272, 0.05243302
    %v3274 = vmul.f32 %v3267, %v3273
    %v3275 = vadd.f32 %v3274, 0.18741608
    %v3276 = vmul.f32 %v3267, %v3275
    %v3277 = vadd.f32 %v3276, 1.1283791
    %v3278 = vmul.f32 %v3021, %v3277
    %v3279 = vmul.f32 %v3267, 3.8918573e-05
    %v3280 = vadd.f32 %v3279, 0.001143296
    %v3281 = vmul.f32 %v3267, %v3280
    %v3282 = vadd.f32 %v3281, 0.014752088
    %v3283 = vmul.f32 %v3267, %v3282
    %v3284 = vadd.f32 %v3283, 0.112945676
    %v3285 = vmul.f32 %v3267, %v3284
    %v3286 = vadd.f32 %v3285, 0.4994258
    %v3287 = vmul.f32 %v3267, %v3286
    %v3288 = vadd.f32 %v3287, 1.0
    %v3289 = vrcp.pop %v3288
    %v3290 = vmul.f32 %v3288, %v3289
    %v3291 = vsub.f32 1.0, %v3290
    %v3292 = vmul.f32 %v3289, %v3291
    %v3293 = vadd.f32 %v3289, %v3292
    %vm3294 = vweird.f32 %v3288
    %vm3295 = vweird.f32 %v3289
    %vm3296 = vmor %vm3294, %vm3295
    %v3297 = vsel %vm3296, %v3289, %v3293
    %v3298 = vand.u32 2147483647, %v3288
    %vm3299 = vcmp.eq.f32.partialorder %v3298, 8.507059e+37
    %v3300 = vand.u32 %v3288, 2147483648
    %v3301 = vor.u32 1.1754944e-38, %v3300
    %v3302 = vsel %vm3299, %v3301, %v3297
    %v3303 = vmul.f32 %v3278, %v3302
    %v3304 = vmin.f32 %v3303, 1.0
    %v3305 = vmax.f32 %v3304, -1.0
    %v3306 = vmul.f32 %v3022, %v3022
    %v3307 = vmin.f32 16.0, %v3306
    %v3308 = vmul.f32 %v3307, 2.1237322e-06
    %v3309 = vadd.f32 %v3308, 0.00028619796
    %v3310 = vmul.f32 %v3307, %v3309
    %v3311 = vadd.f32 %v3310, 0.0036580483
    %v3312 = vmul.f32 %v3307, %v3311
    %v3313 = vadd.f32 %v3312, 0.05243302
    %v3314 = vmul.f32 %v3307, %v3313
    %v3315 = vadd.f32 %v3314, 0.18741608
    %v3316 = vmul.f32 %v3307, %v3315
    %v3317 = vadd.f32 %v3316, 1.1283791
    %v3318 = vmul.f32 %v3022, %v3317
    %v3319 = vmul.f32 %v3307, 3.8918573e-05
    %v3320 = vadd.f32 %v3319, 0.001143296
    %v3321 = vmul.f32 %v3307, %v3320
    %v3322 = vadd.f32 %v3321, 0.014752088
    %v3323 = vmul.f32 %v3307, %v3322
    %v3324 = vadd.f32 %v3323, 0.112945676
    %v3325 = vmul.f32 %v3307, %v3324
    %v3326 = vadd.f32 %v3325, 0.4994258
    %v3327 = vmul.f32 %v3307, %v3326
    %v3328 = vadd.f32 %v3327, 1.0
    %v3329 = vrcp.pop %v3328
    %v3330 = vmul.f32 %v3328, %v3329
    %v3331 = vsub.f32 1.0, %v3330
    %v3332 = vmul.f32 %v3329, %v3331
    %v3333 = vadd.f32 %v3329, %v3332
    %vm3334 = vweird.f32 %v3328
    %vm3335 = vweird.f32 %v3329
    %vm3336 = vmor %vm3334, %vm3335
    %v3337 = vsel %vm3336, %v3329, %v3333
    %v3338 = vand.u32 2147483647, %v3328
    %vm3339 = vcmp.eq.f32.partialorder %v3338, 8.507059e+37
    %v3340 = vand.u32 %v3328, 2147483648
    %v3341 = vor.u32 1.1754944e-38, %v3340
    %v3342 = vsel %vm3339, %v3341, %v3337
    %v3343 = vmul.f32 %v3318, %v3342
    %v3344 = vmin.f32 %v3343, 1.0
    %v3345 = vmax.f32 %v3344, -1.0
    %v3346 = vmul.f32 %v3023, %v3023
    %v3347 = vmin.f32 16.0, %v3346
    %v3348 = vmul.f32 %v3347, 2.1237322e-06
    %v3349 = vadd.f32 %v3348, 0.00028619796
    %v3350 = vmul.f32 %v3347, %v3349
    %v3351 = vadd.f32 %v3350, 0.0036580483
    %v3352 = vmul.f32 %v3347, %v3351
    %v3353 = vadd.f32 %v3352, 0.05243302
    %v3354 = vmul.f32 %v3347, %v3353
    %v3355 = vadd.f32 %v3354, 0.18741608
    %v3356 = vmul.f32 %v3347, %v3355
    %v3357 = vadd.f32 %v3356, 1.1283791
    %v3358 = vmul.f32 %v3023, %v3357
    %v3359 = vmul.f32 %v3347, 3.8918573e-05
    %v3360 = vadd.f32 %v3359, 0.001143296
    %v3361 = vmul.f32 %v3347, %v3360
    %v3362 = vadd.f32 %v3361, 0.014752088
    %v3363 = vmul.f32 %v3347, %v3362
    %v3364 = vadd.f32 %v3363, 0.112945676
    %v3365 = vmul.f32 %v3347, %v3364
    %v3366 = vadd.f32 %v3365, 0.4994258
    %v3367 = vmul.f32 %v3347, %v3366
    %v3368 = vadd.f32 %v3367, 1.0
    %v3369 = vrcp.pop %v3368
    %v3370 = vmul.f32 %v3368, %v3369
    %v3371 = vsub.f32 1.0, %v3370
    %v3372 = vmul.f32 %v3369, %v3371
    %v3373 = vadd.f32 %v3369, %v3372
    %vm3374 = vweird.f32 %v3368
    %vm3375 = vweird.f32 %v3369
    %vm3376 = vmor %vm3374, %vm3375
    %v3377 = vsel %vm3376, %v3369, %v3373
    %v3378 = vand.u32 2147483647, %v3368
    %vm3379 = vcmp.eq.f32.partialorder %v3378, 8.507059e+37
    %v3380 = vand.u32 %v3368, 2147483648
    %v3381 = vor.u32 1.1754944e-38, %v3380
    %v3382 = vsel %vm3379, %v3381, %v3377
    %v3383 = vmul.f32 %v3358, %v3382
    %v3384 = vmin.f32 %v3383, 1.0
    %v3385 = vmax.f32 %v3384, -1.0
    %v3386 = vmul.f32 %v3024, %v3024
    %v3387 = vmin.f32 16.0, %v3386
    %v3388 = vmul.f32 %v3387, 2.1237322e-06
    %v3389 = vadd.f32 %v3388, 0.00028619796
    %v3390 = vmul.f32 %v3387, %v3389
    %v3391 = vadd.f32 %v3390, 0.0036580483
    %v3392 = vmul.f32 %v3387, %v3391
    %v3393 = vadd.f32 %v3392, 0.05243302
    %v3394 = vmul.f32 %v3387, %v3393
    %v3395 = vadd.f32 %v3394, 0.18741608
    %v3396 = vmul.f32 %v3387, %v3395
    %v3397 = vadd.f32 %v3396, 1.1283791
    %v3398 = vmul.f32 %v3024, %v3397
    %v3399 = vmul.f32 %v3387, 3.8918573e-05
    %v3400 = vadd.f32 %v3399, 0.001143296
    %v3401 = vmul.f32 %v3387, %v3400
    %v3402 = vadd.f32 %v3401, 0.014752088
    %v3403 = vmul.f32 %v3387, %v3402
    %v3404 = vadd.f32 %v3403, 0.112945676
    %v3405 = vmul.f32 %v3387, %v3404
    %v3406 = vadd.f32 %v3405, 0.4994258
    %v3407 = vmul.f32 %v3387, %v3406
    %v3408 = vadd.f32 %v3407, 1.0
    %v3409 = vrcp.pop %v3408
    %v3410 = vmul.f32 %v3408, %v3409
    %v3411 = vsub.f32 1.0, %v3410
    %v3412 = vmul.f32 %v3409, %v3411
    %v3413 = vadd.f32 %v3409, %v3412
    %vm3414 = vweird.f32 %v3408
    %vm3415 = vweird.f32 %v3409
    %vm3416 = vmor %vm3414, %vm3415
    %v3417 = vsel %vm3416, %v3409, %v3413
    %v3418 = vand.u32 2147483647, %v3408
    %vm3419 = vcmp.eq.f32.partialorder %v3418, 8.507059e+37
    %v3420 = vand.u32 %v3408, 2147483648
    %v3421 = vor.u32 1.1754944e-38, %v3420
    %v3422 = vsel %vm3419, %v3421, %v3417
    %v3423 = vmul.f32 %v3398, %v3422
    %v3424 = vmin.f32 %v3423, 1.0
    %v3425 = vmax.f32 %v3424, -1.0
    %v3426 = vmul.f32 %v3025, %v3025
    %v3427 = vmin.f32 16.0, %v3426
    %v3428 = vmul.f32 %v3427, 2.1237322e-06
    %v3429 = vadd.f32 %v3428, 0.00028619796
    %v3430 = vmul.f32 %v3427, %v3429
    %v3431 = vadd.f32 %v3430, 0.0036580483
    %v3432 = vmul.f32 %v3427, %v3431
    %v3433 = vadd.f32 %v3432, 0.05243302
    %v3434 = vmul.f32 %v3427, %v3433
    %v3435 = vadd.f32 %v3434, 0.18741608
    %v3436 = vmul.f32 %v3427, %v3435
    %v3437 = vadd.f32 %v3436, 1.1283791
    %v3438 = vmul.f32 %v3025, %v3437
    %v3439 = vmul.f32 %v3427, 3.8918573e-05
    %v3440 = vadd.f32 %v3439, 0.001143296
    %v3441 = vmul.f32 %v3427, %v3440
    %v3442 = vadd.f32 %v3441, 0.014752088
    %v3443 = vmul.f32 %v3427, %v3442
    %v3444 = vadd.f32 %v3443, 0.112945676
    %v3445 = vmul.f32 %v3427, %v3444
    %v3446 = vadd.f32 %v3445, 0.4994258
    %v3447 = vmul.f32 %v3427, %v3446
    %v3448 = vadd.f32 %v3447, 1.0
    %v3449 = vrcp.pop %v3448
    %v3450 = vmul.f32 %v3448, %v3449
    %v3451 = vsub.f32 1.0, %v3450
    %v3452 = vmul.f32 %v3449, %v3451
    %v3453 = vadd.f32 %v3449, %v3452
    %vm3454 = vweird.f32 %v3448
    %vm3455 = vweird.f32 %v3449
    %vm3456 = vmor %vm3454, %vm3455
    %v3457 = vsel %vm3456, %v3449, %v3453
    %v3458 = vand.u32 2147483647, %v3448
    %vm3459 = vcmp.eq.f32.partialorder %v3458, 8.507059e+37
    %v3460 = vand.u32 %v3448, 2147483648
    %v3461 = vor.u32 1.1754944e-38, %v3460
    %v3462 = vsel %vm3459, %v3461, %v3457
    %v3463 = vmul.f32 %v3438, %v3462
    %v3464 = vmin.f32 %v3463, 1.0
    %v3465 = vmax.f32 %v3464, -1.0
    %v3466 = vmul.f32 %v3026, %v3026
    %v3467 = vmin.f32 16.0, %v3466
    %v3468 = vmul.f32 %v3467, 2.1237322e-06
    %v3469 = vadd.f32 %v3468, 0.00028619796
    %v3470 = vmul.f32 %v3467, %v3469
    %v3471 = vadd.f32 %v3470, 0.0036580483
    %v3472 = vmul.f32 %v3467, %v3471
    %v3473 = vadd.f32 %v3472, 0.05243302
    %v3474 = vmul.f32 %v3467, %v3473
    %v3475 = vadd.f32 %v3474, 0.18741608
    %v3476 = vmul.f32 %v3467, %v3475
    %v3477 = vadd.f32 %v3476, 1.1283791
    %v3478 = vmul.f32 %v3026, %v3477
    %v3479 = vmul.f32 %v3467, 3.8918573e-05
    %v3480 = vadd.f32 %v3479, 0.001143296
    %v3481 = vmul.f32 %v3467, %v3480
    %v3482 = vadd.f32 %v3481, 0.014752088
    %v3483 = vmul.f32 %v3467, %v3482
    %v3484 = vadd.f32 %v3483, 0.112945676
    %v3485 = vmul.f32 %v3467, %v3484
    %v3486 = vadd.f32 %v3485, 0.4994258
    %v3487 = vmul.f32 %v3467, %v3486
    %v3488 = vadd.f32 %v3487, 1.0
    %v3489 = vrcp.pop %v3488
    %v3490 = vmul.f32 %v3488, %v3489
    %v3491 = vsub.f32 1.0, %v3490
    %v3492 = vmul.f32 %v3489, %v3491
    %v3493 = vadd.f32 %v3489, %v3492
    %vm3494 = vweird.f32 %v3488
    %vm3495 = vweird.f32 %v3489
    %vm3496 = vmor %vm3494, %vm3495
    %v3497 = vsel %vm3496, %v3489, %v3493
    %v3498 = vand.u32 2147483647, %v3488
    %vm3499 = vcmp.eq.f32.partialorder %v3498, 8.507059e+37
    %v3500 = vand.u32 %v3488, 2147483648
    %v3501 = vor.u32 1.1754944e-38, %v3500
    %v3502 = vsel %vm3499, %v3501, %v3497
    %v3503 = vmul.f32 %v3478, %v3502
    %v3504 = vmin.f32 %v3503, 1.0
    %v3505 = vmax.f32 %v3504, -1.0
    %v3506 = vmul.f32 %v3027, %v3027
    %v3507 = vmin.f32 16.0, %v3506
    %v3508 = vmul.f32 %v3507, 2.1237322e-06
    %v3509 = vadd.f32 %v3508, 0.00028619796
    %v3510 = vmul.f32 %v3507, %v3509
    %v3511 = vadd.f32 %v3510, 0.0036580483
    %v3512 = vmul.f32 %v3507, %v3511
    %v3513 = vadd.f32 %v3512, 0.05243302
    %v3514 = vmul.f32 %v3507, %v3513
    %v3515 = vadd.f32 %v3514, 0.18741608
    %v3516 = vmul.f32 %v3507, %v3515
    %v3517 = vadd.f32 %v3516, 1.1283791
    %v3518 = vmul.f32 %v3027, %v3517
    %v3519 = vmul.f32 %v3507, 3.8918573e-05
    %v3520 = vadd.f32 %v3519, 0.001143296
    %v3521 = vmul.f32 %v3507, %v3520
    %v3522 = vadd.f32 %v3521, 0.014752088
    %v3523 = vmul.f32 %v3507, %v3522
    %v3524 = vadd.f32 %v3523, 0.112945676
    %v3525 = vmul.f32 %v3507, %v3524
    %v3526 = vadd.f32 %v3525, 0.4994258
    %v3527 = vmul.f32 %v3507, %v3526
    %v3528 = vadd.f32 %v3527, 1.0
    %v3529 = vrcp.pop %v3528
    %v3530 = vmul.f32 %v3528, %v3529
    %v3531 = vsub.f32 1.0, %v3530
    %v3532 = vmul.f32 %v3529, %v3531
    %v3533 = vadd.f32 %v3529, %v3532
    %vm3534 = vweird.f32 %v3528
    %vm3535 = vweird.f32 %v3529
    %vm3536 = vmor %vm3534, %vm3535
    %v3537 = vsel %vm3536, %v3529, %v3533
    %v3538 = vand.u32 2147483647, %v3528
    %vm3539 = vcmp.eq.f32.partialorder %v3538, 8.507059e+37
    %v3540 = vand.u32 %v3528, 2147483648
    %v3541 = vor.u32 1.1754944e-38, %v3540
    %v3542 = vsel %vm3539, %v3541, %v3537
    %v3543 = vmul.f32 %v3518, %v3542
    %v3544 = vmin.f32 %v3543, 1.0
    %v3545 = vmax.f32 %v3544, -1.0
    %v3546 = vmul.f32 %v3028, %v3028
    %v3547 = vmin.f32 16.0, %v3546
    %v3548 = vmul.f32 %v3547, 2.1237322e-06
    %v3549 = vadd.f32 %v3548, 0.00028619796
    %v3550 = vmul.f32 %v3547, %v3549
    %v3551 = vadd.f32 %v3550, 0.0036580483
    %v3552 = vmul.f32 %v3547, %v3551
    %v3553 = vadd.f32 %v3552, 0.05243302
    %v3554 = vmul.f32 %v3547, %v3553
    %v3555 = vadd.f32 %v3554, 0.18741608
    %v3556 = vmul.f32 %v3547, %v3555
    %v3557 = vadd.f32 %v3556, 1.1283791
    %v3558 = vmul.f32 %v3028, %v3557
    %v3559 = vmul.f32 %v3547, 3.8918573e-05
    %v3560 = vadd.f32 %v3559, 0.001143296
    %v3561 = vmul.f32 %v3547, %v3560
    %v3562 = vadd.f32 %v3561, 0.014752088
    %v3563 = vmul.f32 %v3547, %v3562
    %v3564 = vadd.f32 %v3563, 0.112945676
    %v3565 = vmul.f32 %v3547, %v3564
    %v3566 = vadd.f32 %v3565, 0.4994258
    %v3567 = vmul.f32 %v3547, %v3566
    %v3568 = vadd.f32 %v3567, 1.0
    %v3569 = vrcp.pop %v3568
    %v3570 = vmul.f32 %v3568, %v3569
    %v3571 = vsub.f32 1.0, %v3570
    %v3572 = vmul.f32 %v3569, %v3571
    %v3573 = vadd.f32 %v3569, %v3572
    %vm3574 = vweird.f32 %v3568
    %vm3575 = vweird.f32 %v3569
    %vm3576 = vmor %vm3574, %vm3575
    %v3577 = vsel %vm3576, %v3569, %v3573
    %v3578 = vand.u32 2147483647, %v3568
    %vm3579 = vcmp.eq.f32.partialorder %v3578, 8.507059e+37
    %v3580 = vand.u32 %v3568, 2147483648
    %v3581 = vor.u32 1.1754944e-38, %v3580
    %v3582 = vsel %vm3579, %v3581, %v3577
    %v3583 = vmul.f32 %v3558, %v3582
    %v3584 = vmin.f32 %v3583, 1.0
    %v3585 = vmax.f32 %v3584, -1.0
    %v3586 = vmul.f32 %v3029, %v3029
    %v3587 = vmin.f32 16.0, %v3586
    %v3588 = vmul.f32 %v3587, 2.1237322e-06
    %v3589 = vadd.f32 %v3588, 0.00028619796
    %v3590 = vmul.f32 %v3587, %v3589
    %v3591 = vadd.f32 %v3590, 0.0036580483
    %v3592 = vmul.f32 %v3587, %v3591
    %v3593 = vadd.f32 %v3592, 0.05243302
    %v3594 = vmul.f32 %v3587, %v3593
    %v3595 = vadd.f32 %v3594, 0.18741608
    %v3596 = vmul.f32 %v3587, %v3595
    %v3597 = vadd.f32 %v3596, 1.1283791
    %v3598 = vmul.f32 %v3029, %v3597
    %v3599 = vmul.f32 %v3587, 3.8918573e-05
    %v3600 = vadd.f32 %v3599, 0.001143296
    %v3601 = vmul.f32 %v3587, %v3600
    %v3602 = vadd.f32 %v3601, 0.014752088
    %v3603 = vmul.f32 %v3587, %v3602
    %v3604 = vadd.f32 %v3603, 0.112945676
    %v3605 = vmul.f32 %v3587, %v3604
    %v3606 = vadd.f32 %v3605, 0.4994258
    %v3607 = vmul.f32 %v3587, %v3606
    %v3608 = vadd.f32 %v3607, 1.0
    %v3609 = vrcp.pop %v3608
    %v3610 = vmul.f32 %v3608, %v3609
    %v3611 = vsub.f32 1.0, %v3610
    %v3612 = vmul.f32 %v3609, %v3611
    %v3613 = vadd.f32 %v3609, %v3612
    %vm3614 = vweird.f32 %v3608
    %vm3615 = vweird.f32 %v3609
    %vm3616 = vmor %vm3614, %vm3615
    %v3617 = vsel %vm3616, %v3609, %v3613
    %v3618 = vand.u32 2147483647, %v3608
    %vm3619 = vcmp.eq.f32.partialorder %v3618, 8.507059e+37
    %v3620 = vand.u32 %v3608, 2147483648
    %v3621 = vor.u32 1.1754944e-38, %v3620
    %v3622 = vsel %vm3619, %v3621, %v3617
    %v3623 = vmul.f32 %v3598, %v3622
    %v3624 = vmin.f32 %v3623, 1.0
    %v3625 = vmax.f32 %v3624, -1.0
    %v3626 = vmul.f32 %v3030, %v3030
    %v3627 = vmin.f32 16.0, %v3626
    %v3628 = vmul.f32 %v3627, 2.1237322e-06
    %v3629 = vadd.f32 %v3628, 0.00028619796
    %v3630 = vmul.f32 %v3627, %v3629
    %v3631 = vadd.f32 %v3630, 0.0036580483
    %v3632 = vmul.f32 %v3627, %v3631
    %v3633 = vadd.f32 %v3632, 0.05243302
    %v3634 = vmul.f32 %v3627, %v3633
    %v3635 = vadd.f32 %v3634, 0.18741608
    %v3636 = vmul.f32 %v3627, %v3635
    %v3637 = vadd.f32 %v3636, 1.1283791
    %v3638 = vmul.f32 %v3030, %v3637
    %v3639 = vmul.f32 %v3627, 3.8918573e-05
    %v3640 = vadd.f32 %v3639, 0.001143296
    %v3641 = vmul.f32 %v3627, %v3640
    %v3642 = vadd.f32 %v3641, 0.014752088
    %v3643 = vmul.f32 %v3627, %v3642
    %v3644 = vadd.f32 %v3643, 0.112945676
    %v3645 = vmul.f32 %v3627, %v3644
    %v3646 = vadd.f32 %v3645, 0.4994258
    %v3647 = vmul.f32 %v3627, %v3646
    %v3648 = vadd.f32 %v3647, 1.0
    %v3649 = vrcp.pop %v3648
    %v3650 = vmul.f32 %v3648, %v3649
    %v3651 = vsub.f32 1.0, %v3650
    %v3652 = vmul.f32 %v3649, %v3651
    %v3653 = vadd.f32 %v3649, %v3652
    %vm3654 = vweird.f32 %v3648
    %vm3655 = vweird.f32 %v3649
    %vm3656 = vmor %vm3654, %vm3655
    %v3657 = vsel %vm3656, %v3649, %v3653
    %v3658 = vand.u32 2147483647, %v3648
    %vm3659 = vcmp.eq.f32.partialorder %v3658, 8.507059e+37
    %v3660 = vand.u32 %v3648, 2147483648
    %v3661 = vor.u32 1.1754944e-38, %v3660
    %v3662 = vsel %vm3659, %v3661, %v3657
    %v3663 = vmul.f32 %v3638, %v3662
    %v3664 = vmin.f32 %v3663, 1.0
    %v3665 = vmax.f32 %v3664, -1.0
    %v3666 = vmul.f32 %v3031, %v3031
    %v3667 = vmin.f32 16.0, %v3666
    %v3668 = vmul.f32 %v3667, 2.1237322e-06
    %v3669 = vadd.f32 %v3668, 0.00028619796
    %v3670 = vmul.f32 %v3667, %v3669
    %v3671 = vadd.f32 %v3670, 0.0036580483
    %v3672 = vmul.f32 %v3667, %v3671
    %v3673 = vadd.f32 %v3672, 0.05243302
    %v3674 = vmul.f32 %v3667, %v3673
    %v3675 = vadd.f32 %v3674, 0.18741608
    %v3676 = vmul.f32 %v3667, %v3675
    %v3677 = vadd.f32 %v3676, 1.1283791
    %v3678 = vmul.f32 %v3031, %v3677
    %v3679 = vmul.f32 %v3667, 3.8918573e-05
    %v3680 = vadd.f32 %v3679, 0.001143296
    %v3681 = vmul.f32 %v3667, %v3680
    %v3682 = vadd.f32 %v3681, 0.014752088
    %v3683 = vmul.f32 %v3667, %v3682
    %v3684 = vadd.f32 %v3683, 0.112945676
    %v3685 = vmul.f32 %v3667, %v3684
    %v3686 = vadd.f32 %v3685, 0.4994258
    %v3687 = vmul.f32 %v3667, %v3686
    %v3688 = vadd.f32 %v3687, 1.0
    %v3689 = vrcp.pop %v3688
    %v3690 = vmul.f32 %v3688, %v3689
    %v3691 = vsub.f32 1.0, %v3690
    %v3692 = vmul.f32 %v3689, %v3691
    %v3693 = vadd.f32 %v3689, %v3692
    %vm3694 = vweird.f32 %v3688
    %vm3695 = vweird.f32 %v3689
    %vm3696 = vmor %vm3694, %vm3695
    %v3697 = vsel %vm3696, %v3689, %v3693
    %v3698 = vand.u32 2147483647, %v3688
    %vm3699 = vcmp.eq.f32.partialorder %v3698, 8.507059e+37
    %v3700 = vand.u32 %v3688, 2147483648
    %v3701 = vor.u32 1.1754944e-38, %v3700
    %v3702 = vsel %vm3699, %v3701, %v3697
    %v3703 = vmul.f32 %v3678, %v3702
    %v3704 = vmin.f32 %v3703, 1.0
    %v3705 = vmax.f32 %v3704, -1.0
    %v3706 = vmul.f32 %v3032, %v3032
    %v3707 = vmin.f32 16.0, %v3706
    %v3708 = vmul.f32 %v3707, 2.1237322e-06
    %v3709 = vadd.f32 %v3708, 0.00028619796
    %v3710 = vmul.f32 %v3707, %v3709
    %v3711 = vadd.f32 %v3710, 0.0036580483
    %v3712 = vmul.f32 %v3707, %v3711
    %v3713 = vadd.f32 %v3712, 0.05243302
    %v3714 = vmul.f32 %v3707, %v3713
    %v3715 = vadd.f32 %v3714, 0.18741608
    %v3716 = vmul.f32 %v3707, %v3715
    %v3717 = vadd.f32 %v3716, 1.1283791
    %v3718 = vmul.f32 %v3032, %v3717
    %v3719 = vmul.f32 %v3707, 3.8918573e-05
    %v3720 = vadd.f32 %v3719, 0.001143296
    %v3721 = vmul.f32 %v3707, %v3720
    %v3722 = vadd.f32 %v3721, 0.014752088
    %v3723 = vmul.f32 %v3707, %v3722
    %v3724 = vadd.f32 %v3723, 0.112945676
    %v3725 = vmul.f32 %v3707, %v3724
    %v3726 = vadd.f32 %v3725, 0.4994258
    %v3727 = vmul.f32 %v3707, %v3726
    %v3728 = vadd.f32 %v3727, 1.0
    %v3729 = vrcp.pop %v3728
    %v3730 = vmul.f32 %v3728, %v3729
    %v3731 = vsub.f32 1.0, %v3730
    %v3732 = vmul.f32 %v3729, %v3731
    %v3733 = vadd.f32 %v3729, %v3732
    %vm3734 = vweird.f32 %v3728
    %vm3735 = vweird.f32 %v3729
    %vm3736 = vmor %vm3734, %vm3735
    %v3737 = vsel %vm3736, %v3729, %v3733
    %v3738 = vand.u32 2147483647, %v3728
    %vm3739 = vcmp.eq.f32.partialorder %v3738, 8.507059e+37
    %v3740 = vand.u32 %v3728, 2147483648
    %v3741 = vor.u32 1.1754944e-38, %v3740
    %v3742 = vsel %vm3739, %v3741, %v3737
    %v3743 = vmul.f32 %v3718, %v3742
    %v3744 = vmin.f32 %v3743, 1.0
    %v3745 = vmax.f32 %v3744, -1.0
    %v3746 = vmul.f32 %v3033, %v3033
    %v3747 = vmin.f32 16.0, %v3746
    %v3748 = vmul.f32 %v3747, 2.1237322e-06
    %v3749 = vadd.f32 %v3748, 0.00028619796
    %v3750 = vmul.f32 %v3747, %v3749
    %v3751 = vadd.f32 %v3750, 0.0036580483
    %v3752 = vmul.f32 %v3747, %v3751
    %v3753 = vadd.f32 %v3752, 0.05243302
    %v3754 = vmul.f32 %v3747, %v3753
    %v3755 = vadd.f32 %v3754, 0.18741608
    %v3756 = vmul.f32 %v3747, %v3755
    %v3757 = vadd.f32 %v3756, 1.1283791
    %v3758 = vmul.f32 %v3033, %v3757
    %v3759 = vmul.f32 %v3747, 3.8918573e-05
    %v3760 = vadd.f32 %v3759, 0.001143296
    %v3761 = vmul.f32 %v3747, %v3760
    %v3762 = vadd.f32 %v3761, 0.014752088
    %v3763 = vmul.f32 %v3747, %v3762
    %v3764 = vadd.f32 %v3763, 0.112945676
    %v3765 = vmul.f32 %v3747, %v3764
    %v3766 = vadd.f32 %v3765, 0.4994258
    %v3767 = vmul.f32 %v3747, %v3766
    %v3768 = vadd.f32 %v3767, 1.0
    %v3769 = vrcp.pop %v3768
    %v3770 = vmul.f32 %v3768, %v3769
    %v3771 = vsub.f32 1.0, %v3770
    %v3772 = vmul.f32 %v3769, %v3771
    %v3773 = vadd.f32 %v3769, %v3772
    %vm3774 = vweird.f32 %v3768
    %vm3775 = vweird.f32 %v3769
    %vm3776 = vmor %vm3774, %vm3775
    %v3777 = vsel %vm3776, %v3769, %v3773
    %v3778 = vand.u32 2147483647, %v3768
    %vm3779 = vcmp.eq.f32.partialorder %v3778, 8.507059e+37
    %v3780 = vand.u32 %v3768, 2147483648
    %v3781 = vor.u32 1.1754944e-38, %v3780
    %v3782 = vsel %vm3779, %v3781, %v3777
    %v3783 = vmul.f32 %v3758, %v3782
    %v3784 = vmin.f32 %v3783, 1.0
    %v3785 = vmax.f32 %v3784, -1.0
    %v3786 = vmul.f32 %v3034, %v3034
    %v3787 = vmin.f32 16.0, %v3786
    %v3788 = vmul.f32 %v3787, 2.1237322e-06
    %v3789 = vadd.f32 %v3788, 0.00028619796
    %v3790 = vmul.f32 %v3787, %v3789
    %v3791 = vadd.f32 %v3790, 0.0036580483
    %v3792 = vmul.f32 %v3787, %v3791
    %v3793 = vadd.f32 %v3792, 0.05243302
    %v3794 = vmul.f32 %v3787, %v3793
    %v3795 = vadd.f32 %v3794, 0.18741608
    %v3796 = vmul.f32 %v3787, %v3795
    %v3797 = vadd.f32 %v3796, 1.1283791
    %v3798 = vmul.f32 %v3034, %v3797
    %v3799 = vmul.f32 %v3787, 3.8918573e-05
    %v3800 = vadd.f32 %v3799, 0.001143296
    %v3801 = vmul.f32 %v3787, %v3800
    %v3802 = vadd.f32 %v3801, 0.014752088
    %v3803 = vmul.f32 %v3787, %v3802
    %v3804 = vadd.f32 %v3803, 0.112945676
    %v3805 = vmul.f32 %v3787, %v3804
    %v3806 = vadd.f32 %v3805, 0.4994258
    %v3807 = vmul.f32 %v3787, %v3806
    %v3808 = vadd.f32 %v3807, 1.0
    %v3809 = vrcp.pop %v3808
    %v3810 = vmul.f32 %v3808, %v3809
    %v3811 = vsub.f32 1.0, %v3810
    %v3812 = vmul.f32 %v3809, %v3811
    %v3813 = vadd.f32 %v3809, %v3812
    %vm3814 = vweird.f32 %v3808
    %vm3815 = vweird.f32 %v3809
    %vm3816 = vmor %vm3814, %vm3815
    %v3817 = vsel %vm3816, %v3809, %v3813
    %v3818 = vand.u32 2147483647, %v3808
    %vm3819 = vcmp.eq.f32.partialorder %v3818, 8.507059e+37
    %v3820 = vand.u32 %v3808, 2147483648
    %v3821 = vor.u32 1.1754944e-38, %v3820
    %v3822 = vsel %vm3819, %v3821, %v3817
    %v3823 = vmul.f32 %v3798, %v3822
    %v3824 = vmin.f32 %v3823, 1.0
    %v3825 = vmax.f32 %v3824, -1.0
    %v3826 = vmul.f32 %v3035, %v3035
    %v3827 = vmin.f32 16.0, %v3826
    %v3828 = vmul.f32 %v3827, 2.1237322e-06
    %v3829 = vadd.f32 %v3828, 0.00028619796
    %v3830 = vmul.f32 %v3827, %v3829
    %v3831 = vadd.f32 %v3830, 0.0036580483
    %v3832 = vmul.f32 %v3827, %v3831
    %v3833 = vadd.f32 %v3832, 0.05243302
    %v3834 = vmul.f32 %v3827, %v3833
    %v3835 = vadd.f32 %v3834, 0.18741608
    %v3836 = vmul.f32 %v3827, %v3835
    %v3837 = vadd.f32 %v3836, 1.1283791
    %v3838 = vmul.f32 %v3035, %v3837
    %v3839 = vmul.f32 %v3827, 3.8918573e-05
    %v3840 = vadd.f32 %v3839, 0.001143296
    %v3841 = vmul.f32 %v3827, %v3840
    %v3842 = vadd.f32 %v3841, 0.014752088
    %v3843 = vmul.f32 %v3827, %v3842
    %v3844 = vadd.f32 %v3843, 0.112945676
    %v3845 = vmul.f32 %v3827, %v3844
    %v3846 = vadd.f32 %v3845, 0.4994258
    %v3847 = vmul.f32 %v3827, %v3846
    %v3848 = vadd.f32 %v3847, 1.0
    %v3849 = vrcp.pop %v3848
    %v3850 = vmul.f32 %v3848, %v3849
    %v3851 = vsub.f32 1.0, %v3850
    %v3852 = vmul.f32 %v3849, %v3851
    %v3853 = vadd.f32 %v3849, %v3852
    %vm3854 = vweird.f32 %v3848
    %vm3855 = vweird.f32 %v3849
    %vm3856 = vmor %vm3854, %vm3855
    %v3857 = vsel %vm3856, %v3849, %v3853
    %v3858 = vand.u32 2147483647, %v3848
    %vm3859 = vcmp.eq.f32.partialorder %v3858, 8.507059e+37
    %v3860 = vand.u32 %v3848, 2147483648
    %v3861 = vor.u32 1.1754944e-38, %v3860
    %v3862 = vsel %vm3859, %v3861, %v3857
    %v3863 = vmul.f32 %v3838, %v3862
    %v3864 = vmin.f32 %v3863, 1.0
    %v3865 = vmax.f32 %v3864, -1.0
    %v3866 = vmul.f32 %v3036, %v3036
    %v3867 = vmin.f32 16.0, %v3866
    %v3868 = vmul.f32 %v3867, 2.1237322e-06
    %v3869 = vadd.f32 %v3868, 0.00028619796
    %v3870 = vmul.f32 %v3867, %v3869
    %v3871 = vadd.f32 %v3870, 0.0036580483
    %v3872 = vmul.f32 %v3867, %v3871
    %v3873 = vadd.f32 %v3872, 0.05243302
    %v3874 = vmul.f32 %v3867, %v3873
    %v3875 = vadd.f32 %v3874, 0.18741608
    %v3876 = vmul.f32 %v3867, %v3875
    %v3877 = vadd.f32 %v3876, 1.1283791
    %v3878 = vmul.f32 %v3036, %v3877
    %v3879 = vmul.f32 %v3867, 3.8918573e-05
    %v3880 = vadd.f32 %v3879, 0.001143296
    %v3881 = vmul.f32 %v3867, %v3880
    %v3882 = vadd.f32 %v3881, 0.014752088
    %v3883 = vmul.f32 %v3867, %v3882
    %v3884 = vadd.f32 %v3883, 0.112945676
    %v3885 = vmul.f32 %v3867, %v3884
    %v3886 = vadd.f32 %v3885, 0.4994258
    %v3887 = vmul.f32 %v3867, %v3886
    %v3888 = vadd.f32 %v3887, 1.0
    %v3889 = vrcp.pop %v3888
    %v3890 = vmul.f32 %v3888, %v3889
    %v3891 = vsub.f32 1.0, %v3890
    %v3892 = vmul.f32 %v3889, %v3891
    %v3893 = vadd.f32 %v3889, %v3892
    %vm3894 = vweird.f32 %v3888
    %vm3895 = vweird.f32 %v3889
    %vm3896 = vmor %vm3894, %vm3895
    %v3897 = vsel %vm3896, %v3889, %v3893
    %v3898 = vand.u32 2147483647, %v3888
    %vm3899 = vcmp.eq.f32.partialorder %v3898, 8.507059e+37
    %v3900 = vand.u32 %v3888, 2147483648
    %v3901 = vor.u32 1.1754944e-38, %v3900
    %v3902 = vsel %vm3899, %v3901, %v3897
    %v3903 = vmul.f32 %v3878, %v3902
    %v3904 = vmin.f32 %v3903, 1.0
    %v3905 = vmax.f32 %v3904, -1.0
    %v3906 = vmul.f32 %v3037, %v3037
    %v3907 = vmin.f32 16.0, %v3906
    %v3908 = vmul.f32 %v3907, 2.1237322e-06
    %v3909 = vadd.f32 %v3908, 0.00028619796
    %v3910 = vmul.f32 %v3907, %v3909
    %v3911 = vadd.f32 %v3910, 0.0036580483
    %v3912 = vmul.f32 %v3907, %v3911
    %v3913 = vadd.f32 %v3912, 0.05243302
    %v3914 = vmul.f32 %v3907, %v3913
    %v3915 = vadd.f32 %v3914, 0.18741608
    %v3916 = vmul.f32 %v3907, %v3915
    %v3917 = vadd.f32 %v3916, 1.1283791
    %v3918 = vmul.f32 %v3037, %v3917
    %v3919 = vmul.f32 %v3907, 3.8918573e-05
    %v3920 = vadd.f32 %v3919, 0.001143296
    %v3921 = vmul.f32 %v3907, %v3920
    %v3922 = vadd.f32 %v3921, 0.014752088
    %v3923 = vmul.f32 %v3907, %v3922
    %v3924 = vadd.f32 %v3923, 0.112945676
    %v3925 = vmul.f32 %v3907, %v3924
    %v3926 = vadd.f32 %v3925, 0.4994258
    %v3927 = vmul.f32 %v3907, %v3926
    %v3928 = vadd.f32 %v3927, 1.0
    %v3929 = vrcp.pop %v3928
    %v3930 = vmul.f32 %v3928, %v3929
    %v3931 = vsub.f32 1.0, %v3930
    %v3932 = vmul.f32 %v3929, %v3931
    %v3933 = vadd.f32 %v3929, %v3932
    %vm3934 = vweird.f32 %v3928
    %vm3935 = vweird.f32 %v3929
    %vm3936 = vmor %vm3934, %vm3935
    %v3937 = vsel %vm3936, %v3929, %v3933
    %v3938 = vand.u32 2147483647, %v3928
    %vm3939 = vcmp.eq.f32.partialorder %v3938, 8.507059e+37
    %v3940 = vand.u32 %v3928, 2147483648
    %v3941 = vor.u32 1.1754944e-38, %v3940
    %v3942 = vsel %vm3939, %v3941, %v3937
    %v3943 = vmul.f32 %v3918, %v3942
    %v3944 = vmin.f32 %v3943, 1.0
    %v3945 = vmax.f32 %v3944, -1.0
    %v3946 = vmul.f32 %v3038, %v3038
    %v3947 = vmin.f32 16.0, %v3946
    %v3948 = vmul.f32 %v3947, 2.1237322e-06
    %v3949 = vadd.f32 %v3948, 0.00028619796
    %v3950 = vmul.f32 %v3947, %v3949
    %v3951 = vadd.f32 %v3950, 0.0036580483
    %v3952 = vmul.f32 %v3947, %v3951
    %v3953 = vadd.f32 %v3952, 0.05243302
    %v3954 = vmul.f32 %v3947, %v3953
    %v3955 = vadd.f32 %v3954, 0.18741608
    %v3956 = vmul.f32 %v3947, %v3955
    %v3957 = vadd.f32 %v3956, 1.1283791
    %v3958 = vmul.f32 %v3038, %v3957
    %v3959 = vmul.f32 %v3947, 3.8918573e-05
    %v3960 = vadd.f32 %v3959, 0.001143296
    %v3961 = vmul.f32 %v3947, %v3960
    %v3962 = vadd.f32 %v3961, 0.014752088
    %v3963 = vmul.f32 %v3947, %v3962
    %v3964 = vadd.f32 %v3963, 0.112945676
    %v3965 = vmul.f32 %v3947, %v3964
    %v3966 = vadd.f32 %v3965, 0.4994258
    %v3967 = vmul.f32 %v3947, %v3966
    %v3968 = vadd.f32 %v3967, 1.0
    %v3969 = vrcp.pop %v3968
    %v3970 = vmul.f32 %v3968, %v3969
    %v3971 = vsub.f32 1.0, %v3970
    %v3972 = vmul.f32 %v3969, %v3971
    %v3973 = vadd.f32 %v3969, %v3972
    %vm3974 = vweird.f32 %v3968
    %vm3975 = vweird.f32 %v3969
    %vm3976 = vmor %vm3974, %vm3975
    %v3977 = vsel %vm3976, %v3969, %v3973
    %v3978 = vand.u32 2147483647, %v3968
    %vm3979 = vcmp.eq.f32.partialorder %v3978, 8.507059e+37
    %v3980 = vand.u32 %v3968, 2147483648
    %v3981 = vor.u32 1.1754944e-38, %v3980
    %v3982 = vsel %vm3979, %v3981, %v3977
    %v3983 = vmul.f32 %v3958, %v3982
    %v3984 = vmin.f32 %v3983, 1.0
    %v3985 = vmax.f32 %v3984, -1.0
    %v3986 = vmul.f32 %v3039, %v3039
    %v3987 = vmin.f32 16.0, %v3986
    %v3988 = vmul.f32 %v3987, 2.1237322e-06
    %v3989 = vadd.f32 %v3988, 0.00028619796
    %v3990 = vmul.f32 %v3987, %v3989
    %v3991 = vadd.f32 %v3990, 0.0036580483
    %v3992 = vmul.f32 %v3987, %v3991
    %v3993 = vadd.f32 %v3992, 0.05243302
    %v3994 = vmul.f32 %v3987, %v3993
    %v3995 = vadd.f32 %v3994, 0.18741608
    %v3996 = vmul.f32 %v3987, %v3995
    %v3997 = vadd.f32 %v3996, 1.1283791
    %v3998 = vmul.f32 %v3039, %v3997
    %v3999 = vmul.f32 %v3987, 3.8918573e-05
    %v4000 = vadd.f32 %v3999, 0.001143296
    %v4001 = vmul.f32 %v3987, %v4000
    %v4002 = vadd.f32 %v4001, 0.014752088
    %v4003 = vmul.f32 %v3987, %v4002
    %v4004 = vadd.f32 %v4003, 0.112945676
    %v4005 = vmul.f32 %v3987, %v4004
    %v4006 = vadd.f32 %v4005, 0.4994258
    %v4007 = vmul.f32 %v3987, %v4006
    %v4008 = vadd.f32 %v4007, 1.0
    %v4009 = vrcp.pop %v4008
    %v4010 = vmul.f32 %v4008, %v4009
    %v4011 = vsub.f32 1.0, %v4010
    %v4012 = vmul.f32 %v4009, %v4011
    %v4013 = vadd.f32 %v4009, %v4012
    %vm4014 = vweird.f32 %v4008
    %vm4015 = vweird.f32 %v4009
    %vm4016 = vmor %vm4014, %vm4015
    %v4017 = vsel %vm4016, %v4009, %v4013
    %v4018 = vand.u32 2147483647, %v4008
    %vm4019 = vcmp.eq.f32.partialorder %v4018, 8.507059e+37
    %v4020 = vand.u32 %v4008, 2147483648
    %v4021 = vor.u32 1.1754944e-38, %v4020
    %v4022 = vsel %vm4019, %v4021, %v4017
    %v4023 = vmul.f32 %v3998, %v4022
    %v4024 = vmin.f32 %v4023, 1.0
    %v4025 = vmax.f32 %v4024, -1.0
    %v4026 = vmul.f32 %v3040, %v3040
    %v4027 = vmin.f32 16.0, %v4026
    %v4028 = vmul.f32 %v4027, 2.1237322e-06
    %v4029 = vadd.f32 %v4028, 0.00028619796
    %v4030 = vmul.f32 %v4027, %v4029
    %v4031 = vadd.f32 %v4030, 0.0036580483
    %v4032 = vmul.f32 %v4027, %v4031
    %v4033 = vadd.f32 %v4032, 0.05243302
    %v4034 = vmul.f32 %v4027, %v4033
    %v4035 = vadd.f32 %v4034, 0.18741608
    %v4036 = vmul.f32 %v4027, %v4035
    %v4037 = vadd.f32 %v4036, 1.1283791
    %v4038 = vmul.f32 %v3040, %v4037
    %v4039 = vmul.f32 %v4027, 3.8918573e-05
    %v4040 = vadd.f32 %v4039, 0.001143296
    %v4041 = vmul.f32 %v4027, %v4040
    %v4042 = vadd.f32 %v4041, 0.014752088
    %v4043 = vmul.f32 %v4027, %v4042
    %v4044 = vadd.f32 %v4043, 0.112945676
    %v4045 = vmul.f32 %v4027, %v4044
    %v4046 = vadd.f32 %v4045, 0.4994258
    %v4047 = vmul.f32 %v4027, %v4046
    %v4048 = vadd.f32 %v4047, 1.0
    %v4049 = vrcp.pop %v4048
    %v4050 = vmul.f32 %v4048, %v4049
    %v4051 = vsub.f32 1.0, %v4050
    %v4052 = vmul.f32 %v4049, %v4051
    %v4053 = vadd.f32 %v4049, %v4052
    %vm4054 = vweird.f32 %v4048
    %vm4055 = vweird.f32 %v4049
    %vm4056 = vmor %vm4054, %vm4055
    %v4057 = vsel %vm4056, %v4049, %v4053
    %v4058 = vand.u32 2147483647, %v4048
    %vm4059 = vcmp.eq.f32.partialorder %v4058, 8.507059e+37
    %v4060 = vand.u32 %v4048, 2147483648
    %v4061 = vor.u32 1.1754944e-38, %v4060
    %v4062 = vsel %vm4059, %v4061, %v4057
    %v4063 = vmul.f32 %v4038, %v4062
    %v4064 = vmin.f32 %v4063, 1.0
    %v4065 = vmax.f32 %v4064, -1.0
    %v4066 = vmul.f32 %v3041, %v3041
    %v4067 = vmin.f32 16.0, %v4066
    %v4068 = vmul.f32 %v4067, 2.1237322e-06
    %v4069 = vadd.f32 %v4068, 0.00028619796
    %v4070 = vmul.f32 %v4067, %v4069
    %v4071 = vadd.f32 %v4070, 0.0036580483
    %v4072 = vmul.f32 %v4067, %v4071
    %v4073 = vadd.f32 %v4072, 0.05243302
    %v4074 = vmul.f32 %v4067, %v4073
    %v4075 = vadd.f32 %v4074, 0.18741608
    %v4076 = vmul.f32 %v4067, %v4075
    %v4077 = vadd.f32 %v4076, 1.1283791
    %v4078 = vmul.f32 %v3041, %v4077
    %v4079 = vmul.f32 %v4067, 3.8918573e-05
    %v4080 = vadd.f32 %v4079, 0.001143296
    %v4081 = vmul.f32 %v4067, %v4080
    %v4082 = vadd.f32 %v4081, 0.014752088
    %v4083 = vmul.f32 %v4067, %v4082
    %v4084 = vadd.f32 %v4083, 0.112945676
    %v4085 = vmul.f32 %v4067, %v4084
    %v4086 = vadd.f32 %v4085, 0.4994258
    %v4087 = vmul.f32 %v4067, %v4086
    %v4088 = vadd.f32 %v4087, 1.0
    %v4089 = vrcp.pop %v4088
    %v4090 = vmul.f32 %v4088, %v4089
    %v4091 = vsub.f32 1.0, %v4090
    %v4092 = vmul.f32 %v4089, %v4091
    %v4093 = vadd.f32 %v4089, %v4092
    %vm4094 = vweird.f32 %v4088
    %vm4095 = vweird.f32 %v4089
    %vm4096 = vmor %vm4094, %vm4095
    %v4097 = vsel %vm4096, %v4089, %v4093
    %v4098 = vand.u32 2147483647, %v4088
    %vm4099 = vcmp.eq.f32.partialorder %v4098, 8.507059e+37
    %v4100 = vand.u32 %v4088, 2147483648
    %v4101 = vor.u32 1.1754944e-38, %v4100
    %v4102 = vsel %vm4099, %v4101, %v4097
    %v4103 = vmul.f32 %v4078, %v4102
    %v4104 = vmin.f32 %v4103, 1.0
    %v4105 = vmax.f32 %v4104, -1.0
    %v4106 = vmul.f32 %v3042, %v3042
    %v4107 = vmin.f32 16.0, %v4106
    %v4108 = vmul.f32 %v4107, 2.1237322e-06
    %v4109 = vadd.f32 %v4108, 0.00028619796
    %v4110 = vmul.f32 %v4107, %v4109
    %v4111 = vadd.f32 %v4110, 0.0036580483
    %v4112 = vmul.f32 %v4107, %v4111
    %v4113 = vadd.f32 %v4112, 0.05243302
    %v4114 = vmul.f32 %v4107, %v4113
    %v4115 = vadd.f32 %v4114, 0.18741608
    %v4116 = vmul.f32 %v4107, %v4115
    %v4117 = vadd.f32 %v4116, 1.1283791
    %v4118 = vmul.f32 %v3042, %v4117
    %v4119 = vmul.f32 %v4107, 3.8918573e-05
    %v4120 = vadd.f32 %v4119, 0.001143296
    %v4121 = vmul.f32 %v4107, %v4120
    %v4122 = vadd.f32 %v4121, 0.014752088
    %v4123 = vmul.f32 %v4107, %v4122
    %v4124 = vadd.f32 %v4123, 0.112945676
    %v4125 = vmul.f32 %v4107, %v4124
    %v4126 = vadd.f32 %v4125, 0.4994258
    %v4127 = vmul.f32 %v4107, %v4126
    %v4128 = vadd.f32 %v4127, 1.0
    %v4129 = vrcp.pop %v4128
    %v4130 = vmul.f32 %v4128, %v4129
    %v4131 = vsub.f32 1.0, %v4130
    %v4132 = vmul.f32 %v4129, %v4131
    %v4133 = vadd.f32 %v4129, %v4132
    %vm4134 = vweird.f32 %v4128
    %vm4135 = vweird.f32 %v4129
    %vm4136 = vmor %vm4134, %vm4135
    %v4137 = vsel %vm4136, %v4129, %v4133
    %v4138 = vand.u32 2147483647, %v4128
    %vm4139 = vcmp.eq.f32.partialorder %v4138, 8.507059e+37
    %v4140 = vand.u32 %v4128, 2147483648
    %v4141 = vor.u32 1.1754944e-38, %v4140
    %v4142 = vsel %vm4139, %v4141, %v4137
    %v4143 = vmul.f32 %v4118, %v4142
    %v4144 = vmin.f32 %v4143, 1.0
    %v4145 = vmax.f32 %v4144, -1.0
    %v4146 = vmul.f32 %v3043, %v3043
    %v4147 = vmin.f32 16.0, %v4146
    %v4148 = vmul.f32 %v4147, 2.1237322e-06
    %v4149 = vadd.f32 %v4148, 0.00028619796
    %v4150 = vmul.f32 %v4147, %v4149
    %v4151 = vadd.f32 %v4150, 0.0036580483
    %v4152 = vmul.f32 %v4147, %v4151
    %v4153 = vadd.f32 %v4152, 0.05243302
    %v4154 = vmul.f32 %v4147, %v4153
    %v4155 = vadd.f32 %v4154, 0.18741608
    %v4156 = vmul.f32 %v4147, %v4155
    %v4157 = vadd.f32 %v4156, 1.1283791
    %v4158 = vmul.f32 %v3043, %v4157
    %v4159 = vmul.f32 %v4147, 3.8918573e-05
    %v4160 = vadd.f32 %v4159, 0.001143296
    %v4161 = vmul.f32 %v4147, %v4160
    %v4162 = vadd.f32 %v4161, 0.014752088
    %v4163 = vmul.f32 %v4147, %v4162
    %v4164 = vadd.f32 %v4163, 0.112945676
    %v4165 = vmul.f32 %v4147, %v4164
    %v4166 = vadd.f32 %v4165, 0.4994258
    %v4167 = vmul.f32 %v4147, %v4166
    %v4168 = vadd.f32 %v4167, 1.0
    %v4169 = vrcp.pop %v4168
    %v4170 = vmul.f32 %v4168, %v4169
    %v4171 = vsub.f32 1.0, %v4170
    %v4172 = vmul.f32 %v4169, %v4171
    %v4173 = vadd.f32 %v4169, %v4172
    %vm4174 = vweird.f32 %v4168
    %vm4175 = vweird.f32 %v4169
    %vm4176 = vmor %vm4174, %vm4175
    %v4177 = vsel %vm4176, %v4169, %v4173
    %v4178 = vand.u32 2147483647, %v4168
    %vm4179 = vcmp.eq.f32.partialorder %v4178, 8.507059e+37
    %v4180 = vand.u32 %v4168, 2147483648
    %v4181 = vor.u32 1.1754944e-38, %v4180
    %v4182 = vsel %vm4179, %v4181, %v4177
    %v4183 = vmul.f32 %v4158, %v4182
    %v4184 = vmin.f32 %v4183, 1.0
    %v4185 = vmax.f32 %v4184, -1.0
    %v4186 = vmul.f32 %v3044, %v3044
    %v4187 = vmin.f32 16.0, %v4186
    %v4188 = vmul.f32 %v4187, 2.1237322e-06
    %v4189 = vadd.f32 %v4188, 0.00028619796
    %v4190 = vmul.f32 %v4187, %v4189
    %v4191 = vadd.f32 %v4190, 0.0036580483
    %v4192 = vmul.f32 %v4187, %v4191
    %v4193 = vadd.f32 %v4192, 0.05243302
    %v4194 = vmul.f32 %v4187, %v4193
    %v4195 = vadd.f32 %v4194, 0.18741608
    %v4196 = vmul.f32 %v4187, %v4195
    %v4197 = vadd.f32 %v4196, 1.1283791
    %v4198 = vmul.f32 %v3044, %v4197
    %v4199 = vmul.f32 %v4187, 3.8918573e-05
    %v4200 = vadd.f32 %v4199, 0.001143296
    %v4201 = vmul.f32 %v4187, %v4200
    %v4202 = vadd.f32 %v4201, 0.014752088
    %v4203 = vmul.f32 %v4187, %v4202
    %v4204 = vadd.f32 %v4203, 0.112945676
    %v4205 = vmul.f32 %v4187, %v4204
    %v4206 = vadd.f32 %v4205, 0.4994258
    %v4207 = vmul.f32 %v4187, %v4206
    %v4208 = vadd.f32 %v4207, 1.0
    %v4209 = vrcp.pop %v4208
    %v4210 = vmul.f32 %v4208, %v4209
    %v4211 = vsub.f32 1.0, %v4210
    %v4212 = vmul.f32 %v4209, %v4211
    %v4213 = vadd.f32 %v4209, %v4212
    %vm4214 = vweird.f32 %v4208
    %vm4215 = vweird.f32 %v4209
    %vm4216 = vmor %vm4214, %vm4215
    %v4217 = vsel %vm4216, %v4209, %v4213
    %v4218 = vand.u32 2147483647, %v4208
    %vm4219 = vcmp.eq.f32.partialorder %v4218, 8.507059e+37
    %v4220 = vand.u32 %v4208, 2147483648
    %v4221 = vor.u32 1.1754944e-38, %v4220
    %v4222 = vsel %vm4219, %v4221, %v4217
    %v4223 = vmul.f32 %v4198, %v4222
    %v4224 = vmin.f32 %v4223, 1.0
    %v4225 = vmax.f32 %v4224, -1.0
    %v4226 = vmul.f32 %v3045, %v3045
    %v4227 = vmin.f32 16.0, %v4226
    %v4228 = vmul.f32 %v4227, 2.1237322e-06
    %v4229 = vadd.f32 %v4228, 0.00028619796
    %v4230 = vmul.f32 %v4227, %v4229
    %v4231 = vadd.f32 %v4230, 0.0036580483
    %v4232 = vmul.f32 %v4227, %v4231
    %v4233 = vadd.f32 %v4232, 0.05243302
    %v4234 = vmul.f32 %v4227, %v4233
    %v4235 = vadd.f32 %v4234, 0.18741608
    %v4236 = vmul.f32 %v4227, %v4235
    %v4237 = vadd.f32 %v4236, 1.1283791
    %v4238 = vmul.f32 %v3045, %v4237
    %v4239 = vmul.f32 %v4227, 3.8918573e-05
    %v4240 = vadd.f32 %v4239, 0.001143296
    %v4241 = vmul.f32 %v4227, %v4240
    %v4242 = vadd.f32 %v4241, 0.014752088
    %v4243 = vmul.f32 %v4227, %v4242
    %v4244 = vadd.f32 %v4243, 0.112945676
    %v4245 = vmul.f32 %v4227, %v4244
    %v4246 = vadd.f32 %v4245, 0.4994258
    %v4247 = vmul.f32 %v4227, %v4246
    %v4248 = vadd.f32 %v4247, 1.0
    %v4249 = vrcp.pop %v4248
    %v4250 = vmul.f32 %v4248, %v4249
    %v4251 = vsub.f32 1.0, %v4250
    %v4252 = vmul.f32 %v4249, %v4251
    %v4253 = vadd.f32 %v4249, %v4252
    %vm4254 = vweird.f32 %v4248
    %vm4255 = vweird.f32 %v4249
    %vm4256 = vmor %vm4254, %vm4255
    %v4257 = vsel %vm4256, %v4249, %v4253
    %v4258 = vand.u32 2147483647, %v4248
    %vm4259 = vcmp.eq.f32.partialorder %v4258, 8.507059e+37
    %v4260 = vand.u32 %v4248, 2147483648
    %v4261 = vor.u32 1.1754944e-38, %v4260
    %v4262 = vsel %vm4259, %v4261, %v4257
    %v4263 = vmul.f32 %v4238, %v4262
    %v4264 = vmin.f32 %v4263, 1.0
    %v4265 = vmax.f32 %v4264, -1.0
    %v4266 = vmul.f32 %v3046, %v3046
    %v4267 = vmin.f32 16.0, %v4266
    %v4268 = vmul.f32 %v4267, 2.1237322e-06
    %v4269 = vadd.f32 %v4268, 0.00028619796
    %v4270 = vmul.f32 %v4267, %v4269
    %v4271 = vadd.f32 %v4270, 0.0036580483
    %v4272 = vmul.f32 %v4267, %v4271
    %v4273 = vadd.f32 %v4272, 0.05243302
    %v4274 = vmul.f32 %v4267, %v4273
    %v4275 = vadd.f32 %v4274, 0.18741608
    %v4276 = vmul.f32 %v4267, %v4275
    %v4277 = vadd.f32 %v4276, 1.1283791
    %v4278 = vmul.f32 %v3046, %v4277
    %v4279 = vmul.f32 %v4267, 3.8918573e-05
    %v4280 = vadd.f32 %v4279, 0.001143296
    %v4281 = vmul.f32 %v4267, %v4280
    %v4282 = vadd.f32 %v4281, 0.014752088
    %v4283 = vmul.f32 %v4267, %v4282
    %v4284 = vadd.f32 %v4283, 0.112945676
    %v4285 = vmul.f32 %v4267, %v4284
    %v4286 = vadd.f32 %v4285, 0.4994258
    %v4287 = vmul.f32 %v4267, %v4286
    %v4288 = vadd.f32 %v4287, 1.0
    %v4289 = vrcp.pop %v4288
    %v4290 = vmul.f32 %v4288, %v4289
    %v4291 = vsub.f32 1.0, %v4290
    %v4292 = vmul.f32 %v4289, %v4291
    %v4293 = vadd.f32 %v4289, %v4292
    %vm4294 = vweird.f32 %v4288
    %vm4295 = vweird.f32 %v4289
    %vm4296 = vmor %vm4294, %vm4295
    %v4297 = vsel %vm4296, %v4289, %v4293
    %v4298 = vand.u32 2147483647, %v4288
    %vm4299 = vcmp.eq.f32.partialorder %v4298, 8.507059e+37
    %v4300 = vand.u32 %v4288, 2147483648
    %v4301 = vor.u32 1.1754944e-38, %v4300
    %v4302 = vsel %vm4299, %v4301, %v4297
    %v4303 = vmul.f32 %v4278, %v4302
    %v4304 = vmin.f32 %v4303, 1.0
    %v4305 = vmax.f32 %v4304, -1.0
    %v4306 = vmul.f32 %v3047, %v3047
    %v4307 = vmin.f32 16.0, %v4306
    %v4308 = vmul.f32 %v4307, 2.1237322e-06
    %v4309 = vadd.f32 %v4308, 0.00028619796
    %v4310 = vmul.f32 %v4307, %v4309
    %v4311 = vadd.f32 %v4310, 0.0036580483
    %v4312 = vmul.f32 %v4307, %v4311
    %v4313 = vadd.f32 %v4312, 0.05243302
    %v4314 = vmul.f32 %v4307, %v4313
    %v4315 = vadd.f32 %v4314, 0.18741608
    %v4316 = vmul.f32 %v4307, %v4315
    %v4317 = vadd.f32 %v4316, 1.1283791
    %v4318 = vmul.f32 %v3047, %v4317
    %v4319 = vmul.f32 %v4307, 3.8918573e-05
    %v4320 = vadd.f32 %v4319, 0.001143296
    %v4321 = vmul.f32 %v4307, %v4320
    %v4322 = vadd.f32 %v4321, 0.014752088
    %v4323 = vmul.f32 %v4307, %v4322
    %v4324 = vadd.f32 %v4323, 0.112945676
    %v4325 = vmul.f32 %v4307, %v4324
    %v4326 = vadd.f32 %v4325, 0.4994258
    %v4327 = vmul.f32 %v4307, %v4326
    %v4328 = vadd.f32 %v4327, 1.0
    %v4329 = vrcp.pop %v4328
    %v4330 = vmul.f32 %v4328, %v4329
    %v4331 = vsub.f32 1.0, %v4330
    %v4332 = vmul.f32 %v4329, %v4331
    %v4333 = vadd.f32 %v4329, %v4332
    %vm4334 = vweird.f32 %v4328
    %vm4335 = vweird.f32 %v4329
    %vm4336 = vmor %vm4334, %vm4335
    %v4337 = vsel %vm4336, %v4329, %v4333
    %v4338 = vand.u32 2147483647, %v4328
    %vm4339 = vcmp.eq.f32.partialorder %v4338, 8.507059e+37
    %v4340 = vand.u32 %v4328, 2147483648
    %v4341 = vor.u32 1.1754944e-38, %v4340
    %v4342 = vsel %vm4339, %v4341, %v4337
    %v4343 = vmul.f32 %v4318, %v4342
    %v4344 = vmin.f32 %v4343, 1.0
    %v4345 = vmax.f32 %v4344, -1.0
    %v4346 = vmul.f32 %v3048, %v3048
    %v4347 = vmin.f32 16.0, %v4346
    %v4348 = vmul.f32 %v4347, 2.1237322e-06
    %v4349 = vadd.f32 %v4348, 0.00028619796
    %v4350 = vmul.f32 %v4347, %v4349
    %v4351 = vadd.f32 %v4350, 0.0036580483
    %v4352 = vmul.f32 %v4347, %v4351
    %v4353 = vadd.f32 %v4352, 0.05243302
    %v4354 = vmul.f32 %v4347, %v4353
    %v4355 = vadd.f32 %v4354, 0.18741608
    %v4356 = vmul.f32 %v4347, %v4355
    %v4357 = vadd.f32 %v4356, 1.1283791
    %v4358 = vmul.f32 %v3048, %v4357
    %v4359 = vmul.f32 %v4347, 3.8918573e-05
    %v4360 = vadd.f32 %v4359, 0.001143296
    %v4361 = vmul.f32 %v4347, %v4360
    %v4362 = vadd.f32 %v4361, 0.014752088
    %v4363 = vmul.f32 %v4347, %v4362
    %v4364 = vadd.f32 %v4363, 0.112945676
    %v4365 = vmul.f32 %v4347, %v4364
    %v4366 = vadd.f32 %v4365, 0.4994258
    %v4367 = vmul.f32 %v4347, %v4366
    %v4368 = vadd.f32 %v4367, 1.0
    %v4369 = vrcp.pop %v4368
    %v4370 = vmul.f32 %v4368, %v4369
    %v4371 = vsub.f32 1.0, %v4370
    %v4372 = vmul.f32 %v4369, %v4371
    %v4373 = vadd.f32 %v4369, %v4372
    %vm4374 = vweird.f32 %v4368
    %vm4375 = vweird.f32 %v4369
    %vm4376 = vmor %vm4374, %vm4375
    %v4377 = vsel %vm4376, %v4369, %v4373
    %v4378 = vand.u32 2147483647, %v4368
    %vm4379 = vcmp.eq.f32.partialorder %v4378, 8.507059e+37
    %v4380 = vand.u32 %v4368, 2147483648
    %v4381 = vor.u32 1.1754944e-38, %v4380
    %v4382 = vsel %vm4379, %v4381, %v4377
    %v4383 = vmul.f32 %v4358, %v4382
    %v4384 = vmin.f32 %v4383, 1.0
    %v4385 = vmax.f32 %v4384, -1.0
    %v4386 = vmul.f32 %v3049, %v3049
    %v4387 = vmin.f32 16.0, %v4386
    %v4388 = vmul.f32 %v4387, 2.1237322e-06
    %v4389 = vadd.f32 %v4388, 0.00028619796
    %v4390 = vmul.f32 %v4387, %v4389
    %v4391 = vadd.f32 %v4390, 0.0036580483
    %v4392 = vmul.f32 %v4387, %v4391
    %v4393 = vadd.f32 %v4392, 0.05243302
    %v4394 = vmul.f32 %v4387, %v4393
    %v4395 = vadd.f32 %v4394, 0.18741608
    %v4396 = vmul.f32 %v4387, %v4395
    %v4397 = vadd.f32 %v4396, 1.1283791
    %v4398 = vmul.f32 %v3049, %v4397
    %v4399 = vmul.f32 %v4387, 3.8918573e-05
    %v4400 = vadd.f32 %v4399, 0.001143296
    %v4401 = vmul.f32 %v4387, %v4400
    %v4402 = vadd.f32 %v4401, 0.014752088
    %v4403 = vmul.f32 %v4387, %v4402
    %v4404 = vadd.f32 %v4403, 0.112945676
    %v4405 = vmul.f32 %v4387, %v4404
    %v4406 = vadd.f32 %v4405, 0.4994258
    %v4407 = vmul.f32 %v4387, %v4406
    %v4408 = vadd.f32 %v4407, 1.0
    %v4409 = vrcp.pop %v4408
    %v4410 = vmul.f32 %v4408, %v4409
    %v4411 = vsub.f32 1.0, %v4410
    %v4412 = vmul.f32 %v4409, %v4411
    %v4413 = vadd.f32 %v4409, %v4412
    %vm4414 = vweird.f32 %v4408
    %vm4415 = vweird.f32 %v4409
    %vm4416 = vmor %vm4414, %vm4415
    %v4417 = vsel %vm4416, %v4409, %v4413
    %v4418 = vand.u32 2147483647, %v4408
    %vm4419 = vcmp.eq.f32.partialorder %v4418, 8.507059e+37
    %v4420 = vand.u32 %v4408, 2147483648
    %v4421 = vor.u32 1.1754944e-38, %v4420
    %v4422 = vsel %vm4419, %v4421, %v4417
    %v4423 = vmul.f32 %v4398, %v4422
    %v4424 = vmin.f32 %v4423, 1.0
    %v4425 = vmax.f32 %v4424, -1.0
    %v4426 = vmul.f32 %v3050, %v3050
    %v4427 = vmin.f32 16.0, %v4426
    %v4428 = vmul.f32 %v4427, 2.1237322e-06
    %v4429 = vadd.f32 %v4428, 0.00028619796
    %v4430 = vmul.f32 %v4427, %v4429
    %v4431 = vadd.f32 %v4430, 0.0036580483
    %v4432 = vmul.f32 %v4427, %v4431
    %v4433 = vadd.f32 %v4432, 0.05243302
    %v4434 = vmul.f32 %v4427, %v4433
    %v4435 = vadd.f32 %v4434, 0.18741608
    %v4436 = vmul.f32 %v4427, %v4435
    %v4437 = vadd.f32 %v4436, 1.1283791
    %v4438 = vmul.f32 %v3050, %v4437
    %v4439 = vmul.f32 %v4427, 3.8918573e-05
    %v4440 = vadd.f32 %v4439, 0.001143296
    %v4441 = vmul.f32 %v4427, %v4440
    %v4442 = vadd.f32 %v4441, 0.014752088
    %v4443 = vmul.f32 %v4427, %v4442
    %v4444 = vadd.f32 %v4443, 0.112945676
    %v4445 = vmul.f32 %v4427, %v4444
    %v4446 = vadd.f32 %v4445, 0.4994258
    %v4447 = vmul.f32 %v4427, %v4446
    %v4448 = vadd.f32 %v4447, 1.0
    %v4449 = vrcp.pop %v4448
    %v4450 = vmul.f32 %v4448, %v4449
    %v4451 = vsub.f32 1.0, %v4450
    %v4452 = vmul.f32 %v4449, %v4451
    %v4453 = vadd.f32 %v4449, %v4452
    %vm4454 = vweird.f32 %v4448
    %vm4455 = vweird.f32 %v4449
    %vm4456 = vmor %vm4454, %vm4455
    %v4457 = vsel %vm4456, %v4449, %v4453
    %v4458 = vand.u32 2147483647, %v4448
    %vm4459 = vcmp.eq.f32.partialorder %v4458, 8.507059e+37
    %v4460 = vand.u32 %v4448, 2147483648
    %v4461 = vor.u32 1.1754944e-38, %v4460
    %v4462 = vsel %vm4459, %v4461, %v4457
    %v4463 = vmul.f32 %v4438, %v4462
    %v4464 = vmin.f32 %v4463, 1.0
    %v4465 = vmax.f32 %v4464, -1.0
    %v4466 = vmul.f32 %v3051, %v3051
    %v4467 = vmin.f32 16.0, %v4466
    %v4468 = vmul.f32 %v4467, 2.1237322e-06
    %v4469 = vadd.f32 %v4468, 0.00028619796
    %v4470 = vmul.f32 %v4467, %v4469
    %v4471 = vadd.f32 %v4470, 0.0036580483
    %v4472 = vmul.f32 %v4467, %v4471
    %v4473 = vadd.f32 %v4472, 0.05243302
    %v4474 = vmul.f32 %v4467, %v4473
    %v4475 = vadd.f32 %v4474, 0.18741608
    %v4476 = vmul.f32 %v4467, %v4475
    %v4477 = vadd.f32 %v4476, 1.1283791
    %v4478 = vmul.f32 %v3051, %v4477
    %v4479 = vmul.f32 %v4467, 3.8918573e-05
    %v4480 = vadd.f32 %v4479, 0.001143296
    %v4481 = vmul.f32 %v4467, %v4480
    %v4482 = vadd.f32 %v4481, 0.014752088
    %v4483 = vmul.f32 %v4467, %v4482
    %v4484 = vadd.f32 %v4483, 0.112945676
    %v4485 = vmul.f32 %v4467, %v4484
    %v4486 = vadd.f32 %v4485, 0.4994258
    %v4487 = vmul.f32 %v4467, %v4486
    %v4488 = vadd.f32 %v4487, 1.0
    %v4489 = vrcp.pop %v4488
    %v4490 = vmul.f32 %v4488, %v4489
    %v4491 = vsub.f32 1.0, %v4490
    %v4492 = vmul.f32 %v4489, %v4491
    %v4493 = vadd.f32 %v4489, %v4492
    %vm4494 = vweird.f32 %v4488
    %vm4495 = vweird.f32 %v4489
    %vm4496 = vmor %vm4494, %vm4495
    %v4497 = vsel %vm4496, %v4489, %v4493
    %v4498 = vand.u32 2147483647, %v4488
    %vm4499 = vcmp.eq.f32.partialorder %v4498, 8.507059e+37
    %v4500 = vand.u32 %v4488, 2147483648
    %v4501 = vor.u32 1.1754944e-38, %v4500
    %v4502 = vsel %vm4499, %v4501, %v4497
    %v4503 = vmul.f32 %v4478, %v4502
    %v4504 = vmin.f32 %v4503, 1.0
    %v4505 = vmax.f32 %v4504, -1.0
    %v4506 = vmul.f32 %v3052, %v3052
    %v4507 = vmin.f32 16.0, %v4506
    %v4508 = vmul.f32 %v4507, 2.1237322e-06
    %v4509 = vadd.f32 %v4508, 0.00028619796
    %v4510 = vmul.f32 %v4507, %v4509
    %v4511 = vadd.f32 %v4510, 0.0036580483
    %v4512 = vmul.f32 %v4507, %v4511
    %v4513 = vadd.f32 %v4512, 0.05243302
    %v4514 = vmul.f32 %v4507, %v4513
    %v4515 = vadd.f32 %v4514, 0.18741608
    %v4516 = vmul.f32 %v4507, %v4515
    %v4517 = vadd.f32 %v4516, 1.1283791
    %v4518 = vmul.f32 %v3052, %v4517
    %v4519 = vmul.f32 %v4507, 3.8918573e-05
    %v4520 = vadd.f32 %v4519, 0.001143296
    %v4521 = vmul.f32 %v4507, %v4520
    %v4522 = vadd.f32 %v4521, 0.014752088
    %v4523 = vmul.f32 %v4507, %v4522
    %v4524 = vadd.f32 %v4523, 0.112945676
    %v4525 = vmul.f32 %v4507, %v4524
    %v4526 = vadd.f32 %v4525, 0.4994258
    %v4527 = vmul.f32 %v4507, %v4526
    %v4528 = vadd.f32 %v4527, 1.0
    %v4529 = vrcp.pop %v4528
    %v4530 = vmul.f32 %v4528, %v4529
    %v4531 = vsub.f32 1.0, %v4530
    %v4532 = vmul.f32 %v4529, %v4531
    %v4533 = vadd.f32 %v4529, %v4532
    %vm4534 = vweird.f32 %v4528
    %vm4535 = vweird.f32 %v4529
    %vm4536 = vmor %vm4534, %vm4535
    %v4537 = vsel %vm4536, %v4529, %v4533
    %v4538 = vand.u32 2147483647, %v4528
    %vm4539 = vcmp.eq.f32.partialorder %v4538, 8.507059e+37
    %v4540 = vand.u32 %v4528, 2147483648
    %v4541 = vor.u32 1.1754944e-38, %v4540
    %v4542 = vsel %vm4539, %v4541, %v4537
    %v4543 = vmul.f32 %v4518, %v4542
    %v4544 = vmin.f32 %v4543, 1.0
    %v4545 = vmax.f32 %v4544, -1.0
    %v4546 = vmul.f32 %v3053, %v3053
    %v4547 = vmin.f32 16.0, %v4546
    %v4548 = vmul.f32 %v4547, 2.1237322e-06
    %v4549 = vadd.f32 %v4548, 0.00028619796
    %v4550 = vmul.f32 %v4547, %v4549
    %v4551 = vadd.f32 %v4550, 0.0036580483
    %v4552 = vmul.f32 %v4547, %v4551
    %v4553 = vadd.f32 %v4552, 0.05243302
    %v4554 = vmul.f32 %v4547, %v4553
    %v4555 = vadd.f32 %v4554, 0.18741608
    %v4556 = vmul.f32 %v4547, %v4555
    %v4557 = vadd.f32 %v4556, 1.1283791
    %v4558 = vmul.f32 %v3053, %v4557
    %v4559 = vmul.f32 %v4547, 3.8918573e-05
    %v4560 = vadd.f32 %v4559, 0.001143296
    %v4561 = vmul.f32 %v4547, %v4560
    %v4562 = vadd.f32 %v4561, 0.014752088
    %v4563 = vmul.f32 %v4547, %v4562
    %v4564 = vadd.f32 %v4563, 0.112945676
    %v4565 = vmul.f32 %v4547, %v4564
    %v4566 = vadd.f32 %v4565, 0.4994258
    %v4567 = vmul.f32 %v4547, %v4566
    %v4568 = vadd.f32 %v4567, 1.0
    %v4569 = vrcp.pop %v4568
    %v4570 = vmul.f32 %v4568, %v4569
    %v4571 = vsub.f32 1.0, %v4570
    %v4572 = vmul.f32 %v4569, %v4571
    %v4573 = vadd.f32 %v4569, %v4572
    %vm4574 = vweird.f32 %v4568
    %vm4575 = vweird.f32 %v4569
    %vm4576 = vmor %vm4574, %vm4575
    %v4577 = vsel %vm4576, %v4569, %v4573
    %v4578 = vand.u32 2147483647, %v4568
    %vm4579 = vcmp.eq.f32.partialorder %v4578, 8.507059e+37
    %v4580 = vand.u32 %v4568, 2147483648
    %v4581 = vor.u32 1.1754944e-38, %v4580
    %v4582 = vsel %vm4579, %v4581, %v4577
    %v4583 = vmul.f32 %v4558, %v4582
    %v4584 = vmin.f32 %v4583, 1.0
    %v4585 = vmax.f32 %v4584, -1.0
    %v4586 = vmul.f32 %v3054, %v3054
    %v4587 = vmin.f32 16.0, %v4586
    %v4588 = vmul.f32 %v4587, 2.1237322e-06
    %v4589 = vadd.f32 %v4588, 0.00028619796
    %v4590 = vmul.f32 %v4587, %v4589
    %v4591 = vadd.f32 %v4590, 0.0036580483
    %v4592 = vmul.f32 %v4587, %v4591
    %v4593 = vadd.f32 %v4592, 0.05243302
    %v4594 = vmul.f32 %v4587, %v4593
    %v4595 = vadd.f32 %v4594, 0.18741608
    %v4596 = vmul.f32 %v4587, %v4595
    %v4597 = vadd.f32 %v4596, 1.1283791
    %v4598 = vmul.f32 %v3054, %v4597
    %v4599 = vmul.f32 %v4587, 3.8918573e-05
    %v4600 = vadd.f32 %v4599, 0.001143296
    %v4601 = vmul.f32 %v4587, %v4600
    %v4602 = vadd.f32 %v4601, 0.014752088
    %v4603 = vmul.f32 %v4587, %v4602
    %v4604 = vadd.f32 %v4603, 0.112945676
    %v4605 = vmul.f32 %v4587, %v4604
    %v4606 = vadd.f32 %v4605, 0.4994258
    %v4607 = vmul.f32 %v4587, %v4606
    %v4608 = vadd.f32 %v4607, 1.0
    %v4609 = vrcp.pop %v4608
    %v4610 = vmul.f32 %v4608, %v4609
    %v4611 = vsub.f32 1.0, %v4610
    %v4612 = vmul.f32 %v4609, %v4611
    %v4613 = vadd.f32 %v4609, %v4612
    %vm4614 = vweird.f32 %v4608
    %vm4615 = vweird.f32 %v4609
    %vm4616 = vmor %vm4614, %vm4615
    %v4617 = vsel %vm4616, %v4609, %v4613
    %v4618 = vand.u32 2147483647, %v4608
    %vm4619 = vcmp.eq.f32.partialorder %v4618, 8.507059e+37
    %v4620 = vand.u32 %v4608, 2147483648
    %v4621 = vor.u32 1.1754944e-38, %v4620
    %v4622 = vsel %vm4619, %v4621, %v4617
    %v4623 = vmul.f32 %v4598, %v4622
    %v4624 = vmin.f32 %v4623, 1.0
    %v4625 = vmax.f32 %v4624, -1.0
    %v4626 = vmul.f32 %v3055, %v3055
    %v4627 = vmin.f32 16.0, %v4626
    %v4628 = vmul.f32 %v4627, 2.1237322e-06
    %v4629 = vadd.f32 %v4628, 0.00028619796
    %v4630 = vmul.f32 %v4627, %v4629
    %v4631 = vadd.f32 %v4630, 0.0036580483
    %v4632 = vmul.f32 %v4627, %v4631
    %v4633 = vadd.f32 %v4632, 0.05243302
    %v4634 = vmul.f32 %v4627, %v4633
    %v4635 = vadd.f32 %v4634, 0.18741608
    %v4636 = vmul.f32 %v4627, %v4635
    %v4637 = vadd.f32 %v4636, 1.1283791
    %v4638 = vmul.f32 %v3055, %v4637
    %v4639 = vmul.f32 %v4627, 3.8918573e-05
    %v4640 = vadd.f32 %v4639, 0.001143296
    %v4641 = vmul.f32 %v4627, %v4640
    %v4642 = vadd.f32 %v4641, 0.014752088
    %v4643 = vmul.f32 %v4627, %v4642
    %v4644 = vadd.f32 %v4643, 0.112945676
    %v4645 = vmul.f32 %v4627, %v4644
    %v4646 = vadd.f32 %v4645, 0.4994258
    %v4647 = vmul.f32 %v4627, %v4646
    %v4648 = vadd.f32 %v4647, 1.0
    %v4649 = vrcp.pop %v4648
    %v4650 = vmul.f32 %v4648, %v4649
    %v4651 = vsub.f32 1.0, %v4650
    %v4652 = vmul.f32 %v4649, %v4651
    %v4653 = vadd.f32 %v4649, %v4652
    %vm4654 = vweird.f32 %v4648
    %vm4655 = vweird.f32 %v4649
    %vm4656 = vmor %vm4654, %vm4655
    %v4657 = vsel %vm4656, %v4649, %v4653
    %v4658 = vand.u32 2147483647, %v4648
    %vm4659 = vcmp.eq.f32.partialorder %v4658, 8.507059e+37
    %v4660 = vand.u32 %v4648, 2147483648
    %v4661 = vor.u32 1.1754944e-38, %v4660
    %v4662 = vsel %vm4659, %v4661, %v4657
    %v4663 = vmul.f32 %v4638, %v4662
    %v4664 = vmin.f32 %v4663, 1.0
    %v4665 = vmax.f32 %v4664, -1.0
    %v4666 = vmul.f32 %v3056, %v3056
    %v4667 = vmin.f32 16.0, %v4666
    %v4668 = vmul.f32 %v4667, 2.1237322e-06
    %v4669 = vadd.f32 %v4668, 0.00028619796
    %v4670 = vmul.f32 %v4667, %v4669
    %v4671 = vadd.f32 %v4670, 0.0036580483
    %v4672 = vmul.f32 %v4667, %v4671
    %v4673 = vadd.f32 %v4672, 0.05243302
    %v4674 = vmul.f32 %v4667, %v4673
    %v4675 = vadd.f32 %v4674, 0.18741608
    %v4676 = vmul.f32 %v4667, %v4675
    %v4677 = vadd.f32 %v4676, 1.1283791
    %v4678 = vmul.f32 %v3056, %v4677
    %v4679 = vmul.f32 %v4667, 3.8918573e-05
    %v4680 = vadd.f32 %v4679, 0.001143296
    %v4681 = vmul.f32 %v4667, %v4680
    %v4682 = vadd.f32 %v4681, 0.014752088
    %v4683 = vmul.f32 %v4667, %v4682
    %v4684 = vadd.f32 %v4683, 0.112945676
    %v4685 = vmul.f32 %v4667, %v4684
    %v4686 = vadd.f32 %v4685, 0.4994258
    %v4687 = vmul.f32 %v4667, %v4686
    %v4688 = vadd.f32 %v4687, 1.0
    %v4689 = vrcp.pop %v4688
    %v4690 = vmul.f32 %v4688, %v4689
    %v4691 = vsub.f32 1.0, %v4690
    %v4692 = vmul.f32 %v4689, %v4691
    %v4693 = vadd.f32 %v4689, %v4692
    %vm4694 = vweird.f32 %v4688
    %vm4695 = vweird.f32 %v4689
    %vm4696 = vmor %vm4694, %vm4695
    %v4697 = vsel %vm4696, %v4689, %v4693
    %v4698 = vand.u32 2147483647, %v4688
    %vm4699 = vcmp.eq.f32.partialorder %v4698, 8.507059e+37
    %v4700 = vand.u32 %v4688, 2147483648
    %v4701 = vor.u32 1.1754944e-38, %v4700
    %v4702 = vsel %vm4699, %v4701, %v4697
    %v4703 = vmul.f32 %v4678, %v4702
    %v4704 = vmin.f32 %v4703, 1.0
    %v4705 = vmax.f32 %v4704, -1.0
    %v4706 = vmul.f32 %v3057, %v3057
    %v4707 = vmin.f32 16.0, %v4706
    %v4708 = vmul.f32 %v4707, 2.1237322e-06
    %v4709 = vadd.f32 %v4708, 0.00028619796
    %v4710 = vmul.f32 %v4707, %v4709
    %v4711 = vadd.f32 %v4710, 0.0036580483
    %v4712 = vmul.f32 %v4707, %v4711
    %v4713 = vadd.f32 %v4712, 0.05243302
    %v4714 = vmul.f32 %v4707, %v4713
    %v4715 = vadd.f32 %v4714, 0.18741608
    %v4716 = vmul.f32 %v4707, %v4715
    %v4717 = vadd.f32 %v4716, 1.1283791
    %v4718 = vmul.f32 %v3057, %v4717
    %v4719 = vmul.f32 %v4707, 3.8918573e-05
    %v4720 = vadd.f32 %v4719, 0.001143296
    %v4721 = vmul.f32 %v4707, %v4720
    %v4722 = vadd.f32 %v4721, 0.014752088
    %v4723 = vmul.f32 %v4707, %v4722
    %v4724 = vadd.f32 %v4723, 0.112945676
    %v4725 = vmul.f32 %v4707, %v4724
    %v4726 = vadd.f32 %v4725, 0.4994258
    %v4727 = vmul.f32 %v4707, %v4726
    %v4728 = vadd.f32 %v4727, 1.0
    %v4729 = vrcp.pop %v4728
    %v4730 = vmul.f32 %v4728, %v4729
    %v4731 = vsub.f32 1.0, %v4730
    %v4732 = vmul.f32 %v4729, %v4731
    %v4733 = vadd.f32 %v4729, %v4732
    %vm4734 = vweird.f32 %v4728
    %vm4735 = vweird.f32 %v4729
    %vm4736 = vmor %vm4734, %vm4735
    %v4737 = vsel %vm4736, %v4729, %v4733
    %v4738 = vand.u32 2147483647, %v4728
    %vm4739 = vcmp.eq.f32.partialorder %v4738, 8.507059e+37
    %v4740 = vand.u32 %v4728, 2147483648
    %v4741 = vor.u32 1.1754944e-38, %v4740
    %v4742 = vsel %vm4739, %v4741, %v4737
    %v4743 = vmul.f32 %v4718, %v4742
    %v4744 = vmin.f32 %v4743, 1.0
    %v4745 = vmax.f32 %v4744, -1.0
    %v4746 = vmul.f32 %v3058, %v3058
    %v4747 = vmin.f32 16.0, %v4746
    %v4748 = vmul.f32 %v4747, 2.1237322e-06
    %v4749 = vadd.f32 %v4748, 0.00028619796
    %v4750 = vmul.f32 %v4747, %v4749
    %v4751 = vadd.f32 %v4750, 0.0036580483
    %v4752 = vmul.f32 %v4747, %v4751
    %v4753 = vadd.f32 %v4752, 0.05243302
    %v4754 = vmul.f32 %v4747, %v4753
    %v4755 = vadd.f32 %v4754, 0.18741608
    %v4756 = vmul.f32 %v4747, %v4755
    %v4757 = vadd.f32 %v4756, 1.1283791
    %v4758 = vmul.f32 %v3058, %v4757
    %v4759 = vmul.f32 %v4747, 3.8918573e-05
    %v4760 = vadd.f32 %v4759, 0.001143296
    %v4761 = vmul.f32 %v4747, %v4760
    %v4762 = vadd.f32 %v4761, 0.014752088
    %v4763 = vmul.f32 %v4747, %v4762
    %v4764 = vadd.f32 %v4763, 0.112945676
    %v4765 = vmul.f32 %v4747, %v4764
    %v4766 = vadd.f32 %v4765, 0.4994258
    %v4767 = vmul.f32 %v4747, %v4766
    %v4768 = vadd.f32 %v4767, 1.0
    %v4769 = vrcp.pop %v4768
    %v4770 = vmul.f32 %v4768, %v4769
    %v4771 = vsub.f32 1.0, %v4770
    %v4772 = vmul.f32 %v4769, %v4771
    %v4773 = vadd.f32 %v4769, %v4772
    %vm4774 = vweird.f32 %v4768
    %vm4775 = vweird.f32 %v4769
    %vm4776 = vmor %vm4774, %vm4775
    %v4777 = vsel %vm4776, %v4769, %v4773
    %v4778 = vand.u32 2147483647, %v4768
    %vm4779 = vcmp.eq.f32.partialorder %v4778, 8.507059e+37
    %v4780 = vand.u32 %v4768, 2147483648
    %v4781 = vor.u32 1.1754944e-38, %v4780
    %v4782 = vsel %vm4779, %v4781, %v4777
    %v4783 = vmul.f32 %v4758, %v4782
    %v4784 = vmin.f32 %v4783, 1.0
    %v4785 = vmax.f32 %v4784, -1.0
    %v4786 = vmul.f32 %v3059, %v3059
    %v4787 = vmin.f32 16.0, %v4786
    %v4788 = vmul.f32 %v4787, 2.1237322e-06
    %v4789 = vadd.f32 %v4788, 0.00028619796
    %v4790 = vmul.f32 %v4787, %v4789
    %v4791 = vadd.f32 %v4790, 0.0036580483
    %v4792 = vmul.f32 %v4787, %v4791
    %v4793 = vadd.f32 %v4792, 0.05243302
    %v4794 = vmul.f32 %v4787, %v4793
    %v4795 = vadd.f32 %v4794, 0.18741608
    %v4796 = vmul.f32 %v4787, %v4795
    %v4797 = vadd.f32 %v4796, 1.1283791
    %v4798 = vmul.f32 %v3059, %v4797
    %v4799 = vmul.f32 %v4787, 3.8918573e-05
    %v4800 = vadd.f32 %v4799, 0.001143296
    %v4801 = vmul.f32 %v4787, %v4800
    %v4802 = vadd.f32 %v4801, 0.014752088
    %v4803 = vmul.f32 %v4787, %v4802
    %v4804 = vadd.f32 %v4803, 0.112945676
    %v4805 = vmul.f32 %v4787, %v4804
    %v4806 = vadd.f32 %v4805, 0.4994258
    %v4807 = vmul.f32 %v4787, %v4806
    %v4808 = vadd.f32 %v4807, 1.0
    %v4809 = vrcp.pop %v4808
    %v4810 = vmul.f32 %v4808, %v4809
    %v4811 = vsub.f32 1.0, %v4810
    %v4812 = vmul.f32 %v4809, %v4811
    %v4813 = vadd.f32 %v4809, %v4812
    %vm4814 = vweird.f32 %v4808
    %vm4815 = vweird.f32 %v4809
    %vm4816 = vmor %vm4814, %vm4815
    %v4817 = vsel %vm4816, %v4809, %v4813
    %v4818 = vand.u32 2147483647, %v4808
    %vm4819 = vcmp.eq.f32.partialorder %v4818, 8.507059e+37
    %v4820 = vand.u32 %v4808, 2147483648
    %v4821 = vor.u32 1.1754944e-38, %v4820
    %v4822 = vsel %vm4819, %v4821, %v4817
    %v4823 = vmul.f32 %v4798, %v4822
    %v4824 = vmin.f32 %v4823, 1.0
    %v4825 = vmax.f32 %v4824, -1.0
    %v4826 = vmul.f32 %v3060, %v3060
    %v4827 = vmin.f32 16.0, %v4826
    %v4828 = vmul.f32 %v4827, 2.1237322e-06
    %v4829 = vadd.f32 %v4828, 0.00028619796
    %v4830 = vmul.f32 %v4827, %v4829
    %v4831 = vadd.f32 %v4830, 0.0036580483
    %v4832 = vmul.f32 %v4827, %v4831
    %v4833 = vadd.f32 %v4832, 0.05243302
    %v4834 = vmul.f32 %v4827, %v4833
    %v4835 = vadd.f32 %v4834, 0.18741608
    %v4836 = vmul.f32 %v4827, %v4835
    %v4837 = vadd.f32 %v4836, 1.1283791
    %v4838 = vmul.f32 %v3060, %v4837
    %v4839 = vmul.f32 %v4827, 3.8918573e-05
    %v4840 = vadd.f32 %v4839, 0.001143296
    %v4841 = vmul.f32 %v4827, %v4840
    %v4842 = vadd.f32 %v4841, 0.014752088
    %v4843 = vmul.f32 %v4827, %v4842
    %v4844 = vadd.f32 %v4843, 0.112945676
    %v4845 = vmul.f32 %v4827, %v4844
    %v4846 = vadd.f32 %v4845, 0.4994258
    %v4847 = vmul.f32 %v4827, %v4846
    %v4848 = vadd.f32 %v4847, 1.0
    %v4849 = vrcp.pop %v4848
    %v4850 = vmul.f32 %v4848, %v4849
    %v4851 = vsub.f32 1.0, %v4850
    %v4852 = vmul.f32 %v4849, %v4851
    %v4853 = vadd.f32 %v4849, %v4852
    %vm4854 = vweird.f32 %v4848
    %vm4855 = vweird.f32 %v4849
    %vm4856 = vmor %vm4854, %vm4855
    %v4857 = vsel %vm4856, %v4849, %v4853
    %v4858 = vand.u32 2147483647, %v4848
    %vm4859 = vcmp.eq.f32.partialorder %v4858, 8.507059e+37
    %v4860 = vand.u32 %v4848, 2147483648
    %v4861 = vor.u32 1.1754944e-38, %v4860
    %v4862 = vsel %vm4859, %v4861, %v4857
    %v4863 = vmul.f32 %v4838, %v4862
    %v4864 = vmin.f32 %v4863, 1.0
    %v4865 = vmax.f32 %v4864, -1.0
    %v4866 = vmul.f32 %v3061, %v3061
    %v4867 = vmin.f32 16.0, %v4866
    %v4868 = vmul.f32 %v4867, 2.1237322e-06
    %v4869 = vadd.f32 %v4868, 0.00028619796
    %v4870 = vmul.f32 %v4867, %v4869
    %v4871 = vadd.f32 %v4870, 0.0036580483
    %v4872 = vmul.f32 %v4867, %v4871
    %v4873 = vadd.f32 %v4872, 0.05243302
    %v4874 = vmul.f32 %v4867, %v4873
    %v4875 = vadd.f32 %v4874, 0.18741608
    %v4876 = vmul.f32 %v4867, %v4875
    %v4877 = vadd.f32 %v4876, 1.1283791
    %v4878 = vmul.f32 %v3061, %v4877
    %v4879 = vmul.f32 %v4867, 3.8918573e-05
    %v4880 = vadd.f32 %v4879, 0.001143296
    %v4881 = vmul.f32 %v4867, %v4880
    %v4882 = vadd.f32 %v4881, 0.014752088
    %v4883 = vmul.f32 %v4867, %v4882
    %v4884 = vadd.f32 %v4883, 0.112945676
    %v4885 = vmul.f32 %v4867, %v4884
    %v4886 = vadd.f32 %v4885, 0.4994258
    %v4887 = vmul.f32 %v4867, %v4886
    %v4888 = vadd.f32 %v4887, 1.0
    %v4889 = vrcp.pop %v4888
    %v4890 = vmul.f32 %v4888, %v4889
    %v4891 = vsub.f32 1.0, %v4890
    %v4892 = vmul.f32 %v4889, %v4891
    %v4893 = vadd.f32 %v4889, %v4892
    %vm4894 = vweird.f32 %v4888
    %vm4895 = vweird.f32 %v4889
    %vm4896 = vmor %vm4894, %vm4895
    %v4897 = vsel %vm4896, %v4889, %v4893
    %v4898 = vand.u32 2147483647, %v4888
    %vm4899 = vcmp.eq.f32.partialorder %v4898, 8.507059e+37
    %v4900 = vand.u32 %v4888, 2147483648
    %v4901 = vor.u32 1.1754944e-38, %v4900
    %v4902 = vsel %vm4899, %v4901, %v4897
    %v4903 = vmul.f32 %v4878, %v4902
    %v4904 = vmin.f32 %v4903, 1.0
    %v4905 = vmax.f32 %v4904, -1.0
    %v4906 = vmul.f32 %v3062, %v3062
    %v4907 = vmin.f32 16.0, %v4906
    %v4908 = vmul.f32 %v4907, 2.1237322e-06
    %v4909 = vadd.f32 %v4908, 0.00028619796
    %v4910 = vmul.f32 %v4907, %v4909
    %v4911 = vadd.f32 %v4910, 0.0036580483
    %v4912 = vmul.f32 %v4907, %v4911
    %v4913 = vadd.f32 %v4912, 0.05243302
    %v4914 = vmul.f32 %v4907, %v4913
    %v4915 = vadd.f32 %v4914, 0.18741608
    %v4916 = vmul.f32 %v4907, %v4915
    %v4917 = vadd.f32 %v4916, 1.1283791
    %v4918 = vmul.f32 %v3062, %v4917
    %v4919 = vmul.f32 %v4907, 3.8918573e-05
    %v4920 = vadd.f32 %v4919, 0.001143296
    %v4921 = vmul.f32 %v4907, %v4920
    %v4922 = vadd.f32 %v4921, 0.014752088
    %v4923 = vmul.f32 %v4907, %v4922
    %v4924 = vadd.f32 %v4923, 0.112945676
    %v4925 = vmul.f32 %v4907, %v4924
    %v4926 = vadd.f32 %v4925, 0.4994258
    %v4927 = vmul.f32 %v4907, %v4926
    %v4928 = vadd.f32 %v4927, 1.0
    %v4929 = vrcp.pop %v4928
    %v4930 = vmul.f32 %v4928, %v4929
    %v4931 = vsub.f32 1.0, %v4930
    %v4932 = vmul.f32 %v4929, %v4931
    %v4933 = vadd.f32 %v4929, %v4932
    %vm4934 = vweird.f32 %v4928
    %vm4935 = vweird.f32 %v4929
    %vm4936 = vmor %vm4934, %vm4935
    %v4937 = vsel %vm4936, %v4929, %v4933
    %v4938 = vand.u32 2147483647, %v4928
    %vm4939 = vcmp.eq.f32.partialorder %v4938, 8.507059e+37
    %v4940 = vand.u32 %v4928, 2147483648
    %v4941 = vor.u32 1.1754944e-38, %v4940
    %v4942 = vsel %vm4939, %v4941, %v4937
    %v4943 = vmul.f32 %v4918, %v4942
    %v4944 = vmin.f32 %v4943, 1.0
    %v4945 = vmax.f32 %v4944, -1.0
    %v4946 = vmul.f32 %v3063, %v3063
    %v4947 = vmin.f32 16.0, %v4946
    %v4948 = vmul.f32 %v4947, 2.1237322e-06
    %v4949 = vadd.f32 %v4948, 0.00028619796
    %v4950 = vmul.f32 %v4947, %v4949
    %v4951 = vadd.f32 %v4950, 0.0036580483
    %v4952 = vmul.f32 %v4947, %v4951
    %v4953 = vadd.f32 %v4952, 0.05243302
    %v4954 = vmul.f32 %v4947, %v4953
    %v4955 = vadd.f32 %v4954, 0.18741608
    %v4956 = vmul.f32 %v4947, %v4955
    %v4957 = vadd.f32 %v4956, 1.1283791
    %v4958 = vmul.f32 %v3063, %v4957
    %v4959 = vmul.f32 %v4947, 3.8918573e-05
    %v4960 = vadd.f32 %v4959, 0.001143296
    %v4961 = vmul.f32 %v4947, %v4960
    %v4962 = vadd.f32 %v4961, 0.014752088
    %v4963 = vmul.f32 %v4947, %v4962
    %v4964 = vadd.f32 %v4963, 0.112945676
    %v4965 = vmul.f32 %v4947, %v4964
    %v4966 = vadd.f32 %v4965, 0.4994258
    %v4967 = vmul.f32 %v4947, %v4966
    %v4968 = vadd.f32 %v4967, 1.0
    %v4969 = vrcp.pop %v4968
    %v4970 = vmul.f32 %v4968, %v4969
    %v4971 = vsub.f32 1.0, %v4970
    %v4972 = vmul.f32 %v4969, %v4971
    %v4973 = vadd.f32 %v4969, %v4972
    %vm4974 = vweird.f32 %v4968
    %vm4975 = vweird.f32 %v4969
    %vm4976 = vmor %vm4974, %vm4975
    %v4977 = vsel %vm4976, %v4969, %v4973
    %v4978 = vand.u32 2147483647, %v4968
    %vm4979 = vcmp.eq.f32.partialorder %v4978, 8.507059e+37
    %v4980 = vand.u32 %v4968, 2147483648
    %v4981 = vor.u32 1.1754944e-38, %v4980
    %v4982 = vsel %vm4979, %v4981, %v4977
    %v4983 = vmul.f32 %v4958, %v4982
    %v4984 = vmin.f32 %v4983, 1.0
    %v4985 = vmax.f32 %v4984, -1.0
    %v4986 = vmul.f32 %v3064, %v3064
    %v4987 = vmin.f32 16.0, %v4986
    %v4988 = vmul.f32 %v4987, 2.1237322e-06
    %v4989 = vadd.f32 %v4988, 0.00028619796
    %v4990 = vmul.f32 %v4987, %v4989
    %v4991 = vadd.f32 %v4990, 0.0036580483
    %v4992 = vmul.f32 %v4987, %v4991
    %v4993 = vadd.f32 %v4992, 0.05243302
    %v4994 = vmul.f32 %v4987, %v4993
    %v4995 = vadd.f32 %v4994, 0.18741608
    %v4996 = vmul.f32 %v4987, %v4995
    %v4997 = vadd.f32 %v4996, 1.1283791
    %v4998 = vmul.f32 %v3064, %v4997
    %v4999 = vmul.f32 %v4987, 3.8918573e-05
    %v5000 = vadd.f32 %v4999, 0.001143296
    %v5001 = vmul.f32 %v4987, %v5000
    %v5002 = vadd.f32 %v5001, 0.014752088
    %v5003 = vmul.f32 %v4987, %v5002
    %v5004 = vadd.f32 %v5003, 0.112945676
    %v5005 = vmul.f32 %v4987, %v5004
    %v5006 = vadd.f32 %v5005, 0.4994258
    %v5007 = vmul.f32 %v4987, %v5006
    %v5008 = vadd.f32 %v5007, 1.0
    %v5009 = vrcp.pop %v5008
    %v5010 = vmul.f32 %v5008, %v5009
    %v5011 = vsub.f32 1.0, %v5010
    %v5012 = vmul.f32 %v5009, %v5011
    %v5013 = vadd.f32 %v5009, %v5012
    %vm5014 = vweird.f32 %v5008
    %vm5015 = vweird.f32 %v5009
    %vm5016 = vmor %vm5014, %vm5015
    %v5017 = vsel %vm5016, %v5009, %v5013
    %v5018 = vand.u32 2147483647, %v5008
    %vm5019 = vcmp.eq.f32.partialorder %v5018, 8.507059e+37
    %v5020 = vand.u32 %v5008, 2147483648
    %v5021 = vor.u32 1.1754944e-38, %v5020
    %v5022 = vsel %vm5019, %v5021, %v5017
    %v5023 = vmul.f32 %v4998, %v5022
    %v5024 = vmin.f32 %v5023, 1.0
    %v5025 = vmax.f32 %v5024, -1.0
    %v5026 = vmul.f32 %v3065, %v3065
    %v5027 = vmin.f32 16.0, %v5026
    %v5028 = vmul.f32 %v5027, 2.1237322e-06
    %v5029 = vadd.f32 %v5028, 0.00028619796
    %v5030 = vmul.f32 %v5027, %v5029
    %v5031 = vadd.f32 %v5030, 0.0036580483
    %v5032 = vmul.f32 %v5027, %v5031
    %v5033 = vadd.f32 %v5032, 0.05243302
    %v5034 = vmul.f32 %v5027, %v5033
    %v5035 = vadd.f32 %v5034, 0.18741608
    %v5036 = vmul.f32 %v5027, %v5035
    %v5037 = vadd.f32 %v5036, 1.1283791
    %v5038 = vmul.f32 %v3065, %v5037
    %v5039 = vmul.f32 %v5027, 3.8918573e-05
    %v5040 = vadd.f32 %v5039, 0.001143296
    %v5041 = vmul.f32 %v5027, %v5040
    %v5042 = vadd.f32 %v5041, 0.014752088
    %v5043 = vmul.f32 %v5027, %v5042
    %v5044 = vadd.f32 %v5043, 0.112945676
    %v5045 = vmul.f32 %v5027, %v5044
    %v5046 = vadd.f32 %v5045, 0.4994258
    %v5047 = vmul.f32 %v5027, %v5046
    %v5048 = vadd.f32 %v5047, 1.0
    %v5049 = vrcp.pop %v5048
    %v5050 = vmul.f32 %v5048, %v5049
    %v5051 = vsub.f32 1.0, %v5050
    %v5052 = vmul.f32 %v5049, %v5051
    %v5053 = vadd.f32 %v5049, %v5052
    %vm5054 = vweird.f32 %v5048
    %vm5055 = vweird.f32 %v5049
    %vm5056 = vmor %vm5054, %vm5055
    %v5057 = vsel %vm5056, %v5049, %v5053
    %v5058 = vand.u32 2147483647, %v5048
    %vm5059 = vcmp.eq.f32.partialorder %v5058, 8.507059e+37
    %v5060 = vand.u32 %v5048, 2147483648
    %v5061 = vor.u32 1.1754944e-38, %v5060
    %v5062 = vsel %vm5059, %v5061, %v5057
    %v5063 = vmul.f32 %v5038, %v5062
    %v5064 = vmin.f32 %v5063, 1.0
    %v5065 = vmax.f32 %v5064, -1.0
    %v5066 = vmul.f32 %v3066, %v3066
    %v5067 = vmin.f32 16.0, %v5066
    %v5068 = vmul.f32 %v5067, 2.1237322e-06
    %v5069 = vadd.f32 %v5068, 0.00028619796
    %v5070 = vmul.f32 %v5067, %v5069
    %v5071 = vadd.f32 %v5070, 0.0036580483
    %v5072 = vmul.f32 %v5067, %v5071
    %v5073 = vadd.f32 %v5072, 0.05243302
    %v5074 = vmul.f32 %v5067, %v5073
    %v5075 = vadd.f32 %v5074, 0.18741608
    %v5076 = vmul.f32 %v5067, %v5075
    %v5077 = vadd.f32 %v5076, 1.1283791
    %v5078 = vmul.f32 %v3066, %v5077
    %v5079 = vmul.f32 %v5067, 3.8918573e-05
    %v5080 = vadd.f32 %v5079, 0.001143296
    %v5081 = vmul.f32 %v5067, %v5080
    %v5082 = vadd.f32 %v5081, 0.014752088
    %v5083 = vmul.f32 %v5067, %v5082
    %v5084 = vadd.f32 %v5083, 0.112945676
    %v5085 = vmul.f32 %v5067, %v5084
    %v5086 = vadd.f32 %v5085, 0.4994258
    %v5087 = vmul.f32 %v5067, %v5086
    %v5088 = vadd.f32 %v5087, 1.0
    %v5089 = vrcp.pop %v5088
    %v5090 = vmul.f32 %v5088, %v5089
    %v5091 = vsub.f32 1.0, %v5090
    %v5092 = vmul.f32 %v5089, %v5091
    %v5093 = vadd.f32 %v5089, %v5092
    %vm5094 = vweird.f32 %v5088
    %vm5095 = vweird.f32 %v5089
    %vm5096 = vmor %vm5094, %vm5095
    %v5097 = vsel %vm5096, %v5089, %v5093
    %v5098 = vand.u32 2147483647, %v5088
    %vm5099 = vcmp.eq.f32.partialorder %v5098, 8.507059e+37
    %v5100 = vand.u32 %v5088, 2147483648
    %v5101 = vor.u32 1.1754944e-38, %v5100
    %v5102 = vsel %vm5099, %v5101, %v5097
    %v5103 = vmul.f32 %v5078, %v5102
    %v5104 = vmin.f32 %v5103, 1.0
    %v5105 = vmax.f32 %v5104, -1.0
    %v5106 = vmul.f32 %v3067, %v3067
    %v5107 = vmin.f32 16.0, %v5106
    %v5108 = vmul.f32 %v5107, 2.1237322e-06
    %v5109 = vadd.f32 %v5108, 0.00028619796
    %v5110 = vmul.f32 %v5107, %v5109
    %v5111 = vadd.f32 %v5110, 0.0036580483
    %v5112 = vmul.f32 %v5107, %v5111
    %v5113 = vadd.f32 %v5112, 0.05243302
    %v5114 = vmul.f32 %v5107, %v5113
    %v5115 = vadd.f32 %v5114, 0.18741608
    %v5116 = vmul.f32 %v5107, %v5115
    %v5117 = vadd.f32 %v5116, 1.1283791
    %v5118 = vmul.f32 %v3067, %v5117
    %v5119 = vmul.f32 %v5107, 3.8918573e-05
    %v5120 = vadd.f32 %v5119, 0.001143296
    %v5121 = vmul.f32 %v5107, %v5120
    %v5122 = vadd.f32 %v5121, 0.014752088
    %v5123 = vmul.f32 %v5107, %v5122
    %v5124 = vadd.f32 %v5123, 0.112945676
    %v5125 = vmul.f32 %v5107, %v5124
    %v5126 = vadd.f32 %v5125, 0.4994258
    %v5127 = vmul.f32 %v5107, %v5126
    %v5128 = vadd.f32 %v5127, 1.0
    %v5129 = vrcp.pop %v5128
    %v5130 = vmul.f32 %v5128, %v5129
    %v5131 = vsub.f32 1.0, %v5130
    %v5132 = vmul.f32 %v5129, %v5131
    %v5133 = vadd.f32 %v5129, %v5132
    %vm5134 = vweird.f32 %v5128
    %vm5135 = vweird.f32 %v5129
    %vm5136 = vmor %vm5134, %vm5135
    %v5137 = vsel %vm5136, %v5129, %v5133
    %v5138 = vand.u32 2147483647, %v5128
    %vm5139 = vcmp.eq.f32.partialorder %v5138, 8.507059e+37
    %v5140 = vand.u32 %v5128, 2147483648
    %v5141 = vor.u32 1.1754944e-38, %v5140
    %v5142 = vsel %vm5139, %v5141, %v5137
    %v5143 = vmul.f32 %v5118, %v5142
    %v5144 = vmin.f32 %v5143, 1.0
    %v5145 = vmax.f32 %v5144, -1.0
    %v5146 = vmul.f32 %v3068, %v3068
    %v5147 = vmin.f32 16.0, %v5146
    %v5148 = vmul.f32 %v5147, 2.1237322e-06
    %v5149 = vadd.f32 %v5148, 0.00028619796
    %v5150 = vmul.f32 %v5147, %v5149
    %v5151 = vadd.f32 %v5150, 0.0036580483
    %v5152 = vmul.f32 %v5147, %v5151
    %v5153 = vadd.f32 %v5152, 0.05243302
    %v5154 = vmul.f32 %v5147, %v5153
    %v5155 = vadd.f32 %v5154, 0.18741608
    %v5156 = vmul.f32 %v5147, %v5155
    %v5157 = vadd.f32 %v5156, 1.1283791
    %v5158 = vmul.f32 %v3068, %v5157
    %v5159 = vmul.f32 %v5147, 3.8918573e-05
    %v5160 = vadd.f32 %v5159, 0.001143296
    %v5161 = vmul.f32 %v5147, %v5160
    %v5162 = vadd.f32 %v5161, 0.014752088
    %v5163 = vmul.f32 %v5147, %v5162
    %v5164 = vadd.f32 %v5163, 0.112945676
    %v5165 = vmul.f32 %v5147, %v5164
    %v5166 = vadd.f32 %v5165, 0.4994258
    %v5167 = vmul.f32 %v5147, %v5166
    %v5168 = vadd.f32 %v5167, 1.0
    %v5169 = vrcp.pop %v5168
    %v5170 = vmul.f32 %v5168, %v5169
    %v5171 = vsub.f32 1.0, %v5170
    %v5172 = vmul.f32 %v5169, %v5171
    %v5173 = vadd.f32 %v5169, %v5172
    %vm5174 = vweird.f32 %v5168
    %vm5175 = vweird.f32 %v5169
    %vm5176 = vmor %vm5174, %vm5175
    %v5177 = vsel %vm5176, %v5169, %v5173
    %v5178 = vand.u32 2147483647, %v5168
    %vm5179 = vcmp.eq.f32.partialorder %v5178, 8.507059e+37
    %v5180 = vand.u32 %v5168, 2147483648
    %v5181 = vor.u32 1.1754944e-38, %v5180
    %v5182 = vsel %vm5179, %v5181, %v5177
    %v5183 = vmul.f32 %v5158, %v5182
    %v5184 = vmin.f32 %v5183, 1.0
    %v5185 = vmax.f32 %v5184, -1.0
    %v5186 = vmul.f32 %v3069, %v3069
    %v5187 = vmin.f32 16.0, %v5186
    %v5188 = vmul.f32 %v5187, 2.1237322e-06
    %v5189 = vadd.f32 %v5188, 0.00028619796
    %v5190 = vmul.f32 %v5187, %v5189
    %v5191 = vadd.f32 %v5190, 0.0036580483
    %v5192 = vmul.f32 %v5187, %v5191
    %v5193 = vadd.f32 %v5192, 0.05243302
    %v5194 = vmul.f32 %v5187, %v5193
    %v5195 = vadd.f32 %v5194, 0.18741608
    %v5196 = vmul.f32 %v5187, %v5195
    %v5197 = vadd.f32 %v5196, 1.1283791
    %v5198 = vmul.f32 %v3069, %v5197
    %v5199 = vmul.f32 %v5187, 3.8918573e-05
    %v5200 = vadd.f32 %v5199, 0.001143296
    %v5201 = vmul.f32 %v5187, %v5200
    %v5202 = vadd.f32 %v5201, 0.014752088
    %v5203 = vmul.f32 %v5187, %v5202
    %v5204 = vadd.f32 %v5203, 0.112945676
    %v5205 = vmul.f32 %v5187, %v5204
    %v5206 = vadd.f32 %v5205, 0.4994258
    %v5207 = vmul.f32 %v5187, %v5206
    %v5208 = vadd.f32 %v5207, 1.0
    %v5209 = vrcp.pop %v5208
    %v5210 = vmul.f32 %v5208, %v5209
    %v5211 = vsub.f32 1.0, %v5210
    %v5212 = vmul.f32 %v5209, %v5211
    %v5213 = vadd.f32 %v5209, %v5212
    %vm5214 = vweird.f32 %v5208
    %vm5215 = vweird.f32 %v5209
    %vm5216 = vmor %vm5214, %vm5215
    %v5217 = vsel %vm5216, %v5209, %v5213
    %v5218 = vand.u32 2147483647, %v5208
    %vm5219 = vcmp.eq.f32.partialorder %v5218, 8.507059e+37
    %v5220 = vand.u32 %v5208, 2147483648
    %v5221 = vor.u32 1.1754944e-38, %v5220
    %v5222 = vsel %vm5219, %v5221, %v5217
    %v5223 = vmul.f32 %v5198, %v5222
    %v5224 = vmin.f32 %v5223, 1.0
    %v5225 = vmax.f32 %v5224, -1.0
    %v5226 = vmul.f32 %v3070, %v3070
    %v5227 = vmin.f32 16.0, %v5226
    %v5228 = vmul.f32 %v5227, 2.1237322e-06
    %v5229 = vadd.f32 %v5228, 0.00028619796
    %v5230 = vmul.f32 %v5227, %v5229
    %v5231 = vadd.f32 %v5230, 0.0036580483
    %v5232 = vmul.f32 %v5227, %v5231
    %v5233 = vadd.f32 %v5232, 0.05243302
    %v5234 = vmul.f32 %v5227, %v5233
    %v5235 = vadd.f32 %v5234, 0.18741608
    %v5236 = vmul.f32 %v5227, %v5235
    %v5237 = vadd.f32 %v5236, 1.1283791
    %v5238 = vmul.f32 %v3070, %v5237
    %v5239 = vmul.f32 %v5227, 3.8918573e-05
    %v5240 = vadd.f32 %v5239, 0.001143296
    %v5241 = vmul.f32 %v5227, %v5240
    %v5242 = vadd.f32 %v5241, 0.014752088
    %v5243 = vmul.f32 %v5227, %v5242
    %v5244 = vadd.f32 %v5243, 0.112945676
    %v5245 = vmul.f32 %v5227, %v5244
    %v5246 = vadd.f32 %v5245, 0.4994258
    %v5247 = vmul.f32 %v5227, %v5246
    %v5248 = vadd.f32 %v5247, 1.0
    %v5249 = vrcp.pop %v5248
    %v5250 = vmul.f32 %v5248, %v5249
    %v5251 = vsub.f32 1.0, %v5250
    %v5252 = vmul.f32 %v5249, %v5251
    %v5253 = vadd.f32 %v5249, %v5252
    %vm5254 = vweird.f32 %v5248
    %vm5255 = vweird.f32 %v5249
    %vm5256 = vmor %vm5254, %vm5255
    %v5257 = vsel %vm5256, %v5249, %v5253
    %v5258 = vand.u32 2147483647, %v5248
    %vm5259 = vcmp.eq.f32.partialorder %v5258, 8.507059e+37
    %v5260 = vand.u32 %v5248, 2147483648
    %v5261 = vor.u32 1.1754944e-38, %v5260
    %v5262 = vsel %vm5259, %v5261, %v5257
    %v5263 = vmul.f32 %v5238, %v5262
    %v5264 = vmin.f32 %v5263, 1.0
    %v5265 = vmax.f32 %v5264, -1.0
    %v5266 = vmul.f32 %v3071, %v3071
    %v5267 = vmin.f32 16.0, %v5266
    %v5268 = vmul.f32 %v5267, 2.1237322e-06
    %v5269 = vadd.f32 %v5268, 0.00028619796
    %v5270 = vmul.f32 %v5267, %v5269
    %v5271 = vadd.f32 %v5270, 0.0036580483
    %v5272 = vmul.f32 %v5267, %v5271
    %v5273 = vadd.f32 %v5272, 0.05243302
    %v5274 = vmul.f32 %v5267, %v5273
    %v5275 = vadd.f32 %v5274, 0.18741608
    %v5276 = vmul.f32 %v5267, %v5275
    %v5277 = vadd.f32 %v5276, 1.1283791
    %v5278 = vmul.f32 %v3071, %v5277
    %v5279 = vmul.f32 %v5267, 3.8918573e-05
    %v5280 = vadd.f32 %v5279, 0.001143296
    %v5281 = vmul.f32 %v5267, %v5280
    %v5282 = vadd.f32 %v5281, 0.014752088
    %v5283 = vmul.f32 %v5267, %v5282
    %v5284 = vadd.f32 %v5283, 0.112945676
    %v5285 = vmul.f32 %v5267, %v5284
    %v5286 = vadd.f32 %v5285, 0.4994258
    %v5287 = vmul.f32 %v5267, %v5286
    %v5288 = vadd.f32 %v5287, 1.0
    %v5289 = vrcp.pop %v5288
    %v5290 = vmul.f32 %v5288, %v5289
    %v5291 = vsub.f32 1.0, %v5290
    %v5292 = vmul.f32 %v5289, %v5291
    %v5293 = vadd.f32 %v5289, %v5292
    %vm5294 = vweird.f32 %v5288
    %vm5295 = vweird.f32 %v5289
    %vm5296 = vmor %vm5294, %vm5295
    %v5297 = vsel %vm5296, %v5289, %v5293
    %v5298 = vand.u32 2147483647, %v5288
    %vm5299 = vcmp.eq.f32.partialorder %v5298, 8.507059e+37
    %v5300 = vand.u32 %v5288, 2147483648
    %v5301 = vor.u32 1.1754944e-38, %v5300
    %v5302 = vsel %vm5299, %v5301, %v5297
    %v5303 = vmul.f32 %v5278, %v5302
    %v5304 = vmin.f32 %v5303, 1.0
    %v5305 = vmax.f32 %v5304, -1.0
    %v5306 = vmul.f32 %v3072, %v3072
    %v5307 = vmin.f32 16.0, %v5306
    %v5308 = vmul.f32 %v5307, 2.1237322e-06
    %v5309 = vadd.f32 %v5308, 0.00028619796
    %v5310 = vmul.f32 %v5307, %v5309
    %v5311 = vadd.f32 %v5310, 0.0036580483
    %v5312 = vmul.f32 %v5307, %v5311
    %v5313 = vadd.f32 %v5312, 0.05243302
    %v5314 = vmul.f32 %v5307, %v5313
    %v5315 = vadd.f32 %v5314, 0.18741608
    %v5316 = vmul.f32 %v5307, %v5315
    %v5317 = vadd.f32 %v5316, 1.1283791
    %v5318 = vmul.f32 %v3072, %v5317
    %v5319 = vmul.f32 %v5307, 3.8918573e-05
    %v5320 = vadd.f32 %v5319, 0.001143296
    %v5321 = vmul.f32 %v5307, %v5320
    %v5322 = vadd.f32 %v5321, 0.014752088
    %v5323 = vmul.f32 %v5307, %v5322
    %v5324 = vadd.f32 %v5323, 0.112945676
    %v5325 = vmul.f32 %v5307, %v5324
    %v5326 = vadd.f32 %v5325, 0.4994258
    %v5327 = vmul.f32 %v5307, %v5326
    %v5328 = vadd.f32 %v5327, 1.0
    %v5329 = vrcp.pop %v5328
    %v5330 = vmul.f32 %v5328, %v5329
    %v5331 = vsub.f32 1.0, %v5330
    %v5332 = vmul.f32 %v5329, %v5331
    %v5333 = vadd.f32 %v5329, %v5332
    %vm5334 = vweird.f32 %v5328
    %vm5335 = vweird.f32 %v5329
    %vm5336 = vmor %vm5334, %vm5335
    %v5337 = vsel %vm5336, %v5329, %v5333
    %v5338 = vand.u32 2147483647, %v5328
    %vm5339 = vcmp.eq.f32.partialorder %v5338, 8.507059e+37
    %v5340 = vand.u32 %v5328, 2147483648
    %v5341 = vor.u32 1.1754944e-38, %v5340
    %v5342 = vsel %vm5339, %v5341, %v5337
    %v5343 = vmul.f32 %v5318, %v5342
    %v5344 = vmin.f32 %v5343, 1.0
    %v5345 = vmax.f32 %v5344, -1.0
    %v5346 = vmul.f32 %v3073, %v3073
    %v5347 = vmin.f32 16.0, %v5346
    %v5348 = vmul.f32 %v5347, 2.1237322e-06
    %v5349 = vadd.f32 %v5348, 0.00028619796
    %v5350 = vmul.f32 %v5347, %v5349
    %v5351 = vadd.f32 %v5350, 0.0036580483
    %v5352 = vmul.f32 %v5347, %v5351
    %v5353 = vadd.f32 %v5352, 0.05243302
    %v5354 = vmul.f32 %v5347, %v5353
    %v5355 = vadd.f32 %v5354, 0.18741608
    %v5356 = vmul.f32 %v5347, %v5355
    %v5357 = vadd.f32 %v5356, 1.1283791
    %v5358 = vmul.f32 %v3073, %v5357
    %v5359 = vmul.f32 %v5347, 3.8918573e-05
    %v5360 = vadd.f32 %v5359, 0.001143296
    %v5361 = vmul.f32 %v5347, %v5360
    %v5362 = vadd.f32 %v5361, 0.014752088
    %v5363 = vmul.f32 %v5347, %v5362
    %v5364 = vadd.f32 %v5363, 0.112945676
    %v5365 = vmul.f32 %v5347, %v5364
    %v5366 = vadd.f32 %v5365, 0.4994258
    %v5367 = vmul.f32 %v5347, %v5366
    %v5368 = vadd.f32 %v5367, 1.0
    %v5369 = vrcp.pop %v5368
    %v5370 = vmul.f32 %v5368, %v5369
    %v5371 = vsub.f32 1.0, %v5370
    %v5372 = vmul.f32 %v5369, %v5371
    %v5373 = vadd.f32 %v5369, %v5372
    %vm5374 = vweird.f32 %v5368
    %vm5375 = vweird.f32 %v5369
    %vm5376 = vmor %vm5374, %vm5375
    %v5377 = vsel %vm5376, %v5369, %v5373
    %v5378 = vand.u32 2147483647, %v5368
    %vm5379 = vcmp.eq.f32.partialorder %v5378, 8.507059e+37
    %v5380 = vand.u32 %v5368, 2147483648
    %v5381 = vor.u32 1.1754944e-38, %v5380
    %v5382 = vsel %vm5379, %v5381, %v5377
    %v5383 = vmul.f32 %v5358, %v5382
    %v5384 = vmin.f32 %v5383, 1.0
    %v5385 = vmax.f32 %v5384, -1.0
    %v5386 = vmul.f32 %v3074, %v3074
    %v5387 = vmin.f32 16.0, %v5386
    %v5388 = vmul.f32 %v5387, 2.1237322e-06
    %v5389 = vadd.f32 %v5388, 0.00028619796
    %v5390 = vmul.f32 %v5387, %v5389
    %v5391 = vadd.f32 %v5390, 0.0036580483
    %v5392 = vmul.f32 %v5387, %v5391
    %v5393 = vadd.f32 %v5392, 0.05243302
    %v5394 = vmul.f32 %v5387, %v5393
    %v5395 = vadd.f32 %v5394, 0.18741608
    %v5396 = vmul.f32 %v5387, %v5395
    %v5397 = vadd.f32 %v5396, 1.1283791
    %v5398 = vmul.f32 %v3074, %v5397
    %v5399 = vmul.f32 %v5387, 3.8918573e-05
    %v5400 = vadd.f32 %v5399, 0.001143296
    %v5401 = vmul.f32 %v5387, %v5400
    %v5402 = vadd.f32 %v5401, 0.014752088
    %v5403 = vmul.f32 %v5387, %v5402
    %v5404 = vadd.f32 %v5403, 0.112945676
    %v5405 = vmul.f32 %v5387, %v5404
    %v5406 = vadd.f32 %v5405, 0.4994258
    %v5407 = vmul.f32 %v5387, %v5406
    %v5408 = vadd.f32 %v5407, 1.0
    %v5409 = vrcp.pop %v5408
    %v5410 = vmul.f32 %v5408, %v5409
    %v5411 = vsub.f32 1.0, %v5410
    %v5412 = vmul.f32 %v5409, %v5411
    %v5413 = vadd.f32 %v5409, %v5412
    %vm5414 = vweird.f32 %v5408
    %vm5415 = vweird.f32 %v5409
    %vm5416 = vmor %vm5414, %vm5415
    %v5417 = vsel %vm5416, %v5409, %v5413
    %v5418 = vand.u32 2147483647, %v5408
    %vm5419 = vcmp.eq.f32.partialorder %v5418, 8.507059e+37
    %v5420 = vand.u32 %v5408, 2147483648
    %v5421 = vor.u32 1.1754944e-38, %v5420
    %v5422 = vsel %vm5419, %v5421, %v5417
    %v5423 = vmul.f32 %v5398, %v5422
    %v5424 = vmin.f32 %v5423, 1.0
    %v5425 = vmax.f32 %v5424, -1.0
    %v5426 = vmul.f32 %v3075, %v3075
    %v5427 = vmin.f32 16.0, %v5426
    %v5428 = vmul.f32 %v5427, 2.1237322e-06
    %v5429 = vadd.f32 %v5428, 0.00028619796
    %v5430 = vmul.f32 %v5427, %v5429
    %v5431 = vadd.f32 %v5430, 0.0036580483
    %v5432 = vmul.f32 %v5427, %v5431
    %v5433 = vadd.f32 %v5432, 0.05243302
    %v5434 = vmul.f32 %v5427, %v5433
    %v5435 = vadd.f32 %v5434, 0.18741608
    %v5436 = vmul.f32 %v5427, %v5435
    %v5437 = vadd.f32 %v5436, 1.1283791
    %v5438 = vmul.f32 %v3075, %v5437
    %v5439 = vmul.f32 %v5427, 3.8918573e-05
    %v5440 = vadd.f32 %v5439, 0.001143296
    %v5441 = vmul.f32 %v5427, %v5440
    %v5442 = vadd.f32 %v5441, 0.014752088
    %v5443 = vmul.f32 %v5427, %v5442
    %v5444 = vadd.f32 %v5443, 0.112945676
    %v5445 = vmul.f32 %v5427, %v5444
    %v5446 = vadd.f32 %v5445, 0.4994258
    %v5447 = vmul.f32 %v5427, %v5446
    %v5448 = vadd.f32 %v5447, 1.0
    %v5449 = vrcp.pop %v5448
    %v5450 = vmul.f32 %v5448, %v5449
    %v5451 = vsub.f32 1.0, %v5450
    %v5452 = vmul.f32 %v5449, %v5451
    %v5453 = vadd.f32 %v5449, %v5452
    %vm5454 = vweird.f32 %v5448
    %vm5455 = vweird.f32 %v5449
    %vm5456 = vmor %vm5454, %vm5455
    %v5457 = vsel %vm5456, %v5449, %v5453
    %v5458 = vand.u32 2147483647, %v5448
    %vm5459 = vcmp.eq.f32.partialorder %v5458, 8.507059e+37
    %v5460 = vand.u32 %v5448, 2147483648
    %v5461 = vor.u32 1.1754944e-38, %v5460
    %v5462 = vsel %vm5459, %v5461, %v5457
    %v5463 = vmul.f32 %v5438, %v5462
    %v5464 = vmin.f32 %v5463, 1.0
    %v5465 = vmax.f32 %v5464, -1.0
    %v5466 = vmul.f32 %v3076, %v3076
    %v5467 = vmin.f32 16.0, %v5466
    %v5468 = vmul.f32 %v5467, 2.1237322e-06
    %v5469 = vadd.f32 %v5468, 0.00028619796
    %v5470 = vmul.f32 %v5467, %v5469
    %v5471 = vadd.f32 %v5470, 0.0036580483
    %v5472 = vmul.f32 %v5467, %v5471
    %v5473 = vadd.f32 %v5472, 0.05243302
    %v5474 = vmul.f32 %v5467, %v5473
    %v5475 = vadd.f32 %v5474, 0.18741608
    %v5476 = vmul.f32 %v5467, %v5475
    %v5477 = vadd.f32 %v5476, 1.1283791
    %v5478 = vmul.f32 %v3076, %v5477
    %v5479 = vmul.f32 %v5467, 3.8918573e-05
    %v5480 = vadd.f32 %v5479, 0.001143296
    %v5481 = vmul.f32 %v5467, %v5480
    %v5482 = vadd.f32 %v5481, 0.014752088
    %v5483 = vmul.f32 %v5467, %v5482
    %v5484 = vadd.f32 %v5483, 0.112945676
    %v5485 = vmul.f32 %v5467, %v5484
    %v5486 = vadd.f32 %v5485, 0.4994258
    %v5487 = vmul.f32 %v5467, %v5486
    %v5488 = vadd.f32 %v5487, 1.0
    %v5489 = vrcp.pop %v5488
    %v5490 = vmul.f32 %v5488, %v5489
    %v5491 = vsub.f32 1.0, %v5490
    %v5492 = vmul.f32 %v5489, %v5491
    %v5493 = vadd.f32 %v5489, %v5492
    %vm5494 = vweird.f32 %v5488
    %vm5495 = vweird.f32 %v5489
    %vm5496 = vmor %vm5494, %vm5495
    %v5497 = vsel %vm5496, %v5489, %v5493
    %v5498 = vand.u32 2147483647, %v5488
    %vm5499 = vcmp.eq.f32.partialorder %v5498, 8.507059e+37
    %v5500 = vand.u32 %v5488, 2147483648
    %v5501 = vor.u32 1.1754944e-38, %v5500
    %v5502 = vsel %vm5499, %v5501, %v5497
    %v5503 = vmul.f32 %v5478, %v5502
    %v5504 = vmin.f32 %v5503, 1.0
    %v5505 = vmax.f32 %v5504, -1.0
    %v5506 = vmul.f32 %v3077, %v3077
    %v5507 = vmin.f32 16.0, %v5506
    %v5508 = vmul.f32 %v5507, 2.1237322e-06
    %v5509 = vadd.f32 %v5508, 0.00028619796
    %v5510 = vmul.f32 %v5507, %v5509
    %v5511 = vadd.f32 %v5510, 0.0036580483
    %v5512 = vmul.f32 %v5507, %v5511
    %v5513 = vadd.f32 %v5512, 0.05243302
    %v5514 = vmul.f32 %v5507, %v5513
    %v5515 = vadd.f32 %v5514, 0.18741608
    %v5516 = vmul.f32 %v5507, %v5515
    %v5517 = vadd.f32 %v5516, 1.1283791
    %v5518 = vmul.f32 %v3077, %v5517
    %v5519 = vmul.f32 %v5507, 3.8918573e-05
    %v5520 = vadd.f32 %v5519, 0.001143296
    %v5521 = vmul.f32 %v5507, %v5520
    %v5522 = vadd.f32 %v5521, 0.014752088
    %v5523 = vmul.f32 %v5507, %v5522
    %v5524 = vadd.f32 %v5523, 0.112945676
    %v5525 = vmul.f32 %v5507, %v5524
    %v5526 = vadd.f32 %v5525, 0.4994258
    %v5527 = vmul.f32 %v5507, %v5526
    %v5528 = vadd.f32 %v5527, 1.0
    %v5529 = vrcp.pop %v5528
    %v5530 = vmul.f32 %v5528, %v5529
    %v5531 = vsub.f32 1.0, %v5530
    %v5532 = vmul.f32 %v5529, %v5531
    %v5533 = vadd.f32 %v5529, %v5532
    %vm5534 = vweird.f32 %v5528
    %vm5535 = vweird.f32 %v5529
    %vm5536 = vmor %vm5534, %vm5535
    %v5537 = vsel %vm5536, %v5529, %v5533
    %v5538 = vand.u32 2147483647, %v5528
    %vm5539 = vcmp.eq.f32.partialorder %v5538, 8.507059e+37
    %v5540 = vand.u32 %v5528, 2147483648
    %v5541 = vor.u32 1.1754944e-38, %v5540
    %v5542 = vsel %vm5539, %v5541, %v5537
    %v5543 = vmul.f32 %v5518, %v5542
    %v5544 = vmin.f32 %v5543, 1.0
    %v5545 = vmax.f32 %v5544, -1.0
    %v5546 = vmul.f32 %v3078, %v3078
    %v5547 = vmin.f32 16.0, %v5546
    %v5548 = vmul.f32 %v5547, 2.1237322e-06
    %v5549 = vadd.f32 %v5548, 0.00028619796
    %v5550 = vmul.f32 %v5547, %v5549
    %v5551 = vadd.f32 %v5550, 0.0036580483
    %v5552 = vmul.f32 %v5547, %v5551
    %v5553 = vadd.f32 %v5552, 0.05243302
    %v5554 = vmul.f32 %v5547, %v5553
    %v5555 = vadd.f32 %v5554, 0.18741608
    %v5556 = vmul.f32 %v5547, %v5555
    %v5557 = vadd.f32 %v5556, 1.1283791
    %v5558 = vmul.f32 %v3078, %v5557
    %v5559 = vmul.f32 %v5547, 3.8918573e-05
    %v5560 = vadd.f32 %v5559, 0.001143296
    %v5561 = vmul.f32 %v5547, %v5560
    %v5562 = vadd.f32 %v5561, 0.014752088
    %v5563 = vmul.f32 %v5547, %v5562
    %v5564 = vadd.f32 %v5563, 0.112945676
    %v5565 = vmul.f32 %v5547, %v5564
    %v5566 = vadd.f32 %v5565, 0.4994258
    %v5567 = vmul.f32 %v5547, %v5566
    %v5568 = vadd.f32 %v5567, 1.0
    %v5569 = vrcp.pop %v5568
    %v5570 = vmul.f32 %v5568, %v5569
    %v5571 = vsub.f32 1.0, %v5570
    %v5572 = vmul.f32 %v5569, %v5571
    %v5573 = vadd.f32 %v5569, %v5572
    %vm5574 = vweird.f32 %v5568
    %vm5575 = vweird.f32 %v5569
    %vm5576 = vmor %vm5574, %vm5575
    %v5577 = vsel %vm5576, %v5569, %v5573
    %v5578 = vand.u32 2147483647, %v5568
    %vm5579 = vcmp.eq.f32.partialorder %v5578, 8.507059e+37
    %v5580 = vand.u32 %v5568, 2147483648
    %v5581 = vor.u32 1.1754944e-38, %v5580
    %v5582 = vsel %vm5579, %v5581, %v5577
    %v5583 = vmul.f32 %v5558, %v5582
    %v5584 = vmin.f32 %v5583, 1.0
    %v5585 = vmax.f32 %v5584, -1.0
    %v5586 = vmul.f32 %v3079, %v3079
    %v5587 = vmin.f32 16.0, %v5586
    %v5588 = vmul.f32 %v5587, 2.1237322e-06
    %v5589 = vadd.f32 %v5588, 0.00028619796
    %v5590 = vmul.f32 %v5587, %v5589
    %v5591 = vadd.f32 %v5590, 0.0036580483
    %v5592 = vmul.f32 %v5587, %v5591
    %v5593 = vadd.f32 %v5592, 0.05243302
    %v5594 = vmul.f32 %v5587, %v5593
    %v5595 = vadd.f32 %v5594, 0.18741608
    %v5596 = vmul.f32 %v5587, %v5595
    %v5597 = vadd.f32 %v5596, 1.1283791
    %v5598 = vmul.f32 %v3079, %v5597
    %v5599 = vmul.f32 %v5587, 3.8918573e-05
    %v5600 = vadd.f32 %v5599, 0.001143296
    %v5601 = vmul.f32 %v5587, %v5600
    %v5602 = vadd.f32 %v5601, 0.014752088
    %v5603 = vmul.f32 %v5587, %v5602
    %v5604 = vadd.f32 %v5603, 0.112945676
    %v5605 = vmul.f32 %v5587, %v5604
    %v5606 = vadd.f32 %v5605, 0.4994258
    %v5607 = vmul.f32 %v5587, %v5606
    %v5608 = vadd.f32 %v5607, 1.0
    %v5609 = vrcp.pop %v5608
    %v5610 = vmul.f32 %v5608, %v5609
    %v5611 = vsub.f32 1.0, %v5610
    %v5612 = vmul.f32 %v5609, %v5611
    %v5613 = vadd.f32 %v5609, %v5612
    %vm5614 = vweird.f32 %v5608
    %vm5615 = vweird.f32 %v5609
    %vm5616 = vmor %vm5614, %vm5615
    %v5617 = vsel %vm5616, %v5609, %v5613
    %v5618 = vand.u32 2147483647, %v5608
    %vm5619 = vcmp.eq.f32.partialorder %v5618, 8.507059e+37
    %v5620 = vand.u32 %v5608, 2147483648
    %v5621 = vor.u32 1.1754944e-38, %v5620
    %v5622 = vsel %vm5619, %v5621, %v5617
    %v5623 = vmul.f32 %v5598, %v5622
    %v5624 = vmin.f32 %v5623, 1.0
    %v5625 = vmax.f32 %v5624, -1.0
    %v5626 = vmul.f32 %v3080, %v3080
    %v5627 = vmin.f32 16.0, %v5626
    %v5628 = vmul.f32 %v5627, 2.1237322e-06
    %v5629 = vadd.f32 %v5628, 0.00028619796
    %v5630 = vmul.f32 %v5627, %v5629
    %v5631 = vadd.f32 %v5630, 0.0036580483
    %v5632 = vmul.f32 %v5627, %v5631
    %v5633 = vadd.f32 %v5632, 0.05243302
    %v5634 = vmul.f32 %v5627, %v5633
    %v5635 = vadd.f32 %v5634, 0.18741608
    %v5636 = vmul.f32 %v5627, %v5635
    %v5637 = vadd.f32 %v5636, 1.1283791
    %v5638 = vmul.f32 %v3080, %v5637
    %v5639 = vmul.f32 %v5627, 3.8918573e-05
    %v5640 = vadd.f32 %v5639, 0.001143296
    %v5641 = vmul.f32 %v5627, %v5640
    %v5642 = vadd.f32 %v5641, 0.014752088
    %v5643 = vmul.f32 %v5627, %v5642
    %v5644 = vadd.f32 %v5643, 0.112945676
    %v5645 = vmul.f32 %v5627, %v5644
    %v5646 = vadd.f32 %v5645, 0.4994258
    %v5647 = vmul.f32 %v5627, %v5646
    %v5648 = vadd.f32 %v5647, 1.0
    %v5649 = vrcp.pop %v5648
    %v5650 = vmul.f32 %v5648, %v5649
    %v5651 = vsub.f32 1.0, %v5650
    %v5652 = vmul.f32 %v5649, %v5651
    %v5653 = vadd.f32 %v5649, %v5652
    %vm5654 = vweird.f32 %v5648
    %vm5655 = vweird.f32 %v5649
    %vm5656 = vmor %vm5654, %vm5655
    %v5657 = vsel %vm5656, %v5649, %v5653
    %v5658 = vand.u32 2147483647, %v5648
    %vm5659 = vcmp.eq.f32.partialorder %v5658, 8.507059e+37
    %v5660 = vand.u32 %v5648, 2147483648
    %v5661 = vor.u32 1.1754944e-38, %v5660
    %v5662 = vsel %vm5659, %v5661, %v5657
    %v5663 = vmul.f32 %v5638, %v5662
    %v5664 = vmin.f32 %v5663, 1.0
    %v5665 = vmax.f32 %v5664, -1.0
    %v5666 = vmul.f32 %v3081, %v3081
    %v5667 = vmin.f32 16.0, %v5666
    %v5668 = vmul.f32 %v5667, 2.1237322e-06
    %v5669 = vadd.f32 %v5668, 0.00028619796
    %v5670 = vmul.f32 %v5667, %v5669
    %v5671 = vadd.f32 %v5670, 0.0036580483
    %v5672 = vmul.f32 %v5667, %v5671
    %v5673 = vadd.f32 %v5672, 0.05243302
    %v5674 = vmul.f32 %v5667, %v5673
    %v5675 = vadd.f32 %v5674, 0.18741608
    %v5676 = vmul.f32 %v5667, %v5675
    %v5677 = vadd.f32 %v5676, 1.1283791
    %v5678 = vmul.f32 %v3081, %v5677
    %v5679 = vmul.f32 %v5667, 3.8918573e-05
    %v5680 = vadd.f32 %v5679, 0.001143296
    %v5681 = vmul.f32 %v5667, %v5680
    %v5682 = vadd.f32 %v5681, 0.014752088
    %v5683 = vmul.f32 %v5667, %v5682
    %v5684 = vadd.f32 %v5683, 0.112945676
    %v5685 = vmul.f32 %v5667, %v5684
    %v5686 = vadd.f32 %v5685, 0.4994258
    %v5687 = vmul.f32 %v5667, %v5686
    %v5688 = vadd.f32 %v5687, 1.0
    %v5689 = vrcp.pop %v5688
    %v5690 = vmul.f32 %v5688, %v5689
    %v5691 = vsub.f32 1.0, %v5690
    %v5692 = vmul.f32 %v5689, %v5691
    %v5693 = vadd.f32 %v5689, %v5692
    %vm5694 = vweird.f32 %v5688
    %vm5695 = vweird.f32 %v5689
    %vm5696 = vmor %vm5694, %vm5695
    %v5697 = vsel %vm5696, %v5689, %v5693
    %v5698 = vand.u32 2147483647, %v5688
    %vm5699 = vcmp.eq.f32.partialorder %v5698, 8.507059e+37
    %v5700 = vand.u32 %v5688, 2147483648
    %v5701 = vor.u32 1.1754944e-38, %v5700
    %v5702 = vsel %vm5699, %v5701, %v5697
    %v5703 = vmul.f32 %v5678, %v5702
    %v5704 = vmin.f32 %v5703, 1.0
    %v5705 = vmax.f32 %v5704, -1.0
    %v5706 = vmul.f32 %v3082, %v3082
    %v5707 = vmin.f32 16.0, %v5706
    %v5708 = vmul.f32 %v5707, 2.1237322e-06
    %v5709 = vadd.f32 %v5708, 0.00028619796
    %v5710 = vmul.f32 %v5707, %v5709
    %v5711 = vadd.f32 %v5710, 0.0036580483
    %v5712 = vmul.f32 %v5707, %v5711
    %v5713 = vadd.f32 %v5712, 0.05243302
    %v5714 = vmul.f32 %v5707, %v5713
    %v5715 = vadd.f32 %v5714, 0.18741608
    %v5716 = vmul.f32 %v5707, %v5715
    %v5717 = vadd.f32 %v5716, 1.1283791
    %v5718 = vmul.f32 %v3082, %v5717
    %v5719 = vmul.f32 %v5707, 3.8918573e-05
    %v5720 = vadd.f32 %v5719, 0.001143296
    %v5721 = vmul.f32 %v5707, %v5720
    %v5722 = vadd.f32 %v5721, 0.014752088
    %v5723 = vmul.f32 %v5707, %v5722
    %v5724 = vadd.f32 %v5723, 0.112945676
    %v5725 = vmul.f32 %v5707, %v5724
    %v5726 = vadd.f32 %v5725, 0.4994258
    %v5727 = vmul.f32 %v5707, %v5726
    %v5728 = vadd.f32 %v5727, 1.0
    %v5729 = vrcp.pop %v5728
    %v5730 = vmul.f32 %v5728, %v5729
    %v5731 = vsub.f32 1.0, %v5730
    %v5732 = vmul.f32 %v5729, %v5731
    %v5733 = vadd.f32 %v5729, %v5732
    %vm5734 = vweird.f32 %v5728
    %vm5735 = vweird.f32 %v5729
    %vm5736 = vmor %vm5734, %vm5735
    %v5737 = vsel %vm5736, %v5729, %v5733
    %v5738 = vand.u32 2147483647, %v5728
    %vm5739 = vcmp.eq.f32.partialorder %v5738, 8.507059e+37
    %v5740 = vand.u32 %v5728, 2147483648
    %v5741 = vor.u32 1.1754944e-38, %v5740
    %v5742 = vsel %vm5739, %v5741, %v5737
    %v5743 = vmul.f32 %v5718, %v5742
    %v5744 = vmin.f32 %v5743, 1.0
    %v5745 = vmax.f32 %v5744, -1.0
    %v5746 = vmul.f32 %v3083, %v3083
    %v5747 = vmin.f32 16.0, %v5746
    %v5748 = vmul.f32 %v5747, 2.1237322e-06
    %v5749 = vadd.f32 %v5748, 0.00028619796
    %v5750 = vmul.f32 %v5747, %v5749
    %v5751 = vadd.f32 %v5750, 0.0036580483
    %v5752 = vmul.f32 %v5747, %v5751
    %v5753 = vadd.f32 %v5752, 0.05243302
    %v5754 = vmul.f32 %v5747, %v5753
    %v5755 = vadd.f32 %v5754, 0.18741608
    %v5756 = vmul.f32 %v5747, %v5755
    %v5757 = vadd.f32 %v5756, 1.1283791
    %v5758 = vmul.f32 %v3083, %v5757
    %v5759 = vmul.f32 %v5747, 3.8918573e-05
    %v5760 = vadd.f32 %v5759, 0.001143296
    %v5761 = vmul.f32 %v5747, %v5760
    %v5762 = vadd.f32 %v5761, 0.014752088
    %v5763 = vmul.f32 %v5747, %v5762
    %v5764 = vadd.f32 %v5763, 0.112945676
    %v5765 = vmul.f32 %v5747, %v5764
    %v5766 = vadd.f32 %v5765, 0.4994258
    %v5767 = vmul.f32 %v5747, %v5766
    %v5768 = vadd.f32 %v5767, 1.0
    %v5769 = vrcp.pop %v5768
    %v5770 = vmul.f32 %v5768, %v5769
    %v5771 = vsub.f32 1.0, %v5770
    %v5772 = vmul.f32 %v5769, %v5771
    %v5773 = vadd.f32 %v5769, %v5772
    %vm5774 = vweird.f32 %v5768
    %vm5775 = vweird.f32 %v5769
    %vm5776 = vmor %vm5774, %vm5775
    %v5777 = vsel %vm5776, %v5769, %v5773
    %v5778 = vand.u32 2147483647, %v5768
    %vm5779 = vcmp.eq.f32.partialorder %v5778, 8.507059e+37
    %v5780 = vand.u32 %v5768, 2147483648
    %v5781 = vor.u32 1.1754944e-38, %v5780
    %v5782 = vsel %vm5779, %v5781, %v5777
    %v5783 = vmul.f32 %v5758, %v5782
    %v5784 = vmin.f32 %v5783, 1.0
    %v5785 = vmax.f32 %v5784, -1.0
    %v5786 = vmul.f32 %v3084, %v3084
    %v5787 = vmin.f32 16.0, %v5786
    %v5788 = vmul.f32 %v5787, 2.1237322e-06
    %v5789 = vadd.f32 %v5788, 0.00028619796
    %v5790 = vmul.f32 %v5787, %v5789
    %v5791 = vadd.f32 %v5790, 0.0036580483
    %v5792 = vmul.f32 %v5787, %v5791
    %v5793 = vadd.f32 %v5792, 0.05243302
    %v5794 = vmul.f32 %v5787, %v5793
    %v5795 = vadd.f32 %v5794, 0.18741608
    %v5796 = vmul.f32 %v5787, %v5795
    %v5797 = vadd.f32 %v5796, 1.1283791
    %v5798 = vmul.f32 %v3084, %v5797
    %v5799 = vmul.f32 %v5787, 3.8918573e-05
    %v5800 = vadd.f32 %v5799, 0.001143296
    %v5801 = vmul.f32 %v5787, %v5800
    %v5802 = vadd.f32 %v5801, 0.014752088
    %v5803 = vmul.f32 %v5787, %v5802
    %v5804 = vadd.f32 %v5803, 0.112945676
    %v5805 = vmul.f32 %v5787, %v5804
    %v5806 = vadd.f32 %v5805, 0.4994258
    %v5807 = vmul.f32 %v5787, %v5806
    %v5808 = vadd.f32 %v5807, 1.0
    %v5809 = vrcp.pop %v5808
    %v5810 = vmul.f32 %v5808, %v5809
    %v5811 = vsub.f32 1.0, %v5810
    %v5812 = vmul.f32 %v5809, %v5811
    %v5813 = vadd.f32 %v5809, %v5812
    %vm5814 = vweird.f32 %v5808
    %vm5815 = vweird.f32 %v5809
    %vm5816 = vmor %vm5814, %vm5815
    %v5817 = vsel %vm5816, %v5809, %v5813
    %v5818 = vand.u32 2147483647, %v5808
    %vm5819 = vcmp.eq.f32.partialorder %v5818, 8.507059e+37
    %v5820 = vand.u32 %v5808, 2147483648
    %v5821 = vor.u32 1.1754944e-38, %v5820
    %v5822 = vsel %vm5819, %v5821, %v5817
    %v5823 = vmul.f32 %v5798, %v5822
    %v5824 = vmin.f32 %v5823, 1.0
    %v5825 = vmax.f32 %v5824, -1.0
    %v5826 = vmul.f32 %v3085, %v3085
    %v5827 = vmin.f32 16.0, %v5826
    %v5828 = vmul.f32 %v5827, 2.1237322e-06
    %v5829 = vadd.f32 %v5828, 0.00028619796
    %v5830 = vmul.f32 %v5827, %v5829
    %v5831 = vadd.f32 %v5830, 0.0036580483
    %v5832 = vmul.f32 %v5827, %v5831
    %v5833 = vadd.f32 %v5832, 0.05243302
    %v5834 = vmul.f32 %v5827, %v5833
    %v5835 = vadd.f32 %v5834, 0.18741608
    %v5836 = vmul.f32 %v5827, %v5835
    %v5837 = vadd.f32 %v5836, 1.1283791
    %v5838 = vmul.f32 %v3085, %v5837
    %v5839 = vmul.f32 %v5827, 3.8918573e-05
    %v5840 = vadd.f32 %v5839, 0.001143296
    %v5841 = vmul.f32 %v5827, %v5840
    %v5842 = vadd.f32 %v5841, 0.014752088
    %v5843 = vmul.f32 %v5827, %v5842
    %v5844 = vadd.f32 %v5843, 0.112945676
    %v5845 = vmul.f32 %v5827, %v5844
    %v5846 = vadd.f32 %v5845, 0.4994258
    %v5847 = vmul.f32 %v5827, %v5846
    %v5848 = vadd.f32 %v5847, 1.0
    %v5849 = vrcp.pop %v5848
    %v5850 = vmul.f32 %v5848, %v5849
    %v5851 = vsub.f32 1.0, %v5850
    %v5852 = vmul.f32 %v5849, %v5851
    %v5853 = vadd.f32 %v5849, %v5852
    %vm5854 = vweird.f32 %v5848
    %vm5855 = vweird.f32 %v5849
    %vm5856 = vmor %vm5854, %vm5855
    %v5857 = vsel %vm5856, %v5849, %v5853
    %v5858 = vand.u32 2147483647, %v5848
    %vm5859 = vcmp.eq.f32.partialorder %v5858, 8.507059e+37
    %v5860 = vand.u32 %v5848, 2147483648
    %v5861 = vor.u32 1.1754944e-38, %v5860
    %v5862 = vsel %vm5859, %v5861, %v5857
    %v5863 = vmul.f32 %v5838, %v5862
    %v5864 = vmin.f32 %v5863, 1.0
    %v5865 = vmax.f32 %v5864, -1.0
    %v5866 = vmul.f32 %v3086, %v3086
    %v5867 = vmin.f32 16.0, %v5866
    %v5868 = vmul.f32 %v5867, 2.1237322e-06
    %v5869 = vadd.f32 %v5868, 0.00028619796
    %v5870 = vmul.f32 %v5867, %v5869
    %v5871 = vadd.f32 %v5870, 0.0036580483
    %v5872 = vmul.f32 %v5867, %v5871
    %v5873 = vadd.f32 %v5872, 0.05243302
    %v5874 = vmul.f32 %v5867, %v5873
    %v5875 = vadd.f32 %v5874, 0.18741608
    %v5876 = vmul.f32 %v5867, %v5875
    %v5877 = vadd.f32 %v5876, 1.1283791
    %v5878 = vmul.f32 %v3086, %v5877
    %v5879 = vmul.f32 %v5867, 3.8918573e-05
    %v5880 = vadd.f32 %v5879, 0.001143296
    %v5881 = vmul.f32 %v5867, %v5880
    %v5882 = vadd.f32 %v5881, 0.014752088
    %v5883 = vmul.f32 %v5867, %v5882
    %v5884 = vadd.f32 %v5883, 0.112945676
    %v5885 = vmul.f32 %v5867, %v5884
    %v5886 = vadd.f32 %v5885, 0.4994258
    %v5887 = vmul.f32 %v5867, %v5886
    %v5888 = vadd.f32 %v5887, 1.0
    %v5889 = vrcp.pop %v5888
    %v5890 = vmul.f32 %v5888, %v5889
    %v5891 = vsub.f32 1.0, %v5890
    %v5892 = vmul.f32 %v5889, %v5891
    %v5893 = vadd.f32 %v5889, %v5892
    %vm5894 = vweird.f32 %v5888
    %vm5895 = vweird.f32 %v5889
    %vm5896 = vmor %vm5894, %vm5895
    %v5897 = vsel %vm5896, %v5889, %v5893
    %v5898 = vand.u32 2147483647, %v5888
    %vm5899 = vcmp.eq.f32.partialorder %v5898, 8.507059e+37
    %v5900 = vand.u32 %v5888, 2147483648
    %v5901 = vor.u32 1.1754944e-38, %v5900
    %v5902 = vsel %vm5899, %v5901, %v5897
    %v5903 = vmul.f32 %v5878, %v5902
    %v5904 = vmin.f32 %v5903, 1.0
    %v5905 = vmax.f32 %v5904, -1.0
    %v5906 = vmul.f32 %v3087, %v3087
    %v5907 = vmin.f32 16.0, %v5906
    %v5908 = vmul.f32 %v5907, 2.1237322e-06
    %v5909 = vadd.f32 %v5908, 0.00028619796
    %v5910 = vmul.f32 %v5907, %v5909
    %v5911 = vadd.f32 %v5910, 0.0036580483
    %v5912 = vmul.f32 %v5907, %v5911
    %v5913 = vadd.f32 %v5912, 0.05243302
    %v5914 = vmul.f32 %v5907, %v5913
    %v5915 = vadd.f32 %v5914, 0.18741608
    %v5916 = vmul.f32 %v5907, %v5915
    %v5917 = vadd.f32 %v5916, 1.1283791
    %v5918 = vmul.f32 %v3087, %v5917
    %v5919 = vmul.f32 %v5907, 3.8918573e-05
    %v5920 = vadd.f32 %v5919, 0.001143296
    %v5921 = vmul.f32 %v5907, %v5920
    %v5922 = vadd.f32 %v5921, 0.014752088
    %v5923 = vmul.f32 %v5907, %v5922
    %v5924 = vadd.f32 %v5923, 0.112945676
    %v5925 = vmul.f32 %v5907, %v5924
    %v5926 = vadd.f32 %v5925, 0.4994258
    %v5927 = vmul.f32 %v5907, %v5926
    %v5928 = vadd.f32 %v5927, 1.0
    %v5929 = vrcp.pop %v5928
    %v5930 = vmul.f32 %v5928, %v5929
    %v5931 = vsub.f32 1.0, %v5930
    %v5932 = vmul.f32 %v5929, %v5931
    %v5933 = vadd.f32 %v5929, %v5932
    %vm5934 = vweird.f32 %v5928
    %vm5935 = vweird.f32 %v5929
    %vm5936 = vmor %vm5934, %vm5935
    %v5937 = vsel %vm5936, %v5929, %v5933
    %v5938 = vand.u32 2147483647, %v5928
    %vm5939 = vcmp.eq.f32.partialorder %v5938, 8.507059e+37
    %v5940 = vand.u32 %v5928, 2147483648
    %v5941 = vor.u32 1.1754944e-38, %v5940
    %v5942 = vsel %vm5939, %v5941, %v5937
    %v5943 = vmul.f32 %v5918, %v5942
    %v5944 = vmin.f32 %v5943, 1.0
    %v5945 = vmax.f32 %v5944, -1.0
    %v5946 = vmul.f32 %v3088, %v3088
    %v5947 = vmin.f32 16.0, %v5946
    %v5948 = vmul.f32 %v5947, 2.1237322e-06
    %v5949 = vadd.f32 %v5948, 0.00028619796
    %v5950 = vmul.f32 %v5947, %v5949
    %v5951 = vadd.f32 %v5950, 0.0036580483
    %v5952 = vmul.f32 %v5947, %v5951
    %v5953 = vadd.f32 %v5952, 0.05243302
    %v5954 = vmul.f32 %v5947, %v5953
    %v5955 = vadd.f32 %v5954, 0.18741608
    %v5956 = vmul.f32 %v5947, %v5955
    %v5957 = vadd.f32 %v5956, 1.1283791
    %v5958 = vmul.f32 %v3088, %v5957
    %v5959 = vmul.f32 %v5947, 3.8918573e-05
    %v5960 = vadd.f32 %v5959, 0.001143296
    %v5961 = vmul.f32 %v5947, %v5960
    %v5962 = vadd.f32 %v5961, 0.014752088
    %v5963 = vmul.f32 %v5947, %v5962
    %v5964 = vadd.f32 %v5963, 0.112945676
    %v5965 = vmul.f32 %v5947, %v5964
    %v5966 = vadd.f32 %v5965, 0.4994258
    %v5967 = vmul.f32 %v5947, %v5966
    %v5968 = vadd.f32 %v5967, 1.0
    %v5969 = vrcp.pop %v5968
    %v5970 = vmul.f32 %v5968, %v5969
    %v5971 = vsub.f32 1.0, %v5970
    %v5972 = vmul.f32 %v5969, %v5971
    %v5973 = vadd.f32 %v5969, %v5972
    %vm5974 = vweird.f32 %v5968
    %vm5975 = vweird.f32 %v5969
    %vm5976 = vmor %vm5974, %vm5975
    %v5977 = vsel %vm5976, %v5969, %v5973
    %v5978 = vand.u32 2147483647, %v5968
    %vm5979 = vcmp.eq.f32.partialorder %v5978, 8.507059e+37
    %v5980 = vand.u32 %v5968, 2147483648
    %v5981 = vor.u32 1.1754944e-38, %v5980
    %v5982 = vsel %vm5979, %v5981, %v5977
    %v5983 = vmul.f32 %v5958, %v5982
    %v5984 = vmin.f32 %v5983, 1.0
    %v5985 = vmax.f32 %v5984, -1.0
    %v5986 = vmul.f32 %v3089, %v3089
    %v5987 = vmin.f32 16.0, %v5986
    %v5988 = vmul.f32 %v5987, 2.1237322e-06
    %v5989 = vadd.f32 %v5988, 0.00028619796
    %v5990 = vmul.f32 %v5987, %v5989
    %v5991 = vadd.f32 %v5990, 0.0036580483
    %v5992 = vmul.f32 %v5987, %v5991
    %v5993 = vadd.f32 %v5992, 0.05243302
    %v5994 = vmul.f32 %v5987, %v5993
    %v5995 = vadd.f32 %v5994, 0.18741608
    %v5996 = vmul.f32 %v5987, %v5995
    %v5997 = vadd.f32 %v5996, 1.1283791
    %v5998 = vmul.f32 %v3089, %v5997
    %v5999 = vmul.f32 %v5987, 3.8918573e-05
    %v6000 = vadd.f32 %v5999, 0.001143296
    %v6001 = vmul.f32 %v5987, %v6000
    %v6002 = vadd.f32 %v6001, 0.014752088
    %v6003 = vmul.f32 %v5987, %v6002
    %v6004 = vadd.f32 %v6003, 0.112945676
    %v6005 = vmul.f32 %v5987, %v6004
    %v6006 = vadd.f32 %v6005, 0.4994258
    %v6007 = vmul.f32 %v5987, %v6006
    %v6008 = vadd.f32 %v6007, 1.0
    %v6009 = vrcp.pop %v6008
    %v6010 = vmul.f32 %v6008, %v6009
    %v6011 = vsub.f32 1.0, %v6010
    %v6012 = vmul.f32 %v6009, %v6011
    %v6013 = vadd.f32 %v6009, %v6012
    %vm6014 = vweird.f32 %v6008
    %vm6015 = vweird.f32 %v6009
    %vm6016 = vmor %vm6014, %vm6015
    %v6017 = vsel %vm6016, %v6009, %v6013
    %v6018 = vand.u32 2147483647, %v6008
    %vm6019 = vcmp.eq.f32.partialorder %v6018, 8.507059e+37
    %v6020 = vand.u32 %v6008, 2147483648
    %v6021 = vor.u32 1.1754944e-38, %v6020
    %v6022 = vsel %vm6019, %v6021, %v6017
    %v6023 = vmul.f32 %v5998, %v6022
    %v6024 = vmin.f32 %v6023, 1.0
    %v6025 = vmax.f32 %v6024, -1.0
    %v6026 = vmul.f32 %v3090, %v3090
    %v6027 = vmin.f32 16.0, %v6026
    %v6028 = vmul.f32 %v6027, 2.1237322e-06
    %v6029 = vadd.f32 %v6028, 0.00028619796
    %v6030 = vmul.f32 %v6027, %v6029
    %v6031 = vadd.f32 %v6030, 0.0036580483
    %v6032 = vmul.f32 %v6027, %v6031
    %v6033 = vadd.f32 %v6032, 0.05243302
    %v6034 = vmul.f32 %v6027, %v6033
    %v6035 = vadd.f32 %v6034, 0.18741608
    %v6036 = vmul.f32 %v6027, %v6035
    %v6037 = vadd.f32 %v6036, 1.1283791
    %v6038 = vmul.f32 %v3090, %v6037
    %v6039 = vmul.f32 %v6027, 3.8918573e-05
    %v6040 = vadd.f32 %v6039, 0.001143296
    %v6041 = vmul.f32 %v6027, %v6040
    %v6042 = vadd.f32 %v6041, 0.014752088
    %v6043 = vmul.f32 %v6027, %v6042
    %v6044 = vadd.f32 %v6043, 0.112945676
    %v6045 = vmul.f32 %v6027, %v6044
    %v6046 = vadd.f32 %v6045, 0.4994258
    %v6047 = vmul.f32 %v6027, %v6046
    %v6048 = vadd.f32 %v6047, 1.0
    %v6049 = vrcp.pop %v6048
    %v6050 = vmul.f32 %v6048, %v6049
    %v6051 = vsub.f32 1.0, %v6050
    %v6052 = vmul.f32 %v6049, %v6051
    %v6053 = vadd.f32 %v6049, %v6052
    %vm6054 = vweird.f32 %v6048
    %vm6055 = vweird.f32 %v6049
    %vm6056 = vmor %vm6054, %vm6055
    %v6057 = vsel %vm6056, %v6049, %v6053
    %v6058 = vand.u32 2147483647, %v6048
    %vm6059 = vcmp.eq.f32.partialorder %v6058, 8.507059e+37
    %v6060 = vand.u32 %v6048, 2147483648
    %v6061 = vor.u32 1.1754944e-38, %v6060
    %v6062 = vsel %vm6059, %v6061, %v6057
    %v6063 = vmul.f32 %v6038, %v6062
    %v6064 = vmin.f32 %v6063, 1.0
    %v6065 = vmax.f32 %v6064, -1.0
    %v6066 = vmul.f32 %v3091, %v3091
    %v6067 = vmin.f32 16.0, %v6066
    %v6068 = vmul.f32 %v6067, 2.1237322e-06
    %v6069 = vadd.f32 %v6068, 0.00028619796
    %v6070 = vmul.f32 %v6067, %v6069
    %v6071 = vadd.f32 %v6070, 0.0036580483
    %v6072 = vmul.f32 %v6067, %v6071
    %v6073 = vadd.f32 %v6072, 0.05243302
    %v6074 = vmul.f32 %v6067, %v6073
    %v6075 = vadd.f32 %v6074, 0.18741608
    %v6076 = vmul.f32 %v6067, %v6075
    %v6077 = vadd.f32 %v6076, 1.1283791
    %v6078 = vmul.f32 %v3091, %v6077
    %v6079 = vmul.f32 %v6067, 3.8918573e-05
    %v6080 = vadd.f32 %v6079, 0.001143296
    %v6081 = vmul.f32 %v6067, %v6080
    %v6082 = vadd.f32 %v6081, 0.014752088
    %v6083 = vmul.f32 %v6067, %v6082
    %v6084 = vadd.f32 %v6083, 0.112945676
    %v6085 = vmul.f32 %v6067, %v6084
    %v6086 = vadd.f32 %v6085, 0.4994258
    %v6087 = vmul.f32 %v6067, %v6086
    %v6088 = vadd.f32 %v6087, 1.0
    %v6089 = vrcp.pop %v6088
    %v6090 = vmul.f32 %v6088, %v6089
    %v6091 = vsub.f32 1.0, %v6090
    %v6092 = vmul.f32 %v6089, %v6091
    %v6093 = vadd.f32 %v6089, %v6092
    %vm6094 = vweird.f32 %v6088
    %vm6095 = vweird.f32 %v6089
    %vm6096 = vmor %vm6094, %vm6095
    %v6097 = vsel %vm6096, %v6089, %v6093
    %v6098 = vand.u32 2147483647, %v6088
    %vm6099 = vcmp.eq.f32.partialorder %v6098, 8.507059e+37
    %v6100 = vand.u32 %v6088, 2147483648
    %v6101 = vor.u32 1.1754944e-38, %v6100
    %v6102 = vsel %vm6099, %v6101, %v6097
    %v6103 = vmul.f32 %v6078, %v6102
    %v6104 = vmin.f32 %v6103, 1.0
    %v6105 = vmax.f32 %v6104, -1.0
    %v6106 = vmul.f32 %v3092, %v3092
    %v6107 = vmin.f32 16.0, %v6106
    %v6108 = vmul.f32 %v6107, 2.1237322e-06
    %v6109 = vadd.f32 %v6108, 0.00028619796
    %v6110 = vmul.f32 %v6107, %v6109
    %v6111 = vadd.f32 %v6110, 0.0036580483
    %v6112 = vmul.f32 %v6107, %v6111
    %v6113 = vadd.f32 %v6112, 0.05243302
    %v6114 = vmul.f32 %v6107, %v6113
    %v6115 = vadd.f32 %v6114, 0.18741608
    %v6116 = vmul.f32 %v6107, %v6115
    %v6117 = vadd.f32 %v6116, 1.1283791
    %v6118 = vmul.f32 %v3092, %v6117
    %v6119 = vmul.f32 %v6107, 3.8918573e-05
    %v6120 = vadd.f32 %v6119, 0.001143296
    %v6121 = vmul.f32 %v6107, %v6120
    %v6122 = vadd.f32 %v6121, 0.014752088
    %v6123 = vmul.f32 %v6107, %v6122
    %v6124 = vadd.f32 %v6123, 0.112945676
    %v6125 = vmul.f32 %v6107, %v6124
    %v6126 = vadd.f32 %v6125, 0.4994258
    %v6127 = vmul.f32 %v6107, %v6126
    %v6128 = vadd.f32 %v6127, 1.0
    %v6129 = vrcp.pop %v6128
    %v6130 = vmul.f32 %v6128, %v6129
    %v6131 = vsub.f32 1.0, %v6130
    %v6132 = vmul.f32 %v6129, %v6131
    %v6133 = vadd.f32 %v6129, %v6132
    %vm6134 = vweird.f32 %v6128
    %vm6135 = vweird.f32 %v6129
    %vm6136 = vmor %vm6134, %vm6135
    %v6137 = vsel %vm6136, %v6129, %v6133
    %v6138 = vand.u32 2147483647, %v6128
    %vm6139 = vcmp.eq.f32.partialorder %v6138, 8.507059e+37
    %v6140 = vand.u32 %v6128, 2147483648
    %v6141 = vor.u32 1.1754944e-38, %v6140
    %v6142 = vsel %vm6139, %v6141, %v6137
    %v6143 = vmul.f32 %v6118, %v6142
    %v6144 = vmin.f32 %v6143, 1.0
    %v6145 = vmax.f32 %v6144, -1.0
    %v6146 = vmul.f32 %v3093, %v3093
    %v6147 = vmin.f32 16.0, %v6146
    %v6148 = vmul.f32 %v6147, 2.1237322e-06
    %v6149 = vadd.f32 %v6148, 0.00028619796
    %v6150 = vmul.f32 %v6147, %v6149
    %v6151 = vadd.f32 %v6150, 0.0036580483
    %v6152 = vmul.f32 %v6147, %v6151
    %v6153 = vadd.f32 %v6152, 0.05243302
    %v6154 = vmul.f32 %v6147, %v6153
    %v6155 = vadd.f32 %v6154, 0.18741608
    %v6156 = vmul.f32 %v6147, %v6155
    %v6157 = vadd.f32 %v6156, 1.1283791
    %v6158 = vmul.f32 %v3093, %v6157
    %v6159 = vmul.f32 %v6147, 3.8918573e-05
    %v6160 = vadd.f32 %v6159, 0.001143296
    %v6161 = vmul.f32 %v6147, %v6160
    %v6162 = vadd.f32 %v6161, 0.014752088
    %v6163 = vmul.f32 %v6147, %v6162
    %v6164 = vadd.f32 %v6163, 0.112945676
    %v6165 = vmul.f32 %v6147, %v6164
    %v6166 = vadd.f32 %v6165, 0.4994258
    %v6167 = vmul.f32 %v6147, %v6166
    %v6168 = vadd.f32 %v6167, 1.0
    %v6169 = vrcp.pop %v6168
    %v6170 = vmul.f32 %v6168, %v6169
    %v6171 = vsub.f32 1.0, %v6170
    %v6172 = vmul.f32 %v6169, %v6171
    %v6173 = vadd.f32 %v6169, %v6172
    %vm6174 = vweird.f32 %v6168
    %vm6175 = vweird.f32 %v6169
    %vm6176 = vmor %vm6174, %vm6175
    %v6177 = vsel %vm6176, %v6169, %v6173
    %v6178 = vand.u32 2147483647, %v6168
    %vm6179 = vcmp.eq.f32.partialorder %v6178, 8.507059e+37
    %v6180 = vand.u32 %v6168, 2147483648
    %v6181 = vor.u32 1.1754944e-38, %v6180
    %v6182 = vsel %vm6179, %v6181, %v6177
    %v6183 = vmul.f32 %v6158, %v6182
    %v6184 = vmin.f32 %v6183, 1.0
    %v6185 = vmax.f32 %v6184, -1.0
    %v6186 = vmul.f32 %v3094, %v3094
    %v6187 = vmin.f32 16.0, %v6186
    %v6188 = vmul.f32 %v6187, 2.1237322e-06
    %v6189 = vadd.f32 %v6188, 0.00028619796
    %v6190 = vmul.f32 %v6187, %v6189
    %v6191 = vadd.f32 %v6190, 0.0036580483
    %v6192 = vmul.f32 %v6187, %v6191
    %v6193 = vadd.f32 %v6192, 0.05243302
    %v6194 = vmul.f32 %v6187, %v6193
    %v6195 = vadd.f32 %v6194, 0.18741608
    %v6196 = vmul.f32 %v6187, %v6195
    %v6197 = vadd.f32 %v6196, 1.1283791
    %v6198 = vmul.f32 %v3094, %v6197
    %v6199 = vmul.f32 %v6187, 3.8918573e-05
    %v6200 = vadd.f32 %v6199, 0.001143296
    %v6201 = vmul.f32 %v6187, %v6200
    %v6202 = vadd.f32 %v6201, 0.014752088
    %v6203 = vmul.f32 %v6187, %v6202
    %v6204 = vadd.f32 %v6203, 0.112945676
    %v6205 = vmul.f32 %v6187, %v6204
    %v6206 = vadd.f32 %v6205, 0.4994258
    %v6207 = vmul.f32 %v6187, %v6206
    %v6208 = vadd.f32 %v6207, 1.0
    %v6209 = vrcp.pop %v6208
    %v6210 = vmul.f32 %v6208, %v6209
    %v6211 = vsub.f32 1.0, %v6210
    %v6212 = vmul.f32 %v6209, %v6211
    %v6213 = vadd.f32 %v6209, %v6212
    %vm6214 = vweird.f32 %v6208
    %vm6215 = vweird.f32 %v6209
    %vm6216 = vmor %vm6214, %vm6215
    %v6217 = vsel %vm6216, %v6209, %v6213
    %v6218 = vand.u32 2147483647, %v6208
    %vm6219 = vcmp.eq.f32.partialorder %v6218, 8.507059e+37
    %v6220 = vand.u32 %v6208, 2147483648
    %v6221 = vor.u32 1.1754944e-38, %v6220
    %v6222 = vsel %vm6219, %v6221, %v6217
    %v6223 = vmul.f32 %v6198, %v6222
    %v6224 = vmin.f32 %v6223, 1.0
    %v6225 = vmax.f32 %v6224, -1.0
    %v6226 = vmul.f32 %v3095, %v3095
    %v6227 = vmin.f32 16.0, %v6226
    %v6228 = vmul.f32 %v6227, 2.1237322e-06
    %v6229 = vadd.f32 %v6228, 0.00028619796
    %v6230 = vmul.f32 %v6227, %v6229
    %v6231 = vadd.f32 %v6230, 0.0036580483
    %v6232 = vmul.f32 %v6227, %v6231
    %v6233 = vadd.f32 %v6232, 0.05243302
    %v6234 = vmul.f32 %v6227, %v6233
    %v6235 = vadd.f32 %v6234, 0.18741608
    %v6236 = vmul.f32 %v6227, %v6235
    %v6237 = vadd.f32 %v6236, 1.1283791
    %v6238 = vmul.f32 %v3095, %v6237
    %v6239 = vmul.f32 %v6227, 3.8918573e-05
    %v6240 = vadd.f32 %v6239, 0.001143296
    %v6241 = vmul.f32 %v6227, %v6240
    %v6242 = vadd.f32 %v6241, 0.014752088
    %v6243 = vmul.f32 %v6227, %v6242
    %v6244 = vadd.f32 %v6243, 0.112945676
    %v6245 = vmul.f32 %v6227, %v6244
    %v6246 = vadd.f32 %v6245, 0.4994258
    %v6247 = vmul.f32 %v6227, %v6246
    %v6248 = vadd.f32 %v6247, 1.0
    %v6249 = vrcp.pop %v6248
    %v6250 = vmul.f32 %v6248, %v6249
    %v6251 = vsub.f32 1.0, %v6250
    %v6252 = vmul.f32 %v6249, %v6251
    %v6253 = vadd.f32 %v6249, %v6252
    %vm6254 = vweird.f32 %v6248
    %vm6255 = vweird.f32 %v6249
    %vm6256 = vmor %vm6254, %vm6255
    %v6257 = vsel %vm6256, %v6249, %v6253
    %v6258 = vand.u32 2147483647, %v6248
    %vm6259 = vcmp.eq.f32.partialorder %v6258, 8.507059e+37
    %v6260 = vand.u32 %v6248, 2147483648
    %v6261 = vor.u32 1.1754944e-38, %v6260
    %v6262 = vsel %vm6259, %v6261, %v6257
    %v6263 = vmul.f32 %v6238, %v6262
    %v6264 = vmin.f32 %v6263, 1.0
    %v6265 = vmax.f32 %v6264, -1.0
    %v6266 = vmul.f32 %v3096, %v3096
    %v6267 = vmin.f32 16.0, %v6266
    %v6268 = vmul.f32 %v6267, 2.1237322e-06
    %v6269 = vadd.f32 %v6268, 0.00028619796
    %v6270 = vmul.f32 %v6267, %v6269
    %v6271 = vadd.f32 %v6270, 0.0036580483
    %v6272 = vmul.f32 %v6267, %v6271
    %v6273 = vadd.f32 %v6272, 0.05243302
    %v6274 = vmul.f32 %v6267, %v6273
    %v6275 = vadd.f32 %v6274, 0.18741608
    %v6276 = vmul.f32 %v6267, %v6275
    %v6277 = vadd.f32 %v6276, 1.1283791
    %v6278 = vmul.f32 %v3096, %v6277
    %v6279 = vmul.f32 %v6267, 3.8918573e-05
    %v6280 = vadd.f32 %v6279, 0.001143296
    %v6281 = vmul.f32 %v6267, %v6280
    %v6282 = vadd.f32 %v6281, 0.014752088
    %v6283 = vmul.f32 %v6267, %v6282
    %v6284 = vadd.f32 %v6283, 0.112945676
    %v6285 = vmul.f32 %v6267, %v6284
    %v6286 = vadd.f32 %v6285, 0.4994258
    %v6287 = vmul.f32 %v6267, %v6286
    %v6288 = vadd.f32 %v6287, 1.0
    %v6289 = vrcp.pop %v6288
    %v6290 = vmul.f32 %v6288, %v6289
    %v6291 = vsub.f32 1.0, %v6290
    %v6292 = vmul.f32 %v6289, %v6291
    %v6293 = vadd.f32 %v6289, %v6292
    %vm6294 = vweird.f32 %v6288
    %vm6295 = vweird.f32 %v6289
    %vm6296 = vmor %vm6294, %vm6295
    %v6297 = vsel %vm6296, %v6289, %v6293
    %v6298 = vand.u32 2147483647, %v6288
    %vm6299 = vcmp.eq.f32.partialorder %v6298, 8.507059e+37
    %v6300 = vand.u32 %v6288, 2147483648
    %v6301 = vor.u32 1.1754944e-38, %v6300
    %v6302 = vsel %vm6299, %v6301, %v6297
    %v6303 = vmul.f32 %v6278, %v6302
    %v6304 = vmin.f32 %v6303, 1.0
    %v6305 = vmax.f32 %v6304, -1.0
    %v6306 = vmul.f32 %v3097, %v3097
    %v6307 = vmin.f32 16.0, %v6306
    %v6308 = vmul.f32 %v6307, 2.1237322e-06
    %v6309 = vadd.f32 %v6308, 0.00028619796
    %v6310 = vmul.f32 %v6307, %v6309
    %v6311 = vadd.f32 %v6310, 0.0036580483
    %v6312 = vmul.f32 %v6307, %v6311
    %v6313 = vadd.f32 %v6312, 0.05243302
    %v6314 = vmul.f32 %v6307, %v6313
    %v6315 = vadd.f32 %v6314, 0.18741608
    %v6316 = vmul.f32 %v6307, %v6315
    %v6317 = vadd.f32 %v6316, 1.1283791
    %v6318 = vmul.f32 %v3097, %v6317
    %v6319 = vmul.f32 %v6307, 3.8918573e-05
    %v6320 = vadd.f32 %v6319, 0.001143296
    %v6321 = vmul.f32 %v6307, %v6320
    %v6322 = vadd.f32 %v6321, 0.014752088
    %v6323 = vmul.f32 %v6307, %v6322
    %v6324 = vadd.f32 %v6323, 0.112945676
    %v6325 = vmul.f32 %v6307, %v6324
    %v6326 = vadd.f32 %v6325, 0.4994258
    %v6327 = vmul.f32 %v6307, %v6326
    %v6328 = vadd.f32 %v6327, 1.0
    %v6329 = vrcp.pop %v6328
    %v6330 = vmul.f32 %v6328, %v6329
    %v6331 = vsub.f32 1.0, %v6330
    %v6332 = vmul.f32 %v6329, %v6331
    %v6333 = vadd.f32 %v6329, %v6332
    %vm6334 = vweird.f32 %v6328
    %vm6335 = vweird.f32 %v6329
    %vm6336 = vmor %vm6334, %vm6335
    %v6337 = vsel %vm6336, %v6329, %v6333
    %v6338 = vand.u32 2147483647, %v6328
    %vm6339 = vcmp.eq.f32.partialorder %v6338, 8.507059e+37
    %v6340 = vand.u32 %v6328, 2147483648
    %v6341 = vor.u32 1.1754944e-38, %v6340
    %v6342 = vsel %vm6339, %v6341, %v6337
    %v6343 = vmul.f32 %v6318, %v6342
    %v6344 = vmin.f32 %v6343, 1.0
    %v6345 = vmax.f32 %v6344, -1.0
    %v6346 = vmul.f32 %v3098, %v3098
    %v6347 = vmin.f32 16.0, %v6346
    %v6348 = vmul.f32 %v6347, 2.1237322e-06
    %v6349 = vadd.f32 %v6348, 0.00028619796
    %v6350 = vmul.f32 %v6347, %v6349
    %v6351 = vadd.f32 %v6350, 0.0036580483
    %v6352 = vmul.f32 %v6347, %v6351
    %v6353 = vadd.f32 %v6352, 0.05243302
    %v6354 = vmul.f32 %v6347, %v6353
    %v6355 = vadd.f32 %v6354, 0.18741608
    %v6356 = vmul.f32 %v6347, %v6355
    %v6357 = vadd.f32 %v6356, 1.1283791
    %v6358 = vmul.f32 %v3098, %v6357
    %v6359 = vmul.f32 %v6347, 3.8918573e-05
    %v6360 = vadd.f32 %v6359, 0.001143296
    %v6361 = vmul.f32 %v6347, %v6360
    %v6362 = vadd.f32 %v6361, 0.014752088
    %v6363 = vmul.f32 %v6347, %v6362
    %v6364 = vadd.f32 %v6363, 0.112945676
    %v6365 = vmul.f32 %v6347, %v6364
    %v6366 = vadd.f32 %v6365, 0.4994258
    %v6367 = vmul.f32 %v6347, %v6366
    %v6368 = vadd.f32 %v6367, 1.0
    %v6369 = vrcp.pop %v6368
    %v6370 = vmul.f32 %v6368, %v6369
    %v6371 = vsub.f32 1.0, %v6370
    %v6372 = vmul.f32 %v6369, %v6371
    %v6373 = vadd.f32 %v6369, %v6372
    %vm6374 = vweird.f32 %v6368
    %vm6375 = vweird.f32 %v6369
    %vm6376 = vmor %vm6374, %vm6375
    %v6377 = vsel %vm6376, %v6369, %v6373
    %v6378 = vand.u32 2147483647, %v6368
    %vm6379 = vcmp.eq.f32.partialorder %v6378, 8.507059e+37
    %v6380 = vand.u32 %v6368, 2147483648
    %v6381 = vor.u32 1.1754944e-38, %v6380
    %v6382 = vsel %vm6379, %v6381, %v6377
    %v6383 = vmul.f32 %v6358, %v6382
    %v6384 = vmin.f32 %v6383, 1.0
    %v6385 = vmax.f32 %v6384, -1.0
    %v6386 = vmul.f32 %v3099, %v3099
    %v6387 = vmin.f32 16.0, %v6386
    %v6388 = vmul.f32 %v6387, 2.1237322e-06
    %v6389 = vadd.f32 %v6388, 0.00028619796
    %v6390 = vmul.f32 %v6387, %v6389
    %v6391 = vadd.f32 %v6390, 0.0036580483
    %v6392 = vmul.f32 %v6387, %v6391
    %v6393 = vadd.f32 %v6392, 0.05243302
    %v6394 = vmul.f32 %v6387, %v6393
    %v6395 = vadd.f32 %v6394, 0.18741608
    %v6396 = vmul.f32 %v6387, %v6395
    %v6397 = vadd.f32 %v6396, 1.1283791
    %v6398 = vmul.f32 %v3099, %v6397
    %v6399 = vmul.f32 %v6387, 3.8918573e-05
    %v6400 = vadd.f32 %v6399, 0.001143296
    %v6401 = vmul.f32 %v6387, %v6400
    %v6402 = vadd.f32 %v6401, 0.014752088
    %v6403 = vmul.f32 %v6387, %v6402
    %v6404 = vadd.f32 %v6403, 0.112945676
    %v6405 = vmul.f32 %v6387, %v6404
    %v6406 = vadd.f32 %v6405, 0.4994258
    %v6407 = vmul.f32 %v6387, %v6406
    %v6408 = vadd.f32 %v6407, 1.0
    %v6409 = vrcp.pop %v6408
    %v6410 = vmul.f32 %v6408, %v6409
    %v6411 = vsub.f32 1.0, %v6410
    %v6412 = vmul.f32 %v6409, %v6411
    %v6413 = vadd.f32 %v6409, %v6412
    %vm6414 = vweird.f32 %v6408
    %vm6415 = vweird.f32 %v6409
    %vm6416 = vmor %vm6414, %vm6415
    %v6417 = vsel %vm6416, %v6409, %v6413
    %v6418 = vand.u32 2147483647, %v6408
    %vm6419 = vcmp.eq.f32.partialorder %v6418, 8.507059e+37
    %v6420 = vand.u32 %v6408, 2147483648
    %v6421 = vor.u32 1.1754944e-38, %v6420
    %v6422 = vsel %vm6419, %v6421, %v6417
    %v6423 = vmul.f32 %v6398, %v6422
    %v6424 = vmin.f32 %v6423, 1.0
    %v6425 = vmax.f32 %v6424, -1.0
    %v6426 = vmul.f32 %v3100, %v3100
    %v6427 = vmin.f32 16.0, %v6426
    %v6428 = vmul.f32 %v6427, 2.1237322e-06
    %v6429 = vadd.f32 %v6428, 0.00028619796
    %v6430 = vmul.f32 %v6427, %v6429
    %v6431 = vadd.f32 %v6430, 0.0036580483
    %v6432 = vmul.f32 %v6427, %v6431
    %v6433 = vadd.f32 %v6432, 0.05243302
    %v6434 = vmul.f32 %v6427, %v6433
    %v6435 = vadd.f32 %v6434, 0.18741608
    %v6436 = vmul.f32 %v6427, %v6435
    %v6437 = vadd.f32 %v6436, 1.1283791
    %v6438 = vmul.f32 %v3100, %v6437
    %v6439 = vmul.f32 %v6427, 3.8918573e-05
    %v6440 = vadd.f32 %v6439, 0.001143296
    %v6441 = vmul.f32 %v6427, %v6440
    %v6442 = vadd.f32 %v6441, 0.014752088
    %v6443 = vmul.f32 %v6427, %v6442
    %v6444 = vadd.f32 %v6443, 0.112945676
    %v6445 = vmul.f32 %v6427, %v6444
    %v6446 = vadd.f32 %v6445, 0.4994258
    %v6447 = vmul.f32 %v6427, %v6446
    %v6448 = vadd.f32 %v6447, 1.0
    %v6449 = vrcp.pop %v6448
    %v6450 = vmul.f32 %v6448, %v6449
    %v6451 = vsub.f32 1.0, %v6450
    %v6452 = vmul.f32 %v6449, %v6451
    %v6453 = vadd.f32 %v6449, %v6452
    %vm6454 = vweird.f32 %v6448
    %vm6455 = vweird.f32 %v6449
    %vm6456 = vmor %vm6454, %vm6455
    %v6457 = vsel %vm6456, %v6449, %v6453
    %v6458 = vand.u32 2147483647, %v6448
    %vm6459 = vcmp.eq.f32.partialorder %v6458, 8.507059e+37
    %v6460 = vand.u32 %v6448, 2147483648
    %v6461 = vor.u32 1.1754944e-38, %v6460
    %v6462 = vsel %vm6459, %v6461, %v6457
    %v6463 = vmul.f32 %v6438, %v6462
    %v6464 = vmin.f32 %v6463, 1.0
    %v6465 = vmax.f32 %v6464, -1.0
    %v6466 = vmul.f32 %v3101, %v3101
    %v6467 = vmin.f32 16.0, %v6466
    %v6468 = vmul.f32 %v6467, 2.1237322e-06
    %v6469 = vadd.f32 %v6468, 0.00028619796
    %v6470 = vmul.f32 %v6467, %v6469
    %v6471 = vadd.f32 %v6470, 0.0036580483
    %v6472 = vmul.f32 %v6467, %v6471
    %v6473 = vadd.f32 %v6472, 0.05243302
    %v6474 = vmul.f32 %v6467, %v6473
    %v6475 = vadd.f32 %v6474, 0.18741608
    %v6476 = vmul.f32 %v6467, %v6475
    %v6477 = vadd.f32 %v6476, 1.1283791
    %v6478 = vmul.f32 %v3101, %v6477
    %v6479 = vmul.f32 %v6467, 3.8918573e-05
    %v6480 = vadd.f32 %v6479, 0.001143296
    %v6481 = vmul.f32 %v6467, %v6480
    %v6482 = vadd.f32 %v6481, 0.014752088
    %v6483 = vmul.f32 %v6467, %v6482
    %v6484 = vadd.f32 %v6483, 0.112945676
    %v6485 = vmul.f32 %v6467, %v6484
    %v6486 = vadd.f32 %v6485, 0.4994258
    %v6487 = vmul.f32 %v6467, %v6486
    %v6488 = vadd.f32 %v6487, 1.0
    %v6489 = vrcp.pop %v6488
    %v6490 = vmul.f32 %v6488, %v6489
    %v6491 = vsub.f32 1.0, %v6490
    %v6492 = vmul.f32 %v6489, %v6491
    %v6493 = vadd.f32 %v6489, %v6492
    %vm6494 = vweird.f32 %v6488
    %vm6495 = vweird.f32 %v6489
    %vm6496 = vmor %vm6494, %vm6495
    %v6497 = vsel %vm6496, %v6489, %v6493
    %v6498 = vand.u32 2147483647, %v6488
    %vm6499 = vcmp.eq.f32.partialorder %v6498, 8.507059e+37
    %v6500 = vand.u32 %v6488, 2147483648
    %v6501 = vor.u32 1.1754944e-38, %v6500
    %v6502 = vsel %vm6499, %v6501, %v6497
    %v6503 = vmul.f32 %v6478, %v6502
    %v6504 = vmin.f32 %v6503, 1.0
    %v6505 = vmax.f32 %v6504, -1.0
    %v6506 = vmul.f32 %v3102, %v3102
    %v6507 = vmin.f32 16.0, %v6506
    %v6508 = vmul.f32 %v6507, 2.1237322e-06
    %v6509 = vadd.f32 %v6508, 0.00028619796
    %v6510 = vmul.f32 %v6507, %v6509
    %v6511 = vadd.f32 %v6510, 0.0036580483
    %v6512 = vmul.f32 %v6507, %v6511
    %v6513 = vadd.f32 %v6512, 0.05243302
    %v6514 = vmul.f32 %v6507, %v6513
    %v6515 = vadd.f32 %v6514, 0.18741608
    %v6516 = vmul.f32 %v6507, %v6515
    %v6517 = vadd.f32 %v6516, 1.1283791
    %v6518 = vmul.f32 %v3102, %v6517
    %v6519 = vmul.f32 %v6507, 3.8918573e-05
    %v6520 = vadd.f32 %v6519, 0.001143296
    %v6521 = vmul.f32 %v6507, %v6520
    %v6522 = vadd.f32 %v6521, 0.014752088
    %v6523 = vmul.f32 %v6507, %v6522
    %v6524 = vadd.f32 %v6523, 0.112945676
    %v6525 = vmul.f32 %v6507, %v6524
    %v6526 = vadd.f32 %v6525, 0.4994258
    %v6527 = vmul.f32 %v6507, %v6526
    %v6528 = vadd.f32 %v6527, 1.0
    %v6529 = vrcp.pop %v6528
    %v6530 = vmul.f32 %v6528, %v6529
    %v6531 = vsub.f32 1.0, %v6530
    %v6532 = vmul.f32 %v6529, %v6531
    %v6533 = vadd.f32 %v6529, %v6532
    %vm6534 = vweird.f32 %v6528
    %vm6535 = vweird.f32 %v6529
    %vm6536 = vmor %vm6534, %vm6535
    %v6537 = vsel %vm6536, %v6529, %v6533
    %v6538 = vand.u32 2147483647, %v6528
    %vm6539 = vcmp.eq.f32.partialorder %v6538, 8.507059e+37
    %v6540 = vand.u32 %v6528, 2147483648
    %v6541 = vor.u32 1.1754944e-38, %v6540
    %v6542 = vsel %vm6539, %v6541, %v6537
    %v6543 = vmul.f32 %v6518, %v6542
    %v6544 = vmin.f32 %v6543, 1.0
    %v6545 = vmax.f32 %v6544, -1.0
    %v6546 = vmul.f32 %v3103, %v3103
    %v6547 = vmin.f32 16.0, %v6546
    %v6548 = vmul.f32 %v6547, 2.1237322e-06
    %v6549 = vadd.f32 %v6548, 0.00028619796
    %v6550 = vmul.f32 %v6547, %v6549
    %v6551 = vadd.f32 %v6550, 0.0036580483
    %v6552 = vmul.f32 %v6547, %v6551
    %v6553 = vadd.f32 %v6552, 0.05243302
    %v6554 = vmul.f32 %v6547, %v6553
    %v6555 = vadd.f32 %v6554, 0.18741608
    %v6556 = vmul.f32 %v6547, %v6555
    %v6557 = vadd.f32 %v6556, 1.1283791
    %v6558 = vmul.f32 %v3103, %v6557
    %v6559 = vmul.f32 %v6547, 3.8918573e-05
    %v6560 = vadd.f32 %v6559, 0.001143296
    %v6561 = vmul.f32 %v6547, %v6560
    %v6562 = vadd.f32 %v6561, 0.014752088
    %v6563 = vmul.f32 %v6547, %v6562
    %v6564 = vadd.f32 %v6563, 0.112945676
    %v6565 = vmul.f32 %v6547, %v6564
    %v6566 = vadd.f32 %v6565, 0.4994258
    %v6567 = vmul.f32 %v6547, %v6566
    %v6568 = vadd.f32 %v6567, 1.0
    %v6569 = vrcp.pop %v6568
    %v6570 = vmul.f32 %v6568, %v6569
    %v6571 = vsub.f32 1.0, %v6570
    %v6572 = vmul.f32 %v6569, %v6571
    %v6573 = vadd.f32 %v6569, %v6572
    %vm6574 = vweird.f32 %v6568
    %vm6575 = vweird.f32 %v6569
    %vm6576 = vmor %vm6574, %vm6575
    %v6577 = vsel %vm6576, %v6569, %v6573
    %v6578 = vand.u32 2147483647, %v6568
    %vm6579 = vcmp.eq.f32.partialorder %v6578, 8.507059e+37
    %v6580 = vand.u32 %v6568, 2147483648
    %v6581 = vor.u32 1.1754944e-38, %v6580
    %v6582 = vsel %vm6579, %v6581, %v6577
    %v6583 = vmul.f32 %v6558, %v6582
    %v6584 = vmin.f32 %v6583, 1.0
    %v6585 = vmax.f32 %v6584, -1.0
    %v6586 = vmul.f32 %v3104, %v3104
    %v6587 = vmin.f32 16.0, %v6586
    %v6588 = vmul.f32 %v6587, 2.1237322e-06
    %v6589 = vadd.f32 %v6588, 0.00028619796
    %v6590 = vmul.f32 %v6587, %v6589
    %v6591 = vadd.f32 %v6590, 0.0036580483
    %v6592 = vmul.f32 %v6587, %v6591
    %v6593 = vadd.f32 %v6592, 0.05243302
    %v6594 = vmul.f32 %v6587, %v6593
    %v6595 = vadd.f32 %v6594, 0.18741608
    %v6596 = vmul.f32 %v6587, %v6595
    %v6597 = vadd.f32 %v6596, 1.1283791
    %v6598 = vmul.f32 %v3104, %v6597
    %v6599 = vmul.f32 %v6587, 3.8918573e-05
    %v6600 = vadd.f32 %v6599, 0.001143296
    %v6601 = vmul.f32 %v6587, %v6600
    %v6602 = vadd.f32 %v6601, 0.014752088
    %v6603 = vmul.f32 %v6587, %v6602
    %v6604 = vadd.f32 %v6603, 0.112945676
    %v6605 = vmul.f32 %v6587, %v6604
    %v6606 = vadd.f32 %v6605, 0.4994258
    %v6607 = vmul.f32 %v6587, %v6606
    %v6608 = vadd.f32 %v6607, 1.0
    %v6609 = vrcp.pop %v6608
    %v6610 = vmul.f32 %v6608, %v6609
    %v6611 = vsub.f32 1.0, %v6610
    %v6612 = vmul.f32 %v6609, %v6611
    %v6613 = vadd.f32 %v6609, %v6612
    %vm6614 = vweird.f32 %v6608
    %vm6615 = vweird.f32 %v6609
    %vm6616 = vmor %vm6614, %vm6615
    %v6617 = vsel %vm6616, %v6609, %v6613
    %v6618 = vand.u32 2147483647, %v6608
    %vm6619 = vcmp.eq.f32.partialorder %v6618, 8.507059e+37
    %v6620 = vand.u32 %v6608, 2147483648
    %v6621 = vor.u32 1.1754944e-38, %v6620
    %v6622 = vsel %vm6619, %v6621, %v6617
    %v6623 = vmul.f32 %v6598, %v6622
    %v6624 = vmin.f32 %v6623, 1.0
    %v6625 = vmax.f32 %v6624, -1.0
    %v6626 = vmul.f32 %v3105, %v3105
    %v6627 = vmin.f32 16.0, %v6626
    %v6628 = vmul.f32 %v6627, 2.1237322e-06
    %v6629 = vadd.f32 %v6628, 0.00028619796
    %v6630 = vmul.f32 %v6627, %v6629
    %v6631 = vadd.f32 %v6630, 0.0036580483
    %v6632 = vmul.f32 %v6627, %v6631
    %v6633 = vadd.f32 %v6632, 0.05243302
    %v6634 = vmul.f32 %v6627, %v6633
    %v6635 = vadd.f32 %v6634, 0.18741608
    %v6636 = vmul.f32 %v6627, %v6635
    %v6637 = vadd.f32 %v6636, 1.1283791
    %v6638 = vmul.f32 %v3105, %v6637
    %v6639 = vmul.f32 %v6627, 3.8918573e-05
    %v6640 = vadd.f32 %v6639, 0.001143296
    %v6641 = vmul.f32 %v6627, %v6640
    %v6642 = vadd.f32 %v6641, 0.014752088
    %v6643 = vmul.f32 %v6627, %v6642
    %v6644 = vadd.f32 %v6643, 0.112945676
    %v6645 = vmul.f32 %v6627, %v6644
    %v6646 = vadd.f32 %v6645, 0.4994258
    %v6647 = vmul.f32 %v6627, %v6646
    %v6648 = vadd.f32 %v6647, 1.0
    %v6649 = vrcp.pop %v6648
    %v6650 = vmul.f32 %v6648, %v6649
    %v6651 = vsub.f32 1.0, %v6650
    %v6652 = vmul.f32 %v6649, %v6651
    %v6653 = vadd.f32 %v6649, %v6652
    %vm6654 = vweird.f32 %v6648
    %vm6655 = vweird.f32 %v6649
    %vm6656 = vmor %vm6654, %vm6655
    %v6657 = vsel %vm6656, %v6649, %v6653
    %v6658 = vand.u32 2147483647, %v6648
    %vm6659 = vcmp.eq.f32.partialorder %v6658, 8.507059e+37
    %v6660 = vand.u32 %v6648, 2147483648
    %v6661 = vor.u32 1.1754944e-38, %v6660
    %v6662 = vsel %vm6659, %v6661, %v6657
    %v6663 = vmul.f32 %v6638, %v6662
    %v6664 = vmin.f32 %v6663, 1.0
    %v6665 = vmax.f32 %v6664, -1.0
    %v6666 = vmul.f32 %v3106, %v3106
    %v6667 = vmin.f32 16.0, %v6666
    %v6668 = vmul.f32 %v6667, 2.1237322e-06
    %v6669 = vadd.f32 %v6668, 0.00028619796
    %v6670 = vmul.f32 %v6667, %v6669
    %v6671 = vadd.f32 %v6670, 0.0036580483
    %v6672 = vmul.f32 %v6667, %v6671
    %v6673 = vadd.f32 %v6672, 0.05243302
    %v6674 = vmul.f32 %v6667, %v6673
    %v6675 = vadd.f32 %v6674, 0.18741608
    %v6676 = vmul.f32 %v6667, %v6675
    %v6677 = vadd.f32 %v6676, 1.1283791
    %v6678 = vmul.f32 %v3106, %v6677
    %v6679 = vmul.f32 %v6667, 3.8918573e-05
    %v6680 = vadd.f32 %v6679, 0.001143296
    %v6681 = vmul.f32 %v6667, %v6680
    %v6682 = vadd.f32 %v6681, 0.014752088
    %v6683 = vmul.f32 %v6667, %v6682
    %v6684 = vadd.f32 %v6683, 0.112945676
    %v6685 = vmul.f32 %v6667, %v6684
    %v6686 = vadd.f32 %v6685, 0.4994258
    %v6687 = vmul.f32 %v6667, %v6686
    %v6688 = vadd.f32 %v6687, 1.0
    %v6689 = vrcp.pop %v6688
    %v6690 = vmul.f32 %v6688, %v6689
    %v6691 = vsub.f32 1.0, %v6690
    %v6692 = vmul.f32 %v6689, %v6691
    %v6693 = vadd.f32 %v6689, %v6692
    %vm6694 = vweird.f32 %v6688
    %vm6695 = vweird.f32 %v6689
    %vm6696 = vmor %vm6694, %vm6695
    %v6697 = vsel %vm6696, %v6689, %v6693
    %v6698 = vand.u32 2147483647, %v6688
    %vm6699 = vcmp.eq.f32.partialorder %v6698, 8.507059e+37
    %v6700 = vand.u32 %v6688, 2147483648
    %v6701 = vor.u32 1.1754944e-38, %v6700
    %v6702 = vsel %vm6699, %v6701, %v6697
    %v6703 = vmul.f32 %v6678, %v6702
    %v6704 = vmin.f32 %v6703, 1.0
    %v6705 = vmax.f32 %v6704, -1.0
    %v6706 = vmul.f32 %v3107, %v3107
    %v6707 = vmin.f32 16.0, %v6706
    %v6708 = vmul.f32 %v6707, 2.1237322e-06
    %v6709 = vadd.f32 %v6708, 0.00028619796
    %v6710 = vmul.f32 %v6707, %v6709
    %v6711 = vadd.f32 %v6710, 0.0036580483
    %v6712 = vmul.f32 %v6707, %v6711
    %v6713 = vadd.f32 %v6712, 0.05243302
    %v6714 = vmul.f32 %v6707, %v6713
    %v6715 = vadd.f32 %v6714, 0.18741608
    %v6716 = vmul.f32 %v6707, %v6715
    %v6717 = vadd.f32 %v6716, 1.1283791
    %v6718 = vmul.f32 %v3107, %v6717
    %v6719 = vmul.f32 %v6707, 3.8918573e-05
    %v6720 = vadd.f32 %v6719, 0.001143296
    %v6721 = vmul.f32 %v6707, %v6720
    %v6722 = vadd.f32 %v6721, 0.014752088
    %v6723 = vmul.f32 %v6707, %v6722
    %v6724 = vadd.f32 %v6723, 0.112945676
    %v6725 = vmul.f32 %v6707, %v6724
    %v6726 = vadd.f32 %v6725, 0.4994258
    %v6727 = vmul.f32 %v6707, %v6726
    %v6728 = vadd.f32 %v6727, 1.0
    %v6729 = vrcp.pop %v6728
    %v6730 = vmul.f32 %v6728, %v6729
    %v6731 = vsub.f32 1.0, %v6730
    %v6732 = vmul.f32 %v6729, %v6731
    %v6733 = vadd.f32 %v6729, %v6732
    %vm6734 = vweird.f32 %v6728
    %vm6735 = vweird.f32 %v6729
    %vm6736 = vmor %vm6734, %vm6735
    %v6737 = vsel %vm6736, %v6729, %v6733
    %v6738 = vand.u32 2147483647, %v6728
    %vm6739 = vcmp.eq.f32.partialorder %v6738, 8.507059e+37
    %v6740 = vand.u32 %v6728, 2147483648
    %v6741 = vor.u32 1.1754944e-38, %v6740
    %v6742 = vsel %vm6739, %v6741, %v6737
    %v6743 = vmul.f32 %v6718, %v6742
    %v6744 = vmin.f32 %v6743, 1.0
    %v6745 = vmax.f32 %v6744, -1.0
    %v6746 = vmul.f32 %v3108, %v3108
    %v6747 = vmin.f32 16.0, %v6746
    %v6748 = vmul.f32 %v6747, 2.1237322e-06
    %v6749 = vadd.f32 %v6748, 0.00028619796
    %v6750 = vmul.f32 %v6747, %v6749
    %v6751 = vadd.f32 %v6750, 0.0036580483
    %v6752 = vmul.f32 %v6747, %v6751
    %v6753 = vadd.f32 %v6752, 0.05243302
    %v6754 = vmul.f32 %v6747, %v6753
    %v6755 = vadd.f32 %v6754, 0.18741608
    %v6756 = vmul.f32 %v6747, %v6755
    %v6757 = vadd.f32 %v6756, 1.1283791
    %v6758 = vmul.f32 %v3108, %v6757
    %v6759 = vmul.f32 %v6747, 3.8918573e-05
    %v6760 = vadd.f32 %v6759, 0.001143296
    %v6761 = vmul.f32 %v6747, %v6760
    %v6762 = vadd.f32 %v6761, 0.014752088
    %v6763 = vmul.f32 %v6747, %v6762
    %v6764 = vadd.f32 %v6763, 0.112945676
    %v6765 = vmul.f32 %v6747, %v6764
    %v6766 = vadd.f32 %v6765, 0.4994258
    %v6767 = vmul.f32 %v6747, %v6766
    %v6768 = vadd.f32 %v6767, 1.0
    %v6769 = vrcp.pop %v6768
    %v6770 = vmul.f32 %v6768, %v6769
    %v6771 = vsub.f32 1.0, %v6770
    %v6772 = vmul.f32 %v6769, %v6771
    %v6773 = vadd.f32 %v6769, %v6772
    %vm6774 = vweird.f32 %v6768
    %vm6775 = vweird.f32 %v6769
    %vm6776 = vmor %vm6774, %vm6775
    %v6777 = vsel %vm6776, %v6769, %v6773
    %v6778 = vand.u32 2147483647, %v6768
    %vm6779 = vcmp.eq.f32.partialorder %v6778, 8.507059e+37
    %v6780 = vand.u32 %v6768, 2147483648
    %v6781 = vor.u32 1.1754944e-38, %v6780
    %v6782 = vsel %vm6779, %v6781, %v6777
    %v6783 = vmul.f32 %v6758, %v6782
    %v6784 = vmin.f32 %v6783, 1.0
    %v6785 = vmax.f32 %v6784, -1.0
    %v6786 = vmul.f32 %v3109, %v3109
    %v6787 = vmin.f32 16.0, %v6786
    %v6788 = vmul.f32 %v6787, 2.1237322e-06
    %v6789 = vadd.f32 %v6788, 0.00028619796
    %v6790 = vmul.f32 %v6787, %v6789
    %v6791 = vadd.f32 %v6790, 0.0036580483
    %v6792 = vmul.f32 %v6787, %v6791
    %v6793 = vadd.f32 %v6792, 0.05243302
    %v6794 = vmul.f32 %v6787, %v6793
    %v6795 = vadd.f32 %v6794, 0.18741608
    %v6796 = vmul.f32 %v6787, %v6795
    %v6797 = vadd.f32 %v6796, 1.1283791
    %v6798 = vmul.f32 %v3109, %v6797
    %v6799 = vmul.f32 %v6787, 3.8918573e-05
    %v6800 = vadd.f32 %v6799, 0.001143296
    %v6801 = vmul.f32 %v6787, %v6800
    %v6802 = vadd.f32 %v6801, 0.014752088
    %v6803 = vmul.f32 %v6787, %v6802
    %v6804 = vadd.f32 %v6803, 0.112945676
    %v6805 = vmul.f32 %v6787, %v6804
    %v6806 = vadd.f32 %v6805, 0.4994258
    %v6807 = vmul.f32 %v6787, %v6806
    %v6808 = vadd.f32 %v6807, 1.0
    %v6809 = vrcp.pop %v6808
    %v6810 = vmul.f32 %v6808, %v6809
    %v6811 = vsub.f32 1.0, %v6810
    %v6812 = vmul.f32 %v6809, %v6811
    %v6813 = vadd.f32 %v6809, %v6812
    %vm6814 = vweird.f32 %v6808
    %vm6815 = vweird.f32 %v6809
    %vm6816 = vmor %vm6814, %vm6815
    %v6817 = vsel %vm6816, %v6809, %v6813
    %v6818 = vand.u32 2147483647, %v6808
    %vm6819 = vcmp.eq.f32.partialorder %v6818, 8.507059e+37
    %v6820 = vand.u32 %v6808, 2147483648
    %v6821 = vor.u32 1.1754944e-38, %v6820
    %v6822 = vsel %vm6819, %v6821, %v6817
    %v6823 = vmul.f32 %v6798, %v6822
    %v6824 = vmin.f32 %v6823, 1.0
    %v6825 = vmax.f32 %v6824, -1.0
    %v6826 = vmul.f32 %v3110, %v3110
    %v6827 = vmin.f32 16.0, %v6826
    %v6828 = vmul.f32 %v6827, 2.1237322e-06
    %v6829 = vadd.f32 %v6828, 0.00028619796
    %v6830 = vmul.f32 %v6827, %v6829
    %v6831 = vadd.f32 %v6830, 0.0036580483
    %v6832 = vmul.f32 %v6827, %v6831
    %v6833 = vadd.f32 %v6832, 0.05243302
    %v6834 = vmul.f32 %v6827, %v6833
    %v6835 = vadd.f32 %v6834, 0.18741608
    %v6836 = vmul.f32 %v6827, %v6835
    %v6837 = vadd.f32 %v6836, 1.1283791
    %v6838 = vmul.f32 %v3110, %v6837
    %v6839 = vmul.f32 %v6827, 3.8918573e-05
    %v6840 = vadd.f32 %v6839, 0.001143296
    %v6841 = vmul.f32 %v6827, %v6840
    %v6842 = vadd.f32 %v6841, 0.014752088
    %v6843 = vmul.f32 %v6827, %v6842
    %v6844 = vadd.f32 %v6843, 0.112945676
    %v6845 = vmul.f32 %v6827, %v6844
    %v6846 = vadd.f32 %v6845, 0.4994258
    %v6847 = vmul.f32 %v6827, %v6846
    %v6848 = vadd.f32 %v6847, 1.0
    %v6849 = vrcp.pop %v6848
    %v6850 = vmul.f32 %v6848, %v6849
    %v6851 = vsub.f32 1.0, %v6850
    %v6852 = vmul.f32 %v6849, %v6851
    %v6853 = vadd.f32 %v6849, %v6852
    %vm6854 = vweird.f32 %v6848
    %vm6855 = vweird.f32 %v6849
    %vm6856 = vmor %vm6854, %vm6855
    %v6857 = vsel %vm6856, %v6849, %v6853
    %v6858 = vand.u32 2147483647, %v6848
    %vm6859 = vcmp.eq.f32.partialorder %v6858, 8.507059e+37
    %v6860 = vand.u32 %v6848, 2147483648
    %v6861 = vor.u32 1.1754944e-38, %v6860
    %v6862 = vsel %vm6859, %v6861, %v6857
    %v6863 = vmul.f32 %v6838, %v6862
    %v6864 = vmin.f32 %v6863, 1.0
    %v6865 = vmax.f32 %v6864, -1.0
    %v6866 = vmul.f32 %v3111, %v3111
    %v6867 = vmin.f32 16.0, %v6866
    %v6868 = vmul.f32 %v6867, 2.1237322e-06
    %v6869 = vadd.f32 %v6868, 0.00028619796
    %v6870 = vmul.f32 %v6867, %v6869
    %v6871 = vadd.f32 %v6870, 0.0036580483
    %v6872 = vmul.f32 %v6867, %v6871
    %v6873 = vadd.f32 %v6872, 0.05243302
    %v6874 = vmul.f32 %v6867, %v6873
    %v6875 = vadd.f32 %v6874, 0.18741608
    %v6876 = vmul.f32 %v6867, %v6875
    %v6877 = vadd.f32 %v6876, 1.1283791
    %v6878 = vmul.f32 %v3111, %v6877
    %v6879 = vmul.f32 %v6867, 3.8918573e-05
    %v6880 = vadd.f32 %v6879, 0.001143296
    %v6881 = vmul.f32 %v6867, %v6880
    %v6882 = vadd.f32 %v6881, 0.014752088
    %v6883 = vmul.f32 %v6867, %v6882
    %v6884 = vadd.f32 %v6883, 0.112945676
    %v6885 = vmul.f32 %v6867, %v6884
    %v6886 = vadd.f32 %v6885, 0.4994258
    %v6887 = vmul.f32 %v6867, %v6886
    %v6888 = vadd.f32 %v6887, 1.0
    %v6889 = vrcp.pop %v6888
    %v6890 = vmul.f32 %v6888, %v6889
    %v6891 = vsub.f32 1.0, %v6890
    %v6892 = vmul.f32 %v6889, %v6891
    %v6893 = vadd.f32 %v6889, %v6892
    %vm6894 = vweird.f32 %v6888
    %vm6895 = vweird.f32 %v6889
    %vm6896 = vmor %vm6894, %vm6895
    %v6897 = vsel %vm6896, %v6889, %v6893
    %v6898 = vand.u32 2147483647, %v6888
    %vm6899 = vcmp.eq.f32.partialorder %v6898, 8.507059e+37
    %v6900 = vand.u32 %v6888, 2147483648
    %v6901 = vor.u32 1.1754944e-38, %v6900
    %v6902 = vsel %vm6899, %v6901, %v6897
    %v6903 = vmul.f32 %v6878, %v6902
    %v6904 = vmin.f32 %v6903, 1.0
    %v6905 = vmax.f32 %v6904, -1.0
    %v6906 = vmul.f32 %v3112, %v3112
    %v6907 = vmin.f32 16.0, %v6906
    %v6908 = vmul.f32 %v6907, 2.1237322e-06
    %v6909 = vadd.f32 %v6908, 0.00028619796
    %v6910 = vmul.f32 %v6907, %v6909
    %v6911 = vadd.f32 %v6910, 0.0036580483
    %v6912 = vmul.f32 %v6907, %v6911
    %v6913 = vadd.f32 %v6912, 0.05243302
    %v6914 = vmul.f32 %v6907, %v6913
    %v6915 = vadd.f32 %v6914, 0.18741608
    %v6916 = vmul.f32 %v6907, %v6915
    %v6917 = vadd.f32 %v6916, 1.1283791
    %v6918 = vmul.f32 %v3112, %v6917
    %v6919 = vmul.f32 %v6907, 3.8918573e-05
    %v6920 = vadd.f32 %v6919, 0.001143296
    %v6921 = vmul.f32 %v6907, %v6920
    %v6922 = vadd.f32 %v6921, 0.014752088
    %v6923 = vmul.f32 %v6907, %v6922
    %v6924 = vadd.f32 %v6923, 0.112945676
    %v6925 = vmul.f32 %v6907, %v6924
    %v6926 = vadd.f32 %v6925, 0.4994258
    %v6927 = vmul.f32 %v6907, %v6926
    %v6928 = vadd.f32 %v6927, 1.0
    %v6929 = vrcp.pop %v6928
    %v6930 = vmul.f32 %v6928, %v6929
    %v6931 = vsub.f32 1.0, %v6930
    %v6932 = vmul.f32 %v6929, %v6931
    %v6933 = vadd.f32 %v6929, %v6932
    %vm6934 = vweird.f32 %v6928
    %vm6935 = vweird.f32 %v6929
    %vm6936 = vmor %vm6934, %vm6935
    %v6937 = vsel %vm6936, %v6929, %v6933
    %v6938 = vand.u32 2147483647, %v6928
    %vm6939 = vcmp.eq.f32.partialorder %v6938, 8.507059e+37
    %v6940 = vand.u32 %v6928, 2147483648
    %v6941 = vor.u32 1.1754944e-38, %v6940
    %v6942 = vsel %vm6939, %v6941, %v6937
    %v6943 = vmul.f32 %v6918, %v6942
    %v6944 = vmin.f32 %v6943, 1.0
    %v6945 = vmax.f32 %v6944, -1.0
    %v6946 = vmul.f32 %v3113, %v3113
    %v6947 = vmin.f32 16.0, %v6946
    %v6948 = vmul.f32 %v6947, 2.1237322e-06
    %v6949 = vadd.f32 %v6948, 0.00028619796
    %v6950 = vmul.f32 %v6947, %v6949
    %v6951 = vadd.f32 %v6950, 0.0036580483
    %v6952 = vmul.f32 %v6947, %v6951
    %v6953 = vadd.f32 %v6952, 0.05243302
    %v6954 = vmul.f32 %v6947, %v6953
    %v6955 = vadd.f32 %v6954, 0.18741608
    %v6956 = vmul.f32 %v6947, %v6955
    %v6957 = vadd.f32 %v6956, 1.1283791
    %v6958 = vmul.f32 %v3113, %v6957
    %v6959 = vmul.f32 %v6947, 3.8918573e-05
    %v6960 = vadd.f32 %v6959, 0.001143296
    %v6961 = vmul.f32 %v6947, %v6960
    %v6962 = vadd.f32 %v6961, 0.014752088
    %v6963 = vmul.f32 %v6947, %v6962
    %v6964 = vadd.f32 %v6963, 0.112945676
    %v6965 = vmul.f32 %v6947, %v6964
    %v6966 = vadd.f32 %v6965, 0.4994258
    %v6967 = vmul.f32 %v6947, %v6966
    %v6968 = vadd.f32 %v6967, 1.0
    %v6969 = vrcp.pop %v6968
    %v6970 = vmul.f32 %v6968, %v6969
    %v6971 = vsub.f32 1.0, %v6970
    %v6972 = vmul.f32 %v6969, %v6971
    %v6973 = vadd.f32 %v6969, %v6972
    %vm6974 = vweird.f32 %v6968
    %vm6975 = vweird.f32 %v6969
    %vm6976 = vmor %vm6974, %vm6975
    %v6977 = vsel %vm6976, %v6969, %v6973
    %v6978 = vand.u32 2147483647, %v6968
    %vm6979 = vcmp.eq.f32.partialorder %v6978, 8.507059e+37
    %v6980 = vand.u32 %v6968, 2147483648
    %v6981 = vor.u32 1.1754944e-38, %v6980
    %v6982 = vsel %vm6979, %v6981, %v6977
    %v6983 = vmul.f32 %v6958, %v6982
    %v6984 = vmin.f32 %v6983, 1.0
    %v6985 = vmax.f32 %v6984, -1.0
    %v6986 = vmul.f32 %v3114, %v3114
    %v6987 = vmin.f32 16.0, %v6986
    %v6988 = vmul.f32 %v6987, 2.1237322e-06
    %v6989 = vadd.f32 %v6988, 0.00028619796
    %v6990 = vmul.f32 %v6987, %v6989
    %v6991 = vadd.f32 %v6990, 0.0036580483
    %v6992 = vmul.f32 %v6987, %v6991
    %v6993 = vadd.f32 %v6992, 0.05243302
    %v6994 = vmul.f32 %v6987, %v6993
    %v6995 = vadd.f32 %v6994, 0.18741608
    %v6996 = vmul.f32 %v6987, %v6995
    %v6997 = vadd.f32 %v6996, 1.1283791
    %v6998 = vmul.f32 %v3114, %v6997
    %v6999 = vmul.f32 %v6987, 3.8918573e-05
    %v7000 = vadd.f32 %v6999, 0.001143296
    %v7001 = vmul.f32 %v6987, %v7000
    %v7002 = vadd.f32 %v7001, 0.014752088
    %v7003 = vmul.f32 %v6987, %v7002
    %v7004 = vadd.f32 %v7003, 0.112945676
    %v7005 = vmul.f32 %v6987, %v7004
    %v7006 = vadd.f32 %v7005, 0.4994258
    %v7007 = vmul.f32 %v6987, %v7006
    %v7008 = vadd.f32 %v7007, 1.0
    %v7009 = vrcp.pop %v7008
    %v7010 = vmul.f32 %v7008, %v7009
    %v7011 = vsub.f32 1.0, %v7010
    %v7012 = vmul.f32 %v7009, %v7011
    %v7013 = vadd.f32 %v7009, %v7012
    %vm7014 = vweird.f32 %v7008
    %vm7015 = vweird.f32 %v7009
    %vm7016 = vmor %vm7014, %vm7015
    %v7017 = vsel %vm7016, %v7009, %v7013
    %v7018 = vand.u32 2147483647, %v7008
    %vm7019 = vcmp.eq.f32.partialorder %v7018, 8.507059e+37
    %v7020 = vand.u32 %v7008, 2147483648
    %v7021 = vor.u32 1.1754944e-38, %v7020
    %v7022 = vsel %vm7019, %v7021, %v7017
    %v7023 = vmul.f32 %v6998, %v7022
    %v7024 = vmin.f32 %v7023, 1.0
    %v7025 = vmax.f32 %v7024, -1.0
    %v7026 = vmul.f32 %v3115, %v3115
    %v7027 = vmin.f32 16.0, %v7026
    %v7028 = vmul.f32 %v7027, 2.1237322e-06
    %v7029 = vadd.f32 %v7028, 0.00028619796
    %v7030 = vmul.f32 %v7027, %v7029
    %v7031 = vadd.f32 %v7030, 0.0036580483
    %v7032 = vmul.f32 %v7027, %v7031
    %v7033 = vadd.f32 %v7032, 0.05243302
    %v7034 = vmul.f32 %v7027, %v7033
    %v7035 = vadd.f32 %v7034, 0.18741608
    %v7036 = vmul.f32 %v7027, %v7035
    %v7037 = vadd.f32 %v7036, 1.1283791
    %v7038 = vmul.f32 %v3115, %v7037
    %v7039 = vmul.f32 %v7027, 3.8918573e-05
    %v7040 = vadd.f32 %v7039, 0.001143296
    %v7041 = vmul.f32 %v7027, %v7040
    %v7042 = vadd.f32 %v7041, 0.014752088
    %v7043 = vmul.f32 %v7027, %v7042
    %v7044 = vadd.f32 %v7043, 0.112945676
    %v7045 = vmul.f32 %v7027, %v7044
    %v7046 = vadd.f32 %v7045, 0.4994258
    %v7047 = vmul.f32 %v7027, %v7046
    %v7048 = vadd.f32 %v7047, 1.0
    %v7049 = vrcp.pop %v7048
    %v7050 = vmul.f32 %v7048, %v7049
    %v7051 = vsub.f32 1.0, %v7050
    %v7052 = vmul.f32 %v7049, %v7051
    %v7053 = vadd.f32 %v7049, %v7052
    %vm7054 = vweird.f32 %v7048
    %vm7055 = vweird.f32 %v7049
    %vm7056 = vmor %vm7054, %vm7055
    %v7057 = vsel %vm7056, %v7049, %v7053
    %v7058 = vand.u32 2147483647, %v7048
    %vm7059 = vcmp.eq.f32.partialorder %v7058, 8.507059e+37
    %v7060 = vand.u32 %v7048, 2147483648
    %v7061 = vor.u32 1.1754944e-38, %v7060
    %v7062 = vsel %vm7059, %v7061, %v7057
    %v7063 = vmul.f32 %v7038, %v7062
    %v7064 = vmin.f32 %v7063, 1.0
    %v7065 = vmax.f32 %v7064, -1.0
    %v7066 = vmul.f32 %v3116, %v3116
    %v7067 = vmin.f32 16.0, %v7066
    %v7068 = vmul.f32 %v7067, 2.1237322e-06
    %v7069 = vadd.f32 %v7068, 0.00028619796
    %v7070 = vmul.f32 %v7067, %v7069
    %v7071 = vadd.f32 %v7070, 0.0036580483
    %v7072 = vmul.f32 %v7067, %v7071
    %v7073 = vadd.f32 %v7072, 0.05243302
    %v7074 = vmul.f32 %v7067, %v7073
    %v7075 = vadd.f32 %v7074, 0.18741608
    %v7076 = vmul.f32 %v7067, %v7075
    %v7077 = vadd.f32 %v7076, 1.1283791
    %v7078 = vmul.f32 %v3116, %v7077
    %v7079 = vmul.f32 %v7067, 3.8918573e-05
    %v7080 = vadd.f32 %v7079, 0.001143296
    %v7081 = vmul.f32 %v7067, %v7080
    %v7082 = vadd.f32 %v7081, 0.014752088
    %v7083 = vmul.f32 %v7067, %v7082
    %v7084 = vadd.f32 %v7083, 0.112945676
    %v7085 = vmul.f32 %v7067, %v7084
    %v7086 = vadd.f32 %v7085, 0.4994258
    %v7087 = vmul.f32 %v7067, %v7086
    %v7088 = vadd.f32 %v7087, 1.0
    %v7089 = vrcp.pop %v7088
    %v7090 = vmul.f32 %v7088, %v7089
    %v7091 = vsub.f32 1.0, %v7090
    %v7092 = vmul.f32 %v7089, %v7091
    %v7093 = vadd.f32 %v7089, %v7092
    %vm7094 = vweird.f32 %v7088
    %vm7095 = vweird.f32 %v7089
    %vm7096 = vmor %vm7094, %vm7095
    %v7097 = vsel %vm7096, %v7089, %v7093
    %v7098 = vand.u32 2147483647, %v7088
    %vm7099 = vcmp.eq.f32.partialorder %v7098, 8.507059e+37
    %v7100 = vand.u32 %v7088, 2147483648
    %v7101 = vor.u32 1.1754944e-38, %v7100
    %v7102 = vsel %vm7099, %v7101, %v7097
    %v7103 = vmul.f32 %v7078, %v7102
    %v7104 = vmin.f32 %v7103, 1.0
    %v7105 = vmax.f32 %v7104, -1.0
    %v7106 = vmul.f32 %v3117, %v3117
    %v7107 = vmin.f32 16.0, %v7106
    %v7108 = vmul.f32 %v7107, 2.1237322e-06
    %v7109 = vadd.f32 %v7108, 0.00028619796
    %v7110 = vmul.f32 %v7107, %v7109
    %v7111 = vadd.f32 %v7110, 0.0036580483
    %v7112 = vmul.f32 %v7107, %v7111
    %v7113 = vadd.f32 %v7112, 0.05243302
    %v7114 = vmul.f32 %v7107, %v7113
    %v7115 = vadd.f32 %v7114, 0.18741608
    %v7116 = vmul.f32 %v7107, %v7115
    %v7117 = vadd.f32 %v7116, 1.1283791
    %v7118 = vmul.f32 %v3117, %v7117
    %v7119 = vmul.f32 %v7107, 3.8918573e-05
    %v7120 = vadd.f32 %v7119, 0.001143296
    %v7121 = vmul.f32 %v7107, %v7120
    %v7122 = vadd.f32 %v7121, 0.014752088
    %v7123 = vmul.f32 %v7107, %v7122
    %v7124 = vadd.f32 %v7123, 0.112945676
    %v7125 = vmul.f32 %v7107, %v7124
    %v7126 = vadd.f32 %v7125, 0.4994258
    %v7127 = vmul.f32 %v7107, %v7126
    %v7128 = vadd.f32 %v7127, 1.0
    %v7129 = vrcp.pop %v7128
    %v7130 = vmul.f32 %v7128, %v7129
    %v7131 = vsub.f32 1.0, %v7130
    %v7132 = vmul.f32 %v7129, %v7131
    %v7133 = vadd.f32 %v7129, %v7132
    %vm7134 = vweird.f32 %v7128
    %vm7135 = vweird.f32 %v7129
    %vm7136 = vmor %vm7134, %vm7135
    %v7137 = vsel %vm7136, %v7129, %v7133
    %v7138 = vand.u32 2147483647, %v7128
    %vm7139 = vcmp.eq.f32.partialorder %v7138, 8.507059e+37
    %v7140 = vand.u32 %v7128, 2147483648
    %v7141 = vor.u32 1.1754944e-38, %v7140
    %v7142 = vsel %vm7139, %v7141, %v7137
    %v7143 = vmul.f32 %v7118, %v7142
    %v7144 = vmin.f32 %v7143, 1.0
    %v7145 = vmax.f32 %v7144, -1.0
    %v7146 = vmul.f32 %v3118, %v3118
    %v7147 = vmin.f32 16.0, %v7146
    %v7148 = vmul.f32 %v7147, 2.1237322e-06
    %v7149 = vadd.f32 %v7148, 0.00028619796
    %v7150 = vmul.f32 %v7147, %v7149
    %v7151 = vadd.f32 %v7150, 0.0036580483
    %v7152 = vmul.f32 %v7147, %v7151
    %v7153 = vadd.f32 %v7152, 0.05243302
    %v7154 = vmul.f32 %v7147, %v7153
    %v7155 = vadd.f32 %v7154, 0.18741608
    %v7156 = vmul.f32 %v7147, %v7155
    %v7157 = vadd.f32 %v7156, 1.1283791
    %v7158 = vmul.f32 %v3118, %v7157
    %v7159 = vmul.f32 %v7147, 3.8918573e-05
    %v7160 = vadd.f32 %v7159, 0.001143296
    %v7161 = vmul.f32 %v7147, %v7160
    %v7162 = vadd.f32 %v7161, 0.014752088
    %v7163 = vmul.f32 %v7147, %v7162
    %v7164 = vadd.f32 %v7163, 0.112945676
    %v7165 = vmul.f32 %v7147, %v7164
    %v7166 = vadd.f32 %v7165, 0.4994258
    %v7167 = vmul.f32 %v7147, %v7166
    %v7168 = vadd.f32 %v7167, 1.0
    %v7169 = vrcp.pop %v7168
    %v7170 = vmul.f32 %v7168, %v7169
    %v7171 = vsub.f32 1.0, %v7170
    %v7172 = vmul.f32 %v7169, %v7171
    %v7173 = vadd.f32 %v7169, %v7172
    %vm7174 = vweird.f32 %v7168
    %vm7175 = vweird.f32 %v7169
    %vm7176 = vmor %vm7174, %vm7175
    %v7177 = vsel %vm7176, %v7169, %v7173
    %v7178 = vand.u32 2147483647, %v7168
    %vm7179 = vcmp.eq.f32.partialorder %v7178, 8.507059e+37
    %v7180 = vand.u32 %v7168, 2147483648
    %v7181 = vor.u32 1.1754944e-38, %v7180
    %v7182 = vsel %vm7179, %v7181, %v7177
    %v7183 = vmul.f32 %v7158, %v7182
    %v7184 = vmin.f32 %v7183, 1.0
    %v7185 = vmax.f32 %v7184, -1.0
    %v7186 = vmul.f32 %v3119, %v3119
    %v7187 = vmin.f32 16.0, %v7186
    %v7188 = vmul.f32 %v7187, 2.1237322e-06
    %v7189 = vadd.f32 %v7188, 0.00028619796
    %v7190 = vmul.f32 %v7187, %v7189
    %v7191 = vadd.f32 %v7190, 0.0036580483
    %v7192 = vmul.f32 %v7187, %v7191
    %v7193 = vadd.f32 %v7192, 0.05243302
    %v7194 = vmul.f32 %v7187, %v7193
    %v7195 = vadd.f32 %v7194, 0.18741608
    %v7196 = vmul.f32 %v7187, %v7195
    %v7197 = vadd.f32 %v7196, 1.1283791
    %v7198 = vmul.f32 %v3119, %v7197
    %v7199 = vmul.f32 %v7187, 3.8918573e-05
    %v7200 = vadd.f32 %v7199, 0.001143296
    %v7201 = vmul.f32 %v7187, %v7200
    %v7202 = vadd.f32 %v7201, 0.014752088
    %v7203 = vmul.f32 %v7187, %v7202
    %v7204 = vadd.f32 %v7203, 0.112945676
    %v7205 = vmul.f32 %v7187, %v7204
    %v7206 = vadd.f32 %v7205, 0.4994258
    %v7207 = vmul.f32 %v7187, %v7206
    %v7208 = vadd.f32 %v7207, 1.0
    %v7209 = vrcp.pop %v7208
    %v7210 = vmul.f32 %v7208, %v7209
    %v7211 = vsub.f32 1.0, %v7210
    %v7212 = vmul.f32 %v7209, %v7211
    %v7213 = vadd.f32 %v7209, %v7212
    %vm7214 = vweird.f32 %v7208
    %vm7215 = vweird.f32 %v7209
    %vm7216 = vmor %vm7214, %vm7215
    %v7217 = vsel %vm7216, %v7209, %v7213
    %v7218 = vand.u32 2147483647, %v7208
    %vm7219 = vcmp.eq.f32.partialorder %v7218, 8.507059e+37
    %v7220 = vand.u32 %v7208, 2147483648
    %v7221 = vor.u32 1.1754944e-38, %v7220
    %v7222 = vsel %vm7219, %v7221, %v7217
    %v7223 = vmul.f32 %v7198, %v7222
    %v7224 = vmin.f32 %v7223, 1.0
    %v7225 = vmax.f32 %v7224, -1.0
    %v7226 = vmul.f32 %v3120, %v3120
    %v7227 = vmin.f32 16.0, %v7226
    %v7228 = vmul.f32 %v7227, 2.1237322e-06
    %v7229 = vadd.f32 %v7228, 0.00028619796
    %v7230 = vmul.f32 %v7227, %v7229
    %v7231 = vadd.f32 %v7230, 0.0036580483
    %v7232 = vmul.f32 %v7227, %v7231
    %v7233 = vadd.f32 %v7232, 0.05243302
    %v7234 = vmul.f32 %v7227, %v7233
    %v7235 = vadd.f32 %v7234, 0.18741608
    %v7236 = vmul.f32 %v7227, %v7235
    %v7237 = vadd.f32 %v7236, 1.1283791
    %v7238 = vmul.f32 %v3120, %v7237
    %v7239 = vmul.f32 %v7227, 3.8918573e-05
    %v7240 = vadd.f32 %v7239, 0.001143296
    %v7241 = vmul.f32 %v7227, %v7240
    %v7242 = vadd.f32 %v7241, 0.014752088
    %v7243 = vmul.f32 %v7227, %v7242
    %v7244 = vadd.f32 %v7243, 0.112945676
    %v7245 = vmul.f32 %v7227, %v7244
    %v7246 = vadd.f32 %v7245, 0.4994258
    %v7247 = vmul.f32 %v7227, %v7246
    %v7248 = vadd.f32 %v7247, 1.0
    %v7249 = vrcp.pop %v7248
    %v7250 = vmul.f32 %v7248, %v7249
    %v7251 = vsub.f32 1.0, %v7250
    %v7252 = vmul.f32 %v7249, %v7251
    %v7253 = vadd.f32 %v7249, %v7252
    %vm7254 = vweird.f32 %v7248
    %vm7255 = vweird.f32 %v7249
    %vm7256 = vmor %vm7254, %vm7255
    %v7257 = vsel %vm7256, %v7249, %v7253
    %v7258 = vand.u32 2147483647, %v7248
    %vm7259 = vcmp.eq.f32.partialorder %v7258, 8.507059e+37
    %v7260 = vand.u32 %v7248, 2147483648
    %v7261 = vor.u32 1.1754944e-38, %v7260
    %v7262 = vsel %vm7259, %v7261, %v7257
    %v7263 = vmul.f32 %v7238, %v7262
    %v7264 = vmin.f32 %v7263, 1.0
    %v7265 = vmax.f32 %v7264, -1.0
    %v7266 = vmul.f32 %v3121, %v3121
    %v7267 = vmin.f32 16.0, %v7266
    %v7268 = vmul.f32 %v7267, 2.1237322e-06
    %v7269 = vadd.f32 %v7268, 0.00028619796
    %v7270 = vmul.f32 %v7267, %v7269
    %v7271 = vadd.f32 %v7270, 0.0036580483
    %v7272 = vmul.f32 %v7267, %v7271
    %v7273 = vadd.f32 %v7272, 0.05243302
    %v7274 = vmul.f32 %v7267, %v7273
    %v7275 = vadd.f32 %v7274, 0.18741608
    %v7276 = vmul.f32 %v7267, %v7275
    %v7277 = vadd.f32 %v7276, 1.1283791
    %v7278 = vmul.f32 %v3121, %v7277
    %v7279 = vmul.f32 %v7267, 3.8918573e-05
    %v7280 = vadd.f32 %v7279, 0.001143296
    %v7281 = vmul.f32 %v7267, %v7280
    %v7282 = vadd.f32 %v7281, 0.014752088
    %v7283 = vmul.f32 %v7267, %v7282
    %v7284 = vadd.f32 %v7283, 0.112945676
    %v7285 = vmul.f32 %v7267, %v7284
    %v7286 = vadd.f32 %v7285, 0.4994258
    %v7287 = vmul.f32 %v7267, %v7286
    %v7288 = vadd.f32 %v7287, 1.0
    %v7289 = vrcp.pop %v7288
    %v7290 = vmul.f32 %v7288, %v7289
    %v7291 = vsub.f32 1.0, %v7290
    %v7292 = vmul.f32 %v7289, %v7291
    %v7293 = vadd.f32 %v7289, %v7292
    %vm7294 = vweird.f32 %v7288
    %vm7295 = vweird.f32 %v7289
    %vm7296 = vmor %vm7294, %vm7295
    %v7297 = vsel %vm7296, %v7289, %v7293
    %v7298 = vand.u32 2147483647, %v7288
    %vm7299 = vcmp.eq.f32.partialorder %v7298, 8.507059e+37
    %v7300 = vand.u32 %v7288, 2147483648
    %v7301 = vor.u32 1.1754944e-38, %v7300
    %v7302 = vsel %vm7299, %v7301, %v7297
    %v7303 = vmul.f32 %v7278, %v7302
    %v7304 = vmin.f32 %v7303, 1.0
    %v7305 = vmax.f32 %v7304, -1.0
    %v7306 = vmul.f32 %v3122, %v3122
    %v7307 = vmin.f32 16.0, %v7306
    %v7308 = vmul.f32 %v7307, 2.1237322e-06
    %v7309 = vadd.f32 %v7308, 0.00028619796
    %v7310 = vmul.f32 %v7307, %v7309
    %v7311 = vadd.f32 %v7310, 0.0036580483
    %v7312 = vmul.f32 %v7307, %v7311
    %v7313 = vadd.f32 %v7312, 0.05243302
    %v7314 = vmul.f32 %v7307, %v7313
    %v7315 = vadd.f32 %v7314, 0.18741608
    %v7316 = vmul.f32 %v7307, %v7315
    %v7317 = vadd.f32 %v7316, 1.1283791
    %v7318 = vmul.f32 %v3122, %v7317
    %v7319 = vmul.f32 %v7307, 3.8918573e-05
    %v7320 = vadd.f32 %v7319, 0.001143296
    %v7321 = vmul.f32 %v7307, %v7320
    %v7322 = vadd.f32 %v7321, 0.014752088
    %v7323 = vmul.f32 %v7307, %v7322
    %v7324 = vadd.f32 %v7323, 0.112945676
    %v7325 = vmul.f32 %v7307, %v7324
    %v7326 = vadd.f32 %v7325, 0.4994258
    %v7327 = vmul.f32 %v7307, %v7326
    %v7328 = vadd.f32 %v7327, 1.0
    %v7329 = vrcp.pop %v7328
    %v7330 = vmul.f32 %v7328, %v7329
    %v7331 = vsub.f32 1.0, %v7330
    %v7332 = vmul.f32 %v7329, %v7331
    %v7333 = vadd.f32 %v7329, %v7332
    %vm7334 = vweird.f32 %v7328
    %vm7335 = vweird.f32 %v7329
    %vm7336 = vmor %vm7334, %vm7335
    %v7337 = vsel %vm7336, %v7329, %v7333
    %v7338 = vand.u32 2147483647, %v7328
    %vm7339 = vcmp.eq.f32.partialorder %v7338, 8.507059e+37
    %v7340 = vand.u32 %v7328, 2147483648
    %v7341 = vor.u32 1.1754944e-38, %v7340
    %v7342 = vsel %vm7339, %v7341, %v7337
    %v7343 = vmul.f32 %v7318, %v7342
    %v7344 = vmin.f32 %v7343, 1.0
    %v7345 = vmax.f32 %v7344, -1.0
    %v7346 = vmul.f32 %v3123, %v3123
    %v7347 = vmin.f32 16.0, %v7346
    %v7348 = vmul.f32 %v7347, 2.1237322e-06
    %v7349 = vadd.f32 %v7348, 0.00028619796
    %v7350 = vmul.f32 %v7347, %v7349
    %v7351 = vadd.f32 %v7350, 0.0036580483
    %v7352 = vmul.f32 %v7347, %v7351
    %v7353 = vadd.f32 %v7352, 0.05243302
    %v7354 = vmul.f32 %v7347, %v7353
    %v7355 = vadd.f32 %v7354, 0.18741608
    %v7356 = vmul.f32 %v7347, %v7355
    %v7357 = vadd.f32 %v7356, 1.1283791
    %v7358 = vmul.f32 %v3123, %v7357
    %v7359 = vmul.f32 %v7347, 3.8918573e-05
    %v7360 = vadd.f32 %v7359, 0.001143296
    %v7361 = vmul.f32 %v7347, %v7360
    %v7362 = vadd.f32 %v7361, 0.014752088
    %v7363 = vmul.f32 %v7347, %v7362
    %v7364 = vadd.f32 %v7363, 0.112945676
    %v7365 = vmul.f32 %v7347, %v7364
    %v7366 = vadd.f32 %v7365, 0.4994258
    %v7367 = vmul.f32 %v7347, %v7366
    %v7368 = vadd.f32 %v7367, 1.0
    %v7369 = vrcp.pop %v7368
    %v7370 = vmul.f32 %v7368, %v7369
    %v7371 = vsub.f32 1.0, %v7370
    %v7372 = vmul.f32 %v7369, %v7371
    %v7373 = vadd.f32 %v7369, %v7372
    %vm7374 = vweird.f32 %v7368
    %vm7375 = vweird.f32 %v7369
    %vm7376 = vmor %vm7374, %vm7375
    %v7377 = vsel %vm7376, %v7369, %v7373
    %v7378 = vand.u32 2147483647, %v7368
    %vm7379 = vcmp.eq.f32.partialorder %v7378, 8.507059e+37
    %v7380 = vand.u32 %v7368, 2147483648
    %v7381 = vor.u32 1.1754944e-38, %v7380
    %v7382 = vsel %vm7379, %v7381, %v7377
    %v7383 = vmul.f32 %v7358, %v7382
    %v7384 = vmin.f32 %v7383, 1.0
    %v7385 = vmax.f32 %v7384, -1.0
    %v7386 = vmul.f32 %v3124, %v3124
    %v7387 = vmin.f32 16.0, %v7386
    %v7388 = vmul.f32 %v7387, 2.1237322e-06
    %v7389 = vadd.f32 %v7388, 0.00028619796
    %v7390 = vmul.f32 %v7387, %v7389
    %v7391 = vadd.f32 %v7390, 0.0036580483
    %v7392 = vmul.f32 %v7387, %v7391
    %v7393 = vadd.f32 %v7392, 0.05243302
    %v7394 = vmul.f32 %v7387, %v7393
    %v7395 = vadd.f32 %v7394, 0.18741608
    %v7396 = vmul.f32 %v7387, %v7395
    %v7397 = vadd.f32 %v7396, 1.1283791
    %v7398 = vmul.f32 %v3124, %v7397
    %v7399 = vmul.f32 %v7387, 3.8918573e-05
    %v7400 = vadd.f32 %v7399, 0.001143296
    %v7401 = vmul.f32 %v7387, %v7400
    %v7402 = vadd.f32 %v7401, 0.014752088
    %v7403 = vmul.f32 %v7387, %v7402
    %v7404 = vadd.f32 %v7403, 0.112945676
    %v7405 = vmul.f32 %v7387, %v7404
    %v7406 = vadd.f32 %v7405, 0.4994258
    %v7407 = vmul.f32 %v7387, %v7406
    %v7408 = vadd.f32 %v7407, 1.0
    %v7409 = vrcp.pop %v7408
    %v7410 = vmul.f32 %v7408, %v7409
    %v7411 = vsub.f32 1.0, %v7410
    %v7412 = vmul.f32 %v7409, %v7411
    %v7413 = vadd.f32 %v7409, %v7412
    %vm7414 = vweird.f32 %v7408
    %vm7415 = vweird.f32 %v7409
    %vm7416 = vmor %vm7414, %vm7415
    %v7417 = vsel %vm7416, %v7409, %v7413
    %v7418 = vand.u32 2147483647, %v7408
    %vm7419 = vcmp.eq.f32.partialorder %v7418, 8.507059e+37
    %v7420 = vand.u32 %v7408, 2147483648
    %v7421 = vor.u32 1.1754944e-38, %v7420
    %v7422 = vsel %vm7419, %v7421, %v7417
    %v7423 = vmul.f32 %v7398, %v7422
    %v7424 = vmin.f32 %v7423, 1.0
    %v7425 = vmax.f32 %v7424, -1.0
    %v7426 = vmul.f32 %v3125, %v3125
    %v7427 = vmin.f32 16.0, %v7426
    %v7428 = vmul.f32 %v7427, 2.1237322e-06
    %v7429 = vadd.f32 %v7428, 0.00028619796
    %v7430 = vmul.f32 %v7427, %v7429
    %v7431 = vadd.f32 %v7430, 0.0036580483
    %v7432 = vmul.f32 %v7427, %v7431
    %v7433 = vadd.f32 %v7432, 0.05243302
    %v7434 = vmul.f32 %v7427, %v7433
    %v7435 = vadd.f32 %v7434, 0.18741608
    %v7436 = vmul.f32 %v7427, %v7435
    %v7437 = vadd.f32 %v7436, 1.1283791
    %v7438 = vmul.f32 %v3125, %v7437
    %v7439 = vmul.f32 %v7427, 3.8918573e-05
    %v7440 = vadd.f32 %v7439, 0.001143296
    %v7441 = vmul.f32 %v7427, %v7440
    %v7442 = vadd.f32 %v7441, 0.014752088
    %v7443 = vmul.f32 %v7427, %v7442
    %v7444 = vadd.f32 %v7443, 0.112945676
    %v7445 = vmul.f32 %v7427, %v7444
    %v7446 = vadd.f32 %v7445, 0.4994258
    %v7447 = vmul.f32 %v7427, %v7446
    %v7448 = vadd.f32 %v7447, 1.0
    %v7449 = vrcp.pop %v7448
    %v7450 = vmul.f32 %v7448, %v7449
    %v7451 = vsub.f32 1.0, %v7450
    %v7452 = vmul.f32 %v7449, %v7451
    %v7453 = vadd.f32 %v7449, %v7452
    %vm7454 = vweird.f32 %v7448
    %vm7455 = vweird.f32 %v7449
    %vm7456 = vmor %vm7454, %vm7455
    %v7457 = vsel %vm7456, %v7449, %v7453
    %v7458 = vand.u32 2147483647, %v7448
    %vm7459 = vcmp.eq.f32.partialorder %v7458, 8.507059e+37
    %v7460 = vand.u32 %v7448, 2147483648
    %v7461 = vor.u32 1.1754944e-38, %v7460
    %v7462 = vsel %vm7459, %v7461, %v7457
    %v7463 = vmul.f32 %v7438, %v7462
    %v7464 = vmin.f32 %v7463, 1.0
    %v7465 = vmax.f32 %v7464, -1.0
    %v7466 = vmul.f32 %v3126, %v3126
    %v7467 = vmin.f32 16.0, %v7466
    %v7468 = vmul.f32 %v7467, 2.1237322e-06
    %v7469 = vadd.f32 %v7468, 0.00028619796
    %v7470 = vmul.f32 %v7467, %v7469
    %v7471 = vadd.f32 %v7470, 0.0036580483
    %v7472 = vmul.f32 %v7467, %v7471
    %v7473 = vadd.f32 %v7472, 0.05243302
    %v7474 = vmul.f32 %v7467, %v7473
    %v7475 = vadd.f32 %v7474, 0.18741608
    %v7476 = vmul.f32 %v7467, %v7475
    %v7477 = vadd.f32 %v7476, 1.1283791
    %v7478 = vmul.f32 %v3126, %v7477
    %v7479 = vmul.f32 %v7467, 3.8918573e-05
    %v7480 = vadd.f32 %v7479, 0.001143296
    %v7481 = vmul.f32 %v7467, %v7480
    %v7482 = vadd.f32 %v7481, 0.014752088
    %v7483 = vmul.f32 %v7467, %v7482
    %v7484 = vadd.f32 %v7483, 0.112945676
    %v7485 = vmul.f32 %v7467, %v7484
    %v7486 = vadd.f32 %v7485, 0.4994258
    %v7487 = vmul.f32 %v7467, %v7486
    %v7488 = vadd.f32 %v7487, 1.0
    %v7489 = vrcp.pop %v7488
    %v7490 = vmul.f32 %v7488, %v7489
    %v7491 = vsub.f32 1.0, %v7490
    %v7492 = vmul.f32 %v7489, %v7491
    %v7493 = vadd.f32 %v7489, %v7492
    %vm7494 = vweird.f32 %v7488
    %vm7495 = vweird.f32 %v7489
    %vm7496 = vmor %vm7494, %vm7495
    %v7497 = vsel %vm7496, %v7489, %v7493
    %v7498 = vand.u32 2147483647, %v7488
    %vm7499 = vcmp.eq.f32.partialorder %v7498, 8.507059e+37
    %v7500 = vand.u32 %v7488, 2147483648
    %v7501 = vor.u32 1.1754944e-38, %v7500
    %v7502 = vsel %vm7499, %v7501, %v7497
    %v7503 = vmul.f32 %v7478, %v7502
    %v7504 = vmin.f32 %v7503, 1.0
    %v7505 = vmax.f32 %v7504, -1.0
    %v7506 = vmul.f32 %v3127, %v3127
    %v7507 = vmin.f32 16.0, %v7506
    %v7508 = vmul.f32 %v7507, 2.1237322e-06
    %v7509 = vadd.f32 %v7508, 0.00028619796
    %v7510 = vmul.f32 %v7507, %v7509
    %v7511 = vadd.f32 %v7510, 0.0036580483
    %v7512 = vmul.f32 %v7507, %v7511
    %v7513 = vadd.f32 %v7512, 0.05243302
    %v7514 = vmul.f32 %v7507, %v7513
    %v7515 = vadd.f32 %v7514, 0.18741608
    %v7516 = vmul.f32 %v7507, %v7515
    %v7517 = vadd.f32 %v7516, 1.1283791
    %v7518 = vmul.f32 %v3127, %v7517
    %v7519 = vmul.f32 %v7507, 3.8918573e-05
    %v7520 = vadd.f32 %v7519, 0.001143296
    %v7521 = vmul.f32 %v7507, %v7520
    %v7522 = vadd.f32 %v7521, 0.014752088
    %v7523 = vmul.f32 %v7507, %v7522
    %v7524 = vadd.f32 %v7523, 0.112945676
    %v7525 = vmul.f32 %v7507, %v7524
    %v7526 = vadd.f32 %v7525, 0.4994258
    %v7527 = vmul.f32 %v7507, %v7526
    %v7528 = vadd.f32 %v7527, 1.0
    %v7529 = vrcp.pop %v7528
    %v7530 = vmul.f32 %v7528, %v7529
    %v7531 = vsub.f32 1.0, %v7530
    %v7532 = vmul.f32 %v7529, %v7531
    %v7533 = vadd.f32 %v7529, %v7532
    %vm7534 = vweird.f32 %v7528
    %vm7535 = vweird.f32 %v7529
    %vm7536 = vmor %vm7534, %vm7535
    %v7537 = vsel %vm7536, %v7529, %v7533
    %v7538 = vand.u32 2147483647, %v7528
    %vm7539 = vcmp.eq.f32.partialorder %v7538, 8.507059e+37
    %v7540 = vand.u32 %v7528, 2147483648
    %v7541 = vor.u32 1.1754944e-38, %v7540
    %v7542 = vsel %vm7539, %v7541, %v7537
    %v7543 = vmul.f32 %v7518, %v7542
    %v7544 = vmin.f32 %v7543, 1.0
    %v7545 = vmax.f32 %v7544, -1.0
    %v7546 = vmul.f32 %v3128, %v3128
    %v7547 = vmin.f32 16.0, %v7546
    %v7548 = vmul.f32 %v7547, 2.1237322e-06
    %v7549 = vadd.f32 %v7548, 0.00028619796
    %v7550 = vmul.f32 %v7547, %v7549
    %v7551 = vadd.f32 %v7550, 0.0036580483
    %v7552 = vmul.f32 %v7547, %v7551
    %v7553 = vadd.f32 %v7552, 0.05243302
    %v7554 = vmul.f32 %v7547, %v7553
    %v7555 = vadd.f32 %v7554, 0.18741608
    %v7556 = vmul.f32 %v7547, %v7555
    %v7557 = vadd.f32 %v7556, 1.1283791
    %v7558 = vmul.f32 %v3128, %v7557
    %v7559 = vmul.f32 %v7547, 3.8918573e-05
    %v7560 = vadd.f32 %v7559, 0.001143296
    %v7561 = vmul.f32 %v7547, %v7560
    %v7562 = vadd.f32 %v7561, 0.014752088
    %v7563 = vmul.f32 %v7547, %v7562
    %v7564 = vadd.f32 %v7563, 0.112945676
    %v7565 = vmul.f32 %v7547, %v7564
    %v7566 = vadd.f32 %v7565, 0.4994258
    %v7567 = vmul.f32 %v7547, %v7566
    %v7568 = vadd.f32 %v7567, 1.0
    %v7569 = vrcp.pop %v7568
    %v7570 = vmul.f32 %v7568, %v7569
    %v7571 = vsub.f32 1.0, %v7570
    %v7572 = vmul.f32 %v7569, %v7571
    %v7573 = vadd.f32 %v7569, %v7572
    %vm7574 = vweird.f32 %v7568
    %vm7575 = vweird.f32 %v7569
    %vm7576 = vmor %vm7574, %vm7575
    %v7577 = vsel %vm7576, %v7569, %v7573
    %v7578 = vand.u32 2147483647, %v7568
    %vm7579 = vcmp.eq.f32.partialorder %v7578, 8.507059e+37
    %v7580 = vand.u32 %v7568, 2147483648
    %v7581 = vor.u32 1.1754944e-38, %v7580
    %v7582 = vsel %vm7579, %v7581, %v7577
    %v7583 = vmul.f32 %v7558, %v7582
    %v7584 = vmin.f32 %v7583, 1.0
    %v7585 = vmax.f32 %v7584, -1.0
    %v7586 = vmul.f32 %v3129, %v3129
    %v7587 = vmin.f32 16.0, %v7586
    %v7588 = vmul.f32 %v7587, 2.1237322e-06
    %v7589 = vadd.f32 %v7588, 0.00028619796
    %v7590 = vmul.f32 %v7587, %v7589
    %v7591 = vadd.f32 %v7590, 0.0036580483
    %v7592 = vmul.f32 %v7587, %v7591
    %v7593 = vadd.f32 %v7592, 0.05243302
    %v7594 = vmul.f32 %v7587, %v7593
    %v7595 = vadd.f32 %v7594, 0.18741608
    %v7596 = vmul.f32 %v7587, %v7595
    %v7597 = vadd.f32 %v7596, 1.1283791
    %v7598 = vmul.f32 %v3129, %v7597
    %v7599 = vmul.f32 %v7587, 3.8918573e-05
    %v7600 = vadd.f32 %v7599, 0.001143296
    %v7601 = vmul.f32 %v7587, %v7600
    %v7602 = vadd.f32 %v7601, 0.014752088
    %v7603 = vmul.f32 %v7587, %v7602
    %v7604 = vadd.f32 %v7603, 0.112945676
    %v7605 = vmul.f32 %v7587, %v7604
    %v7606 = vadd.f32 %v7605, 0.4994258
    %v7607 = vmul.f32 %v7587, %v7606
    %v7608 = vadd.f32 %v7607, 1.0
    %v7609 = vrcp.pop %v7608
    %v7610 = vmul.f32 %v7608, %v7609
    %v7611 = vsub.f32 1.0, %v7610
    %v7612 = vmul.f32 %v7609, %v7611
    %v7613 = vadd.f32 %v7609, %v7612
    %vm7614 = vweird.f32 %v7608
    %vm7615 = vweird.f32 %v7609
    %vm7616 = vmor %vm7614, %vm7615
    %v7617 = vsel %vm7616, %v7609, %v7613
    %v7618 = vand.u32 2147483647, %v7608
    %vm7619 = vcmp.eq.f32.partialorder %v7618, 8.507059e+37
    %v7620 = vand.u32 %v7608, 2147483648
    %v7621 = vor.u32 1.1754944e-38, %v7620
    %v7622 = vsel %vm7619, %v7621, %v7617
    %v7623 = vmul.f32 %v7598, %v7622
    %v7624 = vmin.f32 %v7623, 1.0
    %v7625 = vmax.f32 %v7624, -1.0
    %v7626 = vmul.f32 %v3130, %v3130
    %v7627 = vmin.f32 16.0, %v7626
    %v7628 = vmul.f32 %v7627, 2.1237322e-06
    %v7629 = vadd.f32 %v7628, 0.00028619796
    %v7630 = vmul.f32 %v7627, %v7629
    %v7631 = vadd.f32 %v7630, 0.0036580483
    %v7632 = vmul.f32 %v7627, %v7631
    %v7633 = vadd.f32 %v7632, 0.05243302
    %v7634 = vmul.f32 %v7627, %v7633
    %v7635 = vadd.f32 %v7634, 0.18741608
    %v7636 = vmul.f32 %v7627, %v7635
    %v7637 = vadd.f32 %v7636, 1.1283791
    %v7638 = vmul.f32 %v3130, %v7637
    %v7639 = vmul.f32 %v7627, 3.8918573e-05
    %v7640 = vadd.f32 %v7639, 0.001143296
    %v7641 = vmul.f32 %v7627, %v7640
    %v7642 = vadd.f32 %v7641, 0.014752088
    %v7643 = vmul.f32 %v7627, %v7642
    %v7644 = vadd.f32 %v7643, 0.112945676
    %v7645 = vmul.f32 %v7627, %v7644
    %v7646 = vadd.f32 %v7645, 0.4994258
    %v7647 = vmul.f32 %v7627, %v7646
    %v7648 = vadd.f32 %v7647, 1.0
    %v7649 = vrcp.pop %v7648
    %v7650 = vmul.f32 %v7648, %v7649
    %v7651 = vsub.f32 1.0, %v7650
    %v7652 = vmul.f32 %v7649, %v7651
    %v7653 = vadd.f32 %v7649, %v7652
    %vm7654 = vweird.f32 %v7648
    %vm7655 = vweird.f32 %v7649
    %vm7656 = vmor %vm7654, %vm7655
    %v7657 = vsel %vm7656, %v7649, %v7653
    %v7658 = vand.u32 2147483647, %v7648
    %vm7659 = vcmp.eq.f32.partialorder %v7658, 8.507059e+37
    %v7660 = vand.u32 %v7648, 2147483648
    %v7661 = vor.u32 1.1754944e-38, %v7660
    %v7662 = vsel %vm7659, %v7661, %v7657
    %v7663 = vmul.f32 %v7638, %v7662
    %v7664 = vmin.f32 %v7663, 1.0
    %v7665 = vmax.f32 %v7664, -1.0
    %v7666 = vmul.f32 %v3131, %v3131
    %v7667 = vmin.f32 16.0, %v7666
    %v7668 = vmul.f32 %v7667, 2.1237322e-06
    %v7669 = vadd.f32 %v7668, 0.00028619796
    %v7670 = vmul.f32 %v7667, %v7669
    %v7671 = vadd.f32 %v7670, 0.0036580483
    %v7672 = vmul.f32 %v7667, %v7671
    %v7673 = vadd.f32 %v7672, 0.05243302
    %v7674 = vmul.f32 %v7667, %v7673
    %v7675 = vadd.f32 %v7674, 0.18741608
    %v7676 = vmul.f32 %v7667, %v7675
    %v7677 = vadd.f32 %v7676, 1.1283791
    %v7678 = vmul.f32 %v3131, %v7677
    %v7679 = vmul.f32 %v7667, 3.8918573e-05
    %v7680 = vadd.f32 %v7679, 0.001143296
    %v7681 = vmul.f32 %v7667, %v7680
    %v7682 = vadd.f32 %v7681, 0.014752088
    %v7683 = vmul.f32 %v7667, %v7682
    %v7684 = vadd.f32 %v7683, 0.112945676
    %v7685 = vmul.f32 %v7667, %v7684
    %v7686 = vadd.f32 %v7685, 0.4994258
    %v7687 = vmul.f32 %v7667, %v7686
    %v7688 = vadd.f32 %v7687, 1.0
    %v7689 = vrcp.pop %v7688
    %v7690 = vmul.f32 %v7688, %v7689
    %v7691 = vsub.f32 1.0, %v7690
    %v7692 = vmul.f32 %v7689, %v7691
    %v7693 = vadd.f32 %v7689, %v7692
    %vm7694 = vweird.f32 %v7688
    %vm7695 = vweird.f32 %v7689
    %vm7696 = vmor %vm7694, %vm7695
    %v7697 = vsel %vm7696, %v7689, %v7693
    %v7698 = vand.u32 2147483647, %v7688
    %vm7699 = vcmp.eq.f32.partialorder %v7698, 8.507059e+37
    %v7700 = vand.u32 %v7688, 2147483648
    %v7701 = vor.u32 1.1754944e-38, %v7700
    %v7702 = vsel %vm7699, %v7701, %v7697
    %v7703 = vmul.f32 %v7678, %v7702
    %v7704 = vmin.f32 %v7703, 1.0
    %v7705 = vmax.f32 %v7704, -1.0
    %v7706 = vmul.f32 %v3132, %v3132
    %v7707 = vmin.f32 16.0, %v7706
    %v7708 = vmul.f32 %v7707, 2.1237322e-06
    %v7709 = vadd.f32 %v7708, 0.00028619796
    %v7710 = vmul.f32 %v7707, %v7709
    %v7711 = vadd.f32 %v7710, 0.0036580483
    %v7712 = vmul.f32 %v7707, %v7711
    %v7713 = vadd.f32 %v7712, 0.05243302
    %v7714 = vmul.f32 %v7707, %v7713
    %v7715 = vadd.f32 %v7714, 0.18741608
    %v7716 = vmul.f32 %v7707, %v7715
    %v7717 = vadd.f32 %v7716, 1.1283791
    %v7718 = vmul.f32 %v3132, %v7717
    %v7719 = vmul.f32 %v7707, 3.8918573e-05
    %v7720 = vadd.f32 %v7719, 0.001143296
    %v7721 = vmul.f32 %v7707, %v7720
    %v7722 = vadd.f32 %v7721, 0.014752088
    %v7723 = vmul.f32 %v7707, %v7722
    %v7724 = vadd.f32 %v7723, 0.112945676
    %v7725 = vmul.f32 %v7707, %v7724
    %v7726 = vadd.f32 %v7725, 0.4994258
    %v7727 = vmul.f32 %v7707, %v7726
    %v7728 = vadd.f32 %v7727, 1.0
    %v7729 = vrcp.pop %v7728
    %v7730 = vmul.f32 %v7728, %v7729
    %v7731 = vsub.f32 1.0, %v7730
    %v7732 = vmul.f32 %v7729, %v7731
    %v7733 = vadd.f32 %v7729, %v7732
    %vm7734 = vweird.f32 %v7728
    %vm7735 = vweird.f32 %v7729
    %vm7736 = vmor %vm7734, %vm7735
    %v7737 = vsel %vm7736, %v7729, %v7733
    %v7738 = vand.u32 2147483647, %v7728
    %vm7739 = vcmp.eq.f32.partialorder %v7738, 8.507059e+37
    %v7740 = vand.u32 %v7728, 2147483648
    %v7741 = vor.u32 1.1754944e-38, %v7740
    %v7742 = vsel %vm7739, %v7741, %v7737
    %v7743 = vmul.f32 %v7718, %v7742
    %v7744 = vmin.f32 %v7743, 1.0
    %v7745 = vmax.f32 %v7744, -1.0
    %v7746 = vmul.f32 %v3133, %v3133
    %v7747 = vmin.f32 16.0, %v7746
    %v7748 = vmul.f32 %v7747, 2.1237322e-06
    %v7749 = vadd.f32 %v7748, 0.00028619796
    %v7750 = vmul.f32 %v7747, %v7749
    %v7751 = vadd.f32 %v7750, 0.0036580483
    %v7752 = vmul.f32 %v7747, %v7751
    %v7753 = vadd.f32 %v7752, 0.05243302
    %v7754 = vmul.f32 %v7747, %v7753
    %v7755 = vadd.f32 %v7754, 0.18741608
    %v7756 = vmul.f32 %v7747, %v7755
    %v7757 = vadd.f32 %v7756, 1.1283791
    %v7758 = vmul.f32 %v3133, %v7757
    %v7759 = vmul.f32 %v7747, 3.8918573e-05
    %v7760 = vadd.f32 %v7759, 0.001143296
    %v7761 = vmul.f32 %v7747, %v7760
    %v7762 = vadd.f32 %v7761, 0.014752088
    %v7763 = vmul.f32 %v7747, %v7762
    %v7764 = vadd.f32 %v7763, 0.112945676
    %v7765 = vmul.f32 %v7747, %v7764
    %v7766 = vadd.f32 %v7765, 0.4994258
    %v7767 = vmul.f32 %v7747, %v7766
    %v7768 = vadd.f32 %v7767, 1.0
    %v7769 = vrcp.pop %v7768
    %v7770 = vmul.f32 %v7768, %v7769
    %v7771 = vsub.f32 1.0, %v7770
    %v7772 = vmul.f32 %v7769, %v7771
    %v7773 = vadd.f32 %v7769, %v7772
    %vm7774 = vweird.f32 %v7768
    %vm7775 = vweird.f32 %v7769
    %vm7776 = vmor %vm7774, %vm7775
    %v7777 = vsel %vm7776, %v7769, %v7773
    %v7778 = vand.u32 2147483647, %v7768
    %vm7779 = vcmp.eq.f32.partialorder %v7778, 8.507059e+37
    %v7780 = vand.u32 %v7768, 2147483648
    %v7781 = vor.u32 1.1754944e-38, %v7780
    %v7782 = vsel %vm7779, %v7781, %v7777
    %v7783 = vmul.f32 %v7758, %v7782
    %v7784 = vmin.f32 %v7783, 1.0
    %v7785 = vmax.f32 %v7784, -1.0
    %v7786 = vmul.f32 %v3134, %v3134
    %v7787 = vmin.f32 16.0, %v7786
    %v7788 = vmul.f32 %v7787, 2.1237322e-06
    %v7789 = vadd.f32 %v7788, 0.00028619796
    %v7790 = vmul.f32 %v7787, %v7789
    %v7791 = vadd.f32 %v7790, 0.0036580483
    %v7792 = vmul.f32 %v7787, %v7791
    %v7793 = vadd.f32 %v7792, 0.05243302
    %v7794 = vmul.f32 %v7787, %v7793
    %v7795 = vadd.f32 %v7794, 0.18741608
    %v7796 = vmul.f32 %v7787, %v7795
    %v7797 = vadd.f32 %v7796, 1.1283791
    %v7798 = vmul.f32 %v3134, %v7797
    %v7799 = vmul.f32 %v7787, 3.8918573e-05
    %v7800 = vadd.f32 %v7799, 0.001143296
    %v7801 = vmul.f32 %v7787, %v7800
    %v7802 = vadd.f32 %v7801, 0.014752088
    %v7803 = vmul.f32 %v7787, %v7802
    %v7804 = vadd.f32 %v7803, 0.112945676
    %v7805 = vmul.f32 %v7787, %v7804
    %v7806 = vadd.f32 %v7805, 0.4994258
    %v7807 = vmul.f32 %v7787, %v7806
    %v7808 = vadd.f32 %v7807, 1.0
    %v7809 = vrcp.pop %v7808
    %v7810 = vmul.f32 %v7808, %v7809
    %v7811 = vsub.f32 1.0, %v7810
    %v7812 = vmul.f32 %v7809, %v7811
    %v7813 = vadd.f32 %v7809, %v7812
    %vm7814 = vweird.f32 %v7808
    %vm7815 = vweird.f32 %v7809
    %vm7816 = vmor %vm7814, %vm7815
    %v7817 = vsel %vm7816, %v7809, %v7813
    %v7818 = vand.u32 2147483647, %v7808
    %vm7819 = vcmp.eq.f32.partialorder %v7818, 8.507059e+37
    %v7820 = vand.u32 %v7808, 2147483648
    %v7821 = vor.u32 1.1754944e-38, %v7820
    %v7822 = vsel %vm7819, %v7821, %v7817
    %v7823 = vmul.f32 %v7798, %v7822
    %v7824 = vmin.f32 %v7823, 1.0
    %v7825 = vmax.f32 %v7824, -1.0
    %v7826 = vmul.f32 %v3135, %v3135
    %v7827 = vmin.f32 16.0, %v7826
    %v7828 = vmul.f32 %v7827, 2.1237322e-06
    %v7829 = vadd.f32 %v7828, 0.00028619796
    %v7830 = vmul.f32 %v7827, %v7829
    %v7831 = vadd.f32 %v7830, 0.0036580483
    %v7832 = vmul.f32 %v7827, %v7831
    %v7833 = vadd.f32 %v7832, 0.05243302
    %v7834 = vmul.f32 %v7827, %v7833
    %v7835 = vadd.f32 %v7834, 0.18741608
    %v7836 = vmul.f32 %v7827, %v7835
    %v7837 = vadd.f32 %v7836, 1.1283791
    %v7838 = vmul.f32 %v3135, %v7837
    %v7839 = vmul.f32 %v7827, 3.8918573e-05
    %v7840 = vadd.f32 %v7839, 0.001143296
    %v7841 = vmul.f32 %v7827, %v7840
    %v7842 = vadd.f32 %v7841, 0.014752088
    %v7843 = vmul.f32 %v7827, %v7842
    %v7844 = vadd.f32 %v7843, 0.112945676
    %v7845 = vmul.f32 %v7827, %v7844
    %v7846 = vadd.f32 %v7845, 0.4994258
    %v7847 = vmul.f32 %v7827, %v7846
    %v7848 = vadd.f32 %v7847, 1.0
    %v7849 = vrcp.pop %v7848
    %v7850 = vmul.f32 %v7848, %v7849
    %v7851 = vsub.f32 1.0, %v7850
    %v7852 = vmul.f32 %v7849, %v7851
    %v7853 = vadd.f32 %v7849, %v7852
    %vm7854 = vweird.f32 %v7848
    %vm7855 = vweird.f32 %v7849
    %vm7856 = vmor %vm7854, %vm7855
    %v7857 = vsel %vm7856, %v7849, %v7853
    %v7858 = vand.u32 2147483647, %v7848
    %vm7859 = vcmp.eq.f32.partialorder %v7858, 8.507059e+37
    %v7860 = vand.u32 %v7848, 2147483648
    %v7861 = vor.u32 1.1754944e-38, %v7860
    %v7862 = vsel %vm7859, %v7861, %v7857
    %v7863 = vmul.f32 %v7838, %v7862
    %v7864 = vmin.f32 %v7863, 1.0
    %v7865 = vmax.f32 %v7864, -1.0
    %v7866 = vmul.f32 %v3136, %v3136
    %v7867 = vmin.f32 16.0, %v7866
    %v7868 = vmul.f32 %v7867, 2.1237322e-06
    %v7869 = vadd.f32 %v7868, 0.00028619796
    %v7870 = vmul.f32 %v7867, %v7869
    %v7871 = vadd.f32 %v7870, 0.0036580483
    %v7872 = vmul.f32 %v7867, %v7871
    %v7873 = vadd.f32 %v7872, 0.05243302
    %v7874 = vmul.f32 %v7867, %v7873
    %v7875 = vadd.f32 %v7874, 0.18741608
    %v7876 = vmul.f32 %v7867, %v7875
    %v7877 = vadd.f32 %v7876, 1.1283791
    %v7878 = vmul.f32 %v3136, %v7877
    %v7879 = vmul.f32 %v7867, 3.8918573e-05
    %v7880 = vadd.f32 %v7879, 0.001143296
    %v7881 = vmul.f32 %v7867, %v7880
    %v7882 = vadd.f32 %v7881, 0.014752088
    %v7883 = vmul.f32 %v7867, %v7882
    %v7884 = vadd.f32 %v7883, 0.112945676
    %v7885 = vmul.f32 %v7867, %v7884
    %v7886 = vadd.f32 %v7885, 0.4994258
    %v7887 = vmul.f32 %v7867, %v7886
    %v7888 = vadd.f32 %v7887, 1.0
    %v7889 = vrcp.pop %v7888
    %v7890 = vmul.f32 %v7888, %v7889
    %v7891 = vsub.f32 1.0, %v7890
    %v7892 = vmul.f32 %v7889, %v7891
    %v7893 = vadd.f32 %v7889, %v7892
    %vm7894 = vweird.f32 %v7888
    %vm7895 = vweird.f32 %v7889
    %vm7896 = vmor %vm7894, %vm7895
    %v7897 = vsel %vm7896, %v7889, %v7893
    %v7898 = vand.u32 2147483647, %v7888
    %vm7899 = vcmp.eq.f32.partialorder %v7898, 8.507059e+37
    %v7900 = vand.u32 %v7888, 2147483648
    %v7901 = vor.u32 1.1754944e-38, %v7900
    %v7902 = vsel %vm7899, %v7901, %v7897
    %v7903 = vmul.f32 %v7878, %v7902
    %v7904 = vmin.f32 %v7903, 1.0
    %v7905 = vmax.f32 %v7904, -1.0
    %v7906 = vmul.f32 %v3137, %v3137
    %v7907 = vmin.f32 16.0, %v7906
    %v7908 = vmul.f32 %v7907, 2.1237322e-06
    %v7909 = vadd.f32 %v7908, 0.00028619796
    %v7910 = vmul.f32 %v7907, %v7909
    %v7911 = vadd.f32 %v7910, 0.0036580483
    %v7912 = vmul.f32 %v7907, %v7911
    %v7913 = vadd.f32 %v7912, 0.05243302
    %v7914 = vmul.f32 %v7907, %v7913
    %v7915 = vadd.f32 %v7914, 0.18741608
    %v7916 = vmul.f32 %v7907, %v7915
    %v7917 = vadd.f32 %v7916, 1.1283791
    %v7918 = vmul.f32 %v3137, %v7917
    %v7919 = vmul.f32 %v7907, 3.8918573e-05
    %v7920 = vadd.f32 %v7919, 0.001143296
    %v7921 = vmul.f32 %v7907, %v7920
    %v7922 = vadd.f32 %v7921, 0.014752088
    %v7923 = vmul.f32 %v7907, %v7922
    %v7924 = vadd.f32 %v7923, 0.112945676
    %v7925 = vmul.f32 %v7907, %v7924
    %v7926 = vadd.f32 %v7925, 0.4994258
    %v7927 = vmul.f32 %v7907, %v7926
    %v7928 = vadd.f32 %v7927, 1.0
    %v7929 = vrcp.pop %v7928
    %v7930 = vmul.f32 %v7928, %v7929
    %v7931 = vsub.f32 1.0, %v7930
    %v7932 = vmul.f32 %v7929, %v7931
    %v7933 = vadd.f32 %v7929, %v7932
    %vm7934 = vweird.f32 %v7928
    %vm7935 = vweird.f32 %v7929
    %vm7936 = vmor %vm7934, %vm7935
    %v7937 = vsel %vm7936, %v7929, %v7933
    %v7938 = vand.u32 2147483647, %v7928
    %vm7939 = vcmp.eq.f32.partialorder %v7938, 8.507059e+37
    %v7940 = vand.u32 %v7928, 2147483648
    %v7941 = vor.u32 1.1754944e-38, %v7940
    %v7942 = vsel %vm7939, %v7941, %v7937
    %v7943 = vmul.f32 %v7918, %v7942
    %v7944 = vmin.f32 %v7943, 1.0
    %v7945 = vmax.f32 %v7944, -1.0
    %v7946 = vmul.f32 %v3138, %v3138
    %v7947 = vmin.f32 16.0, %v7946
    %v7948 = vmul.f32 %v7947, 2.1237322e-06
    %v7949 = vadd.f32 %v7948, 0.00028619796
    %v7950 = vmul.f32 %v7947, %v7949
    %v7951 = vadd.f32 %v7950, 0.0036580483
    %v7952 = vmul.f32 %v7947, %v7951
    %v7953 = vadd.f32 %v7952, 0.05243302
    %v7954 = vmul.f32 %v7947, %v7953
    %v7955 = vadd.f32 %v7954, 0.18741608
    %v7956 = vmul.f32 %v7947, %v7955
    %v7957 = vadd.f32 %v7956, 1.1283791
    %v7958 = vmul.f32 %v3138, %v7957
    %v7959 = vmul.f32 %v7947, 3.8918573e-05
    %v7960 = vadd.f32 %v7959, 0.001143296
    %v7961 = vmul.f32 %v7947, %v7960
    %v7962 = vadd.f32 %v7961, 0.014752088
    %v7963 = vmul.f32 %v7947, %v7962
    %v7964 = vadd.f32 %v7963, 0.112945676
    %v7965 = vmul.f32 %v7947, %v7964
    %v7966 = vadd.f32 %v7965, 0.4994258
    %v7967 = vmul.f32 %v7947, %v7966
    %v7968 = vadd.f32 %v7967, 1.0
    %v7969 = vrcp.pop %v7968
    %v7970 = vmul.f32 %v7968, %v7969
    %v7971 = vsub.f32 1.0, %v7970
    %v7972 = vmul.f32 %v7969, %v7971
    %v7973 = vadd.f32 %v7969, %v7972
    %vm7974 = vweird.f32 %v7968
    %vm7975 = vweird.f32 %v7969
    %vm7976 = vmor %vm7974, %vm7975
    %v7977 = vsel %vm7976, %v7969, %v7973
    %v7978 = vand.u32 2147483647, %v7968
    %vm7979 = vcmp.eq.f32.partialorder %v7978, 8.507059e+37
    %v7980 = vand.u32 %v7968, 2147483648
    %v7981 = vor.u32 1.1754944e-38, %v7980
    %v7982 = vsel %vm7979, %v7981, %v7977
    %v7983 = vmul.f32 %v7958, %v7982
    %v7984 = vmin.f32 %v7983, 1.0
    %v7985 = vmax.f32 %v7984, -1.0
    %v7986 = vmul.f32 %v3139, %v3139
    %v7987 = vmin.f32 16.0, %v7986
    %v7988 = vmul.f32 %v7987, 2.1237322e-06
    %v7989 = vadd.f32 %v7988, 0.00028619796
    %v7990 = vmul.f32 %v7987, %v7989
    %v7991 = vadd.f32 %v7990, 0.0036580483
    %v7992 = vmul.f32 %v7987, %v7991
    %v7993 = vadd.f32 %v7992, 0.05243302
    %v7994 = vmul.f32 %v7987, %v7993
    %v7995 = vadd.f32 %v7994, 0.18741608
    %v7996 = vmul.f32 %v7987, %v7995
    %v7997 = vadd.f32 %v7996, 1.1283791
    %v7998 = vmul.f32 %v3139, %v7997
    %v7999 = vmul.f32 %v7987, 3.8918573e-05
    %v8000 = vadd.f32 %v7999, 0.001143296
    %v8001 = vmul.f32 %v7987, %v8000
    %v8002 = vadd.f32 %v8001, 0.014752088
    %v8003 = vmul.f32 %v7987, %v8002
    %v8004 = vadd.f32 %v8003, 0.112945676
    %v8005 = vmul.f32 %v7987, %v8004
    %v8006 = vadd.f32 %v8005, 0.4994258
    %v8007 = vmul.f32 %v7987, %v8006
    %v8008 = vadd.f32 %v8007, 1.0
    %v8009 = vrcp.pop %v8008
    %v8010 = vmul.f32 %v8008, %v8009
    %v8011 = vsub.f32 1.0, %v8010
    %v8012 = vmul.f32 %v8009, %v8011
    %v8013 = vadd.f32 %v8009, %v8012
    %vm8014 = vweird.f32 %v8008
    %vm8015 = vweird.f32 %v8009
    %vm8016 = vmor %vm8014, %vm8015
    %v8017 = vsel %vm8016, %v8009, %v8013
    %v8018 = vand.u32 2147483647, %v8008
    %vm8019 = vcmp.eq.f32.partialorder %v8018, 8.507059e+37
    %v8020 = vand.u32 %v8008, 2147483648
    %v8021 = vor.u32 1.1754944e-38, %v8020
    %v8022 = vsel %vm8019, %v8021, %v8017
    %v8023 = vmul.f32 %v7998, %v8022
    %v8024 = vmin.f32 %v8023, 1.0
    %v8025 = vmax.f32 %v8024, -1.0
    %v8026 = vmul.f32 %v3140, %v3140
    %v8027 = vmin.f32 16.0, %v8026
    %v8028 = vmul.f32 %v8027, 2.1237322e-06
    %v8029 = vadd.f32 %v8028, 0.00028619796
    %v8030 = vmul.f32 %v8027, %v8029
    %v8031 = vadd.f32 %v8030, 0.0036580483
    %v8032 = vmul.f32 %v8027, %v8031
    %v8033 = vadd.f32 %v8032, 0.05243302
    %v8034 = vmul.f32 %v8027, %v8033
    %v8035 = vadd.f32 %v8034, 0.18741608
    %v8036 = vmul.f32 %v8027, %v8035
    %v8037 = vadd.f32 %v8036, 1.1283791
    %v8038 = vmul.f32 %v3140, %v8037
    %v8039 = vmul.f32 %v8027, 3.8918573e-05
    %v8040 = vadd.f32 %v8039, 0.001143296
    %v8041 = vmul.f32 %v8027, %v8040
    %v8042 = vadd.f32 %v8041, 0.014752088
    %v8043 = vmul.f32 %v8027, %v8042
    %v8044 = vadd.f32 %v8043, 0.112945676
    %v8045 = vmul.f32 %v8027, %v8044
    %v8046 = vadd.f32 %v8045, 0.4994258
    %v8047 = vmul.f32 %v8027, %v8046
    %v8048 = vadd.f32 %v8047, 1.0
    %v8049 = vrcp.pop %v8048
    %v8050 = vmul.f32 %v8048, %v8049
    %v8051 = vsub.f32 1.0, %v8050
    %v8052 = vmul.f32 %v8049, %v8051
    %v8053 = vadd.f32 %v8049, %v8052
    %vm8054 = vweird.f32 %v8048
    %vm8055 = vweird.f32 %v8049
    %vm8056 = vmor %vm8054, %vm8055
    %v8057 = vsel %vm8056, %v8049, %v8053
    %v8058 = vand.u32 2147483647, %v8048
    %vm8059 = vcmp.eq.f32.partialorder %v8058, 8.507059e+37
    %v8060 = vand.u32 %v8048, 2147483648
    %v8061 = vor.u32 1.1754944e-38, %v8060
    %v8062 = vsel %vm8059, %v8061, %v8057
    %v8063 = vmul.f32 %v8038, %v8062
    %v8064 = vmin.f32 %v8063, 1.0
    %v8065 = vmax.f32 %v8064, -1.0
    %v8066 = vmul.f32 %v3141, %v3141
    %v8067 = vmin.f32 16.0, %v8066
    %v8068 = vmul.f32 %v8067, 2.1237322e-06
    %v8069 = vadd.f32 %v8068, 0.00028619796
    %v8070 = vmul.f32 %v8067, %v8069
    %v8071 = vadd.f32 %v8070, 0.0036580483
    %v8072 = vmul.f32 %v8067, %v8071
    %v8073 = vadd.f32 %v8072, 0.05243302
    %v8074 = vmul.f32 %v8067, %v8073
    %v8075 = vadd.f32 %v8074, 0.18741608
    %v8076 = vmul.f32 %v8067, %v8075
    %v8077 = vadd.f32 %v8076, 1.1283791
    %v8078 = vmul.f32 %v3141, %v8077
    %v8079 = vmul.f32 %v8067, 3.8918573e-05
    %v8080 = vadd.f32 %v8079, 0.001143296
    %v8081 = vmul.f32 %v8067, %v8080
    %v8082 = vadd.f32 %v8081, 0.014752088
    %v8083 = vmul.f32 %v8067, %v8082
    %v8084 = vadd.f32 %v8083, 0.112945676
    %v8085 = vmul.f32 %v8067, %v8084
    %v8086 = vadd.f32 %v8085, 0.4994258
    %v8087 = vmul.f32 %v8067, %v8086
    %v8088 = vadd.f32 %v8087, 1.0
    %v8089 = vrcp.pop %v8088
    %v8090 = vmul.f32 %v8088, %v8089
    %v8091 = vsub.f32 1.0, %v8090
    %v8092 = vmul.f32 %v8089, %v8091
    %v8093 = vadd.f32 %v8089, %v8092
    %vm8094 = vweird.f32 %v8088
    %vm8095 = vweird.f32 %v8089
    %vm8096 = vmor %vm8094, %vm8095
    %v8097 = vsel %vm8096, %v8089, %v8093
    %v8098 = vand.u32 2147483647, %v8088
    %vm8099 = vcmp.eq.f32.partialorder %v8098, 8.507059e+37
    %v8100 = vand.u32 %v8088, 2147483648
    %v8101 = vor.u32 1.1754944e-38, %v8100
    %v8102 = vsel %vm8099, %v8101, %v8097
    %v8103 = vmul.f32 %v8078, %v8102
    %v8104 = vmin.f32 %v8103, 1.0
    %v8105 = vmax.f32 %v8104, -1.0
    %v8106 = vmul.f32 %v3142, %v3142
    %v8107 = vmin.f32 16.0, %v8106
    %v8108 = vmul.f32 %v8107, 2.1237322e-06
    %v8109 = vadd.f32 %v8108, 0.00028619796
    %v8110 = vmul.f32 %v8107, %v8109
    %v8111 = vadd.f32 %v8110, 0.0036580483
    %v8112 = vmul.f32 %v8107, %v8111
    %v8113 = vadd.f32 %v8112, 0.05243302
    %v8114 = vmul.f32 %v8107, %v8113
    %v8115 = vadd.f32 %v8114, 0.18741608
    %v8116 = vmul.f32 %v8107, %v8115
    %v8117 = vadd.f32 %v8116, 1.1283791
    %v8118 = vmul.f32 %v3142, %v8117
    %v8119 = vmul.f32 %v8107, 3.8918573e-05
    %v8120 = vadd.f32 %v8119, 0.001143296
    %v8121 = vmul.f32 %v8107, %v8120
    %v8122 = vadd.f32 %v8121, 0.014752088
    %v8123 = vmul.f32 %v8107, %v8122
    %v8124 = vadd.f32 %v8123, 0.112945676
    %v8125 = vmul.f32 %v8107, %v8124
    %v8126 = vadd.f32 %v8125, 0.4994258
    %v8127 = vmul.f32 %v8107, %v8126
    %v8128 = vadd.f32 %v8127, 1.0
    %v8129 = vrcp.pop %v8128
    %v8130 = vmul.f32 %v8128, %v8129
    %v8131 = vsub.f32 1.0, %v8130
    %v8132 = vmul.f32 %v8129, %v8131
    %v8133 = vadd.f32 %v8129, %v8132
    %vm8134 = vweird.f32 %v8128
    %vm8135 = vweird.f32 %v8129
    %vm8136 = vmor %vm8134, %vm8135
    %v8137 = vsel %vm8136, %v8129, %v8133
    %v8138 = vand.u32 2147483647, %v8128
    %vm8139 = vcmp.eq.f32.partialorder %v8138, 8.507059e+37
    %v8140 = vand.u32 %v8128, 2147483648
    %v8141 = vor.u32 1.1754944e-38, %v8140
    %v8142 = vsel %vm8139, %v8141, %v8137
    %v8143 = vmul.f32 %v8118, %v8142
    %v8144 = vmin.f32 %v8143, 1.0
    %v8145 = vmax.f32 %v8144, -1.0
    %v8146 = vmul.f32 %v3143, %v3143
    %v8147 = vmin.f32 16.0, %v8146
    %v8148 = vmul.f32 %v8147, 2.1237322e-06
    %v8149 = vadd.f32 %v8148, 0.00028619796
    %v8150 = vmul.f32 %v8147, %v8149
    %v8151 = vadd.f32 %v8150, 0.0036580483
    %v8152 = vmul.f32 %v8147, %v8151
    %v8153 = vadd.f32 %v8152, 0.05243302
    %v8154 = vmul.f32 %v8147, %v8153
    %v8155 = vadd.f32 %v8154, 0.18741608
    %v8156 = vmul.f32 %v8147, %v8155
    %v8157 = vadd.f32 %v8156, 1.1283791
    %v8158 = vmul.f32 %v3143, %v8157
    %v8159 = vmul.f32 %v8147, 3.8918573e-05
    %v8160 = vadd.f32 %v8159, 0.001143296
    %v8161 = vmul.f32 %v8147, %v8160
    %v8162 = vadd.f32 %v8161, 0.014752088
    %v8163 = vmul.f32 %v8147, %v8162
    %v8164 = vadd.f32 %v8163, 0.112945676
    %v8165 = vmul.f32 %v8147, %v8164
    %v8166 = vadd.f32 %v8165, 0.4994258
    %v8167 = vmul.f32 %v8147, %v8166
    %v8168 = vadd.f32 %v8167, 1.0
    %v8169 = vrcp.pop %v8168
    %v8170 = vmul.f32 %v8168, %v8169
    %v8171 = vsub.f32 1.0, %v8170
    %v8172 = vmul.f32 %v8169, %v8171
    %v8173 = vadd.f32 %v8169, %v8172
    %vm8174 = vweird.f32 %v8168
    %vm8175 = vweird.f32 %v8169
    %vm8176 = vmor %vm8174, %vm8175
    %v8177 = vsel %vm8176, %v8169, %v8173
    %v8178 = vand.u32 2147483647, %v8168
    %vm8179 = vcmp.eq.f32.partialorder %v8178, 8.507059e+37
    %v8180 = vand.u32 %v8168, 2147483648
    %v8181 = vor.u32 1.1754944e-38, %v8180
    %v8182 = vsel %vm8179, %v8181, %v8177
    %v8183 = vmul.f32 %v8158, %v8182
    %v8184 = vmin.f32 %v8183, 1.0
    %v8185 = vmax.f32 %v8184, -1.0
    %v8186 = vmul.f32 %v3144, %v3144
    %v8187 = vmin.f32 16.0, %v8186
    %v8188 = vmul.f32 %v8187, 2.1237322e-06
    %v8189 = vadd.f32 %v8188, 0.00028619796
    %v8190 = vmul.f32 %v8187, %v8189
    %v8191 = vadd.f32 %v8190, 0.0036580483
    %v8192 = vmul.f32 %v8187, %v8191
    %v8193 = vadd.f32 %v8192, 0.05243302
    %v8194 = vmul.f32 %v8187, %v8193
    %v8195 = vadd.f32 %v8194, 0.18741608
    %v8196 = vmul.f32 %v8187, %v8195
    %v8197 = vadd.f32 %v8196, 1.1283791
    %v8198 = vmul.f32 %v3144, %v8197
    %v8199 = vmul.f32 %v8187, 3.8918573e-05
    %v8200 = vadd.f32 %v8199, 0.001143296
    %v8201 = vmul.f32 %v8187, %v8200
    %v8202 = vadd.f32 %v8201, 0.014752088
    %v8203 = vmul.f32 %v8187, %v8202
    %v8204 = vadd.f32 %v8203, 0.112945676
    %v8205 = vmul.f32 %v8187, %v8204
    %v8206 = vadd.f32 %v8205, 0.4994258
    %v8207 = vmul.f32 %v8187, %v8206
    %v8208 = vadd.f32 %v8207, 1.0
    %v8209 = vrcp.pop %v8208
    %v8210 = vmul.f32 %v8208, %v8209
    %v8211 = vsub.f32 1.0, %v8210
    %v8212 = vmul.f32 %v8209, %v8211
    %v8213 = vadd.f32 %v8209, %v8212
    %vm8214 = vweird.f32 %v8208
    %vm8215 = vweird.f32 %v8209
    %vm8216 = vmor %vm8214, %vm8215
    %v8217 = vsel %vm8216, %v8209, %v8213
    %v8218 = vand.u32 2147483647, %v8208
    %vm8219 = vcmp.eq.f32.partialorder %v8218, 8.507059e+37
    %v8220 = vand.u32 %v8208, 2147483648
    %v8221 = vor.u32 1.1754944e-38, %v8220
    %v8222 = vsel %vm8219, %v8221, %v8217
    %v8223 = vmul.f32 %v8198, %v8222
    %v8224 = vmin.f32 %v8223, 1.0
    %v8225 = vmax.f32 %v8224, -1.0
    %v8226 = vmul.f32 %v3145, %v3145
    %v8227 = vmin.f32 16.0, %v8226
    %v8228 = vmul.f32 %v8227, 2.1237322e-06
    %v8229 = vadd.f32 %v8228, 0.00028619796
    %v8230 = vmul.f32 %v8227, %v8229
    %v8231 = vadd.f32 %v8230, 0.0036580483
    %v8232 = vmul.f32 %v8227, %v8231
    %v8233 = vadd.f32 %v8232, 0.05243302
    %v8234 = vmul.f32 %v8227, %v8233
    %v8235 = vadd.f32 %v8234, 0.18741608
    %v8236 = vmul.f32 %v8227, %v8235
    %v8237 = vadd.f32 %v8236, 1.1283791
    %v8238 = vmul.f32 %v3145, %v8237
    %v8239 = vmul.f32 %v8227, 3.8918573e-05
    %v8240 = vadd.f32 %v8239, 0.001143296
    %v8241 = vmul.f32 %v8227, %v8240
    %v8242 = vadd.f32 %v8241, 0.014752088
    %v8243 = vmul.f32 %v8227, %v8242
    %v8244 = vadd.f32 %v8243, 0.112945676
    %v8245 = vmul.f32 %v8227, %v8244
    %v8246 = vadd.f32 %v8245, 0.4994258
    %v8247 = vmul.f32 %v8227, %v8246
    %v8248 = vadd.f32 %v8247, 1.0
    %v8249 = vrcp.pop %v8248
    %v8250 = vmul.f32 %v8248, %v8249
    %v8251 = vsub.f32 1.0, %v8250
    %v8252 = vmul.f32 %v8249, %v8251
    %v8253 = vadd.f32 %v8249, %v8252
    %vm8254 = vweird.f32 %v8248
    %vm8255 = vweird.f32 %v8249
    %vm8256 = vmor %vm8254, %vm8255
    %v8257 = vsel %vm8256, %v8249, %v8253
    %v8258 = vand.u32 2147483647, %v8248
    %vm8259 = vcmp.eq.f32.partialorder %v8258, 8.507059e+37
    %v8260 = vand.u32 %v8248, 2147483648
    %v8261 = vor.u32 1.1754944e-38, %v8260
    %v8262 = vsel %vm8259, %v8261, %v8257
    %v8263 = vmul.f32 %v8238, %v8262
    %v8264 = vmin.f32 %v8263, 1.0
    %v8265 = vmax.f32 %v8264, -1.0
    %v8266 = vadd.f32 %v3185, 1.0
    %v8267 = vadd.f32 %v3225, 1.0
    %v8268 = vadd.f32 %v3265, 1.0
    %v8269 = vadd.f32 %v3305, 1.0
    %v8270 = vadd.f32 %v3345, 1.0
    %v8271 = vadd.f32 %v3385, 1.0
    %v8272 = vadd.f32 %v3425, 1.0
    %v8273 = vadd.f32 %v3465, 1.0
    %v8274 = vadd.f32 %v3505, 1.0
    %v8275 = vadd.f32 %v3545, 1.0
    %v8276 = vadd.f32 %v3585, 1.0
    %v8277 = vadd.f32 %v3625, 1.0
    %v8278 = vadd.f32 %v3665, 1.0
    %v8279 = vadd.f32 %v3705, 1.0
    %v8280 = vadd.f32 %v3745, 1.0
    %v8281 = vadd.f32 %v3785, 1.0
    %v8282 = vadd.f32 %v3825, 1.0
    %v8283 = vadd.f32 %v3865, 1.0
    %v8284 = vadd.f32 %v3905, 1.0
    %v8285 = vadd.f32 %v3945, 1.0
    %v8286 = vadd.f32 %v3985, 1.0
    %v8287 = vadd.f32 %v4025, 1.0
    %v8288 = vadd.f32 %v4065, 1.0
    %v8289 = vadd.f32 %v4105, 1.0
    %v8290 = vadd.f32 %v4145, 1.0
    %v8291 = vadd.f32 %v4185, 1.0
    %v8292 = vadd.f32 %v4225, 1.0
    %v8293 = vadd.f32 %v4265, 1.0
    %v8294 = vadd.f32 %v4305, 1.0
    %v8295 = vadd.f32 %v4345, 1.0
    %v8296 = vadd.f32 %v4385, 1.0
    %v8297 = vadd.f32 %v4425, 1.0
    %v8298 = vadd.f32 %v4465, 1.0
    %v8299 = vadd.f32 %v4505, 1.0
    %v8300 = vadd.f32 %v4545, 1.0
    %v8301 = vadd.f32 %v4585, 1.0
    %v8302 = vadd.f32 %v4625, 1.0
    %v8303 = vadd.f32 %v4665, 1.0
    %v8304 = vadd.f32 %v4705, 1.0
    %v8305 = vadd.f32 %v4745, 1.0
    %v8306 = vadd.f32 %v4785, 1.0
    %v8307 = vadd.f32 %v4825, 1.0
    %v8308 = vadd.f32 %v4865, 1.0
    %v8309 = vadd.f32 %v4905, 1.0
    %v8310 = vadd.f32 %v4945, 1.0
    %v8311 = vadd.f32 %v4985, 1.0
    %v8312 = vadd.f32 %v5025, 1.0
    %v8313 = vadd.f32 %v5065, 1.0
    %v8314 = vadd.f32 %v5105, 1.0
    %v8315 = vadd.f32 %v5145, 1.0
    %v8316 = vadd.f32 %v5185, 1.0
    %v8317 = vadd.f32 %v5225, 1.0
    %v8318 = vadd.f32 %v5265, 1.0
    %v8319 = vadd.f32 %v5305, 1.0
    %v8320 = vadd.f32 %v5345, 1.0
    %v8321 = vadd.f32 %v5385, 1.0
    %v8322 = vadd.f32 %v5425, 1.0
    %v8323 = vadd.f32 %v5465, 1.0
    %v8324 = vadd.f32 %v5505, 1.0
    %v8325 = vadd.f32 %v5545, 1.0
    %v8326 = vadd.f32 %v5585, 1.0
    %v8327 = vadd.f32 %v5625, 1.0
    %v8328 = vadd.f32 %v5665, 1.0
    %v8329 = vadd.f32 %v5705, 1.0
    %v8330 = vadd.f32 %v5745, 1.0
    %v8331 = vadd.f32 %v5785, 1.0
    %v8332 = vadd.f32 %v5825, 1.0
    %v8333 = vadd.f32 %v5865, 1.0
    %v8334 = vadd.f32 %v5905, 1.0
    %v8335 = vadd.f32 %v5945, 1.0
    %v8336 = vadd.f32 %v5985, 1.0
    %v8337 = vadd.f32 %v6025, 1.0
    %v8338 = vadd.f32 %v6065, 1.0
    %v8339 = vadd.f32 %v6105, 1.0
    %v8340 = vadd.f32 %v6145, 1.0
    %v8341 = vadd.f32 %v6185, 1.0
    %v8342 = vadd.f32 %v6225, 1.0
    %v8343 = vadd.f32 %v6265, 1.0
    %v8344 = vadd.f32 %v6305, 1.0
    %v8345 = vadd.f32 %v6345, 1.0
    %v8346 = vadd.f32 %v6385, 1.0
    %v8347 = vadd.f32 %v6425, 1.0
    %v8348 = vadd.f32 %v6465, 1.0
    %v8349 = vadd.f32 %v6505, 1.0
    %v8350 = vadd.f32 %v6545, 1.0
    %v8351 = vadd.f32 %v6585, 1.0
    %v8352 = vadd.f32 %v6625, 1.0
    %v8353 = vadd.f32 %v6665, 1.0
    %v8354 = vadd.f32 %v6705, 1.0
    %v8355 = vadd.f32 %v6745, 1.0
    %v8356 = vadd.f32 %v6785, 1.0
    %v8357 = vadd.f32 %v6825, 1.0
    %v8358 = vadd.f32 %v6865, 1.0
    %v8359 = vadd.f32 %v6905, 1.0
    %v8360 = vadd.f32 %v6945, 1.0
    %v8361 = vadd.f32 %v6985, 1.0
    %v8362 = vadd.f32 %v7025, 1.0
    %v8363 = vadd.f32 %v7065, 1.0
    %v8364 = vadd.f32 %v7105, 1.0
    %v8365 = vadd.f32 %v7145, 1.0
    %v8366 = vadd.f32 %v7185, 1.0
    %v8367 = vadd.f32 %v7225, 1.0
    %v8368 = vadd.f32 %v7265, 1.0
    %v8369 = vadd.f32 %v7305, 1.0
    %v8370 = vadd.f32 %v7345, 1.0
    %v8371 = vadd.f32 %v7385, 1.0
    %v8372 = vadd.f32 %v7425, 1.0
    %v8373 = vadd.f32 %v7465, 1.0
    %v8374 = vadd.f32 %v7505, 1.0
    %v8375 = vadd.f32 %v7545, 1.0
    %v8376 = vadd.f32 %v7585, 1.0
    %v8377 = vadd.f32 %v7625, 1.0
    %v8378 = vadd.f32 %v7665, 1.0
    %v8379 = vadd.f32 %v7705, 1.0
    %v8380 = vadd.f32 %v7745, 1.0
    %v8381 = vadd.f32 %v7785, 1.0
    %v8382 = vadd.f32 %v7825, 1.0
    %v8383 = vadd.f32 %v7865, 1.0
    %v8384 = vadd.f32 %v7905, 1.0
    %v8385 = vadd.f32 %v7945, 1.0
    %v8386 = vadd.f32 %v7985, 1.0
    %v8387 = vadd.f32 %v8025, 1.0
    %v8388 = vadd.f32 %v8065, 1.0
    %v8389 = vadd.f32 %v8105, 1.0
    %v8390 = vadd.f32 %v8145, 1.0
    %v8391 = vadd.f32 %v8185, 1.0
    %v8392 = vadd.f32 %v8225, 1.0
    %v8393 = vadd.f32 %v8265, 1.0
    %v8394 = vmul.f32 %v2890, %v8266
    %v8395 = vmul.f32 %v2891, %v8267
    %v8396 = vmul.f32 %v2892, %v8268
    %v8397 = vmul.f32 %v2893, %v8269
    %v8398 = vmul.f32 %v2894, %v8270
    %v8399 = vmul.f32 %v2895, %v8271
    %v8400 = vmul.f32 %v2896, %v8272
    %v8401 = vmul.f32 %v2897, %v8273
    %v8402 = vmul.f32 %v2898, %v8274
    %v8403 = vmul.f32 %v2899, %v8275
    %v8404 = vmul.f32 %v2900, %v8276
    %v8405 = vmul.f32 %v2901, %v8277
    %v8406 = vmul.f32 %v2902, %v8278
    %v8407 = vmul.f32 %v2903, %v8279
    %v8408 = vmul.f32 %v2904, %v8280
    %v8409 = vmul.f32 %v2905, %v8281
    %v8410 = vmul.f32 %v2906, %v8282
    %v8411 = vmul.f32 %v2907, %v8283
    %v8412 = vmul.f32 %v2908, %v8284
    %v8413 = vmul.f32 %v2909, %v8285
    %v8414 = vmul.f32 %v2910, %v8286
    %v8415 = vmul.f32 %v2911, %v8287
    %v8416 = vmul.f32 %v2912, %v8288
    %v8417 = vmul.f32 %v2913, %v8289
    %v8418 = vmul.f32 %v2914, %v8290
    %v8419 = vmul.f32 %v2915, %v8291
    %v8420 = vmul.f32 %v2916, %v8292
    %v8421 = vmul.f32 %v2917, %v8293
    %v8422 = vmul.f32 %v2918, %v8294
    %v8423 = vmul.f32 %v2919, %v8295
    %v8424 = vmul.f32 %v2920, %v8296
    %v8425 = vmul.f32 %v2921, %v8297
    %v8426 = vmul.f32 %v2922, %v8298
    %v8427 = vmul.f32 %v2923, %v8299
    %v8428 = vmul.f32 %v2924, %v8300
    %v8429 = vmul.f32 %v2925, %v8301
    %v8430 = vmul.f32 %v2926, %v8302
    %v8431 = vmul.f32 %v2927, %v8303
    %v8432 = vmul.f32 %v2928, %v8304
    %v8433 = vmul.f32 %v2929, %v8305
    %v8434 = vmul.f32 %v2930, %v8306
    %v8435 = vmul.f32 %v2931, %v8307
    %v8436 = vmul.f32 %v2932, %v8308
    %v8437 = vmul.f32 %v2933, %v8309
    %v8438 = vmul.f32 %v2934, %v8310
    %v8439 = vmul.f32 %v2935, %v8311
    %v8440 = vmul.f32 %v2936, %v8312
    %v8441 = vmul.f32 %v2937, %v8313
    %v8442 = vmul.f32 %v2938, %v8314
    %v8443 = vmul.f32 %v2939, %v8315
    %v8444 = vmul.f32 %v2940, %v8316
    %v8445 = vmul.f32 %v2941, %v8317
    %v8446 = vmul.f32 %v2942, %v8318
    %v8447 = vmul.f32 %v2943, %v8319
    %v8448 = vmul.f32 %v2944, %v8320
    %v8449 = vmul.f32 %v2945, %v8321
    %v8450 = vmul.f32 %v2946, %v8322
    %v8451 = vmul.f32 %v2947, %v8323
    %v8452 = vmul.f32 %v2948, %v8324
    %v8453 = vmul.f32 %v2949, %v8325
    %v8454 = vmul.f32 %v2950, %v8326
    %v8455 = vmul.f32 %v2951, %v8327
    %v8456 = vmul.f32 %v2952, %v8328
    %v8457 = vmul.f32 %v2953, %v8329
    %v8458 = vmul.f32 %v2954, %v8330
    %v8459 = vmul.f32 %v2955, %v8331
    %v8460 = vmul.f32 %v2956, %v8332
    %v8461 = vmul.f32 %v2957, %v8333
    %v8462 = vmul.f32 %v2958, %v8334
    %v8463 = vmul.f32 %v2959, %v8335
    %v8464 = vmul.f32 %v2960, %v8336
    %v8465 = vmul.f32 %v2961, %v8337
    %v8466 = vmul.f32 %v2962, %v8338
    %v8467 = vmul.f32 %v2963, %v8339
    %v8468 = vmul.f32 %v2964, %v8340
    %v8469 = vmul.f32 %v2965, %v8341
    %v8470 = vmul.f32 %v2966, %v8342
    %v8471 = vmul.f32 %v2967, %v8343
    %v8472 = vmul.f32 %v2968, %v8344
    %v8473 = vmul.f32 %v2969, %v8345
    %v8474 = vmul.f32 %v2970, %v8346
    %v8475 = vmul.f32 %v2971, %v8347
    %v8476 = vmul.f32 %v2972, %v8348
    %v8477 = vmul.f32 %v2973, %v8349
    %v8478 = vmul.f32 %v2974, %v8350
    %v8479 = vmul.f32 %v2975, %v8351
    %v8480 = vmul.f32 %v2976, %v8352
    %v8481 = vmul.f32 %v2977, %v8353
    %v8482 = vmul.f32 %v2978, %v8354
    %v8483 = vmul.f32 %v2979, %v8355
    %v8484 = vmul.f32 %v2980, %v8356
    %v8485 = vmul.f32 %v2981, %v8357
    %v8486 = vmul.f32 %v2982, %v8358
    %v8487 = vmul.f32 %v2983, %v8359
    %v8488 = vmul.f32 %v2984, %v8360
    %v8489 = vmul.f32 %v2985, %v8361
    %v8490 = vmul.f32 %v2986, %v8362
    %v8491 = vmul.f32 %v2987, %v8363
    %v8492 = vmul.f32 %v2988, %v8364
    %v8493 = vmul.f32 %v2989, %v8365
    %v8494 = vmul.f32 %v2990, %v8366
    %v8495 = vmul.f32 %v2991, %v8367
    %v8496 = vmul.f32 %v2992, %v8368
    %v8497 = vmul.f32 %v2993, %v8369
    %v8498 = vmul.f32 %v2994, %v8370
    %v8499 = vmul.f32 %v2995, %v8371
    %v8500 = vmul.f32 %v2996, %v8372
    %v8501 = vmul.f32 %v2997, %v8373
    %v8502 = vmul.f32 %v2998, %v8374
    %v8503 = vmul.f32 %v2999, %v8375
    %v8504 = vmul.f32 %v3000, %v8376
    %v8505 = vmul.f32 %v3001, %v8377
    %v8506 = vmul.f32 %v3002, %v8378
    %v8507 = vmul.f32 %v3003, %v8379
    %v8508 = vmul.f32 %v3004, %v8380
    %v8509 = vmul.f32 %v3005, %v8381
    %v8510 = vmul.f32 %v3006, %v8382
    %v8511 = vmul.f32 %v3007, %v8383
    %v8512 = vmul.f32 %v3008, %v8384
    %v8513 = vmul.f32 %v3009, %v8385
    %v8514 = vmul.f32 %v3010, %v8386
    %v8515 = vmul.f32 %v3011, %v8387
    %v8516 = vmul.f32 %v3012, %v8388
    %v8517 = vmul.f32 %v3013, %v8389
    %v8518 = vmul.f32 %v3014, %v8390
    %v8519 = vmul.f32 %v3015, %v8391
    %v8520 = vmul.f32 %v3016, %v8392
    %v8521 = vmul.f32 %v3017, %v8393
    %v8522 = vadd.f32 %v8394, %v8395
    %8523 = vadd.xlane.f32.xlu0 %v8522
    %v8524 = vpop.xlane.xlu0 %8523
    %v8525 = vadd.f32 %v8396, %v8397
    %8526 = vadd.xlane.f32.xlu0 %v8525
    %v8527 = vpop.xlane.xlu0 %8526
    %v8528 = vadd.f32 %v8398, %v8399
    %8529 = vadd.xlane.f32.xlu0 %v8528
    %v8530 = vpop.xlane.xlu0 %8529
    %v8531 = vadd.f32 %v8400, %v8401
    %8532 = vadd.xlane.f32.xlu0 %v8531
    %v8533 = vpop.xlane.xlu0 %8532
    %v8534 = vadd.f32 %v8402, %v8403
    %8535 = vadd.xlane.f32.xlu0 %v8534
    %v8536 = vpop.xlane.xlu0 %8535
    %v8537 = vadd.f32 %v8404, %v8405
    %8538 = vadd.xlane.f32.xlu0 %v8537
    %v8539 = vpop.xlane.xlu0 %8538
    %v8540 = vadd.f32 %v8406, %v8407
    %8541 = vadd.xlane.f32.xlu0 %v8540
    %v8542 = vpop.xlane.xlu0 %8541
    %v8543 = vadd.f32 %v8408, %v8409
    %8544 = vadd.xlane.f32.xlu0 %v8543
    %v8545 = vpop.xlane.xlu0 %8544
    %v8546 = vadd.f32 %v8410, %v8411
    %8547 = vadd.xlane.f32.xlu0 %v8546
    %v8548 = vpop.xlane.xlu0 %8547
    %v8549 = vadd.f32 %v8412, %v8413
    %8550 = vadd.xlane.f32.xlu0 %v8549
    %v8551 = vpop.xlane.xlu0 %8550
    %v8552 = vadd.f32 %v8414, %v8415
    %8553 = vadd.xlane.f32.xlu0 %v8552
    %v8554 = vpop.xlane.xlu0 %8553
    %v8555 = vadd.f32 %v8416, %v8417
    %8556 = vadd.xlane.f32.xlu0 %v8555
    %v8557 = vpop.xlane.xlu0 %8556
    %v8558 = vadd.f32 %v8418, %v8419
    %8559 = vadd.xlane.f32.xlu0 %v8558
    %v8560 = vpop.xlane.xlu0 %8559
    %v8561 = vadd.f32 %v8420, %v8421
    %8562 = vadd.xlane.f32.xlu0 %v8561
    %v8563 = vpop.xlane.xlu0 %8562
    %v8564 = vadd.f32 %v8422, %v8423
    %8565 = vadd.xlane.f32.xlu0 %v8564
    %v8566 = vpop.xlane.xlu0 %8565
    %v8567 = vadd.f32 %v8424, %v8425
    %8568 = vadd.xlane.f32.xlu0 %v8567
    %v8569 = vpop.xlane.xlu0 %8568
    %v8570 = vadd.f32 %v8426, %v8427
    %8571 = vadd.xlane.f32.xlu0 %v8570
    %v8572 = vpop.xlane.xlu0 %8571
    %v8573 = vadd.f32 %v8428, %v8429
    %8574 = vadd.xlane.f32.xlu0 %v8573
    %v8575 = vpop.xlane.xlu0 %8574
    %v8576 = vadd.f32 %v8430, %v8431
    %8577 = vadd.xlane.f32.xlu0 %v8576
    %v8578 = vpop.xlane.xlu0 %8577
    %v8579 = vadd.f32 %v8432, %v8433
    %8580 = vadd.xlane.f32.xlu0 %v8579
    %v8581 = vpop.xlane.xlu0 %8580
    %v8582 = vadd.f32 %v8434, %v8435
    %8583 = vadd.xlane.f32.xlu0 %v8582
    %v8584 = vpop.xlane.xlu0 %8583
    %v8585 = vadd.f32 %v8436, %v8437
    %8586 = vadd.xlane.f32.xlu0 %v8585
    %v8587 = vpop.xlane.xlu0 %8586
    %v8588 = vadd.f32 %v8438, %v8439
    %8589 = vadd.xlane.f32.xlu0 %v8588
    %v8590 = vpop.xlane.xlu0 %8589
    %v8591 = vadd.f32 %v8440, %v8441
    %8592 = vadd.xlane.f32.xlu0 %v8591
    %v8593 = vpop.xlane.xlu0 %8592
    %v8594 = vadd.f32 %v8442, %v8443
    %8595 = vadd.xlane.f32.xlu0 %v8594
    %v8596 = vpop.xlane.xlu0 %8595
    %v8597 = vadd.f32 %v8444, %v8445
    %8598 = vadd.xlane.f32.xlu0 %v8597
    %v8599 = vpop.xlane.xlu0 %8598
    %v8600 = vadd.f32 %v8446, %v8447
    %8601 = vadd.xlane.f32.xlu0 %v8600
    %v8602 = vpop.xlane.xlu0 %8601
    %v8603 = vadd.f32 %v8448, %v8449
    %8604 = vadd.xlane.f32.xlu0 %v8603
    %v8605 = vpop.xlane.xlu0 %8604
    %v8606 = vadd.f32 %v8450, %v8451
    %8607 = vadd.xlane.f32.xlu0 %v8606
    %v8608 = vpop.xlane.xlu0 %8607
    %v8609 = vadd.f32 %v8452, %v8453
    %8610 = vadd.xlane.f32.xlu0 %v8609
    %v8611 = vpop.xlane.xlu0 %8610
    %v8612 = vadd.f32 %v8454, %v8455
    %8613 = vadd.xlane.f32.xlu0 %v8612
    %v8614 = vpop.xlane.xlu0 %8613
    %v8615 = vadd.f32 %v8456, %v8457
    %8616 = vadd.xlane.f32.xlu0 %v8615
    %v8617 = vpop.xlane.xlu0 %8616
    %v8618 = vadd.f32 %v8458, %v8459
    %8619 = vadd.xlane.f32.xlu0 %v8618
    %v8620 = vpop.xlane.xlu0 %8619
    %v8621 = vadd.f32 %v8460, %v8461
    %8622 = vadd.xlane.f32.xlu0 %v8621
    %v8623 = vpop.xlane.xlu0 %8622
    %v8624 = vadd.f32 %v8462, %v8463
    %8625 = vadd.xlane.f32.xlu0 %v8624
    %v8626 = vpop.xlane.xlu0 %8625
    %v8627 = vadd.f32 %v8464, %v8465
    %8628 = vadd.xlane.f32.xlu0 %v8627
    %v8629 = vpop.xlane.xlu0 %8628
    %v8630 = vadd.f32 %v8466, %v8467
    %8631 = vadd.xlane.f32.xlu0 %v8630
    %v8632 = vpop.xlane.xlu0 %8631
    %v8633 = vadd.f32 %v8468, %v8469
    %8634 = vadd.xlane.f32.xlu0 %v8633
    %v8635 = vpop.xlane.xlu0 %8634
    %v8636 = vadd.f32 %v8470, %v8471
    %8637 = vadd.xlane.f32.xlu0 %v8636
    %v8638 = vpop.xlane.xlu0 %8637
    %v8639 = vadd.f32 %v8472, %v8473
    %8640 = vadd.xlane.f32.xlu0 %v8639
    %v8641 = vpop.xlane.xlu0 %8640
    %v8642 = vadd.f32 %v8474, %v8475
    %8643 = vadd.xlane.f32.xlu0 %v8642
    %v8644 = vpop.xlane.xlu0 %8643
    %v8645 = vadd.f32 %v8476, %v8477
    %8646 = vadd.xlane.f32.xlu0 %v8645
    %v8647 = vpop.xlane.xlu0 %8646
    %v8648 = vadd.f32 %v8478, %v8479
    %8649 = vadd.xlane.f32.xlu0 %v8648
    %v8650 = vpop.xlane.xlu0 %8649
    %v8651 = vadd.f32 %v8480, %v8481
    %8652 = vadd.xlane.f32.xlu0 %v8651
    %v8653 = vpop.xlane.xlu0 %8652
    %v8654 = vadd.f32 %v8482, %v8483
    %8655 = vadd.xlane.f32.xlu0 %v8654
    %v8656 = vpop.xlane.xlu0 %8655
    %v8657 = vadd.f32 %v8484, %v8485
    %8658 = vadd.xlane.f32.xlu0 %v8657
    %v8659 = vpop.xlane.xlu0 %8658
    %v8660 = vadd.f32 %v8486, %v8487
    %8661 = vadd.xlane.f32.xlu0 %v8660
    %v8662 = vpop.xlane.xlu0 %8661
    %v8663 = vadd.f32 %v8488, %v8489
    %8664 = vadd.xlane.f32.xlu0 %v8663
    %v8665 = vpop.xlane.xlu0 %8664
    %v8666 = vadd.f32 %v8490, %v8491
    %8667 = vadd.xlane.f32.xlu0 %v8666
    %v8668 = vpop.xlane.xlu0 %8667
    %v8669 = vadd.f32 %v8492, %v8493
    %8670 = vadd.xlane.f32.xlu0 %v8669
    %v8671 = vpop.xlane.xlu0 %8670
    %v8672 = vadd.f32 %v8494, %v8495
    %8673 = vadd.xlane.f32.xlu0 %v8672
    %v8674 = vpop.xlane.xlu0 %8673
    %v8675 = vadd.f32 %v8496, %v8497
    %8676 = vadd.xlane.f32.xlu0 %v8675
    %v8677 = vpop.xlane.xlu0 %8676
    %v8678 = vadd.f32 %v8498, %v8499
    %8679 = vadd.xlane.f32.xlu0 %v8678
    %v8680 = vpop.xlane.xlu0 %8679
    %v8681 = vadd.f32 %v8500, %v8501
    %8682 = vadd.xlane.f32.xlu0 %v8681
    %v8683 = vpop.xlane.xlu0 %8682
    %v8684 = vadd.f32 %v8502, %v8503
    %8685 = vadd.xlane.f32.xlu0 %v8684
    %v8686 = vpop.xlane.xlu0 %8685
    %v8687 = vadd.f32 %v8504, %v8505
    %8688 = vadd.xlane.f32.xlu0 %v8687
    %v8689 = vpop.xlane.xlu0 %8688
    %v8690 = vadd.f32 %v8506, %v8507
    %8691 = vadd.xlane.f32.xlu0 %v8690
    %v8692 = vpop.xlane.xlu0 %8691
    %v8693 = vadd.f32 %v8508, %v8509
    %8694 = vadd.xlane.f32.xlu0 %v8693
    %v8695 = vpop.xlane.xlu0 %8694
    %v8696 = vadd.f32 %v8510, %v8511
    %8697 = vadd.xlane.f32.xlu0 %v8696
    %v8698 = vpop.xlane.xlu0 %8697
    %v8699 = vadd.f32 %v8512, %v8513
    %8700 = vadd.xlane.f32.xlu0 %v8699
    %v8701 = vpop.xlane.xlu0 %8700
    %v8702 = vadd.f32 %v8514, %v8515
    %8703 = vadd.xlane.f32.xlu0 %v8702
    %v8704 = vpop.xlane.xlu0 %8703
    %v8705 = vadd.f32 %v8516, %v8517
    %8706 = vadd.xlane.f32.xlu0 %v8705
    %v8707 = vpop.xlane.xlu0 %8706
    %v8708 = vadd.f32 %v8518, %v8519
    %8709 = vadd.xlane.f32.xlu0 %v8708
    %v8710 = vpop.xlane.xlu0 %8709
    %v8711 = vadd.f32 %v8520, %v8521
    %8712 = vadd.xlane.f32.xlu0 %v8711
    %v8713 = vpop.xlane.xlu0 %8712
    %v8714 = vmul.f32 %v8394, %v8394
    %v8715 = vmul.f32 %v8395, %v8395
    %v8716 = vmul.f32 %v8396, %v8396
    %v8717 = vmul.f32 %v8397, %v8397
    %v8718 = vmul.f32 %v8398, %v8398
    %v8719 = vmul.f32 %v8399, %v8399
    %v8720 = vmul.f32 %v8400, %v8400
    %v8721 = vmul.f32 %v8401, %v8401
    %v8722 = vmul.f32 %v8402, %v8402
    %v8723 = vmul.f32 %v8403, %v8403
    %v8724 = vmul.f32 %v8404, %v8404
    %v8725 = vmul.f32 %v8405, %v8405
    %v8726 = vmul.f32 %v8406, %v8406
    %v8727 = vmul.f32 %v8407, %v8407
    %v8728 = vmul.f32 %v8408, %v8408
    %v8729 = vmul.f32 %v8409, %v8409
    %v8730 = vmul.f32 %v8410, %v8410
    %v8731 = vmul.f32 %v8411, %v8411
    %v8732 = vmul.f32 %v8412, %v8412
    %v8733 = vmul.f32 %v8413, %v8413
    %v8734 = vmul.f32 %v8414, %v8414
    %v8735 = vmul.f32 %v8415, %v8415
    %v8736 = vmul.f32 %v8416, %v8416
    %v8737 = vmul.f32 %v8417, %v8417
    %v8738 = vmul.f32 %v8418, %v8418
    %v8739 = vmul.f32 %v8419, %v8419
    %v8740 = vmul.f32 %v8420, %v8420
    %v8741 = vmul.f32 %v8421, %v8421
    %v8742 = vmul.f32 %v8422, %v8422
    %v8743 = vmul.f32 %v8423, %v8423
    %v8744 = vmul.f32 %v8424, %v8424
    %v8745 = vmul.f32 %v8425, %v8425
    %v8746 = vmul.f32 %v8426, %v8426
    %v8747 = vmul.f32 %v8427, %v8427
    %v8748 = vmul.f32 %v8428, %v8428
    %v8749 = vmul.f32 %v8429, %v8429
    %v8750 = vmul.f32 %v8430, %v8430
    %v8751 = vmul.f32 %v8431, %v8431
    %v8752 = vmul.f32 %v8432, %v8432
    %v8753 = vmul.f32 %v8433, %v8433
    %v8754 = vmul.f32 %v8434, %v8434
    %v8755 = vmul.f32 %v8435, %v8435
    %v8756 = vmul.f32 %v8436, %v8436
    %v8757 = vmul.f32 %v8437, %v8437
    %v8758 = vmul.f32 %v8438, %v8438
    %v8759 = vmul.f32 %v8439, %v8439
    %v8760 = vmul.f32 %v8440, %v8440
    %v8761 = vmul.f32 %v8441, %v8441
    %v8762 = vmul.f32 %v8442, %v8442
    %v8763 = vmul.f32 %v8443, %v8443
    %v8764 = vmul.f32 %v8444, %v8444
    %v8765 = vmul.f32 %v8445, %v8445
    %v8766 = vmul.f32 %v8446, %v8446
    %v8767 = vmul.f32 %v8447, %v8447
    %v8768 = vmul.f32 %v8448, %v8448
    %v8769 = vmul.f32 %v8449, %v8449
    %v8770 = vmul.f32 %v8450, %v8450
    %v8771 = vmul.f32 %v8451, %v8451
    %v8772 = vmul.f32 %v8452, %v8452
    %v8773 = vmul.f32 %v8453, %v8453
    %v8774 = vmul.f32 %v8454, %v8454
    %v8775 = vmul.f32 %v8455, %v8455
    %v8776 = vmul.f32 %v8456, %v8456
    %v8777 = vmul.f32 %v8457, %v8457
    %v8778 = vmul.f32 %v8458, %v8458
    %v8779 = vmul.f32 %v8459, %v8459
    %v8780 = vmul.f32 %v8460, %v8460
    %v8781 = vmul.f32 %v8461, %v8461
    %v8782 = vmul.f32 %v8462, %v8462
    %v8783 = vmul.f32 %v8463, %v8463
    %v8784 = vmul.f32 %v8464, %v8464
    %v8785 = vmul.f32 %v8465, %v8465
    %v8786 = vmul.f32 %v8466, %v8466
    %v8787 = vmul.f32 %v8467, %v8467
    %v8788 = vmul.f32 %v8468, %v8468
    %v8789 = vmul.f32 %v8469, %v8469
    %v8790 = vmul.f32 %v8470, %v8470
    %v8791 = vmul.f32 %v8471, %v8471
    %v8792 = vmul.f32 %v8472, %v8472
    %v8793 = vmul.f32 %v8473, %v8473
    %v8794 = vmul.f32 %v8474, %v8474
    %v8795 = vmul.f32 %v8475, %v8475
    %v8796 = vmul.f32 %v8476, %v8476
    %v8797 = vmul.f32 %v8477, %v8477
    %v8798 = vmul.f32 %v8478, %v8478
    %v8799 = vmul.f32 %v8479, %v8479
    %v8800 = vmul.f32 %v8480, %v8480
    %v8801 = vmul.f32 %v8481, %v8481
    %v8802 = vmul.f32 %v8482, %v8482
    %v8803 = vmul.f32 %v8483, %v8483
    %v8804 = vmul.f32 %v8484, %v8484
    %v8805 = vmul.f32 %v8485, %v8485
    %v8806 = vmul.f32 %v8486, %v8486
    %v8807 = vmul.f32 %v8487, %v8487
    %v8808 = vmul.f32 %v8488, %v8488
    %v8809 = vmul.f32 %v8489, %v8489
    %v8810 = vmul.f32 %v8490, %v8490
    %v8811 = vmul.f32 %v8491, %v8491
    %v8812 = vmul.f32 %v8492, %v8492
    %v8813 = vmul.f32 %v8493, %v8493
    %v8814 = vmul.f32 %v8494, %v8494
    %v8815 = vmul.f32 %v8495, %v8495
    %v8816 = vmul.f32 %v8496, %v8496
    %v8817 = vmul.f32 %v8497, %v8497
    %v8818 = vmul.f32 %v8498, %v8498
    %v8819 = vmul.f32 %v8499, %v8499
    %v8820 = vmul.f32 %v8500, %v8500
    %v8821 = vmul.f32 %v8501, %v8501
    %v8822 = vmul.f32 %v8502, %v8502
    %v8823 = vmul.f32 %v8503, %v8503
    %v8824 = vmul.f32 %v8504, %v8504
    %v8825 = vmul.f32 %v8505, %v8505
    %v8826 = vmul.f32 %v8506, %v8506
    %v8827 = vmul.f32 %v8507, %v8507
    %v8828 = vmul.f32 %v8508, %v8508
    %v8829 = vmul.f32 %v8509, %v8509
    %v8830 = vmul.f32 %v8510, %v8510
    %v8831 = vmul.f32 %v8511, %v8511
    %v8832 = vmul.f32 %v8512, %v8512
    %v8833 = vmul.f32 %v8513, %v8513
    %v8834 = vmul.f32 %v8514, %v8514
    %v8835 = vmul.f32 %v8515, %v8515
    %v8836 = vmul.f32 %v8516, %v8516
    %v8837 = vmul.f32 %v8517, %v8517
    %v8838 = vmul.f32 %v8518, %v8518
    %v8839 = vmul.f32 %v8519, %v8519
    %v8840 = vmul.f32 %v8520, %v8520
    %v8841 = vmul.f32 %v8521, %v8521
    %v8842 = vadd.f32 %v8714, %v8715
    %8843 = vadd.xlane.f32.xlu0 %v8842
    %v8844 = vpop.xlane.xlu0 %8843
    %v8845 = vadd.f32 %v8716, %v8717
    %8846 = vadd.xlane.f32.xlu0 %v8845
    %v8847 = vpop.xlane.xlu0 %8846
    %v8848 = vadd.f32 %v8718, %v8719
    %8849 = vadd.xlane.f32.xlu0 %v8848
    %v8850 = vpop.xlane.xlu0 %8849
    %v8851 = vadd.f32 %v8720, %v8721
    %8852 = vadd.xlane.f32.xlu0 %v8851
    %v8853 = vpop.xlane.xlu0 %8852
    %v8854 = vadd.f32 %v8722, %v8723
    %8855 = vadd.xlane.f32.xlu0 %v8854
    %v8856 = vpop.xlane.xlu0 %8855
    %v8857 = vadd.f32 %v8724, %v8725
    %8858 = vadd.xlane.f32.xlu0 %v8857
    %v8859 = vpop.xlane.xlu0 %8858
    %v8860 = vadd.f32 %v8726, %v8727
    %8861 = vadd.xlane.f32.xlu0 %v8860
    %v8862 = vpop.xlane.xlu0 %8861
    %v8863 = vadd.f32 %v8728, %v8729
    %8864 = vadd.xlane.f32.xlu0 %v8863
    %v8865 = vpop.xlane.xlu0 %8864
    %v8866 = vadd.f32 %v8730, %v8731
    %8867 = vadd.xlane.f32.xlu0 %v8866
    %v8868 = vpop.xlane.xlu0 %8867
    %v8869 = vadd.f32 %v8732, %v8733
    %8870 = vadd.xlane.f32.xlu0 %v8869
    %v8871 = vpop.xlane.xlu0 %8870
    %v8872 = vadd.f32 %v8734, %v8735
    %8873 = vadd.xlane.f32.xlu0 %v8872
    %v8874 = vpop.xlane.xlu0 %8873
    %v8875 = vadd.f32 %v8736, %v8737
    %8876 = vadd.xlane.f32.xlu0 %v8875
    %v8877 = vpop.xlane.xlu0 %8876
    %v8878 = vadd.f32 %v8738, %v8739
    %8879 = vadd.xlane.f32.xlu0 %v8878
    %v8880 = vpop.xlane.xlu0 %8879
    %v8881 = vadd.f32 %v8740, %v8741
    %8882 = vadd.xlane.f32.xlu0 %v8881
    %v8883 = vpop.xlane.xlu0 %8882
    %v8884 = vadd.f32 %v8742, %v8743
    %8885 = vadd.xlane.f32.xlu0 %v8884
    %v8886 = vpop.xlane.xlu0 %8885
    %v8887 = vadd.f32 %v8744, %v8745
    %8888 = vadd.xlane.f32.xlu0 %v8887
    %v8889 = vpop.xlane.xlu0 %8888
    %v8890 = vadd.f32 %v8746, %v8747
    %8891 = vadd.xlane.f32.xlu0 %v8890
    %v8892 = vpop.xlane.xlu0 %8891
    %v8893 = vadd.f32 %v8748, %v8749
    %8894 = vadd.xlane.f32.xlu0 %v8893
    %v8895 = vpop.xlane.xlu0 %8894
    %v8896 = vadd.f32 %v8750, %v8751
    %8897 = vadd.xlane.f32.xlu0 %v8896
    %v8898 = vpop.xlane.xlu0 %8897
    %v8899 = vadd.f32 %v8752, %v8753
    %8900 = vadd.xlane.f32.xlu0 %v8899
    %v8901 = vpop.xlane.xlu0 %8900
    %v8902 = vadd.f32 %v8754, %v8755
    %8903 = vadd.xlane.f32.xlu0 %v8902
    %v8904 = vpop.xlane.xlu0 %8903
    %v8905 = vadd.f32 %v8756, %v8757
    %8906 = vadd.xlane.f32.xlu0 %v8905
    %v8907 = vpop.xlane.xlu0 %8906
    %v8908 = vadd.f32 %v8758, %v8759
    %8909 = vadd.xlane.f32.xlu0 %v8908
    %v8910 = vpop.xlane.xlu0 %8909
    %v8911 = vadd.f32 %v8760, %v8761
    %8912 = vadd.xlane.f32.xlu0 %v8911
    %v8913 = vpop.xlane.xlu0 %8912
    %v8914 = vadd.f32 %v8762, %v8763
    %8915 = vadd.xlane.f32.xlu0 %v8914
    %v8916 = vpop.xlane.xlu0 %8915
    %v8917 = vadd.f32 %v8764, %v8765
    %8918 = vadd.xlane.f32.xlu0 %v8917
    %v8919 = vpop.xlane.xlu0 %8918
    %v8920 = vadd.f32 %v8766, %v8767
    %8921 = vadd.xlane.f32.xlu0 %v8920
    %v8922 = vpop.xlane.xlu0 %8921
    %v8923 = vadd.f32 %v8768, %v8769
    %8924 = vadd.xlane.f32.xlu0 %v8923
    %v8925 = vpop.xlane.xlu0 %8924
    %v8926 = vadd.f32 %v8770, %v8771
    %8927 = vadd.xlane.f32.xlu0 %v8926
    %v8928 = vpop.xlane.xlu0 %8927
    %v8929 = vadd.f32 %v8772, %v8773
    %8930 = vadd.xlane.f32.xlu0 %v8929
    %v8931 = vpop.xlane.xlu0 %8930
    %v8932 = vadd.f32 %v8774, %v8775
    %8933 = vadd.xlane.f32.xlu0 %v8932
    %v8934 = vpop.xlane.xlu0 %8933
    %v8935 = vadd.f32 %v8776, %v8777
    %8936 = vadd.xlane.f32.xlu0 %v8935
    %v8937 = vpop.xlane.xlu0 %8936
    %v8938 = vadd.f32 %v8778, %v8779
    %8939 = vadd.xlane.f32.xlu0 %v8938
    %v8940 = vpop.xlane.xlu0 %8939
    %v8941 = vadd.f32 %v8780, %v8781
    %8942 = vadd.xlane.f32.xlu0 %v8941
    %v8943 = vpop.xlane.xlu0 %8942
    %v8944 = vadd.f32 %v8782, %v8783
    %8945 = vadd.xlane.f32.xlu0 %v8944
    %v8946 = vpop.xlane.xlu0 %8945
    %v8947 = vadd.f32 %v8784, %v8785
    %8948 = vadd.xlane.f32.xlu0 %v8947
    %v8949 = vpop.xlane.xlu0 %8948
    %v8950 = vadd.f32 %v8786, %v8787
    %8951 = vadd.xlane.f32.xlu0 %v8950
    %v8952 = vpop.xlane.xlu0 %8951
    %v8953 = vadd.f32 %v8788, %v8789
    %8954 = vadd.xlane.f32.xlu0 %v8953
    %v8955 = vpop.xlane.xlu0 %8954
    %v8956 = vadd.f32 %v8790, %v8791
    %8957 = vadd.xlane.f32.xlu0 %v8956
    %v8958 = vpop.xlane.xlu0 %8957
    %v8959 = vadd.f32 %v8792, %v8793
    %8960 = vadd.xlane.f32.xlu0 %v8959
    %v8961 = vpop.xlane.xlu0 %8960
    %v8962 = vadd.f32 %v8794, %v8795
    %8963 = vadd.xlane.f32.xlu0 %v8962
    %v8964 = vpop.xlane.xlu0 %8963
    %v8965 = vadd.f32 %v8796, %v8797
    %8966 = vadd.xlane.f32.xlu0 %v8965
    %v8967 = vpop.xlane.xlu0 %8966
    %v8968 = vadd.f32 %v8798, %v8799
    %8969 = vadd.xlane.f32.xlu0 %v8968
    %v8970 = vpop.xlane.xlu0 %8969
    %v8971 = vadd.f32 %v8800, %v8801
    %8972 = vadd.xlane.f32.xlu0 %v8971
    %v8973 = vpop.xlane.xlu0 %8972
    %v8974 = vadd.f32 %v8802, %v8803
    %8975 = vadd.xlane.f32.xlu0 %v8974
    %v8976 = vpop.xlane.xlu0 %8975
    %v8977 = vadd.f32 %v8804, %v8805
    %8978 = vadd.xlane.f32.xlu0 %v8977
    %v8979 = vpop.xlane.xlu0 %8978
    %v8980 = vadd.f32 %v8806, %v8807
    %8981 = vadd.xlane.f32.xlu0 %v8980
    %v8982 = vpop.xlane.xlu0 %8981
    %v8983 = vadd.f32 %v8808, %v8809
    %8984 = vadd.xlane.f32.xlu0 %v8983
    %v8985 = vpop.xlane.xlu0 %8984
    %v8986 = vadd.f32 %v8810, %v8811
    %8987 = vadd.xlane.f32.xlu0 %v8986
    %v8988 = vpop.xlane.xlu0 %8987
    %v8989 = vadd.f32 %v8812, %v8813
    %8990 = vadd.xlane.f32.xlu0 %v8989
    %v8991 = vpop.xlane.xlu0 %8990
    %v8992 = vadd.f32 %v8814, %v8815
    %8993 = vadd.xlane.f32.xlu0 %v8992
    %v8994 = vpop.xlane.xlu0 %8993
    %v8995 = vadd.f32 %v8816, %v8817
    %8996 = vadd.xlane.f32.xlu0 %v8995
    %v8997 = vpop.xlane.xlu0 %8996
    %v8998 = vadd.f32 %v8818, %v8819
    %8999 = vadd.xlane.f32.xlu0 %v8998
    %v9000 = vpop.xlane.xlu0 %8999
    %v9001 = vadd.f32 %v8820, %v8821
    %9002 = vadd.xlane.f32.xlu0 %v9001
    %v9003 = vpop.xlane.xlu0 %9002
    %v9004 = vadd.f32 %v8822, %v8823
    %9005 = vadd.xlane.f32.xlu0 %v9004
    %v9006 = vpop.xlane.xlu0 %9005
    %v9007 = vadd.f32 %v8824, %v8825
    %9008 = vadd.xlane.f32.xlu0 %v9007
    %v9009 = vpop.xlane.xlu0 %9008
    %v9010 = vadd.f32 %v8826, %v8827
    %9011 = vadd.xlane.f32.xlu0 %v9010
    %v9012 = vpop.xlane.xlu0 %9011
    %v9013 = vadd.f32 %v8828, %v8829
    %9014 = vadd.xlane.f32.xlu0 %v9013
    %v9015 = vpop.xlane.xlu0 %9014
    %v9016 = vadd.f32 %v8830, %v8831
    %9017 = vadd.xlane.f32.xlu0 %v9016
    %v9018 = vpop.xlane.xlu0 %9017
    %v9019 = vadd.f32 %v8832, %v8833
    %9020 = vadd.xlane.f32.xlu0 %v9019
    %v9021 = vpop.xlane.xlu0 %9020
    %v9022 = vadd.f32 %v8834, %v8835
    %9023 = vadd.xlane.f32.xlu0 %v9022
    %v9024 = vpop.xlane.xlu0 %9023
    %v9025 = vadd.f32 %v8836, %v8837
    %9026 = vadd.xlane.f32.xlu0 %v9025
    %v9027 = vpop.xlane.xlu0 %9026
    %v9028 = vadd.f32 %v8838, %v8839
    %9029 = vadd.xlane.f32.xlu0 %v9028
    %v9030 = vpop.xlane.xlu0 %9029
    %v9031 = vadd.f32 %v8840, %v8841
    %9032 = vadd.xlane.f32.xlu0 %v9031
    %v9033 = vpop.xlane.xlu0 %9032
    %v9034 = vmul.f32 %v8524, 0.00390625
    %v9035 = vmul.f32 %v8527, 0.00390625
    %v9036 = vmul.f32 %v8530, 0.00390625
    %v9037 = vmul.f32 %v8533, 0.00390625
    %v9038 = vmul.f32 %v8536, 0.00390625
    %v9039 = vmul.f32 %v8539, 0.00390625
    %v9040 = vmul.f32 %v8542, 0.00390625
    %v9041 = vmul.f32 %v8545, 0.00390625
    %v9042 = vmul.f32 %v8548, 0.00390625
    %v9043 = vmul.f32 %v8551, 0.00390625
    %v9044 = vmul.f32 %v8554, 0.00390625
    %v9045 = vmul.f32 %v8557, 0.00390625
    %v9046 = vmul.f32 %v8560, 0.00390625
    %v9047 = vmul.f32 %v8563, 0.00390625
    %v9048 = vmul.f32 %v8566, 0.00390625
    %v9049 = vmul.f32 %v8569, 0.00390625
    %v9050 = vmul.f32 %v8572, 0.00390625
    %v9051 = vmul.f32 %v8575, 0.00390625
    %v9052 = vmul.f32 %v8578, 0.00390625
    %v9053 = vmul.f32 %v8581, 0.00390625
    %v9054 = vmul.f32 %v8584, 0.00390625
    %v9055 = vmul.f32 %v8587, 0.00390625
    %v9056 = vmul.f32 %v8590, 0.00390625
    %v9057 = vmul.f32 %v8593, 0.00390625
    %v9058 = vmul.f32 %v8596, 0.00390625
    %v9059 = vmul.f32 %v8599, 0.00390625
    %v9060 = vmul.f32 %v8602, 0.00390625
    %v9061 = vmul.f32 %v8605, 0.00390625
    %v9062 = vmul.f32 %v8608, 0.00390625
    %v9063 = vmul.f32 %v8611, 0.00390625
    %v9064 = vmul.f32 %v8614, 0.00390625
    %v9065 = vmul.f32 %v8617, 0.00390625
    %v9066 = vmul.f32 %v8620, 0.00390625
    %v9067 = vmul.f32 %v8623, 0.00390625
    %v9068 = vmul.f32 %v8626, 0.00390625
    %v9069 = vmul.f32 %v8629, 0.00390625
    %v9070 = vmul.f32 %v8632, 0.00390625
    %v9071 = vmul.f32 %v8635, 0.00390625
    %v9072 = vmul.f32 %v8638, 0.00390625
    %v9073 = vmul.f32 %v8641, 0.00390625
    %v9074 = vmul.f32 %v8644, 0.00390625
    %v9075 = vmul.f32 %v8647, 0.00390625
    %v9076 = vmul.f32 %v8650, 0.00390625
    %v9077 = vmul.f32 %v8653, 0.00390625
    %v9078 = vmul.f32 %v8656, 0.00390625
    %v9079 = vmul.f32 %v8659, 0.00390625
    %v9080 = vmul.f32 %v8662, 0.00390625
    %v9081 = vmul.f32 %v8665, 0.00390625
    %v9082 = vmul.f32 %v8668, 0.00390625
    %v9083 = vmul.f32 %v8671, 0.00390625
    %v9084 = vmul.f32 %v8674, 0.00390625
    %v9085 = vmul.f32 %v8677, 0.00390625
    %v9086 = vmul.f32 %v8680, 0.00390625
    %v9087 = vmul.f32 %v8683, 0.00390625
    %v9088 = vmul.f32 %v8686, 0.00390625
    %v9089 = vmul.f32 %v8689, 0.00390625
    %v9090 = vmul.f32 %v8692, 0.00390625
    %v9091 = vmul.f32 %v8695, 0.00390625
    %v9092 = vmul.f32 %v8698, 0.00390625
    %v9093 = vmul.f32 %v8701, 0.00390625
    %v9094 = vmul.f32 %v8704, 0.00390625
    %v9095 = vmul.f32 %v8707, 0.00390625
    %v9096 = vmul.f32 %v8710, 0.00390625
    %v9097 = vmul.f32 %v8713, 0.00390625
    %v9098 = vmul.f32 %v8844, 0.00390625
    %v9099 = vmul.f32 %v8847, 0.00390625
    %v9100 = vmul.f32 %v8850, 0.00390625
    %v9101 = vmul.f32 %v8853, 0.00390625
    %v9102 = vmul.f32 %v8856, 0.00390625
    %v9103 = vmul.f32 %v8859, 0.00390625
    %v9104 = vmul.f32 %v8862, 0.00390625
    %v9105 = vmul.f32 %v8865, 0.00390625
    %v9106 = vmul.f32 %v8868, 0.00390625
    %v9107 = vmul.f32 %v8871, 0.00390625
    %v9108 = vmul.f32 %v8874, 0.00390625
    %v9109 = vmul.f32 %v8877, 0.00390625
    %v9110 = vmul.f32 %v8880, 0.00390625
    %v9111 = vmul.f32 %v8883, 0.00390625
    %v9112 = vmul.f32 %v8886, 0.00390625
    %v9113 = vmul.f32 %v8889, 0.00390625
    %v9114 = vmul.f32 %v8892, 0.00390625
    %v9115 = vmul.f32 %v8895, 0.00390625
    %v9116 = vmul.f32 %v8898, 0.00390625
    %v9117 = vmul.f32 %v8901, 0.00390625
    %v9118 = vmul.f32 %v8904, 0.00390625
    %v9119 = vmul.f32 %v8907, 0.00390625
    %v9120 = vmul.f32 %v8910, 0.00390625
    %v9121 = vmul.f32 %v8913, 0.00390625
    %v9122 = vmul.f32 %v8916, 0.00390625
    %v9123 = vmul.f32 %v8919, 0.00390625
    %v9124 = vmul.f32 %v8922, 0.00390625
    %v9125 = vmul.f32 %v8925, 0.00390625
    %v9126 = vmul.f32 %v8928, 0.00390625
    %v9127 = vmul.f32 %v8931, 0.00390625
    %v9128 = vmul.f32 %v8934, 0.00390625
    %v9129 = vmul.f32 %v8937, 0.00390625
    %v9130 = vmul.f32 %v8940, 0.00390625
    %v9131 = vmul.f32 %v8943, 0.00390625
    %v9132 = vmul.f32 %v8946, 0.00390625
    %v9133 = vmul.f32 %v8949, 0.00390625
    %v9134 = vmul.f32 %v8952, 0.00390625
    %v9135 = vmul.f32 %v8955, 0.00390625
    %v9136 = vmul.f32 %v8958, 0.00390625
    %v9137 = vmul.f32 %v8961, 0.00390625
    %v9138 = vmul.f32 %v8964, 0.00390625
    %v9139 = vmul.f32 %v8967, 0.00390625
    %v9140 = vmul.f32 %v8970, 0.00390625
    %v9141 = vmul.f32 %v8973, 0.00390625
    %v9142 = vmul.f32 %v8976, 0.00390625
    %v9143 = vmul.f32 %v8979, 0.00390625
    %v9144 = vmul.f32 %v8982, 0.00390625
    %v9145 = vmul.f32 %v8985, 0.00390625
    %v9146 = vmul.f32 %v8988, 0.00390625
    %v9147 = vmul.f32 %v8991, 0.00390625
    %v9148 = vmul.f32 %v8994, 0.00390625
    %v9149 = vmul.f32 %v8997, 0.00390625
    %v9150 = vmul.f32 %v9000, 0.00390625
    %v9151 = vmul.f32 %v9003, 0.00390625
    %v9152 = vmul.f32 %v9006, 0.00390625
    %v9153 = vmul.f32 %v9009, 0.00390625
    %v9154 = vmul.f32 %v9012, 0.00390625
    %v9155 = vmul.f32 %v9015, 0.00390625
    %v9156 = vmul.f32 %v9018, 0.00390625
    %v9157 = vmul.f32 %v9021, 0.00390625
    %v9158 = vmul.f32 %v9024, 0.00390625
    %v9159 = vmul.f32 %v9027, 0.00390625
    %v9160 = vmul.f32 %v9030, 0.00390625
    %v9161 = vmul.f32 %v9033, 0.00390625
    %v9162 = vmul.f32 %v9034, %v9034
    %v9163 = vmul.f32 %v9035, %v9035
    %v9164 = vmul.f32 %v9036, %v9036
    %v9165 = vmul.f32 %v9037, %v9037
    %v9166 = vmul.f32 %v9038, %v9038
    %v9167 = vmul.f32 %v9039, %v9039
    %v9168 = vmul.f32 %v9040, %v9040
    %v9169 = vmul.f32 %v9041, %v9041
    %v9170 = vmul.f32 %v9042, %v9042
    %v9171 = vmul.f32 %v9043, %v9043
    %v9172 = vmul.f32 %v9044, %v9044
    %v9173 = vmul.f32 %v9045, %v9045
    %v9174 = vmul.f32 %v9046, %v9046
    %v9175 = vmul.f32 %v9047, %v9047
    %v9176 = vmul.f32 %v9048, %v9048
    %v9177 = vmul.f32 %v9049, %v9049
    %v9178 = vmul.f32 %v9050, %v9050
    %v9179 = vmul.f32 %v9051, %v9051
    %v9180 = vmul.f32 %v9052, %v9052
    %v9181 = vmul.f32 %v9053, %v9053
    %v9182 = vmul.f32 %v9054, %v9054
    %v9183 = vmul.f32 %v9055, %v9055
    %v9184 = vmul.f32 %v9056, %v9056
    %v9185 = vmul.f32 %v9057, %v9057
    %v9186 = vmul.f32 %v9058, %v9058
    %v9187 = vmul.f32 %v9059, %v9059
    %v9188 = vmul.f32 %v9060, %v9060
    %v9189 = vmul.f32 %v9061, %v9061
    %v9190 = vmul.f32 %v9062, %v9062
    %v9191 = vmul.f32 %v9063, %v9063
    %v9192 = vmul.f32 %v9064, %v9064
    %v9193 = vmul.f32 %v9065, %v9065
    %v9194 = vmul.f32 %v9066, %v9066
    %v9195 = vmul.f32 %v9067, %v9067
    %v9196 = vmul.f32 %v9068, %v9068
    %v9197 = vmul.f32 %v9069, %v9069
    %v9198 = vmul.f32 %v9070, %v9070
    %v9199 = vmul.f32 %v9071, %v9071
    %v9200 = vmul.f32 %v9072, %v9072
    %v9201 = vmul.f32 %v9073, %v9073
    %v9202 = vmul.f32 %v9074, %v9074
    %v9203 = vmul.f32 %v9075, %v9075
    %v9204 = vmul.f32 %v9076, %v9076
    %v9205 = vmul.f32 %v9077, %v9077
    %v9206 = vmul.f32 %v9078, %v9078
    %v9207 = vmul.f32 %v9079, %v9079
    %v9208 = vmul.f32 %v9080, %v9080
    %v9209 = vmul.f32 %v9081, %v9081
    %v9210 = vmul.f32 %v9082, %v9082
    %v9211 = vmul.f32 %v9083, %v9083
    %v9212 = vmul.f32 %v9084, %v9084
    %v9213 = vmul.f32 %v9085, %v9085
    %v9214 = vmul.f32 %v9086, %v9086
    %v9215 = vmul.f32 %v9087, %v9087
    %v9216 = vmul.f32 %v9088, %v9088
    %v9217 = vmul.f32 %v9089, %v9089
    %v9218 = vmul.f32 %v9090, %v9090
    %v9219 = vmul.f32 %v9091, %v9091
    %v9220 = vmul.f32 %v9092, %v9092
    %v9221 = vmul.f32 %v9093, %v9093
    %v9222 = vmul.f32 %v9094, %v9094
    %v9223 = vmul.f32 %v9095, %v9095
    %v9224 = vmul.f32 %v9096, %v9096
    %v9225 = vmul.f32 %v9097, %v9097
    %v9226 = vsub.f32 %v9098, %v9162
    %v9227 = vsub.f32 %v9099, %v9163
    %v9228 = vsub.f32 %v9100, %v9164
    %v9229 = vsub.f32 %v9101, %v9165
    %v9230 = vsub.f32 %v9102, %v9166
    %v9231 = vsub.f32 %v9103, %v9167
    %v9232 = vsub.f32 %v9104, %v9168
    %v9233 = vsub.f32 %v9105, %v9169
    %v9234 = vsub.f32 %v9106, %v9170
    %v9235 = vsub.f32 %v9107, %v9171
    %v9236 = vsub.f32 %v9108, %v9172
    %v9237 = vsub.f32 %v9109, %v9173
    %v9238 = vsub.f32 %v9110, %v9174
    %v9239 = vsub.f32 %v9111, %v9175
    %v9240 = vsub.f32 %v9112, %v9176
    %v9241 = vsub.f32 %v9113, %v9177
    %v9242 = vsub.f32 %v9114, %v9178
    %v9243 = vsub.f32 %v9115, %v9179
    %v9244 = vsub.f32 %v9116, %v9180
    %v9245 = vsub.f32 %v9117, %v9181
    %v9246 = vsub.f32 %v9118, %v9182
    %v9247 = vsub.f32 %v9119, %v9183
    %v9248 = vsub.f32 %v9120, %v9184
    %v9249 = vsub.f32 %v9121, %v9185
    %v9250 = vsub.f32 %v9122, %v9186
    %v9251 = vsub.f32 %v9123, %v9187
    %v9252 = vsub.f32 %v9124, %v9188
    %v9253 = vsub.f32 %v9125, %v9189
    %v9254 = vsub.f32 %v9126, %v9190
    %v9255 = vsub.f32 %v9127, %v9191
    %v9256 = vsub.f32 %v9128, %v9192
    %v9257 = vsub.f32 %v9129, %v9193
    %v9258 = vsub.f32 %v9130, %v9194
    %v9259 = vsub.f32 %v9131, %v9195
    %v9260 = vsub.f32 %v9132, %v9196
    %v9261 = vsub.f32 %v9133, %v9197
    %v9262 = vsub.f32 %v9134, %v9198
    %v9263 = vsub.f32 %v9135, %v9199
    %v9264 = vsub.f32 %v9136, %v9200
    %v9265 = vsub.f32 %v9137, %v9201
    %v9266 = vsub.f32 %v9138, %v9202
    %v9267 = vsub.f32 %v9139, %v9203
    %v9268 = vsub.f32 %v9140, %v9204
    %v9269 = vsub.f32 %v9141, %v9205
    %v9270 = vsub.f32 %v9142, %v9206
    %v9271 = vsub.f32 %v9143, %v9207
    %v9272 = vsub.f32 %v9144, %v9208
    %v9273 = vsub.f32 %v9145, %v9209
    %v9274 = vsub.f32 %v9146, %v9210
    %v9275 = vsub.f32 %v9147, %v9211
    %v9276 = vsub.f32 %v9148, %v9212
    %v9277 = vsub.f32 %v9149, %v9213
    %v9278 = vsub.f32 %v9150, %v9214
    %v9279 = vsub.f32 %v9151, %v9215
    %v9280 = vsub.f32 %v9152, %v9216
    %v9281 = vsub.f32 %v9153, %v9217
    %v9282 = vsub.f32 %v9154, %v9218
    %v9283 = vsub.f32 %v9155, %v9219
    %v9284 = vsub.f32 %v9156, %v9220
    %v9285 = vsub.f32 %v9157, %v9221
    %v9286 = vsub.f32 %v9158, %v9222
    %v9287 = vsub.f32 %v9159, %v9223
    %v9288 = vsub.f32 %v9160, %v9224
    %v9289 = vsub.f32 %v9161, %v9225
    %v9290 = vmax.f32 %v9226, 0.0
    %v9291 = vmax.f32 %v9227, 0.0
    %v9292 = vmax.f32 %v9228, 0.0
    %v9293 = vmax.f32 %v9229, 0.0
    %v9294 = vmax.f32 %v9230, 0.0
    %v9295 = vmax.f32 %v9231, 0.0
    %v9296 = vmax.f32 %v9232, 0.0
    %v9297 = vmax.f32 %v9233, 0.0
    %v9298 = vmax.f32 %v9234, 0.0
    %v9299 = vmax.f32 %v9235, 0.0
    %v9300 = vmax.f32 %v9236, 0.0
    %v9301 = vmax.f32 %v9237, 0.0
    %v9302 = vmax.f32 %v9238, 0.0
    %v9303 = vmax.f32 %v9239, 0.0
    %v9304 = vmax.f32 %v9240, 0.0
    %v9305 = vmax.f32 %v9241, 0.0
    %v9306 = vmax.f32 %v9242, 0.0
    %v9307 = vmax.f32 %v9243, 0.0
    %v9308 = vmax.f32 %v9244, 0.0
    %v9309 = vmax.f32 %v9245, 0.0
    %v9310 = vmax.f32 %v9246, 0.0
    %v9311 = vmax.f32 %v9247, 0.0
    %v9312 = vmax.f32 %v9248, 0.0
    %v9313 = vmax.f32 %v9249, 0.0
    %v9314 = vmax.f32 %v9250, 0.0
    %v9315 = vmax.f32 %v9251, 0.0
    %v9316 = vmax.f32 %v9252, 0.0
    %v9317 = vmax.f32 %v9253, 0.0
    %v9318 = vmax.f32 %v9254, 0.0
    %v9319 = vmax.f32 %v9255, 0.0
    %v9320 = vmax.f32 %v9256, 0.0
    %v9321 = vmax.f32 %v9257, 0.0
    %v9322 = vmax.f32 %v9258, 0.0
    %v9323 = vmax.f32 %v9259, 0.0
    %v9324 = vmax.f32 %v9260, 0.0
    %v9325 = vmax.f32 %v9261, 0.0
    %v9326 = vmax.f32 %v9262, 0.0
    %v9327 = vmax.f32 %v9263, 0.0
    %v9328 = vmax.f32 %v9264, 0.0
    %v9329 = vmax.f32 %v9265, 0.0
    %v9330 = vmax.f32 %v9266, 0.0
    %v9331 = vmax.f32 %v9267, 0.0
    %v9332 = vmax.f32 %v9268, 0.0
    %v9333 = vmax.f32 %v9269, 0.0
    %v9334 = vmax.f32 %v9270, 0.0
    %v9335 = vmax.f32 %v9271, 0.0
    %v9336 = vmax.f32 %v9272, 0.0
    %v9337 = vmax.f32 %v9273, 0.0
    %v9338 = vmax.f32 %v9274, 0.0
    %v9339 = vmax.f32 %v9275, 0.0
    %v9340 = vmax.f32 %v9276, 0.0
    %v9341 = vmax.f32 %v9277, 0.0
    %v9342 = vmax.f32 %v9278, 0.0
    %v9343 = vmax.f32 %v9279, 0.0
    %v9344 = vmax.f32 %v9280, 0.0
    %v9345 = vmax.f32 %v9281, 0.0
    %v9346 = vmax.f32 %v9282, 0.0
    %v9347 = vmax.f32 %v9283, 0.0
    %v9348 = vmax.f32 %v9284, 0.0
    %v9349 = vmax.f32 %v9285, 0.0
    %v9350 = vmax.f32 %v9286, 0.0
    %v9351 = vmax.f32 %v9287, 0.0
    %v9352 = vmax.f32 %v9288, 0.0
    %v9353 = vmax.f32 %v9289, 0.0
    %v9354 = vsub.f32 %v8394, %v9034
    %v9355 = vsub.f32 %v8395, %v9034
    %v9356 = vsub.f32 %v8396, %v9035
    %v9357 = vsub.f32 %v8397, %v9035
    %v9358 = vsub.f32 %v8398, %v9036
    %v9359 = vsub.f32 %v8399, %v9036
    %v9360 = vsub.f32 %v8400, %v9037
    %v9361 = vsub.f32 %v8401, %v9037
    %v9362 = vsub.f32 %v8402, %v9038
    %v9363 = vsub.f32 %v8403, %v9038
    %v9364 = vsub.f32 %v8404, %v9039
    %v9365 = vsub.f32 %v8405, %v9039
    %v9366 = vsub.f32 %v8406, %v9040
    %v9367 = vsub.f32 %v8407, %v9040
    %v9368 = vsub.f32 %v8408, %v9041
    %v9369 = vsub.f32 %v8409, %v9041
    %v9370 = vsub.f32 %v8410, %v9042
    %v9371 = vsub.f32 %v8411, %v9042
    %v9372 = vsub.f32 %v8412, %v9043
    %v9373 = vsub.f32 %v8413, %v9043
    %v9374 = vsub.f32 %v8414, %v9044
    %v9375 = vsub.f32 %v8415, %v9044
    %v9376 = vsub.f32 %v8416, %v9045
    %v9377 = vsub.f32 %v8417, %v9045
    %v9378 = vsub.f32 %v8418, %v9046
    %v9379 = vsub.f32 %v8419, %v9046
    %v9380 = vsub.f32 %v8420, %v9047
    %v9381 = vsub.f32 %v8421, %v9047
    %v9382 = vsub.f32 %v8422, %v9048
    %v9383 = vsub.f32 %v8423, %v9048
    %v9384 = vsub.f32 %v8424, %v9049
    %v9385 = vsub.f32 %v8425, %v9049
    %v9386 = vsub.f32 %v8426, %v9050
    %v9387 = vsub.f32 %v8427, %v9050
    %v9388 = vsub.f32 %v8428, %v9051
    %v9389 = vsub.f32 %v8429, %v9051
    %v9390 = vsub.f32 %v8430, %v9052
    %v9391 = vsub.f32 %v8431, %v9052
    %v9392 = vsub.f32 %v8432, %v9053
    %v9393 = vsub.f32 %v8433, %v9053
    %v9394 = vsub.f32 %v8434, %v9054
    %v9395 = vsub.f32 %v8435, %v9054
    %v9396 = vsub.f32 %v8436, %v9055
    %v9397 = vsub.f32 %v8437, %v9055
    %v9398 = vsub.f32 %v8438, %v9056
    %v9399 = vsub.f32 %v8439, %v9056
    %v9400 = vsub.f32 %v8440, %v9057
    %v9401 = vsub.f32 %v8441, %v9057
    %v9402 = vsub.f32 %v8442, %v9058
    %v9403 = vsub.f32 %v8443, %v9058
    %v9404 = vsub.f32 %v8444, %v9059
    %v9405 = vsub.f32 %v8445, %v9059
    %v9406 = vsub.f32 %v8446, %v9060
    %v9407 = vsub.f32 %v8447, %v9060
    %v9408 = vsub.f32 %v8448, %v9061
    %v9409 = vsub.f32 %v8449, %v9061
    %v9410 = vsub.f32 %v8450, %v9062
    %v9411 = vsub.f32 %v8451, %v9062
    %v9412 = vsub.f32 %v8452, %v9063
    %v9413 = vsub.f32 %v8453, %v9063
    %v9414 = vsub.f32 %v8454, %v9064
    %v9415 = vsub.f32 %v8455, %v9064
    %v9416 = vsub.f32 %v8456, %v9065
    %v9417 = vsub.f32 %v8457, %v9065
    %v9418 = vsub.f32 %v8458, %v9066
    %v9419 = vsub.f32 %v8459, %v9066
    %v9420 = vsub.f32 %v8460, %v9067
    %v9421 = vsub.f32 %v8461, %v9067
    %v9422 = vsub.f32 %v8462, %v9068
    %v9423 = vsub.f32 %v8463, %v9068
    %v9424 = vsub.f32 %v8464, %v9069
    %v9425 = vsub.f32 %v8465, %v9069
    %v9426 = vsub.f32 %v8466, %v9070
    %v9427 = vsub.f32 %v8467, %v9070
    %v9428 = vsub.f32 %v8468, %v9071
    %v9429 = vsub.f32 %v8469, %v9071
    %v9430 = vsub.f32 %v8470, %v9072
    %v9431 = vsub.f32 %v8471, %v9072
    %v9432 = vsub.f32 %v8472, %v9073
    %v9433 = vsub.f32 %v8473, %v9073
    %v9434 = vsub.f32 %v8474, %v9074
    %v9435 = vsub.f32 %v8475, %v9074
    %v9436 = vsub.f32 %v8476, %v9075
    %v9437 = vsub.f32 %v8477, %v9075
    %v9438 = vsub.f32 %v8478, %v9076
    %v9439 = vsub.f32 %v8479, %v9076
    %v9440 = vsub.f32 %v8480, %v9077
    %v9441 = vsub.f32 %v8481, %v9077
    %v9442 = vsub.f32 %v8482, %v9078
    %v9443 = vsub.f32 %v8483, %v9078
    %v9444 = vsub.f32 %v8484, %v9079
    %v9445 = vsub.f32 %v8485, %v9079
    %v9446 = vsub.f32 %v8486, %v9080
    %v9447 = vsub.f32 %v8487, %v9080
    %v9448 = vsub.f32 %v8488, %v9081
    %v9449 = vsub.f32 %v8489, %v9081
    %v9450 = vsub.f32 %v8490, %v9082
    %v9451 = vsub.f32 %v8491, %v9082
    %v9452 = vsub.f32 %v8492, %v9083
    %v9453 = vsub.f32 %v8493, %v9083
    %v9454 = vsub.f32 %v8494, %v9084
    %v9455 = vsub.f32 %v8495, %v9084
    %v9456 = vsub.f32 %v8496, %v9085
    %v9457 = vsub.f32 %v8497, %v9085
    %v9458 = vsub.f32 %v8498, %v9086
    %v9459 = vsub.f32 %v8499, %v9086
    %v9460 = vsub.f32 %v8500, %v9087
    %v9461 = vsub.f32 %v8501, %v9087
    %v9462 = vsub.f32 %v8502, %v9088
    %v9463 = vsub.f32 %v8503, %v9088
    %v9464 = vsub.f32 %v8504, %v9089
    %v9465 = vsub.f32 %v8505, %v9089
    %v9466 = vsub.f32 %v8506, %v9090
    %v9467 = vsub.f32 %v8507, %v9090
    %v9468 = vsub.f32 %v8508, %v9091
    %v9469 = vsub.f32 %v8509, %v9091
    %v9470 = vsub.f32 %v8510, %v9092
    %v9471 = vsub.f32 %v8511, %v9092
    %v9472 = vsub.f32 %v8512, %v9093
    %v9473 = vsub.f32 %v8513, %v9093
    %v9474 = vsub.f32 %v8514, %v9094
    %v9475 = vsub.f32 %v8515, %v9094
    %v9476 = vsub.f32 %v8516, %v9095
    %v9477 = vsub.f32 %v8517, %v9095
    %v9478 = vsub.f32 %v8518, %v9096
    %v9479 = vsub.f32 %v8519, %v9096
    %v9480 = vsub.f32 %v8520, %v9097
    %v9481 = vsub.f32 %v8521, %v9097
    %v9482 = vadd.f32 %v9290, 1e-05
    %v9483 = vadd.f32 %v9291, 1e-05
    %v9484 = vadd.f32 %v9292, 1e-05
    %v9485 = vadd.f32 %v9293, 1e-05
    %v9486 = vadd.f32 %v9294, 1e-05
    %v9487 = vadd.f32 %v9295, 1e-05
    %v9488 = vadd.f32 %v9296, 1e-05
    %v9489 = vadd.f32 %v9297, 1e-05
    %v9490 = vadd.f32 %v9298, 1e-05
    %v9491 = vadd.f32 %v9299, 1e-05
    %v9492 = vadd.f32 %v9300, 1e-05
    %v9493 = vadd.f32 %v9301, 1e-05
    %v9494 = vadd.f32 %v9302, 1e-05
    %v9495 = vadd.f32 %v9303, 1e-05
    %v9496 = vadd.f32 %v9304, 1e-05
    %v9497 = vadd.f32 %v9305, 1e-05
    %v9498 = vadd.f32 %v9306, 1e-05
    %v9499 = vadd.f32 %v9307, 1e-05
    %v9500 = vadd.f32 %v9308, 1e-05
    %v9501 = vadd.f32 %v9309, 1e-05
    %v9502 = vadd.f32 %v9310, 1e-05
    %v9503 = vadd.f32 %v9311, 1e-05
    %v9504 = vadd.f32 %v9312, 1e-05
    %v9505 = vadd.f32 %v9313, 1e-05
    %v9506 = vadd.f32 %v9314, 1e-05
    %v9507 = vadd.f32 %v9315, 1e-05
    %v9508 = vadd.f32 %v9316, 1e-05
    %v9509 = vadd.f32 %v9317, 1e-05
    %v9510 = vadd.f32 %v9318, 1e-05
    %v9511 = vadd.f32 %v9319, 1e-05
    %v9512 = vadd.f32 %v9320, 1e-05
    %v9513 = vadd.f32 %v9321, 1e-05
    %v9514 = vadd.f32 %v9322, 1e-05
    %v9515 = vadd.f32 %v9323, 1e-05
    %v9516 = vadd.f32 %v9324, 1e-05
    %v9517 = vadd.f32 %v9325, 1e-05
    %v9518 = vadd.f32 %v9326, 1e-05
    %v9519 = vadd.f32 %v9327, 1e-05
    %v9520 = vadd.f32 %v9328, 1e-05
    %v9521 = vadd.f32 %v9329, 1e-05
    %v9522 = vadd.f32 %v9330, 1e-05
    %v9523 = vadd.f32 %v9331, 1e-05
    %v9524 = vadd.f32 %v9332, 1e-05
    %v9525 = vadd.f32 %v9333, 1e-05
    %v9526 = vadd.f32 %v9334, 1e-05
    %v9527 = vadd.f32 %v9335, 1e-05
    %v9528 = vadd.f32 %v9336, 1e-05
    %v9529 = vadd.f32 %v9337, 1e-05
    %v9530 = vadd.f32 %v9338, 1e-05
    %v9531 = vadd.f32 %v9339, 1e-05
    %v9532 = vadd.f32 %v9340, 1e-05
    %v9533 = vadd.f32 %v9341, 1e-05
    %v9534 = vadd.f32 %v9342, 1e-05
    %v9535 = vadd.f32 %v9343, 1e-05
    %v9536 = vadd.f32 %v9344, 1e-05
    %v9537 = vadd.f32 %v9345, 1e-05
    %v9538 = vadd.f32 %v9346, 1e-05
    %v9539 = vadd.f32 %v9347, 1e-05
    %v9540 = vadd.f32 %v9348, 1e-05
    %v9541 = vadd.f32 %v9349, 1e-05
    %v9542 = vadd.f32 %v9350, 1e-05
    %v9543 = vadd.f32 %v9351, 1e-05
    %v9544 = vadd.f32 %v9352, 1e-05
    %v9545 = vadd.f32 %v9353, 1e-05
    %v9546 = vrsqrt.pop %v9482
    %v9547 = vmul.f32 %v9546, %v9482
    %v9548 = vmul.f32 %v9547, %v9546
    %v9549 = vmul.f32 0.5, %v9548
    %v9550 = vsub.f32 1.5, %v9549
    %v9551 = vmul.f32 %v9546, %v9550
    %vm9552 = vweird.f32 %v9482
    %vm9553 = vweird.f32 %v9546
    %vm9554 = vmor %vm9552, %vm9553
    %v9555 = vsel %vm9554, %v9546, %v9551
    %v9556 = vrsqrt.pop %v9483
    %v9557 = vmul.f32 %v9556, %v9483
    %v9558 = vmul.f32 %v9557, %v9556
    %v9559 = vmul.f32 0.5, %v9558
    %v9560 = vsub.f32 1.5, %v9559
    %v9561 = vmul.f32 %v9556, %v9560
    %vm9562 = vweird.f32 %v9483
    %vm9563 = vweird.f32 %v9556
    %vm9564 = vmor %vm9562, %vm9563
    %v9565 = vsel %vm9564, %v9556, %v9561
    %v9566 = vrsqrt.pop %v9484
    %v9567 = vmul.f32 %v9566, %v9484
    %v9568 = vmul.f32 %v9567, %v9566
    %v9569 = vmul.f32 0.5, %v9568
    %v9570 = vsub.f32 1.5, %v9569
    %v9571 = vmul.f32 %v9566, %v9570
    %vm9572 = vweird.f32 %v9484
    %vm9573 = vweird.f32 %v9566
    %vm9574 = vmor %vm9572, %vm9573
    %v9575 = vsel %vm9574, %v9566, %v9571
    %v9576 = vrsqrt.pop %v9485
    %v9577 = vmul.f32 %v9576, %v9485
    %v9578 = vmul.f32 %v9577, %v9576
    %v9579 = vmul.f32 0.5, %v9578
    %v9580 = vsub.f32 1.5, %v9579
    %v9581 = vmul.f32 %v9576, %v9580
    %vm9582 = vweird.f32 %v9485
    %vm9583 = vweird.f32 %v9576
    %vm9584 = vmor %vm9582, %vm9583
    %v9585 = vsel %vm9584, %v9576, %v9581
    %v9586 = vrsqrt.pop %v9486
    %v9587 = vmul.f32 %v9586, %v9486
    %v9588 = vmul.f32 %v9587, %v9586
    %v9589 = vmul.f32 0.5, %v9588
    %v9590 = vsub.f32 1.5, %v9589
    %v9591 = vmul.f32 %v9586, %v9590
    %vm9592 = vweird.f32 %v9486
    %vm9593 = vweird.f32 %v9586
    %vm9594 = vmor %vm9592, %vm9593
    %v9595 = vsel %vm9594, %v9586, %v9591
    %v9596 = vrsqrt.pop %v9487
    %v9597 = vmul.f32 %v9596, %v9487
    %v9598 = vmul.f32 %v9597, %v9596
    %v9599 = vmul.f32 0.5, %v9598
    %v9600 = vsub.f32 1.5, %v9599
    %v9601 = vmul.f32 %v9596, %v9600
    %vm9602 = vweird.f32 %v9487
    %vm9603 = vweird.f32 %v9596
    %vm9604 = vmor %vm9602, %vm9603
    %v9605 = vsel %vm9604, %v9596, %v9601
    %v9606 = vrsqrt.pop %v9488
    %v9607 = vmul.f32 %v9606, %v9488
    %v9608 = vmul.f32 %v9607, %v9606
    %v9609 = vmul.f32 0.5, %v9608
    %v9610 = vsub.f32 1.5, %v9609
    %v9611 = vmul.f32 %v9606, %v9610
    %vm9612 = vweird.f32 %v9488
    %vm9613 = vweird.f32 %v9606
    %vm9614 = vmor %vm9612, %vm9613
    %v9615 = vsel %vm9614, %v9606, %v9611
    %v9616 = vrsqrt.pop %v9489
    %v9617 = vmul.f32 %v9616, %v9489
    %v9618 = vmul.f32 %v9617, %v9616
    %v9619 = vmul.f32 0.5, %v9618
    %v9620 = vsub.f32 1.5, %v9619
    %v9621 = vmul.f32 %v9616, %v9620
    %vm9622 = vweird.f32 %v9489
    %vm9623 = vweird.f32 %v9616
    %vm9624 = vmor %vm9622, %vm9623
    %v9625 = vsel %vm9624, %v9616, %v9621
    %v9626 = vrsqrt.pop %v9490
    %v9627 = vmul.f32 %v9626, %v9490
    %v9628 = vmul.f32 %v9627, %v9626
    %v9629 = vmul.f32 0.5, %v9628
    %v9630 = vsub.f32 1.5, %v9629
    %v9631 = vmul.f32 %v9626, %v9630
    %vm9632 = vweird.f32 %v9490
    %vm9633 = vweird.f32 %v9626
    %vm9634 = vmor %vm9632, %vm9633
    %v9635 = vsel %vm9634, %v9626, %v9631
    %v9636 = vrsqrt.pop %v9491
    %v9637 = vmul.f32 %v9636, %v9491
    %v9638 = vmul.f32 %v9637, %v9636
    %v9639 = vmul.f32 0.5, %v9638
    %v9640 = vsub.f32 1.5, %v9639
    %v9641 = vmul.f32 %v9636, %v9640
    %vm9642 = vweird.f32 %v9491
    %vm9643 = vweird.f32 %v9636
    %vm9644 = vmor %vm9642, %vm9643
    %v9645 = vsel %vm9644, %v9636, %v9641
    %v9646 = vrsqrt.pop %v9492
    %v9647 = vmul.f32 %v9646, %v9492
    %v9648 = vmul.f32 %v9647, %v9646
    %v9649 = vmul.f32 0.5, %v9648
    %v9650 = vsub.f32 1.5, %v9649
    %v9651 = vmul.f32 %v9646, %v9650
    %vm9652 = vweird.f32 %v9492
    %vm9653 = vweird.f32 %v9646
    %vm9654 = vmor %vm9652, %vm9653
    %v9655 = vsel %vm9654, %v9646, %v9651
    %v9656 = vrsqrt.pop %v9493
    %v9657 = vmul.f32 %v9656, %v9493
    %v9658 = vmul.f32 %v9657, %v9656
    %v9659 = vmul.f32 0.5, %v9658
    %v9660 = vsub.f32 1.5, %v9659
    %v9661 = vmul.f32 %v9656, %v9660
    %vm9662 = vweird.f32 %v9493
    %vm9663 = vweird.f32 %v9656
    %vm9664 = vmor %vm9662, %vm9663
    %v9665 = vsel %vm9664, %v9656, %v9661
    %v9666 = vrsqrt.pop %v9494
    %v9667 = vmul.f32 %v9666, %v9494
    %v9668 = vmul.f32 %v9667, %v9666
    %v9669 = vmul.f32 0.5, %v9668
    %v9670 = vsub.f32 1.5, %v9669
    %v9671 = vmul.f32 %v9666, %v9670
    %vm9672 = vweird.f32 %v9494
    %vm9673 = vweird.f32 %v9666
    %vm9674 = vmor %vm9672, %vm9673
    %v9675 = vsel %vm9674, %v9666, %v9671
    %v9676 = vrsqrt.pop %v9495
    %v9677 = vmul.f32 %v9676, %v9495
    %v9678 = vmul.f32 %v9677, %v9676
    %v9679 = vmul.f32 0.5, %v9678
    %v9680 = vsub.f32 1.5, %v9679
    %v9681 = vmul.f32 %v9676, %v9680
    %vm9682 = vweird.f32 %v9495
    %vm9683 = vweird.f32 %v9676
    %vm9684 = vmor %vm9682, %vm9683
    %v9685 = vsel %vm9684, %v9676, %v9681
    %v9686 = vrsqrt.pop %v9496
    %v9687 = vmul.f32 %v9686, %v9496
    %v9688 = vmul.f32 %v9687, %v9686
    %v9689 = vmul.f32 0.5, %v9688
    %v9690 = vsub.f32 1.5, %v9689
    %v9691 = vmul.f32 %v9686, %v9690
    %vm9692 = vweird.f32 %v9496
    %vm9693 = vweird.f32 %v9686
    %vm9694 = vmor %vm9692, %vm9693
    %v9695 = vsel %vm9694, %v9686, %v9691
    %v9696 = vrsqrt.pop %v9497
    %v9697 = vmul.f32 %v9696, %v9497
    %v9698 = vmul.f32 %v9697, %v9696
    %v9699 = vmul.f32 0.5, %v9698
    %v9700 = vsub.f32 1.5, %v9699
    %v9701 = vmul.f32 %v9696, %v9700
    %vm9702 = vweird.f32 %v9497
    %vm9703 = vweird.f32 %v9696
    %vm9704 = vmor %vm9702, %vm9703
    %v9705 = vsel %vm9704, %v9696, %v9701
    %v9706 = vrsqrt.pop %v9498
    %v9707 = vmul.f32 %v9706, %v9498
    %v9708 = vmul.f32 %v9707, %v9706
    %v9709 = vmul.f32 0.5, %v9708
    %v9710 = vsub.f32 1.5, %v9709
    %v9711 = vmul.f32 %v9706, %v9710
    %vm9712 = vweird.f32 %v9498
    %vm9713 = vweird.f32 %v9706
    %vm9714 = vmor %vm9712, %vm9713
    %v9715 = vsel %vm9714, %v9706, %v9711
    %v9716 = vrsqrt.pop %v9499
    %v9717 = vmul.f32 %v9716, %v9499
    %v9718 = vmul.f32 %v9717, %v9716
    %v9719 = vmul.f32 0.5, %v9718
    %v9720 = vsub.f32 1.5, %v9719
    %v9721 = vmul.f32 %v9716, %v9720
    %vm9722 = vweird.f32 %v9499
    %vm9723 = vweird.f32 %v9716
    %vm9724 = vmor %vm9722, %vm9723
    %v9725 = vsel %vm9724, %v9716, %v9721
    %v9726 = vrsqrt.pop %v9500
    %v9727 = vmul.f32 %v9726, %v9500
    %v9728 = vmul.f32 %v9727, %v9726
    %v9729 = vmul.f32 0.5, %v9728
    %v9730 = vsub.f32 1.5, %v9729
    %v9731 = vmul.f32 %v9726, %v9730
    %vm9732 = vweird.f32 %v9500
    %vm9733 = vweird.f32 %v9726
    %vm9734 = vmor %vm9732, %vm9733
    %v9735 = vsel %vm9734, %v9726, %v9731
    %v9736 = vrsqrt.pop %v9501
    %v9737 = vmul.f32 %v9736, %v9501
    %v9738 = vmul.f32 %v9737, %v9736
    %v9739 = vmul.f32 0.5, %v9738
    %v9740 = vsub.f32 1.5, %v9739
    %v9741 = vmul.f32 %v9736, %v9740
    %vm9742 = vweird.f32 %v9501
    %vm9743 = vweird.f32 %v9736
    %vm9744 = vmor %vm9742, %vm9743
    %v9745 = vsel %vm9744, %v9736, %v9741
    %v9746 = vrsqrt.pop %v9502
    %v9747 = vmul.f32 %v9746, %v9502
    %v9748 = vmul.f32 %v9747, %v9746
    %v9749 = vmul.f32 0.5, %v9748
    %v9750 = vsub.f32 1.5, %v9749
    %v9751 = vmul.f32 %v9746, %v9750
    %vm9752 = vweird.f32 %v9502
    %vm9753 = vweird.f32 %v9746
    %vm9754 = vmor %vm9752, %vm9753
    %v9755 = vsel %vm9754, %v9746, %v9751
    %v9756 = vrsqrt.pop %v9503
    %v9757 = vmul.f32 %v9756, %v9503
    %v9758 = vmul.f32 %v9757, %v9756
    %v9759 = vmul.f32 0.5, %v9758
    %v9760 = vsub.f32 1.5, %v9759
    %v9761 = vmul.f32 %v9756, %v9760
    %vm9762 = vweird.f32 %v9503
    %vm9763 = vweird.f32 %v9756
    %vm9764 = vmor %vm9762, %vm9763
    %v9765 = vsel %vm9764, %v9756, %v9761
    %v9766 = vrsqrt.pop %v9504
    %v9767 = vmul.f32 %v9766, %v9504
    %v9768 = vmul.f32 %v9767, %v9766
    %v9769 = vmul.f32 0.5, %v9768
    %v9770 = vsub.f32 1.5, %v9769
    %v9771 = vmul.f32 %v9766, %v9770
    %vm9772 = vweird.f32 %v9504
    %vm9773 = vweird.f32 %v9766
    %vm9774 = vmor %vm9772, %vm9773
    %v9775 = vsel %vm9774, %v9766, %v9771
    %v9776 = vrsqrt.pop %v9505
    %v9777 = vmul.f32 %v9776, %v9505
    %v9778 = vmul.f32 %v9777, %v9776
    %v9779 = vmul.f32 0.5, %v9778
    %v9780 = vsub.f32 1.5, %v9779
    %v9781 = vmul.f32 %v9776, %v9780
    %vm9782 = vweird.f32 %v9505
    %vm9783 = vweird.f32 %v9776
    %vm9784 = vmor %vm9782, %vm9783
    %v9785 = vsel %vm9784, %v9776, %v9781
    %v9786 = vrsqrt.pop %v9506
    %v9787 = vmul.f32 %v9786, %v9506
    %v9788 = vmul.f32 %v9787, %v9786
    %v9789 = vmul.f32 0.5, %v9788
    %v9790 = vsub.f32 1.5, %v9789
    %v9791 = vmul.f32 %v9786, %v9790
    %vm9792 = vweird.f32 %v9506
    %vm9793 = vweird.f32 %v9786
    %vm9794 = vmor %vm9792, %vm9793
    %v9795 = vsel %vm9794, %v9786, %v9791
    %v9796 = vrsqrt.pop %v9507
    %v9797 = vmul.f32 %v9796, %v9507
    %v9798 = vmul.f32 %v9797, %v9796
    %v9799 = vmul.f32 0.5, %v9798
    %v9800 = vsub.f32 1.5, %v9799
    %v9801 = vmul.f32 %v9796, %v9800
    %vm9802 = vweird.f32 %v9507
    %vm9803 = vweird.f32 %v9796
    %vm9804 = vmor %vm9802, %vm9803
    %v9805 = vsel %vm9804, %v9796, %v9801
    %v9806 = vrsqrt.pop %v9508
    %v9807 = vmul.f32 %v9806, %v9508
    %v9808 = vmul.f32 %v9807, %v9806
    %v9809 = vmul.f32 0.5, %v9808
    %v9810 = vsub.f32 1.5, %v9809
    %v9811 = vmul.f32 %v9806, %v9810
    %vm9812 = vweird.f32 %v9508
    %vm9813 = vweird.f32 %v9806
    %vm9814 = vmor %vm9812, %vm9813
    %v9815 = vsel %vm9814, %v9806, %v9811
    %v9816 = vrsqrt.pop %v9509
    %v9817 = vmul.f32 %v9816, %v9509
    %v9818 = vmul.f32 %v9817, %v9816
    %v9819 = vmul.f32 0.5, %v9818
    %v9820 = vsub.f32 1.5, %v9819
    %v9821 = vmul.f32 %v9816, %v9820
    %vm9822 = vweird.f32 %v9509
    %vm9823 = vweird.f32 %v9816
    %vm9824 = vmor %vm9822, %vm9823
    %v9825 = vsel %vm9824, %v9816, %v9821
    %v9826 = vrsqrt.pop %v9510
    %v9827 = vmul.f32 %v9826, %v9510
    %v9828 = vmul.f32 %v9827, %v9826
    %v9829 = vmul.f32 0.5, %v9828
    %v9830 = vsub.f32 1.5, %v9829
    %v9831 = vmul.f32 %v9826, %v9830
    %vm9832 = vweird.f32 %v9510
    %vm9833 = vweird.f32 %v9826
    %vm9834 = vmor %vm9832, %vm9833
    %v9835 = vsel %vm9834, %v9826, %v9831
    %v9836 = vrsqrt.pop %v9511
    %v9837 = vmul.f32 %v9836, %v9511
    %v9838 = vmul.f32 %v9837, %v9836
    %v9839 = vmul.f32 0.5, %v9838
    %v9840 = vsub.f32 1.5, %v9839
    %v9841 = vmul.f32 %v9836, %v9840
    %vm9842 = vweird.f32 %v9511
    %vm9843 = vweird.f32 %v9836
    %vm9844 = vmor %vm9842, %vm9843
    %v9845 = vsel %vm9844, %v9836, %v9841
    %v9846 = vrsqrt.pop %v9512
    %v9847 = vmul.f32 %v9846, %v9512
    %v9848 = vmul.f32 %v9847, %v9846
    %v9849 = vmul.f32 0.5, %v9848
    %v9850 = vsub.f32 1.5, %v9849
    %v9851 = vmul.f32 %v9846, %v9850
    %vm9852 = vweird.f32 %v9512
    %vm9853 = vweird.f32 %v9846
    %vm9854 = vmor %vm9852, %vm9853
    %v9855 = vsel %vm9854, %v9846, %v9851
    %v9856 = vrsqrt.pop %v9513
    %v9857 = vmul.f32 %v9856, %v9513
    %v9858 = vmul.f32 %v9857, %v9856
    %v9859 = vmul.f32 0.5, %v9858
    %v9860 = vsub.f32 1.5, %v9859
    %v9861 = vmul.f32 %v9856, %v9860
    %vm9862 = vweird.f32 %v9513
    %vm9863 = vweird.f32 %v9856
    %vm9864 = vmor %vm9862, %vm9863
    %v9865 = vsel %vm9864, %v9856, %v9861
    %v9866 = vrsqrt.pop %v9514
    %v9867 = vmul.f32 %v9866, %v9514
    %v9868 = vmul.f32 %v9867, %v9866
    %v9869 = vmul.f32 0.5, %v9868
    %v9870 = vsub.f32 1.5, %v9869
    %v9871 = vmul.f32 %v9866, %v9870
    %vm9872 = vweird.f32 %v9514
    %vm9873 = vweird.f32 %v9866
    %vm9874 = vmor %vm9872, %vm9873
    %v9875 = vsel %vm9874, %v9866, %v9871
    %v9876 = vrsqrt.pop %v9515
    %v9877 = vmul.f32 %v9876, %v9515
    %v9878 = vmul.f32 %v9877, %v9876
    %v9879 = vmul.f32 0.5, %v9878
    %v9880 = vsub.f32 1.5, %v9879
    %v9881 = vmul.f32 %v9876, %v9880
    %vm9882 = vweird.f32 %v9515
    %vm9883 = vweird.f32 %v9876
    %vm9884 = vmor %vm9882, %vm9883
    %v9885 = vsel %vm9884, %v9876, %v9881
    %v9886 = vrsqrt.pop %v9516
    %v9887 = vmul.f32 %v9886, %v9516
    %v9888 = vmul.f32 %v9887, %v9886
    %v9889 = vmul.f32 0.5, %v9888
    %v9890 = vsub.f32 1.5, %v9889
    %v9891 = vmul.f32 %v9886, %v9890
    %vm9892 = vweird.f32 %v9516
    %vm9893 = vweird.f32 %v9886
    %vm9894 = vmor %vm9892, %vm9893
    %v9895 = vsel %vm9894, %v9886, %v9891
    %v9896 = vrsqrt.pop %v9517
    %v9897 = vmul.f32 %v9896, %v9517
    %v9898 = vmul.f32 %v9897, %v9896
    %v9899 = vmul.f32 0.5, %v9898
    %v9900 = vsub.f32 1.5, %v9899
    %v9901 = vmul.f32 %v9896, %v9900
    %vm9902 = vweird.f32 %v9517
    %vm9903 = vweird.f32 %v9896
    %vm9904 = vmor %vm9902, %vm9903
    %v9905 = vsel %vm9904, %v9896, %v9901
    %v9906 = vrsqrt.pop %v9518
    %v9907 = vmul.f32 %v9906, %v9518
    %v9908 = vmul.f32 %v9907, %v9906
    %v9909 = vmul.f32 0.5, %v9908
    %v9910 = vsub.f32 1.5, %v9909
    %v9911 = vmul.f32 %v9906, %v9910
    %vm9912 = vweird.f32 %v9518
    %vm9913 = vweird.f32 %v9906
    %vm9914 = vmor %vm9912, %vm9913
    %v9915 = vsel %vm9914, %v9906, %v9911
    %v9916 = vrsqrt.pop %v9519
    %v9917 = vmul.f32 %v9916, %v9519
    %v9918 = vmul.f32 %v9917, %v9916
    %v9919 = vmul.f32 0.5, %v9918
    %v9920 = vsub.f32 1.5, %v9919
    %v9921 = vmul.f32 %v9916, %v9920
    %vm9922 = vweird.f32 %v9519
    %vm9923 = vweird.f32 %v9916
    %vm9924 = vmor %vm9922, %vm9923
    %v9925 = vsel %vm9924, %v9916, %v9921
    %v9926 = vrsqrt.pop %v9520
    %v9927 = vmul.f32 %v9926, %v9520
    %v9928 = vmul.f32 %v9927, %v9926
    %v9929 = vmul.f32 0.5, %v9928
    %v9930 = vsub.f32 1.5, %v9929
    %v9931 = vmul.f32 %v9926, %v9930
    %vm9932 = vweird.f32 %v9520
    %vm9933 = vweird.f32 %v9926
    %vm9934 = vmor %vm9932, %vm9933
    %v9935 = vsel %vm9934, %v9926, %v9931
    %v9936 = vrsqrt.pop %v9521
    %v9937 = vmul.f32 %v9936, %v9521
    %v9938 = vmul.f32 %v9937, %v9936
    %v9939 = vmul.f32 0.5, %v9938
    %v9940 = vsub.f32 1.5, %v9939
    %v9941 = vmul.f32 %v9936, %v9940
    %vm9942 = vweird.f32 %v9521
    %vm9943 = vweird.f32 %v9936
    %vm9944 = vmor %vm9942, %vm9943
    %v9945 = vsel %vm9944, %v9936, %v9941
    %v9946 = vrsqrt.pop %v9522
    %v9947 = vmul.f32 %v9946, %v9522
    %v9948 = vmul.f32 %v9947, %v9946
    %v9949 = vmul.f32 0.5, %v9948
    %v9950 = vsub.f32 1.5, %v9949
    %v9951 = vmul.f32 %v9946, %v9950
    %vm9952 = vweird.f32 %v9522
    %vm9953 = vweird.f32 %v9946
    %vm9954 = vmor %vm9952, %vm9953
    %v9955 = vsel %vm9954, %v9946, %v9951
    %v9956 = vrsqrt.pop %v9523
    %v9957 = vmul.f32 %v9956, %v9523
    %v9958 = vmul.f32 %v9957, %v9956
    %v9959 = vmul.f32 0.5, %v9958
    %v9960 = vsub.f32 1.5, %v9959
    %v9961 = vmul.f32 %v9956, %v9960
    %vm9962 = vweird.f32 %v9523
    %vm9963 = vweird.f32 %v9956
    %vm9964 = vmor %vm9962, %vm9963
    %v9965 = vsel %vm9964, %v9956, %v9961
    %v9966 = vrsqrt.pop %v9524
    %v9967 = vmul.f32 %v9966, %v9524
    %v9968 = vmul.f32 %v9967, %v9966
    %v9969 = vmul.f32 0.5, %v9968
    %v9970 = vsub.f32 1.5, %v9969
    %v9971 = vmul.f32 %v9966, %v9970
    %vm9972 = vweird.f32 %v9524
    %vm9973 = vweird.f32 %v9966
    %vm9974 = vmor %vm9972, %vm9973
    %v9975 = vsel %vm9974, %v9966, %v9971
    %v9976 = vrsqrt.pop %v9525
    %v9977 = vmul.f32 %v9976, %v9525
    %v9978 = vmul.f32 %v9977, %v9976
    %v9979 = vmul.f32 0.5, %v9978
    %v9980 = vsub.f32 1.5, %v9979
    %v9981 = vmul.f32 %v9976, %v9980
    %vm9982 = vweird.f32 %v9525
    %vm9983 = vweird.f32 %v9976
    %vm9984 = vmor %vm9982, %vm9983
    %v9985 = vsel %vm9984, %v9976, %v9981
    %v9986 = vrsqrt.pop %v9526
    %v9987 = vmul.f32 %v9986, %v9526
    %v9988 = vmul.f32 %v9987, %v9986
    %v9989 = vmul.f32 0.5, %v9988
    %v9990 = vsub.f32 1.5, %v9989
    %v9991 = vmul.f32 %v9986, %v9990
    %vm9992 = vweird.f32 %v9526
    %vm9993 = vweird.f32 %v9986
    %vm9994 = vmor %vm9992, %vm9993
    %v9995 = vsel %vm9994, %v9986, %v9991
    %v9996 = vrsqrt.pop %v9527
    %v9997 = vmul.f32 %v9996, %v9527
    %v9998 = vmul.f32 %v9997, %v9996
    %v9999 = vmul.f32 0.5, %v9998
    %v10000 = vsub.f32 1.5, %v9999
    %v10001 = vmul.f32 %v9996, %v10000
    %vm10002 = vweird.f32 %v9527
    %vm10003 = vweird.f32 %v9996
    %vm10004 = vmor %vm10002, %vm10003
    %v10005 = vsel %vm10004, %v9996, %v10001
    %v10006 = vrsqrt.pop %v9528
    %v10007 = vmul.f32 %v10006, %v9528
    %v10008 = vmul.f32 %v10007, %v10006
    %v10009 = vmul.f32 0.5, %v10008
    %v10010 = vsub.f32 1.5, %v10009
    %v10011 = vmul.f32 %v10006, %v10010
    %vm10012 = vweird.f32 %v9528
    %vm10013 = vweird.f32 %v10006
    %vm10014 = vmor %vm10012, %vm10013
    %v10015 = vsel %vm10014, %v10006, %v10011
    %v10016 = vrsqrt.pop %v9529
    %v10017 = vmul.f32 %v10016, %v9529
    %v10018 = vmul.f32 %v10017, %v10016
    %v10019 = vmul.f32 0.5, %v10018
    %v10020 = vsub.f32 1.5, %v10019
    %v10021 = vmul.f32 %v10016, %v10020
    %vm10022 = vweird.f32 %v9529
    %vm10023 = vweird.f32 %v10016
    %vm10024 = vmor %vm10022, %vm10023
    %v10025 = vsel %vm10024, %v10016, %v10021
    %v10026 = vrsqrt.pop %v9530
    %v10027 = vmul.f32 %v10026, %v9530
    %v10028 = vmul.f32 %v10027, %v10026
    %v10029 = vmul.f32 0.5, %v10028
    %v10030 = vsub.f32 1.5, %v10029
    %v10031 = vmul.f32 %v10026, %v10030
    %vm10032 = vweird.f32 %v9530
    %vm10033 = vweird.f32 %v10026
    %vm10034 = vmor %vm10032, %vm10033
    %v10035 = vsel %vm10034, %v10026, %v10031
    %v10036 = vrsqrt.pop %v9531
    %v10037 = vmul.f32 %v10036, %v9531
    %v10038 = vmul.f32 %v10037, %v10036
    %v10039 = vmul.f32 0.5, %v10038
    %v10040 = vsub.f32 1.5, %v10039
    %v10041 = vmul.f32 %v10036, %v10040
    %vm10042 = vweird.f32 %v9531
    %vm10043 = vweird.f32 %v10036
    %vm10044 = vmor %vm10042, %vm10043
    %v10045 = vsel %vm10044, %v10036, %v10041
    %v10046 = vrsqrt.pop %v9532
    %v10047 = vmul.f32 %v10046, %v9532
    %v10048 = vmul.f32 %v10047, %v10046
    %v10049 = vmul.f32 0.5, %v10048
    %v10050 = vsub.f32 1.5, %v10049
    %v10051 = vmul.f32 %v10046, %v10050
    %vm10052 = vweird.f32 %v9532
    %vm10053 = vweird.f32 %v10046
    %vm10054 = vmor %vm10052, %vm10053
    %v10055 = vsel %vm10054, %v10046, %v10051
    %v10056 = vrsqrt.pop %v9533
    %v10057 = vmul.f32 %v10056, %v9533
    %v10058 = vmul.f32 %v10057, %v10056
    %v10059 = vmul.f32 0.5, %v10058
    %v10060 = vsub.f32 1.5, %v10059
    %v10061 = vmul.f32 %v10056, %v10060
    %vm10062 = vweird.f32 %v9533
    %vm10063 = vweird.f32 %v10056
    %vm10064 = vmor %vm10062, %vm10063
    %v10065 = vsel %vm10064, %v10056, %v10061
    %v10066 = vrsqrt.pop %v9534
    %v10067 = vmul.f32 %v10066, %v9534
    %v10068 = vmul.f32 %v10067, %v10066
    %v10069 = vmul.f32 0.5, %v10068
    %v10070 = vsub.f32 1.5, %v10069
    %v10071 = vmul.f32 %v10066, %v10070
    %vm10072 = vweird.f32 %v9534
    %vm10073 = vweird.f32 %v10066
    %vm10074 = vmor %vm10072, %vm10073
    %v10075 = vsel %vm10074, %v10066, %v10071
    %v10076 = vrsqrt.pop %v9535
    %v10077 = vmul.f32 %v10076, %v9535
    %v10078 = vmul.f32 %v10077, %v10076
    %v10079 = vmul.f32 0.5, %v10078
    %v10080 = vsub.f32 1.5, %v10079
    %v10081 = vmul.f32 %v10076, %v10080
    %vm10082 = vweird.f32 %v9535
    %vm10083 = vweird.f32 %v10076
    %vm10084 = vmor %vm10082, %vm10083
    %v10085 = vsel %vm10084, %v10076, %v10081
    %v10086 = vrsqrt.pop %v9536
    %v10087 = vmul.f32 %v10086, %v9536
    %v10088 = vmul.f32 %v10087, %v10086
    %v10089 = vmul.f32 0.5, %v10088
    %v10090 = vsub.f32 1.5, %v10089
    %v10091 = vmul.f32 %v10086, %v10090
    %vm10092 = vweird.f32 %v9536
    %vm10093 = vweird.f32 %v10086
    %vm10094 = vmor %vm10092, %vm10093
    %v10095 = vsel %vm10094, %v10086, %v10091
    %v10096 = vrsqrt.pop %v9537
    %v10097 = vmul.f32 %v10096, %v9537
    %v10098 = vmul.f32 %v10097, %v10096
    %v10099 = vmul.f32 0.5, %v10098
    %v10100 = vsub.f32 1.5, %v10099
    %v10101 = vmul.f32 %v10096, %v10100
    %vm10102 = vweird.f32 %v9537
    %vm10103 = vweird.f32 %v10096
    %vm10104 = vmor %vm10102, %vm10103
    %v10105 = vsel %vm10104, %v10096, %v10101
    %v10106 = vrsqrt.pop %v9538
    %v10107 = vmul.f32 %v10106, %v9538
    %v10108 = vmul.f32 %v10107, %v10106
    %v10109 = vmul.f32 0.5, %v10108
    %v10110 = vsub.f32 1.5, %v10109
    %v10111 = vmul.f32 %v10106, %v10110
    %vm10112 = vweird.f32 %v9538
    %vm10113 = vweird.f32 %v10106
    %vm10114 = vmor %vm10112, %vm10113
    %v10115 = vsel %vm10114, %v10106, %v10111
    %v10116 = vrsqrt.pop %v9539
    %v10117 = vmul.f32 %v10116, %v9539
    %v10118 = vmul.f32 %v10117, %v10116
    %v10119 = vmul.f32 0.5, %v10118
    %v10120 = vsub.f32 1.5, %v10119
    %v10121 = vmul.f32 %v10116, %v10120
    %vm10122 = vweird.f32 %v9539
    %vm10123 = vweird.f32 %v10116
    %vm10124 = vmor %vm10122, %vm10123
    %v10125 = vsel %vm10124, %v10116, %v10121
    %v10126 = vrsqrt.pop %v9540
    %v10127 = vmul.f32 %v10126, %v9540
    %v10128 = vmul.f32 %v10127, %v10126
    %v10129 = vmul.f32 0.5, %v10128
    %v10130 = vsub.f32 1.5, %v10129
    %v10131 = vmul.f32 %v10126, %v10130
    %vm10132 = vweird.f32 %v9540
    %vm10133 = vweird.f32 %v10126
    %vm10134 = vmor %vm10132, %vm10133
    %v10135 = vsel %vm10134, %v10126, %v10131
    %v10136 = vrsqrt.pop %v9541
    %v10137 = vmul.f32 %v10136, %v9541
    %v10138 = vmul.f32 %v10137, %v10136
    %v10139 = vmul.f32 0.5, %v10138
    %v10140 = vsub.f32 1.5, %v10139
    %v10141 = vmul.f32 %v10136, %v10140
    %vm10142 = vweird.f32 %v9541
    %vm10143 = vweird.f32 %v10136
    %vm10144 = vmor %vm10142, %vm10143
    %v10145 = vsel %vm10144, %v10136, %v10141
    %v10146 = vrsqrt.pop %v9542
    %v10147 = vmul.f32 %v10146, %v9542
    %v10148 = vmul.f32 %v10147, %v10146
    %v10149 = vmul.f32 0.5, %v10148
    %v10150 = vsub.f32 1.5, %v10149
    %v10151 = vmul.f32 %v10146, %v10150
    %vm10152 = vweird.f32 %v9542
    %vm10153 = vweird.f32 %v10146
    %vm10154 = vmor %vm10152, %vm10153
    %v10155 = vsel %vm10154, %v10146, %v10151
    %v10156 = vrsqrt.pop %v9543
    %v10157 = vmul.f32 %v10156, %v9543
    %v10158 = vmul.f32 %v10157, %v10156
    %v10159 = vmul.f32 0.5, %v10158
    %v10160 = vsub.f32 1.5, %v10159
    %v10161 = vmul.f32 %v10156, %v10160
    %vm10162 = vweird.f32 %v9543
    %vm10163 = vweird.f32 %v10156
    %vm10164 = vmor %vm10162, %vm10163
    %v10165 = vsel %vm10164, %v10156, %v10161
    %v10166 = vrsqrt.pop %v9544
    %v10167 = vmul.f32 %v10166, %v9544
    %v10168 = vmul.f32 %v10167, %v10166
    %v10169 = vmul.f32 0.5, %v10168
    %v10170 = vsub.f32 1.5, %v10169
    %v10171 = vmul.f32 %v10166, %v10170
    %vm10172 = vweird.f32 %v9544
    %vm10173 = vweird.f32 %v10166
    %vm10174 = vmor %vm10172, %vm10173
    %v10175 = vsel %vm10174, %v10166, %v10171
    %v10176 = vrsqrt.pop %v9545
    %v10177 = vmul.f32 %v10176, %v9545
    %v10178 = vmul.f32 %v10177, %v10176
    %v10179 = vmul.f32 0.5, %v10178
    %v10180 = vsub.f32 1.5, %v10179
    %v10181 = vmul.f32 %v10176, %v10180
    %vm10182 = vweird.f32 %v9545
    %vm10183 = vweird.f32 %v10176
    %vm10184 = vmor %vm10182, %vm10183
    %v10185 = vsel %vm10184, %v10176, %v10181
    %v10186 = vmul.f32 %v9354, %v9555
    %v10187 = vmul.f32 %v9355, %v9555
    %v10188 = vmul.f32 %v9356, %v9565
    %v10189 = vmul.f32 %v9357, %v9565
    %v10190 = vmul.f32 %v9358, %v9575
    %v10191 = vmul.f32 %v9359, %v9575
    %v10192 = vmul.f32 %v9360, %v9585
    %v10193 = vmul.f32 %v9361, %v9585
    %v10194 = vmul.f32 %v9362, %v9595
    %v10195 = vmul.f32 %v9363, %v9595
    %v10196 = vmul.f32 %v9364, %v9605
    %v10197 = vmul.f32 %v9365, %v9605
    %v10198 = vmul.f32 %v9366, %v9615
    %v10199 = vmul.f32 %v9367, %v9615
    %v10200 = vmul.f32 %v9368, %v9625
    %v10201 = vmul.f32 %v9369, %v9625
    %v10202 = vmul.f32 %v9370, %v9635
    %v10203 = vmul.f32 %v9371, %v9635
    %v10204 = vmul.f32 %v9372, %v9645
    %v10205 = vmul.f32 %v9373, %v9645
    %v10206 = vmul.f32 %v9374, %v9655
    %v10207 = vmul.f32 %v9375, %v9655
    %v10208 = vmul.f32 %v9376, %v9665
    %v10209 = vmul.f32 %v9377, %v9665
    %v10210 = vmul.f32 %v9378, %v9675
    %v10211 = vmul.f32 %v9379, %v9675
    %v10212 = vmul.f32 %v9380, %v9685
    %v10213 = vmul.f32 %v9381, %v9685
    %v10214 = vmul.f32 %v9382, %v9695
    %v10215 = vmul.f32 %v9383, %v9695
    %v10216 = vmul.f32 %v9384, %v9705
    %v10217 = vmul.f32 %v9385, %v9705
    %v10218 = vmul.f32 %v9386, %v9715
    %v10219 = vmul.f32 %v9387, %v9715
    %v10220 = vmul.f32 %v9388, %v9725
    %v10221 = vmul.f32 %v9389, %v9725
    %v10222 = vmul.f32 %v9390, %v9735
    %v10223 = vmul.f32 %v9391, %v9735
    %v10224 = vmul.f32 %v9392, %v9745
    %v10225 = vmul.f32 %v9393, %v9745
    %v10226 = vmul.f32 %v9394, %v9755
    %v10227 = vmul.f32 %v9395, %v9755
    %v10228 = vmul.f32 %v9396, %v9765
    %v10229 = vmul.f32 %v9397, %v9765
    %v10230 = vmul.f32 %v9398, %v9775
    %v10231 = vmul.f32 %v9399, %v9775
    %v10232 = vmul.f32 %v9400, %v9785
    %v10233 = vmul.f32 %v9401, %v9785
    %v10234 = vmul.f32 %v9402, %v9795
    %v10235 = vmul.f32 %v9403, %v9795
    %v10236 = vmul.f32 %v9404, %v9805
    %v10237 = vmul.f32 %v9405, %v9805
    %v10238 = vmul.f32 %v9406, %v9815
    %v10239 = vmul.f32 %v9407, %v9815
    %v10240 = vmul.f32 %v9408, %v9825
    %v10241 = vmul.f32 %v9409, %v9825
    %v10242 = vmul.f32 %v9410, %v9835
    %v10243 = vmul.f32 %v9411, %v9835
    %v10244 = vmul.f32 %v9412, %v9845
    %v10245 = vmul.f32 %v9413, %v9845
    %v10246 = vmul.f32 %v9414, %v9855
    %v10247 = vmul.f32 %v9415, %v9855
    %v10248 = vmul.f32 %v9416, %v9865
    %v10249 = vmul.f32 %v9417, %v9865
    %v10250 = vmul.f32 %v9418, %v9875
    %v10251 = vmul.f32 %v9419, %v9875
    %v10252 = vmul.f32 %v9420, %v9885
    %v10253 = vmul.f32 %v9421, %v9885
    %v10254 = vmul.f32 %v9422, %v9895
    %v10255 = vmul.f32 %v9423, %v9895
    %v10256 = vmul.f32 %v9424, %v9905
    %v10257 = vmul.f32 %v9425, %v9905
    %v10258 = vmul.f32 %v9426, %v9915
    %v10259 = vmul.f32 %v9427, %v9915
    %v10260 = vmul.f32 %v9428, %v9925
    %v10261 = vmul.f32 %v9429, %v9925
    %v10262 = vmul.f32 %v9430, %v9935
    %v10263 = vmul.f32 %v9431, %v9935
    %v10264 = vmul.f32 %v9432, %v9945
    %v10265 = vmul.f32 %v9433, %v9945
    %v10266 = vmul.f32 %v9434, %v9955
    %v10267 = vmul.f32 %v9435, %v9955
    %v10268 = vmul.f32 %v9436, %v9965
    %v10269 = vmul.f32 %v9437, %v9965
    %v10270 = vmul.f32 %v9438, %v9975
    %v10271 = vmul.f32 %v9439, %v9975
    %v10272 = vmul.f32 %v9440, %v9985
    %v10273 = vmul.f32 %v9441, %v9985
    %v10274 = vmul.f32 %v9442, %v9995
    %v10275 = vmul.f32 %v9443, %v9995
    %v10276 = vmul.f32 %v9444, %v10005
    %v10277 = vmul.f32 %v9445, %v10005
    %v10278 = vmul.f32 %v9446, %v10015
    %v10279 = vmul.f32 %v9447, %v10015
    %v10280 = vmul.f32 %v9448, %v10025
    %v10281 = vmul.f32 %v9449, %v10025
    %v10282 = vmul.f32 %v9450, %v10035
    %v10283 = vmul.f32 %v9451, %v10035
    %v10284 = vmul.f32 %v9452, %v10045
    %v10285 = vmul.f32 %v9453, %v10045
    %v10286 = vmul.f32 %v9454, %v10055
    %v10287 = vmul.f32 %v9455, %v10055
    %v10288 = vmul.f32 %v9456, %v10065
    %v10289 = vmul.f32 %v9457, %v10065
    %v10290 = vmul.f32 %v9458, %v10075
    %v10291 = vmul.f32 %v9459, %v10075
    %v10292 = vmul.f32 %v9460, %v10085
    %v10293 = vmul.f32 %v9461, %v10085
    %v10294 = vmul.f32 %v9462, %v10095
    %v10295 = vmul.f32 %v9463, %v10095
    %v10296 = vmul.f32 %v9464, %v10105
    %v10297 = vmul.f32 %v9465, %v10105
    %v10298 = vmul.f32 %v9466, %v10115
    %v10299 = vmul.f32 %v9467, %v10115
    %v10300 = vmul.f32 %v9468, %v10125
    %v10301 = vmul.f32 %v9469, %v10125
    %v10302 = vmul.f32 %v9470, %v10135
    %v10303 = vmul.f32 %v9471, %v10135
    %v10304 = vmul.f32 %v9472, %v10145
    %v10305 = vmul.f32 %v9473, %v10145
    %v10306 = vmul.f32 %v9474, %v10155
    %v10307 = vmul.f32 %v9475, %v10155
    %v10308 = vmul.f32 %v9476, %v10165
    %v10309 = vmul.f32 %v9477, %v10165
    %v10310 = vmul.f32 %v9478, %v10175
    %v10311 = vmul.f32 %v9479, %v10175
    %v10312 = vmul.f32 %v9480, %v10185
    %v10313 = vmul.f32 %v9481, %v10185
    %v10314 = vld [vmem:[%s3] sm:$0x3]
    %10316 = vset.pattern.permute.xlu0 0
    %10317 = vperm.xlu0 %10316, %v192
    %v10318 = vpop.permute.xlu0 %10317
    %v10321 = vperm.slane %v10314, 0
    %v10322 = vperm.slane %v10314, 1
    %10325 = vmatpush.xpose.msra.mxu0 %v10216
    %10326 = vmatpush.xpose.msra.mxu0 %v10214
    %10327 = vmatpush.xpose.msra.mxu0 %v10212
    %10328 = vmatpush.xpose.msra.mxu0 %v10210
    %10329 = vmatpush.xpose.msra.mxu0 %v10208
    %10330 = vmatpush.xpose.msra.mxu0 %v10206
    %10331 = vmatpush.xpose.msra.mxu0 %v10204
    %10332 = vmatpush.xpose.msra.mxu0 %v10202
    %10333 = vmatpush.xpose.msra.mxu0 %v10200
    %10334 = vmatpush.xpose.msra.mxu0 %v10198
    %10335 = vmatpush.xpose.msra.mxu0 %v10196
    %10336 = vmatpush.xpose.msra.mxu0 %v10194
    %10337 = vmatpush.xpose.msra.mxu0 %v10192
    %10338 = vmatpush.xpose.msra.mxu0 %v10190
    %10339 = vmatpush.xpose.msra.mxu0 %v10188
    %10340 = vmatpush.xpose.msra.mxu0 %v10186
    %10341 = vmatmul.f32.gmra.mxu0 %v10321
    %v10342 = vpop.f32.mrf.mxu0
    %v10343 = vadd.f32 %v10318, %v10342
    %10344 = vdwg.mxu0
    %10345 = vmatpush.xpose.msra.mxu0 %v10217
    %10346 = vmatpush.xpose.msra.mxu0 %v10215
    %10347 = vmatpush.xpose.msra.mxu0 %v10213
    %10348 = vmatpush.xpose.msra.mxu0 %v10211
    %10349 = vmatpush.xpose.msra.mxu0 %v10209
    %10350 = vmatpush.xpose.msra.mxu0 %v10207
    %10351 = vmatpush.xpose.msra.mxu0 %v10205
    %10352 = vmatpush.xpose.msra.mxu0 %v10203
    %10353 = vmatpush.xpose.msra.mxu0 %v10201
    %10354 = vmatpush.xpose.msra.mxu0 %v10199
    %10355 = vmatpush.xpose.msra.mxu0 %v10197
    %10356 = vmatpush.xpose.msra.mxu0 %v10195
    %10357 = vmatpush.xpose.msra.mxu0 %v10193
    %10358 = vmatpush.xpose.msra.mxu0 %v10191
    %10359 = vmatpush.xpose.msra.mxu0 %v10189
    %10360 = vmatpush.xpose.msra.mxu0 %v10187
    %10361 = vmatmul.f32.gmra.mxu0 %v10322
    %v10362 = vpop.f32.mrf.mxu0
    %v10363 = vadd.f32 %v10343, %v10362
    %10364 = vdwg.mxu0
    %10365 = vmatpush.xpose.msra.mxu0 %v10248
    %10366 = vmatpush.xpose.msra.mxu0 %v10246
    %10367 = vmatpush.xpose.msra.mxu0 %v10244
    %10368 = vmatpush.xpose.msra.mxu0 %v10242
    %10369 = vmatpush.xpose.msra.mxu0 %v10240
    %10370 = vmatpush.xpose.msra.mxu0 %v10238
    %10371 = vmatpush.xpose.msra.mxu0 %v10236
    %10372 = vmatpush.xpose.msra.mxu0 %v10234
    %10373 = vmatpush.xpose.msra.mxu0 %v10232
    %10374 = vmatpush.xpose.msra.mxu0 %v10230
    %10375 = vmatpush.xpose.msra.mxu0 %v10228
    %10376 = vmatpush.xpose.msra.mxu0 %v10226
    %10377 = vmatpush.xpose.msra.mxu0 %v10224
    %10378 = vmatpush.xpose.msra.mxu0 %v10222
    %10379 = vmatpush.xpose.msra.mxu0 %v10220
    %10380 = vmatpush.xpose.msra.mxu0 %v10218
    %10381 = vmatmul.f32.gmra.mxu0 %v10321
    %v10382 = vpop.f32.mrf.mxu0
    %v10383 = vadd.f32 %v10318, %v10382
    %10384 = vdwg.mxu0
    %10385 = vmatpush.xpose.msra.mxu0 %v10249
    %10386 = vmatpush.xpose.msra.mxu0 %v10247
    %10387 = vmatpush.xpose.msra.mxu0 %v10245
    %10388 = vmatpush.xpose.msra.mxu0 %v10243
    %10389 = vmatpush.xpose.msra.mxu0 %v10241
    %10390 = vmatpush.xpose.msra.mxu0 %v10239
    %10391 = vmatpush.xpose.msra.mxu0 %v10237
    %10392 = vmatpush.xpose.msra.mxu0 %v10235
    %10393 = vmatpush.xpose.msra.mxu0 %v10233
    %10394 = vmatpush.xpose.msra.mxu0 %v10231
    %10395 = vmatpush.xpose.msra.mxu0 %v10229
    %10396 = vmatpush.xpose.msra.mxu0 %v10227
    %10397 = vmatpush.xpose.msra.mxu0 %v10225
    %10398 = vmatpush.xpose.msra.mxu0 %v10223
    %10399 = vmatpush.xpose.msra.mxu0 %v10221
    %10400 = vmatpush.xpose.msra.mxu0 %v10219
    %10401 = vmatmul.f32.gmra.mxu0 %v10322
    %v10402 = vpop.f32.mrf.mxu0
    %v10403 = vadd.f32 %v10383, %v10402
    %10404 = vdwg.mxu0
    %10405 = vmatpush.xpose.msra.mxu0 %v10280
    %10406 = vmatpush.xpose.msra.mxu0 %v10278
    %10407 = vmatpush.xpose.msra.mxu0 %v10276
    %10408 = vmatpush.xpose.msra.mxu0 %v10274
    %10409 = vmatpush.xpose.msra.mxu0 %v10272
    %10410 = vmatpush.xpose.msra.mxu0 %v10270
    %10411 = vmatpush.xpose.msra.mxu0 %v10268
    %10412 = vmatpush.xpose.msra.mxu0 %v10266
    %10413 = vmatpush.xpose.msra.mxu0 %v10264
    %10414 = vmatpush.xpose.msra.mxu0 %v10262
    %10415 = vmatpush.xpose.msra.mxu0 %v10260
    %10416 = vmatpush.xpose.msra.mxu0 %v10258
    %10417 = vmatpush.xpose.msra.mxu0 %v10256
    %10418 = vmatpush.xpose.msra.mxu0 %v10254
    %10419 = vmatpush.xpose.msra.mxu0 %v10252
    %10420 = vmatpush.xpose.msra.mxu0 %v10250
    %10421 = vmatmul.f32.gmra.mxu0 %v10321
    %v10422 = vpop.f32.mrf.mxu0
    %v10423 = vadd.f32 %v10318, %v10422
    %10424 = vdwg.mxu0
    %10425 = vmatpush.xpose.msra.mxu0 %v10281
    %10426 = vmatpush.xpose.msra.mxu0 %v10279
    %10427 = vmatpush.xpose.msra.mxu0 %v10277
    %10428 = vmatpush.xpose.msra.mxu0 %v10275
    %10429 = vmatpush.xpose.msra.mxu0 %v10273
    %10430 = vmatpush.xpose.msra.mxu0 %v10271
    %10431 = vmatpush.xpose.msra.mxu0 %v10269
    %10432 = vmatpush.xpose.msra.mxu0 %v10267
    %10433 = vmatpush.xpose.msra.mxu0 %v10265
    %10434 = vmatpush.xpose.msra.mxu0 %v10263
    %10435 = vmatpush.xpose.msra.mxu0 %v10261
    %10436 = vmatpush.xpose.msra.mxu0 %v10259
    %10437 = vmatpush.xpose.msra.mxu0 %v10257
    %10438 = vmatpush.xpose.msra.mxu0 %v10255
    %10439 = vmatpush.xpose.msra.mxu0 %v10253
    %10440 = vmatpush.xpose.msra.mxu0 %v10251
    %10441 = vmatmul.f32.gmra.mxu0 %v10322
    %v10442 = vpop.f32.mrf.mxu0
    %v10443 = vadd.f32 %v10423, %v10442
    %10444 = vdwg.mxu0
    %10445 = vmatpush.xpose.msra.mxu0 %v10312
    %10446 = vmatpush.xpose.msra.mxu0 %v10310
    %10447 = vmatpush.xpose.msra.mxu0 %v10308
    %10448 = vmatpush.xpose.msra.mxu0 %v10306
    %10449 = vmatpush.xpose.msra.mxu0 %v10304
    %10450 = vmatpush.xpose.msra.mxu0 %v10302
    %10451 = vmatpush.xpose.msra.mxu0 %v10300
    %10452 = vmatpush.xpose.msra.mxu0 %v10298
    %10453 = vmatpush.xpose.msra.mxu0 %v10296
    %10454 = vmatpush.xpose.msra.mxu0 %v10294
    %10455 = vmatpush.xpose.msra.mxu0 %v10292
    %10456 = vmatpush.xpose.msra.mxu0 %v10290
    %10457 = vmatpush.xpose.msra.mxu0 %v10288
    %10458 = vmatpush.xpose.msra.mxu0 %v10286
    %10459 = vmatpush.xpose.msra.mxu0 %v10284
    %10460 = vmatpush.xpose.msra.mxu0 %v10282
    %10461 = vmatmul.f32.gmra.mxu0 %v10321
    %v10462 = vpop.f32.mrf.mxu0
    %v10463 = vadd.f32 %v10318, %v10462
    %10464 = vdwg.mxu0
    %10465 = vmatpush.xpose.msra.mxu0 %v10313
    %10466 = vmatpush.xpose.msra.mxu0 %v10311
    %10467 = vmatpush.xpose.msra.mxu0 %v10309
    %10468 = vmatpush.xpose.msra.mxu0 %v10307
    %10469 = vmatpush.xpose.msra.mxu0 %v10305
    %10470 = vmatpush.xpose.msra.mxu0 %v10303
    %10471 = vmatpush.xpose.msra.mxu0 %v10301
    %10472 = vmatpush.xpose.msra.mxu0 %v10299
    %10473 = vmatpush.xpose.msra.mxu0 %v10297
    %10474 = vmatpush.xpose.msra.mxu0 %v10295
    %10475 = vmatpush.xpose.msra.mxu0 %v10293
    %10476 = vmatpush.xpose.msra.mxu0 %v10291
    %10477 = vmatpush.xpose.msra.mxu0 %v10289
    %10478 = vmatpush.xpose.msra.mxu0 %v10287
    %10479 = vmatpush.xpose.msra.mxu0 %v10285
    %10480 = vmatpush.xpose.msra.mxu0 %v10283
    %10481 = vmatmul.f32.gmra.mxu0 %v10322
    %v10482 = vpop.f32.mrf.mxu0
    %v10483 = vadd.f32 %v10463, %v10482
    %10484 = vdwg.mxu0
    %v10485 = vand.u32 2147483647, %v10363
    %v10486 = vand.u32 2147483647, %v10403
    %v10487 = vand.u32 2147483647, %v10443
    %v10488 = vand.u32 2147483647, %v10483
    %v10489 = vsub.f32 0.0, %v10485
    %v10490 = vsub.f32 0.0, %v10486
    %v10491 = vsub.f32 0.0, %v10487
    %v10492 = vsub.f32 0.0, %v10488
    %v10493 = vmul.f32 %v10489, 1.442695
    %v10494 = vpow.pop %v10493
    %v10495 = vmul.f32 %v10490, 1.442695
    %v10496 = vpow.pop %v10495
    %v10497 = vmul.f32 %v10491, 1.442695
    %v10498 = vpow.pop %v10497
    %v10499 = vmul.f32 %v10492, 1.442695
    %v10500 = vpow.pop %v10499
    %vm10501 = vcmp.ge.f32.partialorder %v10363, 0.0
    %vm10502 = vcmp.ge.f32.partialorder %v10403, 0.0
    %vm10503 = vcmp.ge.f32.partialorder %v10443, 0.0
    %vm10504 = vcmp.ge.f32.partialorder %v10483, 0.0
    %v10505 = vsel %vm10501, 1.0, %v10494
    %v10506 = vsel %vm10502, 1.0, %v10496
    %v10507 = vsel %vm10503, 1.0, %v10498
    %v10508 = vsel %vm10504, 1.0, %v10500
    %v10509 = vadd.f32 %v10494, 1.0
    %v10510 = vadd.f32 %v10496, 1.0
    %v10511 = vadd.f32 %v10498, 1.0
    %v10512 = vadd.f32 %v10500, 1.0
    %v10513 = vrcp.pop %v10509
    %v10514 = vmul.f32 %v10509, %v10513
    %v10515 = vsub.f32 1.0, %v10514
    %v10516 = vmul.f32 %v10513, %v10515
    %v10517 = vadd.f32 %v10513, %v10516
    %vm10518 = vweird.f32 %v10509
    %vm10519 = vweird.f32 %v10513
    %vm10520 = vmor %vm10518, %vm10519
    %v10521 = vsel %vm10520, %v10513, %v10517
    %v10522 = vand.u32 2147483647, %v10509
    %vm10523 = vcmp.eq.f32.partialorder %v10522, 8.507059e+37
    %v10524 = vand.u32 %v10509, 2147483648
    %v10525 = vor.u32 1.1754944e-38, %v10524
    %v10526 = vsel %vm10523, %v10525, %v10521
    %v10527 = vmul.f32 %v10505, %v10526
    %v10528 = vrcp.pop %v10510
    %v10529 = vmul.f32 %v10510, %v10528
    %v10530 = vsub.f32 1.0, %v10529
    %v10531 = vmul.f32 %v10528, %v10530
    %v10532 = vadd.f32 %v10528, %v10531
    %vm10533 = vweird.f32 %v10510
    %vm10534 = vweird.f32 %v10528
    %vm10535 = vmor %vm10533, %vm10534
    %v10536 = vsel %vm10535, %v10528, %v10532
    %v10537 = vand.u32 2147483647, %v10510
    %vm10538 = vcmp.eq.f32.partialorder %v10537, 8.507059e+37
    %v10539 = vand.u32 %v10510, 2147483648
    %v10540 = vor.u32 1.1754944e-38, %v10539
    %v10541 = vsel %vm10538, %v10540, %v10536
    %v10542 = vmul.f32 %v10506, %v10541
    %v10543 = vrcp.pop %v10511
    %v10544 = vmul.f32 %v10511, %v10543
    %v10545 = vsub.f32 1.0, %v10544
    %v10546 = vmul.f32 %v10543, %v10545
    %v10547 = vadd.f32 %v10543, %v10546
    %vm10548 = vweird.f32 %v10511
    %vm10549 = vweird.f32 %v10543
    %vm10550 = vmor %vm10548, %vm10549
    %v10551 = vsel %vm10550, %v10543, %v10547
    %v10552 = vand.u32 2147483647, %v10511
    %vm10553 = vcmp.eq.f32.partialorder %v10552, 8.507059e+37
    %v10554 = vand.u32 %v10511, 2147483648
    %v10555 = vor.u32 1.1754944e-38, %v10554
    %v10556 = vsel %vm10553, %v10555, %v10551
    %v10557 = vmul.f32 %v10507, %v10556
    %v10558 = vrcp.pop %v10512
    %v10559 = vmul.f32 %v10512, %v10558
    %v10560 = vsub.f32 1.0, %v10559
    %v10561 = vmul.f32 %v10558, %v10560
    %v10562 = vadd.f32 %v10558, %v10561
    %vm10563 = vweird.f32 %v10512
    %vm10564 = vweird.f32 %v10558
    %vm10565 = vmor %vm10563, %vm10564
    %v10566 = vsel %vm10565, %v10558, %v10562
    %v10567 = vand.u32 2147483647, %v10512
    %vm10568 = vcmp.eq.f32.partialorder %v10567, 8.507059e+37
    %v10569 = vand.u32 %v10512, 2147483648
    %v10570 = vor.u32 1.1754944e-38, %v10569
    %v10571 = vsel %vm10568, %v10570, %v10566
    %v10572 = vmul.f32 %v10508, %v10571
    %v10577 = vrot.slane %v10542, 7
    %v10578 = vrot.slane %v10557, 6
    %v10579 = vrot.slane %v10572, 5
    %vm10580 = vcmask 1040384
    %v10581 = vsel %vm10580, %v10527, %v10577
    %vm10582 = vcmask 1042434
    %v10583 = vsel %vm10582, %v10578, %v10579
    %vm10584 = vcmask 1041408
    %v10585 = vsel %vm10584, %v10581, %v10583
    %v10587 = vlaneseq
    %vm10588 = vcmp.ge.s32.totalorder %v10587, 0
    %vm10589 = vcmp.lt.s32.totalorder %v10587, 512
    %vm10590 = vmand %vm10588, %vm10589
    %10591 = vst.msk [vmem:[#allocation8] sm:$0xf] %vm10590, %v10585
    // Predicated region
    $region30: #{tpu_custom_call.1} parent=1 // pred_check
      _
    $region31: #{tpu_custom_call.1} parent=1 // pred_check_branch
      %10593 = sbr.rel (0) target = $region33
    $region32: #{tpu_custom_call.1} parent=1 // pred_region
      %10595 = vsyncadd [#allocation4], 0
      %s10597 = sshll.u32 [#allocation8], 4
      %s10598 = int_to_ptr.vmem [resolvable:$true] %s10597
      %s10599 = sshll.u32 %s4, 4
      %s10600 = int_to_ptr.hbm [resolvable:$true] %s10599
      %10602 = dma.vmem_to_hbm [thread:$0]  %s10598, 64, %s10600, [#allocation4]
    $region33: #{tpu_custom_call.1} parent=1 // pred_fallthru
      _
    // Predicated region
    $region34: #{tpu_custom_call.1} parent=1 // pred_check
      _
    $region35: #{tpu_custom_call.1} parent=1 // pred_check_branch
      %10604 = sbr.rel (0) target = $region37
    $region36: #{tpu_custom_call.1} parent=1 // pred_region
      %10606 = dma.done [#allocation4], 64
    $region37: #{tpu_custom_call.1} parent=1 // pred_fallthru
      _
    %10607 = vsyncpa [#allocation3], 1
    %10608 = vsyncpa [#allocation6], 1
    %10609 = vsyncpa [#allocation4], 1

</llo_original>
